<compile_context>
chip_gen: v7x
topology: tpu7x:2x2x1
jax: 0.10.0
libtpu: 0.0.40
codegen_flags: <defaults>
</compile_context>

<pallas_src>
import numpy as np

import jax
import jax.numpy as jnp
from jax.experimental import pallas as pl
from jax.experimental.pallas import tpu as pltpu


# ----------------------------------------------------------------------------
# constant 2x2-maxpool "downsample" selection matrix (built once on the host)
#   pooled[y*12+x, c] = max over h2 rows {48y+2x, +1, +24, +25}
#   -> m[r] = max(h2[r], h2[r+1], h2[r+24], h2[r+25]),  pooled = SEL @ m
# ----------------------------------------------------------------------------
def _make_pool_select():
    sel = np.zeros((144, 551), np.float32)
    k = np.arange(144)
    rows = 48 * (k // 12) + 2 * (k % 12)          # max = 550 < 551
    sel[k, rows] = 1.0
    return sel


_POOL_SELECT = _make_pool_select()


# ----------------------------------------------------------------------------
# Kernel 1: fused conv stem (conv1 + relu + conv2 + relu + maxpool + flatten)
# ----------------------------------------------------------------------------
def _stem_kernel(x_ref, w1_ref, b1_ref, w2_ref, b2_ref, sel_ref, out_ref):
    x3 = x_ref[0]                                            # (28, 28, 1)

    # conv1: Cin=1, so 9 broadcast multiply-adds on the VPU (channels in lanes)
    acc1 = jnp.zeros((26, 26, 32), jnp.float32)
    for dy in range(3):
        for dx in range(3):
            t = dy * 3 + dx
            xs = x3[dy:dy + 26, dx:dx + 26, :]               # (26, 26, 1)
            acc1 = acc1 + xs * w1_ref[t][None, None, :]      # (26, 26, 32)
    h1 = jnp.maximum(acc1 + b1_ref[...][None], 0.0)          # (26, 26, 32)

    # conv2: 9 shifted MXU matmuls, spatial-major output (row = y*24 + x)
    acc2 = jnp.zeros((24 * 24, 64), jnp.float32)
    for dy in range(3):
        for dx in range(3):
            t = dy * 3 + dx
            patch = h1[dy:dy + 24, dx:dx + 24, :].reshape(24 * 24, 32)
            acc2 = acc2 + jnp.dot(patch, w2_ref[t * 32:(t + 1) * 32, :],
                                  preferred_element_type=jnp.float32)
    h2 = jnp.maximum(acc2 + b2_ref[...], 0.0)                # (576, 64)

    # 2x2 maxpool: neighbourhood max via shifted slices, downsample via matmul
    m = jnp.maximum(jnp.maximum(h2[0:551], h2[1:552]),
                    jnp.maximum(h2[24:575], h2[25:576]))     # (551, 64)
    out_ref[0] = jnp.dot(sel_ref[...], m,
                         preferred_element_type=jnp.float32)  # (144, 64) HWC


def stem_pallas(x_hw, w1, b1, w2, b2, sel):
    """x_hw: (N, 28, 28, 1) f32 -> (N, 144, 64) f32 pooled features (HWC-flat)."""
    n = x_hw.shape[0]
    return pl.pallas_call(
        _stem_kernel,
        out_shape=jax.ShapeDtypeStruct((n, 144, 64), jnp.float32),
        grid_spec=pltpu.PrefetchScalarGridSpec(
            num_scalar_prefetch=0,
            grid=(n,),
            in_specs=[
                pl.BlockSpec((1, 28, 28, 1), lambda i: (i, 0, 0, 0)),
                pl.BlockSpec((9, 32), lambda i: (0, 0)),
                pl.BlockSpec((1, 32), lambda i: (0, 0)),
                pl.BlockSpec((288, 64), lambda i: (0, 0)),
                pl.BlockSpec((1, 64), lambda i: (0, 0)),
                pl.BlockSpec((144, 551), lambda i: (0, 0)),
            ],
            out_specs=pl.BlockSpec((1, 144, 64), lambda i: (i, 0, 0)),
        ),
        compiler_params=pltpu.CompilerParams(
            dimension_semantics=("parallel",),
            vmem_limit_bytes=16 * 1024 * 1024,
        ),
    )(x_hw, w1, b1, w2, b2, sel)


# ----------------------------------------------------------------------------
# Kernel 2: Linear(9216, 512)+ReLU fused with the full 'fsa' MIL head
# ----------------------------------------------------------------------------
def _fc_fsa_kernel(x_ref, w_ref, bfc_ref, watt_ref, batt_ref, lin_ref,
                   ins_ref, alpha_ref, f_ref, yprob_ref, acc_ref):
    k = pl.program_id(0)

    @pl.when(k == 0)
    def _():
        acc_ref[...] = jnp.zeros_like(acc_ref)

    acc_ref[...] += jnp.dot(x_ref[...], w_ref[...],
                            preferred_element_type=jnp.float32)

    @pl.when(k == pl.num_programs(0) - 1)
    def _():
        fs = jnp.maximum(acc_ref[...] + bfc_ref[...], 0.0)         # (N, L)
        lin = lin_ref[...]                                          # (L, ks)

        # instance probabilities: softmax(fs @ linear, dim=1)
        logits = jnp.dot(fs, lin, preferred_element_type=jnp.float32)
        mx = jnp.max(logits, axis=1, keepdims=True)
        e = jnp.exp(logits - mx)
        ins_ref[...] = e / jnp.sum(e, axis=1, keepdims=True)

        # attention_based(fs) -> softmax over the instance axis
        a = jnp.dot(fs, watt_ref[...],
                    preferred_element_type=jnp.float32) + batt_ref[...]  # (N,1)
        am = jnp.max(a, axis=0, keepdims=True)
        ae = jnp.exp(a - am)
        alpha = ae / jnp.sum(ae, axis=0, keepdims=True)             # (N, 1)
        alpha_ref[...] = alpha

        # F = alpha^T @ fs
        f = jnp.sum(alpha * fs, axis=0, keepdims=True)              # (1, L)
        f_ref[...] = f

        # Y_prob = log_softmax(F @ linear, dim=1)
        y = jnp.dot(f, lin, preferred_element_type=jnp.float32)     # (1, ks)
        ym = jnp.max(y, axis=1, keepdims=True)
        yprob_ref[...] = y - ym - jnp.log(
            jnp.sum(jnp.exp(y - ym), axis=1, keepdims=True))


def _pick_k_tile(k, nout, budget_bytes=20 * 1024 * 1024):
    """Largest divisor tk of k whose double-buffered weight block fits budget."""
    for steps in range(1, k + 1):
        if k % steps:
            continue
        tk = k // steps
        if tk != k and tk % 128 != 0:
            continue
        if 2 * tk * nout * 4 <= budget_bytes or tk <= 1024:
            return tk
    return k


def fc_fsa_pallas(flat, fc_w, fc_b, att_w, att_b, linear):
    """flat: (N, 9216) -> (ins_probs (N,ks), alpha (N,1), F (1,L), Y_prob (1,ks))."""
    m, k = flat.shape
    nout = fc_w.shape[1]
    ks = linear.shape[1]
    tk = _pick_k_tile(k, nout)                 # 4608 for the 9216 -> 512 fc
    grid = (k // tk,)

    out_shapes = (
        jax.ShapeDtypeStruct((m, ks), jnp.float32),    # ins_probs
        jax.ShapeDtypeStruct((m, 1), jnp.float32),     # alpha (column)
        jax.ShapeDtypeStruct((1, nout), jnp.float32),  # F
        jax.ShapeDtypeStruct((1, ks), jnp.float32),    # Y_prob (log-softmax)
    )
    return pl.pallas_call(
        _fc_fsa_kernel,
        out_shape=out_shapes,
        grid_spec=pltpu.PrefetchScalarGridSpec(
            num_scalar_prefetch=0,
            grid=grid,
            in_specs=[
                pl.BlockSpec((m, tk), lambda kk: (0, kk)),
                pl.BlockSpec((tk, nout), lambda kk: (kk, 0)),
                pl.BlockSpec((1, nout), lambda kk: (0, 0)),
                pl.BlockSpec((nout, 1), lambda kk: (0, 0)),
                pl.BlockSpec((1, 1), lambda kk: (0, 0)),
                pl.BlockSpec((nout, ks), lambda kk: (0, 0)),
            ],
            out_specs=[
                pl.BlockSpec((m, ks), lambda kk: (0, 0)),
                pl.BlockSpec((m, 1), lambda kk: (0, 0)),
                pl.BlockSpec((1, nout), lambda kk: (0, 0)),
                pl.BlockSpec((1, ks), lambda kk: (0, 0)),
            ],
            scratch_shapes=[pltpu.VMEM((m, nout), jnp.float32)],
        ),
        compiler_params=pltpu.CompilerParams(
            dimension_semantics=("arbitrary",),
            vmem_limit_bytes=32 * 1024 * 1024,      # valid on v5e/v6e/v7x
        ),
    )(flat, fc_w, fc_b, att_w, att_b, linear)


# ----------------------------------------------------------------------------
# Parameters & forward
# ----------------------------------------------------------------------------
def init_params(key, feat_dim=512, ks=10):
    """Deterministic synthetic parameters (shapes from PSAMIL.__init__).

    Layout conventions (all equivalent to torch up to a fixed re-indexing that
    is applied ONCE here, on the host):
      conv1_w (9, 32)    = torch (32,1,3,3) weight as [dy*3+dx, cout]
      conv2_w (288, 64)  = torch (64,32,3,3) weight as [(dy*3+dx)*32+cin, cout]
      fc_w    (9216,512) = torch Linear(9216,512).weight.T with its rows
                           permuted from NCHW-flatten order to the kernel's
                           HWC-flatten order ((y*12+x)*64 + c).
    """
    keys = jax.random.split(key, 10)
    s = 0.05

    fc_w_torch = s * jax.random.normal(keys[4], (9216, feat_dim), jnp.float32)
    idx = np.arange(9216)
    perm = (idx % 64) * 144 + (idx // 64)          # hwc row -> torch row
    fc_w_hwc = fc_w_torch[perm]

    return {
        "conv1_w": s * jax.random.normal(keys[0], (9, 32), jnp.float32),
        "conv1_b": s * jax.random.normal(keys[1], (1, 32), jnp.float32),
        "conv2_w": s * jax.random.normal(keys[2], (288, 64), jnp.float32),
        "conv2_b": s * jax.random.normal(keys[3], (1, 64), jnp.float32),
        "fc_w":    fc_w_hwc,
        "fc_b":    s * jax.random.normal(keys[5], (1, feat_dim), jnp.float32),
        # attention_based = nn.Linear(feat_dim, 1)
        "att_w":   s * jax.random.normal(keys[6], (feat_dim, 1), jnp.float32),
        "att_b":   s * jax.random.normal(keys[7], (1, 1), jnp.float32),
        # self.linear  (feat_dim, ks), kaiming-uniform in torch
        "linear": jax.random.uniform(keys[8], (feat_dim, ks), jnp.float32,
                                     minval=-1.0, maxval=1.0) * (6.0 / feat_dim) ** 0.5,
    }


def psamil_forward(params, x, y=None, bag_size=None, pooling="fsa", testmode="bag"):
    """PSAMIL.forward for need_cl=False, pooling='fsa', testmode='bag'.

    x: (N, 1, 28, 28) float32 (NCHW, as in PyTorch).
    Returns (Y_prob (1,ks), Y_hat (1,), alpha (1,N), ins_probs (N,ks), F (1,feat_dim)).
    """
    if pooling != "fsa" or testmode != "bag":
        raise NotImplementedError("only pooling='fsa', testmode='bag' is implemented")

    n = x.shape[0]
    # C == 1, so NCHW -> (N, 28, 28, 1) is a pure reshape (no transpose).
    x_hw = x.reshape(n, 28, 28, 1).astype(jnp.float32)
    sel = jnp.asarray(_POOL_SELECT)

    # Fused conv stem: conv1+relu, conv2+relu, maxpool, flatten  -> (N, 144, 64)
    feat = stem_pallas(x_hw, params["conv1_w"], params["conv1_b"],
                       params["conv2_w"], params["conv2_b"], sel)
    flat = feat.reshape(n, 9216)                 # HWC-flat (matches permuted fc_w)

    # Fused fc(9216->512)+ReLU + 'fsa' MIL head
    ins_probs, alpha_col, f_agg, y_prob = fc_fsa_pallas(
        flat, params["fc_w"], params["fc_b"],
        params["att_w"], params["att_b"], params["linear"])

    alpha = alpha_col.T                          # (1, N)
    y_hat = jnp.argmax(y_prob, axis=1)           # (1,)
    return y_prob, y_hat, alpha, ins_probs, f_agg


# ----------------------------------------------------------------------------
if __name__ == "__main__":
    key = jax.random.PRNGKey(0)
    kp, kx = jax.random.split(key)

    params = init_params(kp, feat_dim=512, ks=10)    # CIFAR10, pos_cls=1 -> ks=10

    # A small bag of 8 single-channel 28x28 instances (the stem requires 28x28).
    x = jax.random.normal(kx, (8, 1, 28, 28), jnp.float32)
    y = jnp.int32(1)          # bag label (unused by the 'fsa' branch)

    outs = psamil_forward(params, x, y, bag_size=8, pooling="fsa", testmode="bag")
    outs = jax.block_until_ready(outs)

    y_prob, y_hat, alpha, ins_probs, f_agg = outs
    assert y_prob.shape == (1, 10)
    assert y_hat.shape == (1,)
    assert alpha.shape == (1, 8)
    assert ins_probs.shape == (8, 10)
    assert f_agg.shape == (1, 512)
    assert bool(jnp.all(jnp.isfinite(y_prob)))
    print("KERNEL_OK")
</pallas_src>

<mosaic_0001>
module attributes {stable_mosaic.version = 11 : i64} {
  func.func @_stem_kernel(%arg0: i32, %arg1: memref<1x28x28x1xf32, #tpu.memory_space<vmem>>, %arg2: memref<9x32xf32, #tpu.memory_space<vmem>>, %arg3: memref<1x32xf32, #tpu.memory_space<vmem>>, %arg4: memref<288x64xf32, #tpu.memory_space<vmem>>, %arg5: memref<1x64xf32, #tpu.memory_space<vmem>>, %arg6: memref<144x551xf32, #tpu.memory_space<vmem>>, %arg7: memref<1x144x64xf32, #tpu.memory_space<vmem>>) attributes {dimension_semantics = [#tpu.dimension_semantics<parallel>], iteration_bounds = array<i64: 8>, scalar_prefetch = 0 : i64, scratch_operands = 0 : i64, tpu.core_type = #tpu.core_type<tc>, window_params = [{transform_indices = @transform_0, window_bounds = array<i64: 1, 28, 28, 1>}, {pipeline_mode = #tpu.pipeline_mode<synchronous>, transform_indices = @transform_1, window_bounds = array<i64: 9, 32>}, {pipeline_mode = #tpu.pipeline_mode<synchronous>, transform_indices = @transform_2, window_bounds = array<i64: 1, 32>}, {pipeline_mode = #tpu.pipeline_mode<synchronous>, transform_indices = @transform_3, window_bounds = array<i64: 288, 64>}, {pipeline_mode = #tpu.pipeline_mode<synchronous>, transform_indices = @transform_4, window_bounds = array<i64: 1, 64>}, {pipeline_mode = #tpu.pipeline_mode<synchronous>, transform_indices = @transform_5, window_bounds = array<i64: 144, 551>}, {transform_indices = @transform_6, window_bounds = array<i64: 1, 144, 64>}]} {
    %c0 = arith.constant 0 : index
    %c0_0 = arith.constant 0 : index
    %c0_1 = arith.constant 0 : index
    %c0_2 = arith.constant 0 : index
    %0 = vector.load %arg1[%c0, %c0_0, %c0_1, %c0_2] : memref<1x28x28x1xf32, #tpu.memory_space<vmem>>, vector<1x28x28x1xf32>
    %1 = vector.shape_cast %0 : vector<1x28x28x1xf32> to vector<28x28x1xf32>
    %cst = arith.constant 0.000000e+00 : f32
    %2 = vector.broadcast %cst : f32 to vector<26x26x32xf32>
    %3 = vector.extract_strided_slice %1 {offsets = [0, 0, 0], sizes = [26, 26, 1], strides = [1, 1, 1]} : vector<28x28x1xf32> to vector<26x26x1xf32>
    %c0_3 = arith.constant 0 : index
    %c0_4 = arith.constant 0 : index
    %4 = vector.load %arg2[%c0_3, %c0_4] : memref<9x32xf32, #tpu.memory_space<vmem>>, vector<1x32xf32>
    %5 = vector.shape_cast %4 : vector<1x32xf32> to vector<32xf32>
    %6 = vector.shape_cast %5 : vector<32xf32> to vector<1x1x32xf32>
    %7 = vector.broadcast %3 : vector<26x26x1xf32> to vector<26x26x32xf32>
    %8 = vector.broadcast %6 : vector<1x1x32xf32> to vector<26x26x32xf32>
    %9 = arith.mulf %7, %8 : vector<26x26x32xf32>
    %10 = arith.addf %2, %9 : vector<26x26x32xf32>
    %11 = vector.extract_strided_slice %1 {offsets = [0, 1, 0], sizes = [26, 26, 1], strides = [1, 1, 1]} : vector<28x28x1xf32> to vector<26x26x1xf32>
    %c1 = arith.constant 1 : index
    %c0_5 = arith.constant 0 : index
    %12 = vector.load %arg2[%c1, %c0_5] : memref<9x32xf32, #tpu.memory_space<vmem>>, vector<1x32xf32>
    %13 = vector.shape_cast %12 : vector<1x32xf32> to vector<32xf32>
    %14 = vector.shape_cast %13 : vector<32xf32> to vector<1x1x32xf32>
    %15 = vector.broadcast %11 : vector<26x26x1xf32> to vector<26x26x32xf32>
    %16 = vector.broadcast %14 : vector<1x1x32xf32> to vector<26x26x32xf32>
    %17 = arith.mulf %15, %16 : vector<26x26x32xf32>
    %18 = arith.addf %10, %17 : vector<26x26x32xf32>
    %19 = vector.extract_strided_slice %1 {offsets = [0, 2, 0], sizes = [26, 26, 1], strides = [1, 1, 1]} : vector<28x28x1xf32> to vector<26x26x1xf32>
    %c2 = arith.constant 2 : index
    %c0_6 = arith.constant 0 : index
    %20 = vector.load %arg2[%c2, %c0_6] : memref<9x32xf32, #tpu.memory_space<vmem>>, vector<1x32xf32>
    %21 = vector.shape_cast %20 : vector<1x32xf32> to vector<32xf32>
    %22 = vector.shape_cast %21 : vector<32xf32> to vector<1x1x32xf32>
    %23 = vector.broadcast %19 : vector<26x26x1xf32> to vector<26x26x32xf32>
    %24 = vector.broadcast %22 : vector<1x1x32xf32> to vector<26x26x32xf32>
    %25 = arith.mulf %23, %24 : vector<26x26x32xf32>
    %26 = arith.addf %18, %25 : vector<26x26x32xf32>
    %27 = vector.extract_strided_slice %1 {offsets = [1, 0, 0], sizes = [26, 26, 1], strides = [1, 1, 1]} : vector<28x28x1xf32> to vector<26x26x1xf32>
    %c3 = arith.constant 3 : index
    %c0_7 = arith.constant 0 : index
    %28 = vector.load %arg2[%c3, %c0_7] : memref<9x32xf32, #tpu.memory_space<vmem>>, vector<1x32xf32>
    %29 = vector.shape_cast %28 : vector<1x32xf32> to vector<32xf32>
    %30 = vector.shape_cast %29 : vector<32xf32> to vector<1x1x32xf32>
    %31 = vector.broadcast %27 : vector<26x26x1xf32> to vector<26x26x32xf32>
    %32 = vector.broadcast %30 : vector<1x1x32xf32> to vector<26x26x32xf32>
    %33 = arith.mulf %31, %32 : vector<26x26x32xf32>
    %34 = arith.addf %26, %33 : vector<26x26x32xf32>
    %35 = vector.extract_strided_slice %1 {offsets = [1, 1, 0], sizes = [26, 26, 1], strides = [1, 1, 1]} : vector<28x28x1xf32> to vector<26x26x1xf32>
    %c4 = arith.constant 4 : index
    %c0_8 = arith.constant 0 : index
    %36 = vector.load %arg2[%c4, %c0_8] : memref<9x32xf32, #tpu.memory_space<vmem>>, vector<1x32xf32>
    %37 = vector.shape_cast %36 : vector<1x32xf32> to vector<32xf32>
    %38 = vector.shape_cast %37 : vector<32xf32> to vector<1x1x32xf32>
    %39 = vector.broadcast %35 : vector<26x26x1xf32> to vector<26x26x32xf32>
    %40 = vector.broadcast %38 : vector<1x1x32xf32> to vector<26x26x32xf32>
    %41 = arith.mulf %39, %40 : vector<26x26x32xf32>
    %42 = arith.addf %34, %41 : vector<26x26x32xf32>
    %43 = vector.extract_strided_slice %1 {offsets = [1, 2, 0], sizes = [26, 26, 1], strides = [1, 1, 1]} : vector<28x28x1xf32> to vector<26x26x1xf32>
    %c5 = arith.constant 5 : index
    %c0_9 = arith.constant 0 : index
    %44 = vector.load %arg2[%c5, %c0_9] : memref<9x32xf32, #tpu.memory_space<vmem>>, vector<1x32xf32>
    %45 = vector.shape_cast %44 : vector<1x32xf32> to vector<32xf32>
    %46 = vector.shape_cast %45 : vector<32xf32> to vector<1x1x32xf32>
    %47 = vector.broadcast %43 : vector<26x26x1xf32> to vector<26x26x32xf32>
    %48 = vector.broadcast %46 : vector<1x1x32xf32> to vector<26x26x32xf32>
    %49 = arith.mulf %47, %48 : vector<26x26x32xf32>
    %50 = arith.addf %42, %49 : vector<26x26x32xf32>
    %51 = vector.extract_strided_slice %1 {offsets = [2, 0, 0], sizes = [26, 26, 1], strides = [1, 1, 1]} : vector<28x28x1xf32> to vector<26x26x1xf32>
    %c6 = arith.constant 6 : index
    %c0_10 = arith.constant 0 : index
    %52 = vector.load %arg2[%c6, %c0_10] : memref<9x32xf32, #tpu.memory_space<vmem>>, vector<1x32xf32>
    %53 = vector.shape_cast %52 : vector<1x32xf32> to vector<32xf32>
    %54 = vector.shape_cast %53 : vector<32xf32> to vector<1x1x32xf32>
    %55 = vector.broadcast %51 : vector<26x26x1xf32> to vector<26x26x32xf32>
    %56 = vector.broadcast %54 : vector<1x1x32xf32> to vector<26x26x32xf32>
    %57 = arith.mulf %55, %56 : vector<26x26x32xf32>
    %58 = arith.addf %50, %57 : vector<26x26x32xf32>
    %59 = vector.extract_strided_slice %1 {offsets = [2, 1, 0], sizes = [26, 26, 1], strides = [1, 1, 1]} : vector<28x28x1xf32> to vector<26x26x1xf32>
    %c7 = arith.constant 7 : index
    %c0_11 = arith.constant 0 : index
    %60 = vector.load %arg2[%c7, %c0_11] : memref<9x32xf32, #tpu.memory_space<vmem>>, vector<1x32xf32>
    %61 = vector.shape_cast %60 : vector<1x32xf32> to vector<32xf32>
    %62 = vector.shape_cast %61 : vector<32xf32> to vector<1x1x32xf32>
    %63 = vector.broadcast %59 : vector<26x26x1xf32> to vector<26x26x32xf32>
    %64 = vector.broadcast %62 : vector<1x1x32xf32> to vector<26x26x32xf32>
    %65 = arith.mulf %63, %64 : vector<26x26x32xf32>
    %66 = arith.addf %58, %65 : vector<26x26x32xf32>
    %67 = vector.extract_strided_slice %1 {offsets = [2, 2, 0], sizes = [26, 26, 1], strides = [1, 1, 1]} : vector<28x28x1xf32> to vector<26x26x1xf32>
    %c8 = arith.constant 8 : index
    %c0_12 = arith.constant 0 : index
    %68 = vector.load %arg2[%c8, %c0_12] : memref<9x32xf32, #tpu.memory_space<vmem>>, vector<1x32xf32>
    %69 = vector.shape_cast %68 : vector<1x32xf32> to vector<32xf32>
    %70 = vector.shape_cast %69 : vector<32xf32> to vector<1x1x32xf32>
    %71 = vector.broadcast %67 : vector<26x26x1xf32> to vector<26x26x32xf32>
    %72 = vector.broadcast %70 : vector<1x1x32xf32> to vector<26x26x32xf32>
    %73 = arith.mulf %71, %72 : vector<26x26x32xf32>
    %74 = arith.addf %66, %73 : vector<26x26x32xf32>
    %c0_13 = arith.constant 0 : index
    %c0_14 = arith.constant 0 : index
    %75 = vector.load %arg3[%c0_13, %c0_14] : memref<1x32xf32, #tpu.memory_space<vmem>>, vector<1x32xf32>
    %76 = vector.shape_cast %75 : vector<1x32xf32> to vector<1x1x32xf32>
    %77 = vector.broadcast %76 : vector<1x1x32xf32> to vector<26x26x32xf32>
    %78 = arith.addf %74, %77 : vector<26x26x32xf32>
    %cst_15 = arith.constant 0.000000e+00 : f32
    %79 = vector.broadcast %cst_15 : f32 to vector<26x26x32xf32>
    %80 = arith.maximumf %78, %79 : vector<26x26x32xf32>
    %cst_16 = arith.constant 0.000000e+00 : f32
    %81 = vector.broadcast %cst_16 : f32 to vector<576x64xf32>
    %82 = vector.extract_strided_slice %80 {offsets = [0, 0, 0], sizes = [24, 24, 32], strides = [1, 1, 1]} : vector<26x26x32xf32> to vector<24x24x32xf32>
    %83 = vector.shape_cast %82 : vector<24x24x32xf32> to vector<576x32xf32>
    %c0_17 = arith.constant 0 : index
    %c0_18 = arith.constant 0 : index
    %84 = vector.load %arg4[%c0_17, %c0_18] : memref<288x64xf32, #tpu.memory_space<vmem>>, vector<32x64xf32>
    %cst_19 = arith.constant dense<0.000000e+00> : vector<576x64xf32>
    %85 = tpu.matmul %83, %84, %cst_19 {dimension_numbers = #tpu.dot_dimension_numbers<[1], [0], [0], [1], [0, 0, 1, 1], [], []>} : vector<576x32xf32>, vector<32x64xf32>, vector<576x64xf32> -> vector<576x64xf32>
    %86 = arith.addf %81, %85 : vector<576x64xf32>
    %87 = vector.extract_strided_slice %80 {offsets = [0, 1, 0], sizes = [24, 24, 32], strides = [1, 1, 1]} : vector<26x26x32xf32> to vector<24x24x32xf32>
    %88 = vector.shape_cast %87 : vector<24x24x32xf32> to vector<576x32xf32>
    %c32 = arith.constant 32 : index
    %c0_20 = arith.constant 0 : index
    %89 = vector.load %arg4[%c32, %c0_20] : memref<288x64xf32, #tpu.memory_space<vmem>>, vector<32x64xf32>
    %cst_21 = arith.constant dense<0.000000e+00> : vector<576x64xf32>
    %90 = tpu.matmul %88, %89, %cst_21 {dimension_numbers = #tpu.dot_dimension_numbers<[1], [0], [0], [1], [0, 0, 1, 1], [], []>} : vector<576x32xf32>, vector<32x64xf32>, vector<576x64xf32> -> vector<576x64xf32>
    %91 = arith.addf %86, %90 : vector<576x64xf32>
    %92 = vector.extract_strided_slice %80 {offsets = [0, 2, 0], sizes = [24, 24, 32], strides = [1, 1, 1]} : vector<26x26x32xf32> to vector<24x24x32xf32>
    %93 = vector.shape_cast %92 : vector<24x24x32xf32> to vector<576x32xf32>
    %c64 = arith.constant 64 : index
    %c0_22 = arith.constant 0 : index
    %94 = vector.load %arg4[%c64, %c0_22] : memref<288x64xf32, #tpu.memory_space<vmem>>, vector<32x64xf32>
    %cst_23 = arith.constant dense<0.000000e+00> : vector<576x64xf32>
    %95 = tpu.matmul %93, %94, %cst_23 {dimension_numbers = #tpu.dot_dimension_numbers<[1], [0], [0], [1], [0, 0, 1, 1], [], []>} : vector<576x32xf32>, vector<32x64xf32>, vector<576x64xf32> -> vector<576x64xf32>
    %96 = arith.addf %91, %95 : vector<576x64xf32>
    %97 = vector.extract_strided_slice %80 {offsets = [1, 0, 0], sizes = [24, 24, 32], strides = [1, 1, 1]} : vector<26x26x32xf32> to vector<24x24x32xf32>
    %98 = vector.shape_cast %97 : vector<24x24x32xf32> to vector<576x32xf32>
    %c96 = arith.constant 96 : index
    %c0_24 = arith.constant 0 : index
    %99 = vector.load %arg4[%c96, %c0_24] : memref<288x64xf32, #tpu.memory_space<vmem>>, vector<32x64xf32>
    %cst_25 = arith.constant dense<0.000000e+00> : vector<576x64xf32>
    %100 = tpu.matmul %98, %99, %cst_25 {dimension_numbers = #tpu.dot_dimension_numbers<[1], [0], [0], [1], [0, 0, 1, 1], [], []>} : vector<576x32xf32>, vector<32x64xf32>, vector<576x64xf32> -> vector<576x64xf32>
    %101 = arith.addf %96, %100 : vector<576x64xf32>
    %102 = vector.extract_strided_slice %80 {offsets = [1, 1, 0], sizes = [24, 24, 32], strides = [1, 1, 1]} : vector<26x26x32xf32> to vector<24x24x32xf32>
    %103 = vector.shape_cast %102 : vector<24x24x32xf32> to vector<576x32xf32>
    %c128 = arith.constant 128 : index
    %c0_26 = arith.constant 0 : index
    %104 = vector.load %arg4[%c128, %c0_26] : memref<288x64xf32, #tpu.memory_space<vmem>>, vector<32x64xf32>
    %cst_27 = arith.constant dense<0.000000e+00> : vector<576x64xf32>
    %105 = tpu.matmul %103, %104, %cst_27 {dimension_numbers = #tpu.dot_dimension_numbers<[1], [0], [0], [1], [0, 0, 1, 1], [], []>} : vector<576x32xf32>, vector<32x64xf32>, vector<576x64xf32> -> vector<576x64xf32>
    %106 = arith.addf %101, %105 : vector<576x64xf32>
    %107 = vector.extract_strided_slice %80 {offsets = [1, 2, 0], sizes = [24, 24, 32], strides = [1, 1, 1]} : vector<26x26x32xf32> to vector<24x24x32xf32>
    %108 = vector.shape_cast %107 : vector<24x24x32xf32> to vector<576x32xf32>
    %c160 = arith.constant 160 : index
    %c0_28 = arith.constant 0 : index
    %109 = vector.load %arg4[%c160, %c0_28] : memref<288x64xf32, #tpu.memory_space<vmem>>, vector<32x64xf32>
    %cst_29 = arith.constant dense<0.000000e+00> : vector<576x64xf32>
    %110 = tpu.matmul %108, %109, %cst_29 {dimension_numbers = #tpu.dot_dimension_numbers<[1], [0], [0], [1], [0, 0, 1, 1], [], []>} : vector<576x32xf32>, vector<32x64xf32>, vector<576x64xf32> -> vector<576x64xf32>
    %111 = arith.addf %106, %110 : vector<576x64xf32>
    %112 = vector.extract_strided_slice %80 {offsets = [2, 0, 0], sizes = [24, 24, 32], strides = [1, 1, 1]} : vector<26x26x32xf32> to vector<24x24x32xf32>
    %113 = vector.shape_cast %112 : vector<24x24x32xf32> to vector<576x32xf32>
    %c192 = arith.constant 192 : index
    %c0_30 = arith.constant 0 : index
    %114 = vector.load %arg4[%c192, %c0_30] : memref<288x64xf32, #tpu.memory_space<vmem>>, vector<32x64xf32>
    %cst_31 = arith.constant dense<0.000000e+00> : vector<576x64xf32>
    %115 = tpu.matmul %113, %114, %cst_31 {dimension_numbers = #tpu.dot_dimension_numbers<[1], [0], [0], [1], [0, 0, 1, 1], [], []>} : vector<576x32xf32>, vector<32x64xf32>, vector<576x64xf32> -> vector<576x64xf32>
    %116 = arith.addf %111, %115 : vector<576x64xf32>
    %117 = vector.extract_strided_slice %80 {offsets = [2, 1, 0], sizes = [24, 24, 32], strides = [1, 1, 1]} : vector<26x26x32xf32> to vector<24x24x32xf32>
    %118 = vector.shape_cast %117 : vector<24x24x32xf32> to vector<576x32xf32>
    %c224 = arith.constant 224 : index
    %c0_32 = arith.constant 0 : index
    %119 = vector.load %arg4[%c224, %c0_32] : memref<288x64xf32, #tpu.memory_space<vmem>>, vector<32x64xf32>
    %cst_33 = arith.constant dense<0.000000e+00> : vector<576x64xf32>
    %120 = tpu.matmul %118, %119, %cst_33 {dimension_numbers = #tpu.dot_dimension_numbers<[1], [0], [0], [1], [0, 0, 1, 1], [], []>} : vector<576x32xf32>, vector<32x64xf32>, vector<576x64xf32> -> vector<576x64xf32>
    %121 = arith.addf %116, %120 : vector<576x64xf32>
    %122 = vector.extract_strided_slice %80 {offsets = [2, 2, 0], sizes = [24, 24, 32], strides = [1, 1, 1]} : vector<26x26x32xf32> to vector<24x24x32xf32>
    %123 = vector.shape_cast %122 : vector<24x24x32xf32> to vector<576x32xf32>
    %c256 = arith.constant 256 : index
    %c0_34 = arith.constant 0 : index
    %124 = vector.load %arg4[%c256, %c0_34] : memref<288x64xf32, #tpu.memory_space<vmem>>, vector<32x64xf32>
    %cst_35 = arith.constant dense<0.000000e+00> : vector<576x64xf32>
    %125 = tpu.matmul %123, %124, %cst_35 {dimension_numbers = #tpu.dot_dimension_numbers<[1], [0], [0], [1], [0, 0, 1, 1], [], []>} : vector<576x32xf32>, vector<32x64xf32>, vector<576x64xf32> -> vector<576x64xf32>
    %126 = arith.addf %121, %125 : vector<576x64xf32>
    %c0_36 = arith.constant 0 : index
    %c0_37 = arith.constant 0 : index
    %127 = vector.load %arg5[%c0_36, %c0_37] : memref<1x64xf32, #tpu.memory_space<vmem>>, vector<1x64xf32>
    %128 = vector.broadcast %127 : vector<1x64xf32> to vector<576x64xf32>
    %129 = arith.addf %126, %128 : vector<576x64xf32>
    %cst_38 = arith.constant 0.000000e+00 : f32
    %130 = vector.broadcast %cst_38 : f32 to vector<576x64xf32>
    %131 = arith.maximumf %129, %130 : vector<576x64xf32>
    %132 = vector.extract_strided_slice %131 {offsets = [0, 0], sizes = [551, 64], strides = [1, 1]} : vector<576x64xf32> to vector<551x64xf32>
    %133 = vector.extract_strided_slice %131 {offsets = [1, 0], sizes = [551, 64], strides = [1, 1]} : vector<576x64xf32> to vector<551x64xf32>
    %134 = arith.maximumf %132, %133 : vector<551x64xf32>
    %135 = vector.extract_strided_slice %131 {offsets = [24, 0], sizes = [551, 64], strides = [1, 1]} : vector<576x64xf32> to vector<551x64xf32>
    %136 = vector.extract_strided_slice %131 {offsets = [25, 0], sizes = [551, 64], strides = [1, 1]} : vector<576x64xf32> to vector<551x64xf32>
    %137 = arith.maximumf %135, %136 : vector<551x64xf32>
    %138 = arith.maximumf %134, %137 : vector<551x64xf32>
    %c0_39 = arith.constant 0 : index
    %c0_40 = arith.constant 0 : index
    %139 = vector.load %arg6[%c0_39, %c0_40] : memref<144x551xf32, #tpu.memory_space<vmem>>, vector<144x551xf32>
    %cst_41 = arith.constant dense<0.000000e+00> : vector<144x64xf32>
    %140 = tpu.matmul %139, %138, %cst_41 {dimension_numbers = #tpu.dot_dimension_numbers<[1], [0], [0], [1], [0, 0, 1, 1], [], []>} : vector<144x551xf32>, vector<551x64xf32>, vector<144x64xf32> -> vector<144x64xf32>
    %c0_42 = arith.constant 0 : index
    %c0_43 = arith.constant 0 : index
    %c0_44 = arith.constant 0 : index
    %141 = vector.load %arg7[%c0_42, %c0_43, %c0_44] : memref<1x144x64xf32, #tpu.memory_space<vmem>>, vector<1x144x64xf32>
    %142 = vector.shape_cast %141 : vector<1x144x64xf32> to vector<144x64xf32>
    %143 = vector.shape_cast %140 : vector<144x64xf32> to vector<1x144x64xf32>
    tpu.vector_store %arg7[%c0_42, %c0_43, %c0_44], %143 {strides = array<i32>} : memref<1x144x64xf32, #tpu.memory_space<vmem>>, vector<1x144x64xf32>,
    return
  }
  func.func @transform_0(%arg0: i32) -> (i32, i32, i32, i32) {
    %c0_i32 = arith.constant 0 : i32
    %c0_i32_0 = arith.constant 0 : i32
    %c0_i32_1 = arith.constant 0 : i32
    %c0_i32_2 = arith.constant 0 : i32
    return %arg0, %c0_i32, %c0_i32_0, %c0_i32_1 : i32, i32, i32, i32
  }
  func.func @transform_1(%arg0: i32) -> (i32, i32) {
    %c0_i32 = arith.constant 0 : i32
    %c0_i32_0 = arith.constant 0 : i32
    %c0_i32_1 = arith.constant 0 : i32
    return %c0_i32, %c0_i32_0 : i32, i32
  }
  func.func @transform_2(%arg0: i32) -> (i32, i32) {
    %c0_i32 = arith.constant 0 : i32
    %c0_i32_0 = arith.constant 0 : i32
    %c0_i32_1 = arith.constant 0 : i32
    return %c0_i32, %c0_i32_0 : i32, i32
  }
  func.func @transform_3(%arg0: i32) -> (i32, i32) {
    %c0_i32 = arith.constant 0 : i32
    %c0_i32_0 = arith.constant 0 : i32
    %c0_i32_1 = arith.constant 0 : i32
    return %c0_i32, %c0_i32_0 : i32, i32
  }
  func.func @transform_4(%arg0: i32) -> (i32, i32) {
    %c0_i32 = arith.constant 0 : i32
    %c0_i32_0 = arith.constant 0 : i32
    %c0_i32_1 = arith.constant 0 : i32
    return %c0_i32, %c0_i32_0 : i32, i32
  }
  func.func @transform_5(%arg0: i32) -> (i32, i32) {
    %c0_i32 = arith.constant 0 : i32
    %c0_i32_0 = arith.constant 0 : i32
    %c0_i32_1 = arith.constant 0 : i32
    return %c0_i32, %c0_i32_0 : i32, i32
  }
  func.func @transform_6(%arg0: i32) -> (i32, i32, i32) {
    %c0_i32 = arith.constant 0 : i32
    %c0_i32_0 = arith.constant 0 : i32
    %c0_i32_1 = arith.constant 0 : i32
    return %arg0, %c0_i32, %c0_i32_0 : i32, i32, i32
  }
}

</mosaic_0001>

<llo_original>
// kernel: tpu_custom_call.1
$region0: #{tpu_custom_call.1}
  #allocation0 [shape = 'u32[]', space=smem, size = 0x4, offset = 0x4, fixed_abs, tag = 'smem constant byte address 0x4 - core index']
  #allocation1 [shape = 'u32[144,128]{1,0:T(1,128)}', space=vmem, size = 0x12000, scoped, tag = 'internal scratch']
  %s0 = inlined_call_operand.vmem [shape: f32[8,28,28,1], index: 0, kind: input, shape index: {}]
  %s1 = inlined_call_operand.vmem [shape: f32[9,32], index: 1, kind: input, shape index: {}]
  %s2 = inlined_call_operand.vmem [shape: f32[1,32], index: 2, kind: input, shape index: {}]
  %s3 = inlined_call_operand.vmem [shape: f32[288,64], index: 3, kind: input, shape index: {}]
  %s4 = inlined_call_operand.vmem [shape: f32[1,64], index: 4, kind: input, shape index: {}]
  %s5 = inlined_call_operand.vmem [shape: f32[144,551], index: 5, kind: input, shape index: {}]
  %s6 = inlined_call_operand.vmem [shape: f32[8,144,64], index: 6, kind: output, shape index: {}]
  %s7 = sld [smem:[#allocation0]]
  $region57: #{tpu_custom_call.1} parent=0
    _
  %s9 = ssub.s32 1, %s7
  %s10 = scalar_select 0, %s9, %s7
  loop: start=0, step=1, limit=10
  $region2: #{tpu_custom_call.1} parent=0 // loop_pre_header
    _
  $region3: #{tpu_custom_call.1} parent=0 // loop_header
    %s12 = sphi 0, %s16
    %p13 = scmp.ge.s32.totalorder %s12, 10
    %s22 = sphi 0, %s24
    %s25 = sphi 0, %s22
    %s26 = sphi 0, %s25
    %s42 = sphi 0, %s26
    %s46 = sphi 0, %s46
    %s48 = sphi 0, %s46
    %s49 = sphi 0, %s48
    %s63 = sphi 0, %s49
    %s67 = sphi 0, %s67
    %s69 = sphi 0, %s67
    %s70 = sphi 0, %s69
    %s84 = sphi 0, %s70
    %s88 = sphi 0, %s88
    %s90 = sphi 0, %s88
    %s91 = sphi 0, %s90
    %s105 = sphi 0, %s91
    %s109 = sphi 0, %s109
    %s111 = sphi 0, %s109
    %s112 = sphi 0, %s111
    %s126 = sphi 0, %s112
    %s130 = sphi 0, %s130
    %s132 = sphi 0, %s130
    %s133 = sphi 0, %s132
    %s147 = sphi 0, %s133
    %s153 = sphi 0, %s155
    %s156 = sphi 0, %s153
    %s157 = sphi 0, %s156
    %s173 = sphi 0, %s157
  $region4: #{tpu_custom_call.1} parent=0 // loop_header_branch
    %15 = sbr.rel (%p13) target = $region8
  $region5: #{tpu_custom_call.1} parent=0 // loop_body
    %s17 = ssub.s32 %s12, 1
    %s18 = ssub.s32 %s12, 2
    %s19 = sadd.s32 %s12, 1
    %s20 = ssub.s32 %s12, %s19
    %p21 = scmp.eq.s32.totalorder %s20, 0
    %s23 = sadd.s32 %s22, 1
    %s24 = scalar_select %p21, %s22, %s23
    %p27 = pneg %p21
    %p28 = scmp.eq.s32.totalorder %s12, 7
    %p29 = por %p27, %p28
    %p30 = scmp.ne.s32.totalorder %s22, %s25
    %p31 = scmp.eq.s32.totalorder %s12, 0
    %p32 = por %p30, %p31
    %p33 = scmp.ne.s32.totalorder %s22, %s25
    %p34 = scmp.eq.s32.totalorder %s17, 7
    %p35 = por %p33, %p34
    %p36 = scmp.ne.s32.totalorder %s25, %s26
    %p37 = scmp.eq.s32.totalorder %s17, 0
    %p38 = por %p36, %p37
    %p39 = scmp.ne.s32.totalorder %s25, %s26
    %p40 = scmp.eq.s32.totalorder %s18, 7
    %p41 = por %p39, %p40
    %p43 = scmp.ne.s32.totalorder %s26, %s42
    %p44 = scmp.eq.s32.totalorder %s18, 0
    %p45 = por %p43, %p44
    %s47 = sadd.s32 %s46, 1
    %p50 = scmp.eq.s32.totalorder %s12, 7
    %p51 = scmp.ne.s32.totalorder %s46, %s48
    %p52 = scmp.eq.s32.totalorder %s12, 0
    %p53 = por %p51, %p52
    %p54 = scmp.ne.s32.totalorder %s46, %s48
    %p55 = scmp.eq.s32.totalorder %s17, 7
    %p56 = por %p54, %p55
    %p57 = scmp.ne.s32.totalorder %s48, %s49
    %p58 = scmp.eq.s32.totalorder %s17, 0
    %p59 = por %p57, %p58
    %p60 = scmp.ne.s32.totalorder %s48, %s49
    %p61 = scmp.eq.s32.totalorder %s18, 7
    %p62 = por %p60, %p61
    %p64 = scmp.ne.s32.totalorder %s49, %s63
    %p65 = scmp.eq.s32.totalorder %s18, 0
    %p66 = por %p64, %p65
    %s68 = sadd.s32 %s67, 1
    %p71 = scmp.eq.s32.totalorder %s12, 7
    %p72 = scmp.ne.s32.totalorder %s67, %s69
    %p73 = scmp.eq.s32.totalorder %s12, 0
    %p74 = por %p72, %p73
    %p75 = scmp.ne.s32.totalorder %s67, %s69
    %p76 = scmp.eq.s32.totalorder %s17, 7
    %p77 = por %p75, %p76
    %p78 = scmp.ne.s32.totalorder %s69, %s70
    %p79 = scmp.eq.s32.totalorder %s17, 0
    %p80 = por %p78, %p79
    %p81 = scmp.ne.s32.totalorder %s69, %s70
    %p82 = scmp.eq.s32.totalorder %s18, 7
    %p83 = por %p81, %p82
    %p85 = scmp.ne.s32.totalorder %s70, %s84
    %p86 = scmp.eq.s32.totalorder %s18, 0
    %p87 = por %p85, %p86
    %s89 = sadd.s32 %s88, 1
    %p92 = scmp.eq.s32.totalorder %s12, 7
    %p93 = scmp.ne.s32.totalorder %s88, %s90
    %p94 = scmp.eq.s32.totalorder %s12, 0
    %p95 = por %p93, %p94
    %p96 = scmp.ne.s32.totalorder %s88, %s90
    %p97 = scmp.eq.s32.totalorder %s17, 7
    %p98 = por %p96, %p97
    %p99 = scmp.ne.s32.totalorder %s90, %s91
    %p100 = scmp.eq.s32.totalorder %s17, 0
    %p101 = por %p99, %p100
    %p102 = scmp.ne.s32.totalorder %s90, %s91
    %p103 = scmp.eq.s32.totalorder %s18, 7
    %p104 = por %p102, %p103
    %p106 = scmp.ne.s32.totalorder %s91, %s105
    %p107 = scmp.eq.s32.totalorder %s18, 0
    %p108 = por %p106, %p107
    %s110 = sadd.s32 %s109, 1
    %p113 = scmp.eq.s32.totalorder %s12, 7
    %p114 = scmp.ne.s32.totalorder %s109, %s111
    %p115 = scmp.eq.s32.totalorder %s12, 0
    %p116 = por %p114, %p115
    %p117 = scmp.ne.s32.totalorder %s109, %s111
    %p118 = scmp.eq.s32.totalorder %s17, 7
    %p119 = por %p117, %p118
    %p120 = scmp.ne.s32.totalorder %s111, %s112
    %p121 = scmp.eq.s32.totalorder %s17, 0
    %p122 = por %p120, %p121
    %p123 = scmp.ne.s32.totalorder %s111, %s112
    %p124 = scmp.eq.s32.totalorder %s18, 7
    %p125 = por %p123, %p124
    %p127 = scmp.ne.s32.totalorder %s112, %s126
    %p128 = scmp.eq.s32.totalorder %s18, 0
    %p129 = por %p127, %p128
    %s131 = sadd.s32 %s130, 1
    %p134 = scmp.eq.s32.totalorder %s12, 7
    %p135 = scmp.ne.s32.totalorder %s130, %s132
    %p136 = scmp.eq.s32.totalorder %s12, 0
    %p137 = por %p135, %p136
    %p138 = scmp.ne.s32.totalorder %s130, %s132
    %p139 = scmp.eq.s32.totalorder %s17, 7
    %p140 = por %p138, %p139
    %p141 = scmp.ne.s32.totalorder %s132, %s133
    %p142 = scmp.eq.s32.totalorder %s17, 0
    %p143 = por %p141, %p142
    %p144 = scmp.ne.s32.totalorder %s132, %s133
    %p145 = scmp.eq.s32.totalorder %s18, 7
    %p146 = por %p144, %p145
    %p148 = scmp.ne.s32.totalorder %s133, %s147
    %p149 = scmp.eq.s32.totalorder %s18, 0
    %p150 = por %p148, %p149
    %s151 = ssub.s32 %s12, %s19
    %p152 = scmp.eq.s32.totalorder %s151, 0
    %s154 = sadd.s32 %s153, 1
    %s155 = scalar_select %p152, %s153, %s154
    %p158 = pneg %p152
    %p159 = scmp.eq.s32.totalorder %s12, 7
    %p160 = por %p158, %p159
    %p161 = scmp.ne.s32.totalorder %s153, %s156
    %p162 = scmp.eq.s32.totalorder %s12, 0
    %p163 = por %p161, %p162
    %p164 = scmp.ne.s32.totalorder %s153, %s156
    %p165 = scmp.eq.s32.totalorder %s17, 7
    %p166 = por %p164, %p165
    %p167 = scmp.ne.s32.totalorder %s156, %s157
    %p168 = scmp.eq.s32.totalorder %s17, 0
    %p169 = por %p167, %p168
    %p170 = scmp.ne.s32.totalorder %s156, %s157
    %p171 = scmp.eq.s32.totalorder %s18, 7
    %p172 = por %p170, %p171
    %p174 = scmp.ne.s32.totalorder %s157, %s173
    %p175 = scmp.eq.s32.totalorder %s18, 0
    %p176 = por %p174, %p175
    %p177 = scmp.le.s32.totalorder 1, %s12
    %p178 = scmp.lt.s32.totalorder %s12, 9
    %p179 = pnand %p177, %p178
    %p180 = pneg %p179
    // Predicated region
    $region9: #{tpu_custom_call.1} parent=5 // pred_check
      _
    $region10: #{tpu_custom_call.1} parent=5 // pred_check_branch
      %182 = sbr.rel (%p179) target = $region12
    $region11: #{tpu_custom_call.1} parent=5 // pred_region
      %s183 = ssub.s32 %s12, 1
      // Predicated region
      $region13: #{tpu_custom_call.1} parent=11 // pred_check
        %p184 = pneg %p59
      $region14: #{tpu_custom_call.1} parent=11 // pred_check_branch
        %186 = sbr.rel (%p184) target = $region16
      $region15: #{tpu_custom_call.1} parent=11 // pred_region
        _
      $region16: #{tpu_custom_call.1} parent=11 // pred_fallthru
        _
      // Predicated region
      $region17: #{tpu_custom_call.1} parent=11 // pred_check
        %p187 = pneg %p80
      $region18: #{tpu_custom_call.1} parent=11 // pred_check_branch
        %189 = sbr.rel (%p187) target = $region20
      $region19: #{tpu_custom_call.1} parent=11 // pred_region
        _
      $region20: #{tpu_custom_call.1} parent=11 // pred_fallthru
        _
      // Predicated region
      $region21: #{tpu_custom_call.1} parent=11 // pred_check
        %p190 = pneg %p101
      $region22: #{tpu_custom_call.1} parent=11 // pred_check_branch
        %192 = sbr.rel (%p190) target = $region24
      $region23: #{tpu_custom_call.1} parent=11 // pred_region
        _
      $region24: #{tpu_custom_call.1} parent=11 // pred_fallthru
        _
      // Predicated region
      $region25: #{tpu_custom_call.1} parent=11 // pred_check
        %p193 = pneg %p122
      $region26: #{tpu_custom_call.1} parent=11 // pred_check_branch
        %195 = sbr.rel (%p193) target = $region28
      $region27: #{tpu_custom_call.1} parent=11 // pred_region
        _
      $region28: #{tpu_custom_call.1} parent=11 // pred_fallthru
        _
      // Predicated region
      $region29: #{tpu_custom_call.1} parent=11 // pred_check
        %p196 = pneg %p143
      $region30: #{tpu_custom_call.1} parent=11 // pred_check_branch
        %198 = sbr.rel (%p196) target = $region32
      $region31: #{tpu_custom_call.1} parent=11 // pred_region
        _
      $region32: #{tpu_custom_call.1} parent=11 // pred_fallthru
        _
    $region12: #{tpu_custom_call.1} parent=5 // pred_fallthru
      _
    %p199 = scmp.lt.s32.totalorder %s12, 8
    // Predicated region
    $region33: #{tpu_custom_call.1} parent=5 // pred_check
      %p200 = pneg %p199
    $region34: #{tpu_custom_call.1} parent=5 // pred_check_branch
      %202 = sbr.rel (%p200) target = $region36
    $region35: #{tpu_custom_call.1} parent=5 // pred_region
      // Predicated region
      $region37: #{tpu_custom_call.1} parent=35 // pred_check
        %p203 = pneg %p32
      $region38: #{tpu_custom_call.1} parent=35 // pred_check_branch
        %205 = sbr.rel (%p203) target = $region40
      $region39: #{tpu_custom_call.1} parent=35 // pred_region
        %p206 = scmp.lt.s32.totalorder %s12, 7
        %s207 = scalar_select %p206, %s12, 7
        %s208 = smul.addr %s207, 112
        %s209 = smul.addr %s208, 8
        %s210 = scalar_lea.vmem %s0, %s209
      $region40: #{tpu_custom_call.1} parent=35 // pred_fallthru
        _
    $region36: #{tpu_custom_call.1} parent=5 // pred_fallthru
      _
    %p211 = scmp.le.s32.totalorder 1, %s12
    %p212 = scmp.lt.s32.totalorder %s12, 9
    %p213 = pnand %p211, %p212
    %p214 = pneg %p213
    // Predicated region
    $region41: #{tpu_custom_call.1} parent=5 // pred_check
      _
    $region42: #{tpu_custom_call.1} parent=5 // pred_check_branch
      %216 = sbr.rel (%p213) target = $region44
    $region43: #{tpu_custom_call.1} parent=5 // pred_region
      %s217 = ssub.s32 %s12, 1
      %p218 = scmp.lt.s32.totalorder %s17, 7
      %s219 = scalar_select %p218, %s17, 7
      %s220 = smul.addr %s219, 112
      %s221 = smul.addr %s220, 8
      %s222 = scalar_lea.vmem %s0, %s221
      %p223 = pneg %p38
      %p224 = pneg %p35
      %p225 = pneg %p59
      %p226 = pneg %p56
      %p227 = pneg %p80
      %p228 = pneg %p77
      %p229 = pneg %p101
      %p230 = pneg %p98
      %p231 = pneg %p122
      %p232 = pneg %p119
      %p233 = pneg %p143
      %p234 = pneg %p140
      %p235 = pneg %p169
      %p236 = pneg %p166
      %p237 = scmp.lt.s32.totalorder %s17, 7
      %s238 = scalar_select %p237, %s17, 7
      %s239 = smul.addr %s238, 18
      %s240 = smul.addr %s239, 8
      %s241 = scalar_lea.vmem %s6, %s240
      %p242 = scmp.lt.s32.totalorder %s17, 7
      %s243 = scalar_select %p242, %s17, 7
      %s244 = smul.addr %s243, 112
      %s245 = smul.addr %s244, 8
      %s246 = scalar_lea.vmem %s0, %s245
      %p247 = scmp.lt.s32.totalorder %s17, 7
      %s248 = scalar_select %p247, %s17, 7
      %s249 = smul.addr %s248, 18
      %s250 = smul.addr %s249, 8
      %s251 = scalar_lea.vmem %s6, %s250
      %v252 = vld [vmem:[%s246] sm:$0xff]
      %v253 = vld [vmem:[%s246 + $0x8] sm:$0xff]
      %v254 = vld [vmem:[%s246 + $0x10] sm:$0xff]
      %v255 = vld [vmem:[%s246 + $0x18] sm:$0xf]
      %v256 = vld [vmem:[%s246 + $0x20] sm:$0xff]
      %v257 = vld [vmem:[%s246 + $0x28] sm:$0xff]
      %v258 = vld [vmem:[%s246 + $0x30] sm:$0xff]
      %v259 = vld [vmem:[%s246 + $0x38] sm:$0xf]
      %v260 = vld [vmem:[%s246 + $0x40] sm:$0xff]
      %v261 = vld [vmem:[%s246 + $0x48] sm:$0xff]
      %v262 = vld [vmem:[%s246 + $0x50] sm:$0xff]
      %v263 = vld [vmem:[%s246 + $0x58] sm:$0xf]
      %v264 = vld [vmem:[%s246 + $0x60] sm:$0xff]
      %v265 = vld [vmem:[%s246 + $0x68] sm:$0xff]
      %v266 = vld [vmem:[%s246 + $0x70] sm:$0xff]
      %v267 = vld [vmem:[%s246 + $0x78] sm:$0xf]
      %v268 = vld [vmem:[%s246 + $0x80] sm:$0xff]
      %v269 = vld [vmem:[%s246 + $0x88] sm:$0xff]
      %v270 = vld [vmem:[%s246 + $0x90] sm:$0xff]
      %v271 = vld [vmem:[%s246 + $0x98] sm:$0xf]
      %v272 = vld [vmem:[%s246 + $0xa0] sm:$0xff]
      %v273 = vld [vmem:[%s246 + $0xa8] sm:$0xff]
      %v274 = vld [vmem:[%s246 + $0xb0] sm:$0xff]
      %v275 = vld [vmem:[%s246 + $0xb8] sm:$0xf]
      %v276 = vld [vmem:[%s246 + $0xc0] sm:$0xff]
      %v277 = vld [vmem:[%s246 + $0xc8] sm:$0xff]
      %v278 = vld [vmem:[%s246 + $0xd0] sm:$0xff]
      %v279 = vld [vmem:[%s246 + $0xd8] sm:$0xf]
      %v280 = vld [vmem:[%s246 + $0xe0] sm:$0xff]
      %v281 = vld [vmem:[%s246 + $0xe8] sm:$0xff]
      %v282 = vld [vmem:[%s246 + $0xf0] sm:$0xff]
      %v283 = vld [vmem:[%s246 + $0xf8] sm:$0xf]
      %v284 = vld [vmem:[%s246 + $0x100] sm:$0xff]
      %v285 = vld [vmem:[%s246 + $0x108] sm:$0xff]
      %v286 = vld [vmem:[%s246 + $0x110] sm:$0xff]
      %v287 = vld [vmem:[%s246 + $0x118] sm:$0xf]
      %v288 = vld [vmem:[%s246 + $0x120] sm:$0xff]
      %v289 = vld [vmem:[%s246 + $0x128] sm:$0xff]
      %v290 = vld [vmem:[%s246 + $0x130] sm:$0xff]
      %v291 = vld [vmem:[%s246 + $0x138] sm:$0xf]
      %v292 = vld [vmem:[%s246 + $0x140] sm:$0xff]
      %v293 = vld [vmem:[%s246 + $0x148] sm:$0xff]
      %v294 = vld [vmem:[%s246 + $0x150] sm:$0xff]
      %v295 = vld [vmem:[%s246 + $0x158] sm:$0xf]
      %v296 = vld [vmem:[%s246 + $0x160] sm:$0xff]
      %v297 = vld [vmem:[%s246 + $0x168] sm:$0xff]
      %v298 = vld [vmem:[%s246 + $0x170] sm:$0xff]
      %v299 = vld [vmem:[%s246 + $0x178] sm:$0xf]
      %v300 = vld [vmem:[%s246 + $0x180] sm:$0xff]
      %v301 = vld [vmem:[%s246 + $0x188] sm:$0xff]
      %v302 = vld [vmem:[%s246 + $0x190] sm:$0xff]
      %v303 = vld [vmem:[%s246 + $0x198] sm:$0xf]
      %v304 = vld [vmem:[%s246 + $0x1a0] sm:$0xff]
      %v305 = vld [vmem:[%s246 + $0x1a8] sm:$0xff]
      %v306 = vld [vmem:[%s246 + $0x1b0] sm:$0xff]
      %v307 = vld [vmem:[%s246 + $0x1b8] sm:$0xf]
      %v308 = vld [vmem:[%s246 + $0x1c0] sm:$0xff]
      %v309 = vld [vmem:[%s246 + $0x1c8] sm:$0xff]
      %v310 = vld [vmem:[%s246 + $0x1d0] sm:$0xff]
      %v311 = vld [vmem:[%s246 + $0x1d8] sm:$0xf]
      %v312 = vld [vmem:[%s246 + $0x1e0] sm:$0xff]
      %v313 = vld [vmem:[%s246 + $0x1e8] sm:$0xff]
      %v314 = vld [vmem:[%s246 + $0x1f0] sm:$0xff]
      %v315 = vld [vmem:[%s246 + $0x1f8] sm:$0xf]
      %v316 = vld [vmem:[%s246 + $0x200] sm:$0xff]
      %v317 = vld [vmem:[%s246 + $0x208] sm:$0xff]
      %v318 = vld [vmem:[%s246 + $0x210] sm:$0xff]
      %v319 = vld [vmem:[%s246 + $0x218] sm:$0xf]
      %v320 = vld [vmem:[%s246 + $0x220] sm:$0xff]
      %v321 = vld [vmem:[%s246 + $0x228] sm:$0xff]
      %v322 = vld [vmem:[%s246 + $0x230] sm:$0xff]
      %v323 = vld [vmem:[%s246 + $0x238] sm:$0xf]
      %v324 = vld [vmem:[%s246 + $0x240] sm:$0xff]
      %v325 = vld [vmem:[%s246 + $0x248] sm:$0xff]
      %v326 = vld [vmem:[%s246 + $0x250] sm:$0xff]
      %v327 = vld [vmem:[%s246 + $0x258] sm:$0xf]
      %v328 = vld [vmem:[%s246 + $0x260] sm:$0xff]
      %v329 = vld [vmem:[%s246 + $0x268] sm:$0xff]
      %v330 = vld [vmem:[%s246 + $0x270] sm:$0xff]
      %v331 = vld [vmem:[%s246 + $0x278] sm:$0xf]
      %v332 = vld [vmem:[%s246 + $0x280] sm:$0xff]
      %v333 = vld [vmem:[%s246 + $0x288] sm:$0xff]
      %v334 = vld [vmem:[%s246 + $0x290] sm:$0xff]
      %v335 = vld [vmem:[%s246 + $0x298] sm:$0xf]
      %v336 = vld [vmem:[%s246 + $0x2a0] sm:$0xff]
      %v337 = vld [vmem:[%s246 + $0x2a8] sm:$0xff]
      %v338 = vld [vmem:[%s246 + $0x2b0] sm:$0xff]
      %v339 = vld [vmem:[%s246 + $0x2b8] sm:$0xf]
      %v340 = vld [vmem:[%s246 + $0x2c0] sm:$0xff]
      %v341 = vld [vmem:[%s246 + $0x2c8] sm:$0xff]
      %v342 = vld [vmem:[%s246 + $0x2d0] sm:$0xff]
      %v343 = vld [vmem:[%s246 + $0x2d8] sm:$0xf]
      %v344 = vld [vmem:[%s246 + $0x2e0] sm:$0xff]
      %v345 = vld [vmem:[%s246 + $0x2e8] sm:$0xff]
      %v346 = vld [vmem:[%s246 + $0x2f0] sm:$0xff]
      %v347 = vld [vmem:[%s246 + $0x2f8] sm:$0xf]
      %v348 = vld [vmem:[%s246 + $0x300] sm:$0xff]
      %v349 = vld [vmem:[%s246 + $0x308] sm:$0xff]
      %v350 = vld [vmem:[%s246 + $0x310] sm:$0xff]
      %v351 = vld [vmem:[%s246 + $0x318] sm:$0xf]
      %v352 = vld [vmem:[%s246 + $0x320] sm:$0xff]
      %v353 = vld [vmem:[%s246 + $0x328] sm:$0xff]
      %v354 = vld [vmem:[%s246 + $0x330] sm:$0xff]
      %v355 = vld [vmem:[%s246 + $0x338] sm:$0xf]
      %v356 = vld [vmem:[%s246 + $0x340] sm:$0xff]
      %v357 = vld [vmem:[%s246 + $0x348] sm:$0xff]
      %v358 = vld [vmem:[%s246 + $0x350] sm:$0xff]
      %v359 = vld [vmem:[%s246 + $0x358] sm:$0xf]
      %v360 = vld [vmem:[%s246 + $0x360] sm:$0xff]
      %v361 = vld [vmem:[%s246 + $0x368] sm:$0xff]
      %v362 = vld [vmem:[%s246 + $0x370] sm:$0xff]
      %v363 = vld [vmem:[%s246 + $0x378] sm:$0xf]
      %v364 = vld [vmem:[%s1] sm:$0x1]
      %366 = vset.pattern.permute.xlu0 0
      %367 = vperm.xlu0 %366, %v252
      %v368 = vpop.permute.xlu0 %367
      %371 = vset.pattern.permute.xlu0 0
      %372 = vperm.xlu0 %371, %v253
      %v373 = vpop.permute.xlu0 %372
      %376 = vset.pattern.permute.xlu0 0
      %377 = vperm.xlu0 %376, %v254
      %v378 = vpop.permute.xlu0 %377
      %381 = vset.pattern.permute.xlu0 0
      %382 = vperm.xlu0 %381, %v255
      %v383 = vpop.permute.xlu0 %382
      %386 = vset.pattern.permute.xlu0 0
      %387 = vperm.xlu0 %386, %v256
      %v388 = vpop.permute.xlu0 %387
      %391 = vset.pattern.permute.xlu0 0
      %392 = vperm.xlu0 %391, %v257
      %v393 = vpop.permute.xlu0 %392
      %396 = vset.pattern.permute.xlu0 0
      %397 = vperm.xlu0 %396, %v258
      %v398 = vpop.permute.xlu0 %397
      %401 = vset.pattern.permute.xlu0 0
      %402 = vperm.xlu0 %401, %v259
      %v403 = vpop.permute.xlu0 %402
      %406 = vset.pattern.permute.xlu0 0
      %407 = vperm.xlu0 %406, %v260
      %v408 = vpop.permute.xlu0 %407
      %411 = vset.pattern.permute.xlu0 0
      %412 = vperm.xlu0 %411, %v261
      %v413 = vpop.permute.xlu0 %412
      %416 = vset.pattern.permute.xlu0 0
      %417 = vperm.xlu0 %416, %v262
      %v418 = vpop.permute.xlu0 %417
      %421 = vset.pattern.permute.xlu0 0
      %422 = vperm.xlu0 %421, %v263
      %v423 = vpop.permute.xlu0 %422
      %426 = vset.pattern.permute.xlu0 0
      %427 = vperm.xlu0 %426, %v264
      %v428 = vpop.permute.xlu0 %427
      %431 = vset.pattern.permute.xlu0 0
      %432 = vperm.xlu0 %431, %v265
      %v433 = vpop.permute.xlu0 %432
      %436 = vset.pattern.permute.xlu0 0
      %437 = vperm.xlu0 %436, %v266
      %v438 = vpop.permute.xlu0 %437
      %441 = vset.pattern.permute.xlu0 0
      %442 = vperm.xlu0 %441, %v267
      %v443 = vpop.permute.xlu0 %442
      %446 = vset.pattern.permute.xlu0 0
      %447 = vperm.xlu0 %446, %v268
      %v448 = vpop.permute.xlu0 %447
      %451 = vset.pattern.permute.xlu0 0
      %452 = vperm.xlu0 %451, %v269
      %v453 = vpop.permute.xlu0 %452
      %456 = vset.pattern.permute.xlu0 0
      %457 = vperm.xlu0 %456, %v270
      %v458 = vpop.permute.xlu0 %457
      %461 = vset.pattern.permute.xlu0 0
      %462 = vperm.xlu0 %461, %v271
      %v463 = vpop.permute.xlu0 %462
      %466 = vset.pattern.permute.xlu0 0
      %467 = vperm.xlu0 %466, %v272
      %v468 = vpop.permute.xlu0 %467
      %471 = vset.pattern.permute.xlu0 0
      %472 = vperm.xlu0 %471, %v273
      %v473 = vpop.permute.xlu0 %472
      %476 = vset.pattern.permute.xlu0 0
      %477 = vperm.xlu0 %476, %v274
      %v478 = vpop.permute.xlu0 %477
      %481 = vset.pattern.permute.xlu0 0
      %482 = vperm.xlu0 %481, %v275
      %v483 = vpop.permute.xlu0 %482
      %486 = vset.pattern.permute.xlu0 0
      %487 = vperm.xlu0 %486, %v276
      %v488 = vpop.permute.xlu0 %487
      %491 = vset.pattern.permute.xlu0 0
      %492 = vperm.xlu0 %491, %v277
      %v493 = vpop.permute.xlu0 %492
      %496 = vset.pattern.permute.xlu0 0
      %497 = vperm.xlu0 %496, %v278
      %v498 = vpop.permute.xlu0 %497
      %501 = vset.pattern.permute.xlu0 0
      %502 = vperm.xlu0 %501, %v279
      %v503 = vpop.permute.xlu0 %502
      %506 = vset.pattern.permute.xlu0 0
      %507 = vperm.xlu0 %506, %v280
      %v508 = vpop.permute.xlu0 %507
      %511 = vset.pattern.permute.xlu0 0
      %512 = vperm.xlu0 %511, %v281
      %v513 = vpop.permute.xlu0 %512
      %516 = vset.pattern.permute.xlu0 0
      %517 = vperm.xlu0 %516, %v282
      %v518 = vpop.permute.xlu0 %517
      %521 = vset.pattern.permute.xlu0 0
      %522 = vperm.xlu0 %521, %v283
      %v523 = vpop.permute.xlu0 %522
      %526 = vset.pattern.permute.xlu0 0
      %527 = vperm.xlu0 %526, %v284
      %v528 = vpop.permute.xlu0 %527
      %531 = vset.pattern.permute.xlu0 0
      %532 = vperm.xlu0 %531, %v285
      %v533 = vpop.permute.xlu0 %532
      %536 = vset.pattern.permute.xlu0 0
      %537 = vperm.xlu0 %536, %v286
      %v538 = vpop.permute.xlu0 %537
      %541 = vset.pattern.permute.xlu0 0
      %542 = vperm.xlu0 %541, %v287
      %v543 = vpop.permute.xlu0 %542
      %546 = vset.pattern.permute.xlu0 0
      %547 = vperm.xlu0 %546, %v288
      %v548 = vpop.permute.xlu0 %547
      %551 = vset.pattern.permute.xlu0 0
      %552 = vperm.xlu0 %551, %v289
      %v553 = vpop.permute.xlu0 %552
      %556 = vset.pattern.permute.xlu0 0
      %557 = vperm.xlu0 %556, %v290
      %v558 = vpop.permute.xlu0 %557
      %561 = vset.pattern.permute.xlu0 0
      %562 = vperm.xlu0 %561, %v291
      %v563 = vpop.permute.xlu0 %562
      %566 = vset.pattern.permute.xlu0 0
      %567 = vperm.xlu0 %566, %v292
      %v568 = vpop.permute.xlu0 %567
      %571 = vset.pattern.permute.xlu0 0
      %572 = vperm.xlu0 %571, %v293
      %v573 = vpop.permute.xlu0 %572
      %576 = vset.pattern.permute.xlu0 0
      %577 = vperm.xlu0 %576, %v294
      %v578 = vpop.permute.xlu0 %577
      %581 = vset.pattern.permute.xlu0 0
      %582 = vperm.xlu0 %581, %v295
      %v583 = vpop.permute.xlu0 %582
      %586 = vset.pattern.permute.xlu0 0
      %587 = vperm.xlu0 %586, %v296
      %v588 = vpop.permute.xlu0 %587
      %591 = vset.pattern.permute.xlu0 0
      %592 = vperm.xlu0 %591, %v297
      %v593 = vpop.permute.xlu0 %592
      %596 = vset.pattern.permute.xlu0 0
      %597 = vperm.xlu0 %596, %v298
      %v598 = vpop.permute.xlu0 %597
      %601 = vset.pattern.permute.xlu0 0
      %602 = vperm.xlu0 %601, %v299
      %v603 = vpop.permute.xlu0 %602
      %606 = vset.pattern.permute.xlu0 0
      %607 = vperm.xlu0 %606, %v300
      %v608 = vpop.permute.xlu0 %607
      %611 = vset.pattern.permute.xlu0 0
      %612 = vperm.xlu0 %611, %v301
      %v613 = vpop.permute.xlu0 %612
      %616 = vset.pattern.permute.xlu0 0
      %617 = vperm.xlu0 %616, %v302
      %v618 = vpop.permute.xlu0 %617
      %621 = vset.pattern.permute.xlu0 0
      %622 = vperm.xlu0 %621, %v303
      %v623 = vpop.permute.xlu0 %622
      %626 = vset.pattern.permute.xlu0 0
      %627 = vperm.xlu0 %626, %v304
      %v628 = vpop.permute.xlu0 %627
      %631 = vset.pattern.permute.xlu0 0
      %632 = vperm.xlu0 %631, %v305
      %v633 = vpop.permute.xlu0 %632
      %636 = vset.pattern.permute.xlu0 0
      %637 = vperm.xlu0 %636, %v306
      %v638 = vpop.permute.xlu0 %637
      %641 = vset.pattern.permute.xlu0 0
      %642 = vperm.xlu0 %641, %v307
      %v643 = vpop.permute.xlu0 %642
      %646 = vset.pattern.permute.xlu0 0
      %647 = vperm.xlu0 %646, %v308
      %v648 = vpop.permute.xlu0 %647
      %651 = vset.pattern.permute.xlu0 0
      %652 = vperm.xlu0 %651, %v309
      %v653 = vpop.permute.xlu0 %652
      %656 = vset.pattern.permute.xlu0 0
      %657 = vperm.xlu0 %656, %v310
      %v658 = vpop.permute.xlu0 %657
      %661 = vset.pattern.permute.xlu0 0
      %662 = vperm.xlu0 %661, %v311
      %v663 = vpop.permute.xlu0 %662
      %666 = vset.pattern.permute.xlu0 0
      %667 = vperm.xlu0 %666, %v312
      %v668 = vpop.permute.xlu0 %667
      %671 = vset.pattern.permute.xlu0 0
      %672 = vperm.xlu0 %671, %v313
      %v673 = vpop.permute.xlu0 %672
      %676 = vset.pattern.permute.xlu0 0
      %677 = vperm.xlu0 %676, %v314
      %v678 = vpop.permute.xlu0 %677
      %681 = vset.pattern.permute.xlu0 0
      %682 = vperm.xlu0 %681, %v315
      %v683 = vpop.permute.xlu0 %682
      %686 = vset.pattern.permute.xlu0 0
      %687 = vperm.xlu0 %686, %v316
      %v688 = vpop.permute.xlu0 %687
      %691 = vset.pattern.permute.xlu0 0
      %692 = vperm.xlu0 %691, %v317
      %v693 = vpop.permute.xlu0 %692
      %696 = vset.pattern.permute.xlu0 0
      %697 = vperm.xlu0 %696, %v318
      %v698 = vpop.permute.xlu0 %697
      %701 = vset.pattern.permute.xlu0 0
      %702 = vperm.xlu0 %701, %v319
      %v703 = vpop.permute.xlu0 %702
      %706 = vset.pattern.permute.xlu0 0
      %707 = vperm.xlu0 %706, %v320
      %v708 = vpop.permute.xlu0 %707
      %711 = vset.pattern.permute.xlu0 0
      %712 = vperm.xlu0 %711, %v321
      %v713 = vpop.permute.xlu0 %712
      %716 = vset.pattern.permute.xlu0 0
      %717 = vperm.xlu0 %716, %v322
      %v718 = vpop.permute.xlu0 %717
      %721 = vset.pattern.permute.xlu0 0
      %722 = vperm.xlu0 %721, %v323
      %v723 = vpop.permute.xlu0 %722
      %726 = vset.pattern.permute.xlu0 0
      %727 = vperm.xlu0 %726, %v324
      %v728 = vpop.permute.xlu0 %727
      %731 = vset.pattern.permute.xlu0 0
      %732 = vperm.xlu0 %731, %v325
      %v733 = vpop.permute.xlu0 %732
      %736 = vset.pattern.permute.xlu0 0
      %737 = vperm.xlu0 %736, %v326
      %v738 = vpop.permute.xlu0 %737
      %741 = vset.pattern.permute.xlu0 0
      %742 = vperm.xlu0 %741, %v327
      %v743 = vpop.permute.xlu0 %742
      %746 = vset.pattern.permute.xlu0 0
      %747 = vperm.xlu0 %746, %v328
      %v748 = vpop.permute.xlu0 %747
      %751 = vset.pattern.permute.xlu0 0
      %752 = vperm.xlu0 %751, %v329
      %v753 = vpop.permute.xlu0 %752
      %756 = vset.pattern.permute.xlu0 0
      %757 = vperm.xlu0 %756, %v330
      %v758 = vpop.permute.xlu0 %757
      %761 = vset.pattern.permute.xlu0 0
      %762 = vperm.xlu0 %761, %v331
      %v763 = vpop.permute.xlu0 %762
      %766 = vset.pattern.permute.xlu0 0
      %767 = vperm.xlu0 %766, %v332
      %v768 = vpop.permute.xlu0 %767
      %771 = vset.pattern.permute.xlu0 0
      %772 = vperm.xlu0 %771, %v333
      %v773 = vpop.permute.xlu0 %772
      %776 = vset.pattern.permute.xlu0 0
      %777 = vperm.xlu0 %776, %v334
      %v778 = vpop.permute.xlu0 %777
      %781 = vset.pattern.permute.xlu0 0
      %782 = vperm.xlu0 %781, %v335
      %v783 = vpop.permute.xlu0 %782
      %786 = vset.pattern.permute.xlu0 0
      %787 = vperm.xlu0 %786, %v336
      %v788 = vpop.permute.xlu0 %787
      %791 = vset.pattern.permute.xlu0 0
      %792 = vperm.xlu0 %791, %v337
      %v793 = vpop.permute.xlu0 %792
      %796 = vset.pattern.permute.xlu0 0
      %797 = vperm.xlu0 %796, %v338
      %v798 = vpop.permute.xlu0 %797
      %801 = vset.pattern.permute.xlu0 0
      %802 = vperm.xlu0 %801, %v339
      %v803 = vpop.permute.xlu0 %802
      %806 = vset.pattern.permute.xlu0 0
      %807 = vperm.xlu0 %806, %v340
      %v808 = vpop.permute.xlu0 %807
      %811 = vset.pattern.permute.xlu0 0
      %812 = vperm.xlu0 %811, %v341
      %v813 = vpop.permute.xlu0 %812
      %816 = vset.pattern.permute.xlu0 0
      %817 = vperm.xlu0 %816, %v342
      %v818 = vpop.permute.xlu0 %817
      %821 = vset.pattern.permute.xlu0 0
      %822 = vperm.xlu0 %821, %v343
      %v823 = vpop.permute.xlu0 %822
      %826 = vset.pattern.permute.xlu0 0
      %827 = vperm.xlu0 %826, %v344
      %v828 = vpop.permute.xlu0 %827
      %831 = vset.pattern.permute.xlu0 0
      %832 = vperm.xlu0 %831, %v345
      %v833 = vpop.permute.xlu0 %832
      %836 = vset.pattern.permute.xlu0 0
      %837 = vperm.xlu0 %836, %v346
      %v838 = vpop.permute.xlu0 %837
      %841 = vset.pattern.permute.xlu0 0
      %842 = vperm.xlu0 %841, %v347
      %v843 = vpop.permute.xlu0 %842
      %846 = vset.pattern.permute.xlu0 0
      %847 = vperm.xlu0 %846, %v348
      %v848 = vpop.permute.xlu0 %847
      %851 = vset.pattern.permute.xlu0 0
      %852 = vperm.xlu0 %851, %v349
      %v853 = vpop.permute.xlu0 %852
      %856 = vset.pattern.permute.xlu0 0
      %857 = vperm.xlu0 %856, %v350
      %v858 = vpop.permute.xlu0 %857
      %861 = vset.pattern.permute.xlu0 0
      %862 = vperm.xlu0 %861, %v351
      %v863 = vpop.permute.xlu0 %862
      %866 = vset.pattern.permute.xlu0 0
      %867 = vperm.xlu0 %866, %v352
      %v868 = vpop.permute.xlu0 %867
      %871 = vset.pattern.permute.xlu0 0
      %872 = vperm.xlu0 %871, %v353
      %v873 = vpop.permute.xlu0 %872
      %876 = vset.pattern.permute.xlu0 0
      %877 = vperm.xlu0 %876, %v354
      %v878 = vpop.permute.xlu0 %877
      %881 = vset.pattern.permute.xlu0 0
      %882 = vperm.xlu0 %881, %v355
      %v883 = vpop.permute.xlu0 %882
      %v885 = vlaneseq
      %v886 = vshrl.u32 %v885, 7
      %v887 = vsub.s32 0, %v886
      %v888 = vrot.slane %v364, %v887
      %v889 = vmul.f32 %v368, %v888
      %v890 = vmul.f32 %v373, %v888
      %v891 = vmul.f32 %v378, %v888
      %v892 = vmul.f32 %v383, %v888
      %v893 = vmul.f32 %v388, %v888
      %v894 = vmul.f32 %v393, %v888
      %v895 = vmul.f32 %v398, %v888
      %v896 = vmul.f32 %v403, %v888
      %v897 = vmul.f32 %v408, %v888
      %v898 = vmul.f32 %v413, %v888
      %v899 = vmul.f32 %v418, %v888
      %v900 = vmul.f32 %v423, %v888
      %v901 = vmul.f32 %v428, %v888
      %v902 = vmul.f32 %v433, %v888
      %v903 = vmul.f32 %v438, %v888
      %v904 = vmul.f32 %v443, %v888
      %v905 = vmul.f32 %v448, %v888
      %v906 = vmul.f32 %v453, %v888
      %v907 = vmul.f32 %v458, %v888
      %v908 = vmul.f32 %v463, %v888
      %v909 = vmul.f32 %v468, %v888
      %v910 = vmul.f32 %v473, %v888
      %v911 = vmul.f32 %v478, %v888
      %v912 = vmul.f32 %v483, %v888
      %v913 = vmul.f32 %v488, %v888
      %v914 = vmul.f32 %v493, %v888
      %v915 = vmul.f32 %v498, %v888
      %v916 = vmul.f32 %v503, %v888
      %v917 = vmul.f32 %v508, %v888
      %v918 = vmul.f32 %v513, %v888
      %v919 = vmul.f32 %v518, %v888
      %v920 = vmul.f32 %v523, %v888
      %v921 = vmul.f32 %v528, %v888
      %v922 = vmul.f32 %v533, %v888
      %v923 = vmul.f32 %v538, %v888
      %v924 = vmul.f32 %v543, %v888
      %v925 = vmul.f32 %v548, %v888
      %v926 = vmul.f32 %v553, %v888
      %v927 = vmul.f32 %v558, %v888
      %v928 = vmul.f32 %v563, %v888
      %v929 = vmul.f32 %v568, %v888
      %v930 = vmul.f32 %v573, %v888
      %v931 = vmul.f32 %v578, %v888
      %v932 = vmul.f32 %v583, %v888
      %v933 = vmul.f32 %v588, %v888
      %v934 = vmul.f32 %v593, %v888
      %v935 = vmul.f32 %v598, %v888
      %v936 = vmul.f32 %v603, %v888
      %v937 = vmul.f32 %v608, %v888
      %v938 = vmul.f32 %v613, %v888
      %v939 = vmul.f32 %v618, %v888
      %v940 = vmul.f32 %v623, %v888
      %v941 = vmul.f32 %v628, %v888
      %v942 = vmul.f32 %v633, %v888
      %v943 = vmul.f32 %v638, %v888
      %v944 = vmul.f32 %v643, %v888
      %v945 = vmul.f32 %v648, %v888
      %v946 = vmul.f32 %v653, %v888
      %v947 = vmul.f32 %v658, %v888
      %v948 = vmul.f32 %v663, %v888
      %v949 = vmul.f32 %v668, %v888
      %v950 = vmul.f32 %v673, %v888
      %v951 = vmul.f32 %v678, %v888
      %v952 = vmul.f32 %v683, %v888
      %v953 = vmul.f32 %v688, %v888
      %v954 = vmul.f32 %v693, %v888
      %v955 = vmul.f32 %v698, %v888
      %v956 = vmul.f32 %v703, %v888
      %v957 = vmul.f32 %v708, %v888
      %v958 = vmul.f32 %v713, %v888
      %v959 = vmul.f32 %v718, %v888
      %v960 = vmul.f32 %v723, %v888
      %v961 = vmul.f32 %v728, %v888
      %v962 = vmul.f32 %v733, %v888
      %v963 = vmul.f32 %v738, %v888
      %v964 = vmul.f32 %v743, %v888
      %v965 = vmul.f32 %v748, %v888
      %v966 = vmul.f32 %v753, %v888
      %v967 = vmul.f32 %v758, %v888
      %v968 = vmul.f32 %v763, %v888
      %v969 = vmul.f32 %v768, %v888
      %v970 = vmul.f32 %v773, %v888
      %v971 = vmul.f32 %v778, %v888
      %v972 = vmul.f32 %v783, %v888
      %v973 = vmul.f32 %v788, %v888
      %v974 = vmul.f32 %v793, %v888
      %v975 = vmul.f32 %v798, %v888
      %v976 = vmul.f32 %v803, %v888
      %v977 = vmul.f32 %v808, %v888
      %v978 = vmul.f32 %v813, %v888
      %v979 = vmul.f32 %v818, %v888
      %v980 = vmul.f32 %v823, %v888
      %v981 = vmul.f32 %v828, %v888
      %v982 = vmul.f32 %v833, %v888
      %v983 = vmul.f32 %v838, %v888
      %v984 = vmul.f32 %v843, %v888
      %v985 = vmul.f32 %v848, %v888
      %v986 = vmul.f32 %v853, %v888
      %v987 = vmul.f32 %v858, %v888
      %v988 = vmul.f32 %v863, %v888
      %v989 = vmul.f32 %v868, %v888
      %v990 = vmul.f32 %v873, %v888
      %v991 = vmul.f32 %v878, %v888
      %v992 = vmul.f32 %v883, %v888
      %v993 = vadd.f32 %v889, 0.0
      %v994 = vadd.f32 %v890, 0.0
      %v995 = vadd.f32 %v891, 0.0
      %v996 = vadd.f32 %v892, 0.0
      %v997 = vadd.f32 %v893, 0.0
      %v998 = vadd.f32 %v894, 0.0
      %v999 = vadd.f32 %v895, 0.0
      %v1000 = vadd.f32 %v896, 0.0
      %v1001 = vadd.f32 %v897, 0.0
      %v1002 = vadd.f32 %v898, 0.0
      %v1003 = vadd.f32 %v899, 0.0
      %v1004 = vadd.f32 %v900, 0.0
      %v1005 = vadd.f32 %v901, 0.0
      %v1006 = vadd.f32 %v902, 0.0
      %v1007 = vadd.f32 %v903, 0.0
      %v1008 = vadd.f32 %v904, 0.0
      %v1009 = vadd.f32 %v905, 0.0
      %v1010 = vadd.f32 %v906, 0.0
      %v1011 = vadd.f32 %v907, 0.0
      %v1012 = vadd.f32 %v908, 0.0
      %v1013 = vadd.f32 %v909, 0.0
      %v1014 = vadd.f32 %v910, 0.0
      %v1015 = vadd.f32 %v911, 0.0
      %v1016 = vadd.f32 %v912, 0.0
      %v1017 = vadd.f32 %v913, 0.0
      %v1018 = vadd.f32 %v914, 0.0
      %v1019 = vadd.f32 %v915, 0.0
      %v1020 = vadd.f32 %v916, 0.0
      %v1021 = vadd.f32 %v917, 0.0
      %v1022 = vadd.f32 %v918, 0.0
      %v1023 = vadd.f32 %v919, 0.0
      %v1024 = vadd.f32 %v920, 0.0
      %v1025 = vadd.f32 %v921, 0.0
      %v1026 = vadd.f32 %v922, 0.0
      %v1027 = vadd.f32 %v923, 0.0
      %v1028 = vadd.f32 %v924, 0.0
      %v1029 = vadd.f32 %v925, 0.0
      %v1030 = vadd.f32 %v926, 0.0
      %v1031 = vadd.f32 %v927, 0.0
      %v1032 = vadd.f32 %v928, 0.0
      %v1033 = vadd.f32 %v929, 0.0
      %v1034 = vadd.f32 %v930, 0.0
      %v1035 = vadd.f32 %v931, 0.0
      %v1036 = vadd.f32 %v932, 0.0
      %v1037 = vadd.f32 %v933, 0.0
      %v1038 = vadd.f32 %v934, 0.0
      %v1039 = vadd.f32 %v935, 0.0
      %v1040 = vadd.f32 %v936, 0.0
      %v1041 = vadd.f32 %v937, 0.0
      %v1042 = vadd.f32 %v938, 0.0
      %v1043 = vadd.f32 %v939, 0.0
      %v1044 = vadd.f32 %v940, 0.0
      %v1045 = vadd.f32 %v941, 0.0
      %v1046 = vadd.f32 %v942, 0.0
      %v1047 = vadd.f32 %v943, 0.0
      %v1048 = vadd.f32 %v944, 0.0
      %v1049 = vadd.f32 %v945, 0.0
      %v1050 = vadd.f32 %v946, 0.0
      %v1051 = vadd.f32 %v947, 0.0
      %v1052 = vadd.f32 %v948, 0.0
      %v1053 = vadd.f32 %v949, 0.0
      %v1054 = vadd.f32 %v950, 0.0
      %v1055 = vadd.f32 %v951, 0.0
      %v1056 = vadd.f32 %v952, 0.0
      %v1057 = vadd.f32 %v953, 0.0
      %v1058 = vadd.f32 %v954, 0.0
      %v1059 = vadd.f32 %v955, 0.0
      %v1060 = vadd.f32 %v956, 0.0
      %v1061 = vadd.f32 %v957, 0.0
      %v1062 = vadd.f32 %v958, 0.0
      %v1063 = vadd.f32 %v959, 0.0
      %v1064 = vadd.f32 %v960, 0.0
      %v1065 = vadd.f32 %v961, 0.0
      %v1066 = vadd.f32 %v962, 0.0
      %v1067 = vadd.f32 %v963, 0.0
      %v1068 = vadd.f32 %v964, 0.0
      %v1069 = vadd.f32 %v965, 0.0
      %v1070 = vadd.f32 %v966, 0.0
      %v1071 = vadd.f32 %v967, 0.0
      %v1072 = vadd.f32 %v968, 0.0
      %v1073 = vadd.f32 %v969, 0.0
      %v1074 = vadd.f32 %v970, 0.0
      %v1075 = vadd.f32 %v971, 0.0
      %v1076 = vadd.f32 %v972, 0.0
      %v1077 = vadd.f32 %v973, 0.0
      %v1078 = vadd.f32 %v974, 0.0
      %v1079 = vadd.f32 %v975, 0.0
      %v1080 = vadd.f32 %v976, 0.0
      %v1081 = vadd.f32 %v977, 0.0
      %v1082 = vadd.f32 %v978, 0.0
      %v1083 = vadd.f32 %v979, 0.0
      %v1084 = vadd.f32 %v980, 0.0
      %v1085 = vadd.f32 %v981, 0.0
      %v1086 = vadd.f32 %v982, 0.0
      %v1087 = vadd.f32 %v983, 0.0
      %v1088 = vadd.f32 %v984, 0.0
      %v1089 = vadd.f32 %v985, 0.0
      %v1090 = vadd.f32 %v986, 0.0
      %v1091 = vadd.f32 %v987, 0.0
      %v1092 = vadd.f32 %v988, 0.0
      %v1093 = vadd.f32 %v989, 0.0
      %v1094 = vadd.f32 %v990, 0.0
      %v1095 = vadd.f32 %v991, 0.0
      %v1096 = vadd.f32 %v992, 0.0
      %v1097 = vld [vmem:[%s1 + $0x1] sm:$0x1]
      %v1098 = vlaneseq
      %v1099 = vshrl.u32 %v1098, 7
      %v1100 = vsub.s32 0, %v1099
      %v1101 = vrot.slane %v1097, %v1100
      %v1102 = vmul.f32 %v368, %v1101
      %v1103 = vmul.f32 %v373, %v1101
      %v1104 = vmul.f32 %v378, %v1101
      %v1105 = vmul.f32 %v383, %v1101
      %v1106 = vmul.f32 %v388, %v1101
      %v1107 = vmul.f32 %v393, %v1101
      %v1108 = vmul.f32 %v398, %v1101
      %v1109 = vmul.f32 %v403, %v1101
      %v1110 = vmul.f32 %v408, %v1101
      %v1111 = vmul.f32 %v413, %v1101
      %v1112 = vmul.f32 %v418, %v1101
      %v1113 = vmul.f32 %v423, %v1101
      %v1114 = vmul.f32 %v428, %v1101
      %v1115 = vmul.f32 %v433, %v1101
      %v1116 = vmul.f32 %v438, %v1101
      %v1117 = vmul.f32 %v443, %v1101
      %v1118 = vmul.f32 %v448, %v1101
      %v1119 = vmul.f32 %v453, %v1101
      %v1120 = vmul.f32 %v458, %v1101
      %v1121 = vmul.f32 %v463, %v1101
      %v1122 = vmul.f32 %v468, %v1101
      %v1123 = vmul.f32 %v473, %v1101
      %v1124 = vmul.f32 %v478, %v1101
      %v1125 = vmul.f32 %v483, %v1101
      %v1126 = vmul.f32 %v488, %v1101
      %v1127 = vmul.f32 %v493, %v1101
      %v1128 = vmul.f32 %v498, %v1101
      %v1129 = vmul.f32 %v503, %v1101
      %v1130 = vmul.f32 %v508, %v1101
      %v1131 = vmul.f32 %v513, %v1101
      %v1132 = vmul.f32 %v518, %v1101
      %v1133 = vmul.f32 %v523, %v1101
      %v1134 = vmul.f32 %v528, %v1101
      %v1135 = vmul.f32 %v533, %v1101
      %v1136 = vmul.f32 %v538, %v1101
      %v1137 = vmul.f32 %v543, %v1101
      %v1138 = vmul.f32 %v548, %v1101
      %v1139 = vmul.f32 %v553, %v1101
      %v1140 = vmul.f32 %v558, %v1101
      %v1141 = vmul.f32 %v563, %v1101
      %v1142 = vmul.f32 %v568, %v1101
      %v1143 = vmul.f32 %v573, %v1101
      %v1144 = vmul.f32 %v578, %v1101
      %v1145 = vmul.f32 %v583, %v1101
      %v1146 = vmul.f32 %v588, %v1101
      %v1147 = vmul.f32 %v593, %v1101
      %v1148 = vmul.f32 %v598, %v1101
      %v1149 = vmul.f32 %v603, %v1101
      %v1150 = vmul.f32 %v608, %v1101
      %v1151 = vmul.f32 %v613, %v1101
      %v1152 = vmul.f32 %v618, %v1101
      %v1153 = vmul.f32 %v623, %v1101
      %v1154 = vmul.f32 %v628, %v1101
      %v1155 = vmul.f32 %v633, %v1101
      %v1156 = vmul.f32 %v638, %v1101
      %v1157 = vmul.f32 %v643, %v1101
      %v1158 = vmul.f32 %v648, %v1101
      %v1159 = vmul.f32 %v653, %v1101
      %v1160 = vmul.f32 %v658, %v1101
      %v1161 = vmul.f32 %v663, %v1101
      %v1162 = vmul.f32 %v668, %v1101
      %v1163 = vmul.f32 %v673, %v1101
      %v1164 = vmul.f32 %v678, %v1101
      %v1165 = vmul.f32 %v683, %v1101
      %v1166 = vmul.f32 %v688, %v1101
      %v1167 = vmul.f32 %v693, %v1101
      %v1168 = vmul.f32 %v698, %v1101
      %v1169 = vmul.f32 %v703, %v1101
      %v1170 = vmul.f32 %v708, %v1101
      %v1171 = vmul.f32 %v713, %v1101
      %v1172 = vmul.f32 %v718, %v1101
      %v1173 = vmul.f32 %v723, %v1101
      %v1174 = vmul.f32 %v728, %v1101
      %v1175 = vmul.f32 %v733, %v1101
      %v1176 = vmul.f32 %v738, %v1101
      %v1177 = vmul.f32 %v743, %v1101
      %v1178 = vmul.f32 %v748, %v1101
      %v1179 = vmul.f32 %v753, %v1101
      %v1180 = vmul.f32 %v758, %v1101
      %v1181 = vmul.f32 %v763, %v1101
      %v1182 = vmul.f32 %v768, %v1101
      %v1183 = vmul.f32 %v773, %v1101
      %v1184 = vmul.f32 %v778, %v1101
      %v1185 = vmul.f32 %v783, %v1101
      %v1186 = vmul.f32 %v788, %v1101
      %v1187 = vmul.f32 %v793, %v1101
      %v1188 = vmul.f32 %v798, %v1101
      %v1189 = vmul.f32 %v803, %v1101
      %v1190 = vmul.f32 %v808, %v1101
      %v1191 = vmul.f32 %v813, %v1101
      %v1192 = vmul.f32 %v818, %v1101
      %v1193 = vmul.f32 %v823, %v1101
      %v1194 = vmul.f32 %v828, %v1101
      %v1195 = vmul.f32 %v833, %v1101
      %v1196 = vmul.f32 %v838, %v1101
      %v1197 = vmul.f32 %v843, %v1101
      %v1198 = vmul.f32 %v848, %v1101
      %v1199 = vmul.f32 %v853, %v1101
      %v1200 = vmul.f32 %v858, %v1101
      %v1201 = vmul.f32 %v863, %v1101
      %v1202 = vmul.f32 %v868, %v1101
      %v1203 = vmul.f32 %v873, %v1101
      %v1204 = vmul.f32 %v878, %v1101
      %v1205 = vmul.f32 %v883, %v1101
      %vm1310 = vcmask 1046528
      %v1311 = vrot.slane %v1102, 1
      %v1312 = vrot.slane %v1103, 1
      %v1313 = vsel %vm1310, %v1311, %v1312
      %v1314 = vrot.slane %v1104, 1
      %v1315 = vsel %vm1310, %v1312, %v1314
      %v1316 = vrot.slane %v1105, 1
      %v1317 = vsel %vm1310, %v1314, %v1316
      %v1318 = vrot.slane %v1106, 1
      %v1319 = vrot.slane %v1107, 1
      %v1320 = vsel %vm1310, %v1318, %v1319
      %v1321 = vrot.slane %v1108, 1
      %v1322 = vsel %vm1310, %v1319, %v1321
      %v1323 = vrot.slane %v1109, 1
      %v1324 = vsel %vm1310, %v1321, %v1323
      %v1325 = vrot.slane %v1110, 1
      %v1326 = vrot.slane %v1111, 1
      %v1327 = vsel %vm1310, %v1325, %v1326
      %v1328 = vrot.slane %v1112, 1
      %v1329 = vsel %vm1310, %v1326, %v1328
      %v1330 = vrot.slane %v1113, 1
      %v1331 = vsel %vm1310, %v1328, %v1330
      %v1332 = vrot.slane %v1114, 1
      %v1333 = vrot.slane %v1115, 1
      %v1334 = vsel %vm1310, %v1332, %v1333
      %v1335 = vrot.slane %v1116, 1
      %v1336 = vsel %vm1310, %v1333, %v1335
      %v1337 = vrot.slane %v1117, 1
      %v1338 = vsel %vm1310, %v1335, %v1337
      %v1339 = vrot.slane %v1118, 1
      %v1340 = vrot.slane %v1119, 1
      %v1341 = vsel %vm1310, %v1339, %v1340
      %v1342 = vrot.slane %v1120, 1
      %v1343 = vsel %vm1310, %v1340, %v1342
      %v1344 = vrot.slane %v1121, 1
      %v1345 = vsel %vm1310, %v1342, %v1344
      %v1346 = vrot.slane %v1122, 1
      %v1347 = vrot.slane %v1123, 1
      %v1348 = vsel %vm1310, %v1346, %v1347
      %v1349 = vrot.slane %v1124, 1
      %v1350 = vsel %vm1310, %v1347, %v1349
      %v1351 = vrot.slane %v1125, 1
      %v1352 = vsel %vm1310, %v1349, %v1351
      %v1353 = vrot.slane %v1126, 1
      %v1354 = vrot.slane %v1127, 1
      %v1355 = vsel %vm1310, %v1353, %v1354
      %v1356 = vrot.slane %v1128, 1
      %v1357 = vsel %vm1310, %v1354, %v1356
      %v1358 = vrot.slane %v1129, 1
      %v1359 = vsel %vm1310, %v1356, %v1358
      %v1360 = vrot.slane %v1130, 1
      %v1361 = vrot.slane %v1131, 1
      %v1362 = vsel %vm1310, %v1360, %v1361
      %v1363 = vrot.slane %v1132, 1
      %v1364 = vsel %vm1310, %v1361, %v1363
      %v1365 = vrot.slane %v1133, 1
      %v1366 = vsel %vm1310, %v1363, %v1365
      %v1367 = vrot.slane %v1134, 1
      %v1368 = vrot.slane %v1135, 1
      %v1369 = vsel %vm1310, %v1367, %v1368
      %v1370 = vrot.slane %v1136, 1
      %v1371 = vsel %vm1310, %v1368, %v1370
      %v1372 = vrot.slane %v1137, 1
      %v1373 = vsel %vm1310, %v1370, %v1372
      %v1374 = vrot.slane %v1138, 1
      %v1375 = vrot.slane %v1139, 1
      %v1376 = vsel %vm1310, %v1374, %v1375
      %v1377 = vrot.slane %v1140, 1
      %v1378 = vsel %vm1310, %v1375, %v1377
      %v1379 = vrot.slane %v1141, 1
      %v1380 = vsel %vm1310, %v1377, %v1379
      %v1381 = vrot.slane %v1142, 1
      %v1382 = vrot.slane %v1143, 1
      %v1383 = vsel %vm1310, %v1381, %v1382
      %v1384 = vrot.slane %v1144, 1
      %v1385 = vsel %vm1310, %v1382, %v1384
      %v1386 = vrot.slane %v1145, 1
      %v1387 = vsel %vm1310, %v1384, %v1386
      %v1388 = vrot.slane %v1146, 1
      %v1389 = vrot.slane %v1147, 1
      %v1390 = vsel %vm1310, %v1388, %v1389
      %v1391 = vrot.slane %v1148, 1
      %v1392 = vsel %vm1310, %v1389, %v1391
      %v1393 = vrot.slane %v1149, 1
      %v1394 = vsel %vm1310, %v1391, %v1393
      %v1395 = vrot.slane %v1150, 1
      %v1396 = vrot.slane %v1151, 1
      %v1397 = vsel %vm1310, %v1395, %v1396
      %v1398 = vrot.slane %v1152, 1
      %v1399 = vsel %vm1310, %v1396, %v1398
      %v1400 = vrot.slane %v1153, 1
      %v1401 = vsel %vm1310, %v1398, %v1400
      %v1402 = vrot.slane %v1154, 1
      %v1403 = vrot.slane %v1155, 1
      %v1404 = vsel %vm1310, %v1402, %v1403
      %v1405 = vrot.slane %v1156, 1
      %v1406 = vsel %vm1310, %v1403, %v1405
      %v1407 = vrot.slane %v1157, 1
      %v1408 = vsel %vm1310, %v1405, %v1407
      %v1409 = vrot.slane %v1158, 1
      %v1410 = vrot.slane %v1159, 1
      %v1411 = vsel %vm1310, %v1409, %v1410
      %v1412 = vrot.slane %v1160, 1
      %v1413 = vsel %vm1310, %v1410, %v1412
      %v1414 = vrot.slane %v1161, 1
      %v1415 = vsel %vm1310, %v1412, %v1414
      %v1416 = vrot.slane %v1162, 1
      %v1417 = vrot.slane %v1163, 1
      %v1418 = vsel %vm1310, %v1416, %v1417
      %v1419 = vrot.slane %v1164, 1
      %v1420 = vsel %vm1310, %v1417, %v1419
      %v1421 = vrot.slane %v1165, 1
      %v1422 = vsel %vm1310, %v1419, %v1421
      %v1423 = vrot.slane %v1166, 1
      %v1424 = vrot.slane %v1167, 1
      %v1425 = vsel %vm1310, %v1423, %v1424
      %v1426 = vrot.slane %v1168, 1
      %v1427 = vsel %vm1310, %v1424, %v1426
      %v1428 = vrot.slane %v1169, 1
      %v1429 = vsel %vm1310, %v1426, %v1428
      %v1430 = vrot.slane %v1170, 1
      %v1431 = vrot.slane %v1171, 1
      %v1432 = vsel %vm1310, %v1430, %v1431
      %v1433 = vrot.slane %v1172, 1
      %v1434 = vsel %vm1310, %v1431, %v1433
      %v1435 = vrot.slane %v1173, 1
      %v1436 = vsel %vm1310, %v1433, %v1435
      %v1437 = vrot.slane %v1174, 1
      %v1438 = vrot.slane %v1175, 1
      %v1439 = vsel %vm1310, %v1437, %v1438
      %v1440 = vrot.slane %v1176, 1
      %v1441 = vsel %vm1310, %v1438, %v1440
      %v1442 = vrot.slane %v1177, 1
      %v1443 = vsel %vm1310, %v1440, %v1442
      %v1444 = vrot.slane %v1178, 1
      %v1445 = vrot.slane %v1179, 1
      %v1446 = vsel %vm1310, %v1444, %v1445
      %v1447 = vrot.slane %v1180, 1
      %v1448 = vsel %vm1310, %v1445, %v1447
      %v1449 = vrot.slane %v1181, 1
      %v1450 = vsel %vm1310, %v1447, %v1449
      %v1451 = vrot.slane %v1182, 1
      %v1452 = vrot.slane %v1183, 1
      %v1453 = vsel %vm1310, %v1451, %v1452
      %v1454 = vrot.slane %v1184, 1
      %v1455 = vsel %vm1310, %v1452, %v1454
      %v1456 = vrot.slane %v1185, 1
      %v1457 = vsel %vm1310, %v1454, %v1456
      %v1458 = vrot.slane %v1186, 1
      %v1459 = vrot.slane %v1187, 1
      %v1460 = vsel %vm1310, %v1458, %v1459
      %v1461 = vrot.slane %v1188, 1
      %v1462 = vsel %vm1310, %v1459, %v1461
      %v1463 = vrot.slane %v1189, 1
      %v1464 = vsel %vm1310, %v1461, %v1463
      %v1465 = vrot.slane %v1190, 1
      %v1466 = vrot.slane %v1191, 1
      %v1467 = vsel %vm1310, %v1465, %v1466
      %v1468 = vrot.slane %v1192, 1
      %v1469 = vsel %vm1310, %v1466, %v1468
      %v1470 = vrot.slane %v1193, 1
      %v1471 = vsel %vm1310, %v1468, %v1470
      %v1472 = vrot.slane %v1194, 1
      %v1473 = vrot.slane %v1195, 1
      %v1474 = vsel %vm1310, %v1472, %v1473
      %v1475 = vrot.slane %v1196, 1
      %v1476 = vsel %vm1310, %v1473, %v1475
      %v1477 = vrot.slane %v1197, 1
      %v1478 = vsel %vm1310, %v1475, %v1477
      %v1479 = vrot.slane %v1198, 1
      %v1480 = vrot.slane %v1199, 1
      %v1481 = vsel %vm1310, %v1479, %v1480
      %v1482 = vrot.slane %v1200, 1
      %v1483 = vsel %vm1310, %v1480, %v1482
      %v1484 = vrot.slane %v1201, 1
      %v1485 = vsel %vm1310, %v1482, %v1484
      %v1486 = vrot.slane %v1202, 1
      %v1487 = vrot.slane %v1203, 1
      %v1488 = vsel %vm1310, %v1486, %v1487
      %v1489 = vrot.slane %v1204, 1
      %v1490 = vsel %vm1310, %v1487, %v1489
      %v1491 = vrot.slane %v1205, 1
      %v1492 = vsel %vm1310, %v1489, %v1491
      %v1597 = vadd.f32 %v993, %v1313
      %v1598 = vadd.f32 %v994, %v1315
      %v1599 = vadd.f32 %v995, %v1317
      %v1600 = vadd.f32 %v996, %v1316
      %v1601 = vadd.f32 %v997, %v1320
      %v1602 = vadd.f32 %v998, %v1322
      %v1603 = vadd.f32 %v999, %v1324
      %v1604 = vadd.f32 %v1000, %v1323
      %v1605 = vadd.f32 %v1001, %v1327
      %v1606 = vadd.f32 %v1002, %v1329
      %v1607 = vadd.f32 %v1003, %v1331
      %v1608 = vadd.f32 %v1004, %v1330
      %v1609 = vadd.f32 %v1005, %v1334
      %v1610 = vadd.f32 %v1006, %v1336
      %v1611 = vadd.f32 %v1007, %v1338
      %v1612 = vadd.f32 %v1008, %v1337
      %v1613 = vadd.f32 %v1009, %v1341
      %v1614 = vadd.f32 %v1010, %v1343
      %v1615 = vadd.f32 %v1011, %v1345
      %v1616 = vadd.f32 %v1012, %v1344
      %v1617 = vadd.f32 %v1013, %v1348
      %v1618 = vadd.f32 %v1014, %v1350
      %v1619 = vadd.f32 %v1015, %v1352
      %v1620 = vadd.f32 %v1016, %v1351
      %v1621 = vadd.f32 %v1017, %v1355
      %v1622 = vadd.f32 %v1018, %v1357
      %v1623 = vadd.f32 %v1019, %v1359
      %v1624 = vadd.f32 %v1020, %v1358
      %v1625 = vadd.f32 %v1021, %v1362
      %v1626 = vadd.f32 %v1022, %v1364
      %v1627 = vadd.f32 %v1023, %v1366
      %v1628 = vadd.f32 %v1024, %v1365
      %v1629 = vadd.f32 %v1025, %v1369
      %v1630 = vadd.f32 %v1026, %v1371
      %v1631 = vadd.f32 %v1027, %v1373
      %v1632 = vadd.f32 %v1028, %v1372
      %v1633 = vadd.f32 %v1029, %v1376
      %v1634 = vadd.f32 %v1030, %v1378
      %v1635 = vadd.f32 %v1031, %v1380
      %v1636 = vadd.f32 %v1032, %v1379
      %v1637 = vadd.f32 %v1033, %v1383
      %v1638 = vadd.f32 %v1034, %v1385
      %v1639 = vadd.f32 %v1035, %v1387
      %v1640 = vadd.f32 %v1036, %v1386
      %v1641 = vadd.f32 %v1037, %v1390
      %v1642 = vadd.f32 %v1038, %v1392
      %v1643 = vadd.f32 %v1039, %v1394
      %v1644 = vadd.f32 %v1040, %v1393
      %v1645 = vadd.f32 %v1041, %v1397
      %v1646 = vadd.f32 %v1042, %v1399
      %v1647 = vadd.f32 %v1043, %v1401
      %v1648 = vadd.f32 %v1044, %v1400
      %v1649 = vadd.f32 %v1045, %v1404
      %v1650 = vadd.f32 %v1046, %v1406
      %v1651 = vadd.f32 %v1047, %v1408
      %v1652 = vadd.f32 %v1048, %v1407
      %v1653 = vadd.f32 %v1049, %v1411
      %v1654 = vadd.f32 %v1050, %v1413
      %v1655 = vadd.f32 %v1051, %v1415
      %v1656 = vadd.f32 %v1052, %v1414
      %v1657 = vadd.f32 %v1053, %v1418
      %v1658 = vadd.f32 %v1054, %v1420
      %v1659 = vadd.f32 %v1055, %v1422
      %v1660 = vadd.f32 %v1056, %v1421
      %v1661 = vadd.f32 %v1057, %v1425
      %v1662 = vadd.f32 %v1058, %v1427
      %v1663 = vadd.f32 %v1059, %v1429
      %v1664 = vadd.f32 %v1060, %v1428
      %v1665 = vadd.f32 %v1061, %v1432
      %v1666 = vadd.f32 %v1062, %v1434
      %v1667 = vadd.f32 %v1063, %v1436
      %v1668 = vadd.f32 %v1064, %v1435
      %v1669 = vadd.f32 %v1065, %v1439
      %v1670 = vadd.f32 %v1066, %v1441
      %v1671 = vadd.f32 %v1067, %v1443
      %v1672 = vadd.f32 %v1068, %v1442
      %v1673 = vadd.f32 %v1069, %v1446
      %v1674 = vadd.f32 %v1070, %v1448
      %v1675 = vadd.f32 %v1071, %v1450
      %v1676 = vadd.f32 %v1072, %v1449
      %v1677 = vadd.f32 %v1073, %v1453
      %v1678 = vadd.f32 %v1074, %v1455
      %v1679 = vadd.f32 %v1075, %v1457
      %v1680 = vadd.f32 %v1076, %v1456
      %v1681 = vadd.f32 %v1077, %v1460
      %v1682 = vadd.f32 %v1078, %v1462
      %v1683 = vadd.f32 %v1079, %v1464
      %v1684 = vadd.f32 %v1080, %v1463
      %v1685 = vadd.f32 %v1081, %v1467
      %v1686 = vadd.f32 %v1082, %v1469
      %v1687 = vadd.f32 %v1083, %v1471
      %v1688 = vadd.f32 %v1084, %v1470
      %v1689 = vadd.f32 %v1085, %v1474
      %v1690 = vadd.f32 %v1086, %v1476
      %v1691 = vadd.f32 %v1087, %v1478
      %v1692 = vadd.f32 %v1088, %v1477
      %v1693 = vadd.f32 %v1089, %v1481
      %v1694 = vadd.f32 %v1090, %v1483
      %v1695 = vadd.f32 %v1091, %v1485
      %v1696 = vadd.f32 %v1092, %v1484
      %v1697 = vadd.f32 %v1093, %v1488
      %v1698 = vadd.f32 %v1094, %v1490
      %v1699 = vadd.f32 %v1095, %v1492
      %v1700 = vadd.f32 %v1096, %v1491
      %v1701 = vld [vmem:[%s1 + $0x2] sm:$0x1]
      %v1702 = vlaneseq
      %v1703 = vshrl.u32 %v1702, 7
      %v1704 = vsub.s32 0, %v1703
      %v1705 = vrot.slane %v1701, %v1704
      %v1706 = vmul.f32 %v368, %v1705
      %v1707 = vmul.f32 %v373, %v1705
      %v1708 = vmul.f32 %v378, %v1705
      %v1709 = vmul.f32 %v383, %v1705
      %v1710 = vmul.f32 %v388, %v1705
      %v1711 = vmul.f32 %v393, %v1705
      %v1712 = vmul.f32 %v398, %v1705
      %v1713 = vmul.f32 %v403, %v1705
      %v1714 = vmul.f32 %v408, %v1705
      %v1715 = vmul.f32 %v413, %v1705
      %v1716 = vmul.f32 %v418, %v1705
      %v1717 = vmul.f32 %v423, %v1705
      %v1718 = vmul.f32 %v428, %v1705
      %v1719 = vmul.f32 %v433, %v1705
      %v1720 = vmul.f32 %v438, %v1705
      %v1721 = vmul.f32 %v443, %v1705
      %v1722 = vmul.f32 %v448, %v1705
      %v1723 = vmul.f32 %v453, %v1705
      %v1724 = vmul.f32 %v458, %v1705
      %v1725 = vmul.f32 %v463, %v1705
      %v1726 = vmul.f32 %v468, %v1705
      %v1727 = vmul.f32 %v473, %v1705
      %v1728 = vmul.f32 %v478, %v1705
      %v1729 = vmul.f32 %v483, %v1705
      %v1730 = vmul.f32 %v488, %v1705
      %v1731 = vmul.f32 %v493, %v1705
      %v1732 = vmul.f32 %v498, %v1705
      %v1733 = vmul.f32 %v503, %v1705
      %v1734 = vmul.f32 %v508, %v1705
      %v1735 = vmul.f32 %v513, %v1705
      %v1736 = vmul.f32 %v518, %v1705
      %v1737 = vmul.f32 %v523, %v1705
      %v1738 = vmul.f32 %v528, %v1705
      %v1739 = vmul.f32 %v533, %v1705
      %v1740 = vmul.f32 %v538, %v1705
      %v1741 = vmul.f32 %v543, %v1705
      %v1742 = vmul.f32 %v548, %v1705
      %v1743 = vmul.f32 %v553, %v1705
      %v1744 = vmul.f32 %v558, %v1705
      %v1745 = vmul.f32 %v563, %v1705
      %v1746 = vmul.f32 %v568, %v1705
      %v1747 = vmul.f32 %v573, %v1705
      %v1748 = vmul.f32 %v578, %v1705
      %v1749 = vmul.f32 %v583, %v1705
      %v1750 = vmul.f32 %v588, %v1705
      %v1751 = vmul.f32 %v593, %v1705
      %v1752 = vmul.f32 %v598, %v1705
      %v1753 = vmul.f32 %v603, %v1705
      %v1754 = vmul.f32 %v608, %v1705
      %v1755 = vmul.f32 %v613, %v1705
      %v1756 = vmul.f32 %v618, %v1705
      %v1757 = vmul.f32 %v623, %v1705
      %v1758 = vmul.f32 %v628, %v1705
      %v1759 = vmul.f32 %v633, %v1705
      %v1760 = vmul.f32 %v638, %v1705
      %v1761 = vmul.f32 %v643, %v1705
      %v1762 = vmul.f32 %v648, %v1705
      %v1763 = vmul.f32 %v653, %v1705
      %v1764 = vmul.f32 %v658, %v1705
      %v1765 = vmul.f32 %v663, %v1705
      %v1766 = vmul.f32 %v668, %v1705
      %v1767 = vmul.f32 %v673, %v1705
      %v1768 = vmul.f32 %v678, %v1705
      %v1769 = vmul.f32 %v683, %v1705
      %v1770 = vmul.f32 %v688, %v1705
      %v1771 = vmul.f32 %v693, %v1705
      %v1772 = vmul.f32 %v698, %v1705
      %v1773 = vmul.f32 %v703, %v1705
      %v1774 = vmul.f32 %v708, %v1705
      %v1775 = vmul.f32 %v713, %v1705
      %v1776 = vmul.f32 %v718, %v1705
      %v1777 = vmul.f32 %v723, %v1705
      %v1778 = vmul.f32 %v728, %v1705
      %v1779 = vmul.f32 %v733, %v1705
      %v1780 = vmul.f32 %v738, %v1705
      %v1781 = vmul.f32 %v743, %v1705
      %v1782 = vmul.f32 %v748, %v1705
      %v1783 = vmul.f32 %v753, %v1705
      %v1784 = vmul.f32 %v758, %v1705
      %v1785 = vmul.f32 %v763, %v1705
      %v1786 = vmul.f32 %v768, %v1705
      %v1787 = vmul.f32 %v773, %v1705
      %v1788 = vmul.f32 %v778, %v1705
      %v1789 = vmul.f32 %v783, %v1705
      %v1790 = vmul.f32 %v788, %v1705
      %v1791 = vmul.f32 %v793, %v1705
      %v1792 = vmul.f32 %v798, %v1705
      %v1793 = vmul.f32 %v803, %v1705
      %v1794 = vmul.f32 %v808, %v1705
      %v1795 = vmul.f32 %v813, %v1705
      %v1796 = vmul.f32 %v818, %v1705
      %v1797 = vmul.f32 %v823, %v1705
      %v1798 = vmul.f32 %v828, %v1705
      %v1799 = vmul.f32 %v833, %v1705
      %v1800 = vmul.f32 %v838, %v1705
      %v1801 = vmul.f32 %v843, %v1705
      %v1802 = vmul.f32 %v848, %v1705
      %v1803 = vmul.f32 %v853, %v1705
      %v1804 = vmul.f32 %v858, %v1705
      %v1805 = vmul.f32 %v863, %v1705
      %v1806 = vmul.f32 %v868, %v1705
      %v1807 = vmul.f32 %v873, %v1705
      %v1808 = vmul.f32 %v878, %v1705
      %v1809 = vmul.f32 %v883, %v1705
      %vm1914 = vcmask 1045504
      %v1915 = vrot.slane %v1706, 2
      %v1916 = vrot.slane %v1707, 2
      %v1917 = vsel %vm1914, %v1915, %v1916
      %v1918 = vrot.slane %v1708, 2
      %v1919 = vsel %vm1914, %v1916, %v1918
      %v1920 = vrot.slane %v1709, 2
      %v1921 = vsel %vm1914, %v1918, %v1920
      %v1922 = vrot.slane %v1710, 2
      %v1923 = vrot.slane %v1711, 2
      %v1924 = vsel %vm1914, %v1922, %v1923
      %v1925 = vrot.slane %v1712, 2
      %v1926 = vsel %vm1914, %v1923, %v1925
      %v1927 = vrot.slane %v1713, 2
      %v1928 = vsel %vm1914, %v1925, %v1927
      %v1929 = vrot.slane %v1714, 2
      %v1930 = vrot.slane %v1715, 2
      %v1931 = vsel %vm1914, %v1929, %v1930
      %v1932 = vrot.slane %v1716, 2
      %v1933 = vsel %vm1914, %v1930, %v1932
      %v1934 = vrot.slane %v1717, 2
      %v1935 = vsel %vm1914, %v1932, %v1934
      %v1936 = vrot.slane %v1718, 2
      %v1937 = vrot.slane %v1719, 2
      %v1938 = vsel %vm1914, %v1936, %v1937
      %v1939 = vrot.slane %v1720, 2
      %v1940 = vsel %vm1914, %v1937, %v1939
      %v1941 = vrot.slane %v1721, 2
      %v1942 = vsel %vm1914, %v1939, %v1941
      %v1943 = vrot.slane %v1722, 2
      %v1944 = vrot.slane %v1723, 2
      %v1945 = vsel %vm1914, %v1943, %v1944
      %v1946 = vrot.slane %v1724, 2
      %v1947 = vsel %vm1914, %v1944, %v1946
      %v1948 = vrot.slane %v1725, 2
      %v1949 = vsel %vm1914, %v1946, %v1948
      %v1950 = vrot.slane %v1726, 2
      %v1951 = vrot.slane %v1727, 2
      %v1952 = vsel %vm1914, %v1950, %v1951
      %v1953 = vrot.slane %v1728, 2
      %v1954 = vsel %vm1914, %v1951, %v1953
      %v1955 = vrot.slane %v1729, 2
      %v1956 = vsel %vm1914, %v1953, %v1955
      %v1957 = vrot.slane %v1730, 2
      %v1958 = vrot.slane %v1731, 2
      %v1959 = vsel %vm1914, %v1957, %v1958
      %v1960 = vrot.slane %v1732, 2
      %v1961 = vsel %vm1914, %v1958, %v1960
      %v1962 = vrot.slane %v1733, 2
      %v1963 = vsel %vm1914, %v1960, %v1962
      %v1964 = vrot.slane %v1734, 2
      %v1965 = vrot.slane %v1735, 2
      %v1966 = vsel %vm1914, %v1964, %v1965
      %v1967 = vrot.slane %v1736, 2
      %v1968 = vsel %vm1914, %v1965, %v1967
      %v1969 = vrot.slane %v1737, 2
      %v1970 = vsel %vm1914, %v1967, %v1969
      %v1971 = vrot.slane %v1738, 2
      %v1972 = vrot.slane %v1739, 2
      %v1973 = vsel %vm1914, %v1971, %v1972
      %v1974 = vrot.slane %v1740, 2
      %v1975 = vsel %vm1914, %v1972, %v1974
      %v1976 = vrot.slane %v1741, 2
      %v1977 = vsel %vm1914, %v1974, %v1976
      %v1978 = vrot.slane %v1742, 2
      %v1979 = vrot.slane %v1743, 2
      %v1980 = vsel %vm1914, %v1978, %v1979
      %v1981 = vrot.slane %v1744, 2
      %v1982 = vsel %vm1914, %v1979, %v1981
      %v1983 = vrot.slane %v1745, 2
      %v1984 = vsel %vm1914, %v1981, %v1983
      %v1985 = vrot.slane %v1746, 2
      %v1986 = vrot.slane %v1747, 2
      %v1987 = vsel %vm1914, %v1985, %v1986
      %v1988 = vrot.slane %v1748, 2
      %v1989 = vsel %vm1914, %v1986, %v1988
      %v1990 = vrot.slane %v1749, 2
      %v1991 = vsel %vm1914, %v1988, %v1990
      %v1992 = vrot.slane %v1750, 2
      %v1993 = vrot.slane %v1751, 2
      %v1994 = vsel %vm1914, %v1992, %v1993
      %v1995 = vrot.slane %v1752, 2
      %v1996 = vsel %vm1914, %v1993, %v1995
      %v1997 = vrot.slane %v1753, 2
      %v1998 = vsel %vm1914, %v1995, %v1997
      %v1999 = vrot.slane %v1754, 2
      %v2000 = vrot.slane %v1755, 2
      %v2001 = vsel %vm1914, %v1999, %v2000
      %v2002 = vrot.slane %v1756, 2
      %v2003 = vsel %vm1914, %v2000, %v2002
      %v2004 = vrot.slane %v1757, 2
      %v2005 = vsel %vm1914, %v2002, %v2004
      %v2006 = vrot.slane %v1758, 2
      %v2007 = vrot.slane %v1759, 2
      %v2008 = vsel %vm1914, %v2006, %v2007
      %v2009 = vrot.slane %v1760, 2
      %v2010 = vsel %vm1914, %v2007, %v2009
      %v2011 = vrot.slane %v1761, 2
      %v2012 = vsel %vm1914, %v2009, %v2011
      %v2013 = vrot.slane %v1762, 2
      %v2014 = vrot.slane %v1763, 2
      %v2015 = vsel %vm1914, %v2013, %v2014
      %v2016 = vrot.slane %v1764, 2
      %v2017 = vsel %vm1914, %v2014, %v2016
      %v2018 = vrot.slane %v1765, 2
      %v2019 = vsel %vm1914, %v2016, %v2018
      %v2020 = vrot.slane %v1766, 2
      %v2021 = vrot.slane %v1767, 2
      %v2022 = vsel %vm1914, %v2020, %v2021
      %v2023 = vrot.slane %v1768, 2
      %v2024 = vsel %vm1914, %v2021, %v2023
      %v2025 = vrot.slane %v1769, 2
      %v2026 = vsel %vm1914, %v2023, %v2025
      %v2027 = vrot.slane %v1770, 2
      %v2028 = vrot.slane %v1771, 2
      %v2029 = vsel %vm1914, %v2027, %v2028
      %v2030 = vrot.slane %v1772, 2
      %v2031 = vsel %vm1914, %v2028, %v2030
      %v2032 = vrot.slane %v1773, 2
      %v2033 = vsel %vm1914, %v2030, %v2032
      %v2034 = vrot.slane %v1774, 2
      %v2035 = vrot.slane %v1775, 2
      %v2036 = vsel %vm1914, %v2034, %v2035
      %v2037 = vrot.slane %v1776, 2
      %v2038 = vsel %vm1914, %v2035, %v2037
      %v2039 = vrot.slane %v1777, 2
      %v2040 = vsel %vm1914, %v2037, %v2039
      %v2041 = vrot.slane %v1778, 2
      %v2042 = vrot.slane %v1779, 2
      %v2043 = vsel %vm1914, %v2041, %v2042
      %v2044 = vrot.slane %v1780, 2
      %v2045 = vsel %vm1914, %v2042, %v2044
      %v2046 = vrot.slane %v1781, 2
      %v2047 = vsel %vm1914, %v2044, %v2046
      %v2048 = vrot.slane %v1782, 2
      %v2049 = vrot.slane %v1783, 2
      %v2050 = vsel %vm1914, %v2048, %v2049
      %v2051 = vrot.slane %v1784, 2
      %v2052 = vsel %vm1914, %v2049, %v2051
      %v2053 = vrot.slane %v1785, 2
      %v2054 = vsel %vm1914, %v2051, %v2053
      %v2055 = vrot.slane %v1786, 2
      %v2056 = vrot.slane %v1787, 2
      %v2057 = vsel %vm1914, %v2055, %v2056
      %v2058 = vrot.slane %v1788, 2
      %v2059 = vsel %vm1914, %v2056, %v2058
      %v2060 = vrot.slane %v1789, 2
      %v2061 = vsel %vm1914, %v2058, %v2060
      %v2062 = vrot.slane %v1790, 2
      %v2063 = vrot.slane %v1791, 2
      %v2064 = vsel %vm1914, %v2062, %v2063
      %v2065 = vrot.slane %v1792, 2
      %v2066 = vsel %vm1914, %v2063, %v2065
      %v2067 = vrot.slane %v1793, 2
      %v2068 = vsel %vm1914, %v2065, %v2067
      %v2069 = vrot.slane %v1794, 2
      %v2070 = vrot.slane %v1795, 2
      %v2071 = vsel %vm1914, %v2069, %v2070
      %v2072 = vrot.slane %v1796, 2
      %v2073 = vsel %vm1914, %v2070, %v2072
      %v2074 = vrot.slane %v1797, 2
      %v2075 = vsel %vm1914, %v2072, %v2074
      %v2076 = vrot.slane %v1798, 2
      %v2077 = vrot.slane %v1799, 2
      %v2078 = vsel %vm1914, %v2076, %v2077
      %v2079 = vrot.slane %v1800, 2
      %v2080 = vsel %vm1914, %v2077, %v2079
      %v2081 = vrot.slane %v1801, 2
      %v2082 = vsel %vm1914, %v2079, %v2081
      %v2083 = vrot.slane %v1802, 2
      %v2084 = vrot.slane %v1803, 2
      %v2085 = vsel %vm1914, %v2083, %v2084
      %v2086 = vrot.slane %v1804, 2
      %v2087 = vsel %vm1914, %v2084, %v2086
      %v2088 = vrot.slane %v1805, 2
      %v2089 = vsel %vm1914, %v2086, %v2088
      %v2090 = vrot.slane %v1806, 2
      %v2091 = vrot.slane %v1807, 2
      %v2092 = vsel %vm1914, %v2090, %v2091
      %v2093 = vrot.slane %v1808, 2
      %v2094 = vsel %vm1914, %v2091, %v2093
      %v2095 = vrot.slane %v1809, 2
      %v2096 = vsel %vm1914, %v2093, %v2095
      %v2201 = vadd.f32 %v1597, %v1917
      %v2202 = vadd.f32 %v1598, %v1919
      %v2203 = vadd.f32 %v1599, %v1921
      %v2204 = vadd.f32 %v1600, %v1920
      %v2205 = vadd.f32 %v1601, %v1924
      %v2206 = vadd.f32 %v1602, %v1926
      %v2207 = vadd.f32 %v1603, %v1928
      %v2208 = vadd.f32 %v1604, %v1927
      %v2209 = vadd.f32 %v1605, %v1931
      %v2210 = vadd.f32 %v1606, %v1933
      %v2211 = vadd.f32 %v1607, %v1935
      %v2212 = vadd.f32 %v1608, %v1934
      %v2213 = vadd.f32 %v1609, %v1938
      %v2214 = vadd.f32 %v1610, %v1940
      %v2215 = vadd.f32 %v1611, %v1942
      %v2216 = vadd.f32 %v1612, %v1941
      %v2217 = vadd.f32 %v1613, %v1945
      %v2218 = vadd.f32 %v1614, %v1947
      %v2219 = vadd.f32 %v1615, %v1949
      %v2220 = vadd.f32 %v1616, %v1948
      %v2221 = vadd.f32 %v1617, %v1952
      %v2222 = vadd.f32 %v1618, %v1954
      %v2223 = vadd.f32 %v1619, %v1956
      %v2224 = vadd.f32 %v1620, %v1955
      %v2225 = vadd.f32 %v1621, %v1959
      %v2226 = vadd.f32 %v1622, %v1961
      %v2227 = vadd.f32 %v1623, %v1963
      %v2228 = vadd.f32 %v1624, %v1962
      %v2229 = vadd.f32 %v1625, %v1966
      %v2230 = vadd.f32 %v1626, %v1968
      %v2231 = vadd.f32 %v1627, %v1970
      %v2232 = vadd.f32 %v1628, %v1969
      %v2233 = vadd.f32 %v1629, %v1973
      %v2234 = vadd.f32 %v1630, %v1975
      %v2235 = vadd.f32 %v1631, %v1977
      %v2236 = vadd.f32 %v1632, %v1976
      %v2237 = vadd.f32 %v1633, %v1980
      %v2238 = vadd.f32 %v1634, %v1982
      %v2239 = vadd.f32 %v1635, %v1984
      %v2240 = vadd.f32 %v1636, %v1983
      %v2241 = vadd.f32 %v1637, %v1987
      %v2242 = vadd.f32 %v1638, %v1989
      %v2243 = vadd.f32 %v1639, %v1991
      %v2244 = vadd.f32 %v1640, %v1990
      %v2245 = vadd.f32 %v1641, %v1994
      %v2246 = vadd.f32 %v1642, %v1996
      %v2247 = vadd.f32 %v1643, %v1998
      %v2248 = vadd.f32 %v1644, %v1997
      %v2249 = vadd.f32 %v1645, %v2001
      %v2250 = vadd.f32 %v1646, %v2003
      %v2251 = vadd.f32 %v1647, %v2005
      %v2252 = vadd.f32 %v1648, %v2004
      %v2253 = vadd.f32 %v1649, %v2008
      %v2254 = vadd.f32 %v1650, %v2010
      %v2255 = vadd.f32 %v1651, %v2012
      %v2256 = vadd.f32 %v1652, %v2011
      %v2257 = vadd.f32 %v1653, %v2015
      %v2258 = vadd.f32 %v1654, %v2017
      %v2259 = vadd.f32 %v1655, %v2019
      %v2260 = vadd.f32 %v1656, %v2018
      %v2261 = vadd.f32 %v1657, %v2022
      %v2262 = vadd.f32 %v1658, %v2024
      %v2263 = vadd.f32 %v1659, %v2026
      %v2264 = vadd.f32 %v1660, %v2025
      %v2265 = vadd.f32 %v1661, %v2029
      %v2266 = vadd.f32 %v1662, %v2031
      %v2267 = vadd.f32 %v1663, %v2033
      %v2268 = vadd.f32 %v1664, %v2032
      %v2269 = vadd.f32 %v1665, %v2036
      %v2270 = vadd.f32 %v1666, %v2038
      %v2271 = vadd.f32 %v1667, %v2040
      %v2272 = vadd.f32 %v1668, %v2039
      %v2273 = vadd.f32 %v1669, %v2043
      %v2274 = vadd.f32 %v1670, %v2045
      %v2275 = vadd.f32 %v1671, %v2047
      %v2276 = vadd.f32 %v1672, %v2046
      %v2277 = vadd.f32 %v1673, %v2050
      %v2278 = vadd.f32 %v1674, %v2052
      %v2279 = vadd.f32 %v1675, %v2054
      %v2280 = vadd.f32 %v1676, %v2053
      %v2281 = vadd.f32 %v1677, %v2057
      %v2282 = vadd.f32 %v1678, %v2059
      %v2283 = vadd.f32 %v1679, %v2061
      %v2284 = vadd.f32 %v1680, %v2060
      %v2285 = vadd.f32 %v1681, %v2064
      %v2286 = vadd.f32 %v1682, %v2066
      %v2287 = vadd.f32 %v1683, %v2068
      %v2288 = vadd.f32 %v1684, %v2067
      %v2289 = vadd.f32 %v1685, %v2071
      %v2290 = vadd.f32 %v1686, %v2073
      %v2291 = vadd.f32 %v1687, %v2075
      %v2292 = vadd.f32 %v1688, %v2074
      %v2293 = vadd.f32 %v1689, %v2078
      %v2294 = vadd.f32 %v1690, %v2080
      %v2295 = vadd.f32 %v1691, %v2082
      %v2296 = vadd.f32 %v1692, %v2081
      %v2297 = vadd.f32 %v1693, %v2085
      %v2298 = vadd.f32 %v1694, %v2087
      %v2299 = vadd.f32 %v1695, %v2089
      %v2300 = vadd.f32 %v1696, %v2088
      %v2301 = vadd.f32 %v1697, %v2092
      %v2302 = vadd.f32 %v1698, %v2094
      %v2303 = vadd.f32 %v1699, %v2096
      %v2304 = vadd.f32 %v1700, %v2095
      %v2305 = vld [vmem:[%s1 + $0x3] sm:$0x1]
      %2307 = vset.pattern.permute.xlu0 0
      %2308 = vperm.xlu0 %2307, %v356
      %v2309 = vpop.permute.xlu0 %2308
      %2312 = vset.pattern.permute.xlu0 0
      %2313 = vperm.xlu0 %2312, %v357
      %v2314 = vpop.permute.xlu0 %2313
      %2317 = vset.pattern.permute.xlu0 0
      %2318 = vperm.xlu0 %2317, %v358
      %v2319 = vpop.permute.xlu0 %2318
      %2322 = vset.pattern.permute.xlu0 0
      %2323 = vperm.xlu0 %2322, %v359
      %v2324 = vpop.permute.xlu0 %2323
      %v2326 = vlaneseq
      %v2327 = vshrl.u32 %v2326, 7
      %v2328 = vsub.s32 0, %v2327
      %v2329 = vrot.slane %v2305, %v2328
      %v2330 = vmul.f32 %v388, %v2329
      %v2331 = vmul.f32 %v393, %v2329
      %v2332 = vmul.f32 %v398, %v2329
      %v2333 = vmul.f32 %v403, %v2329
      %v2334 = vmul.f32 %v408, %v2329
      %v2335 = vmul.f32 %v413, %v2329
      %v2336 = vmul.f32 %v418, %v2329
      %v2337 = vmul.f32 %v423, %v2329
      %v2338 = vmul.f32 %v428, %v2329
      %v2339 = vmul.f32 %v433, %v2329
      %v2340 = vmul.f32 %v438, %v2329
      %v2341 = vmul.f32 %v443, %v2329
      %v2342 = vmul.f32 %v448, %v2329
      %v2343 = vmul.f32 %v453, %v2329
      %v2344 = vmul.f32 %v458, %v2329
      %v2345 = vmul.f32 %v463, %v2329
      %v2346 = vmul.f32 %v468, %v2329
      %v2347 = vmul.f32 %v473, %v2329
      %v2348 = vmul.f32 %v478, %v2329
      %v2349 = vmul.f32 %v483, %v2329
      %v2350 = vmul.f32 %v488, %v2329
      %v2351 = vmul.f32 %v493, %v2329
      %v2352 = vmul.f32 %v498, %v2329
      %v2353 = vmul.f32 %v503, %v2329
      %v2354 = vmul.f32 %v508, %v2329
      %v2355 = vmul.f32 %v513, %v2329
      %v2356 = vmul.f32 %v518, %v2329
      %v2357 = vmul.f32 %v523, %v2329
      %v2358 = vmul.f32 %v528, %v2329
      %v2359 = vmul.f32 %v533, %v2329
      %v2360 = vmul.f32 %v538, %v2329
      %v2361 = vmul.f32 %v543, %v2329
      %v2362 = vmul.f32 %v548, %v2329
      %v2363 = vmul.f32 %v553, %v2329
      %v2364 = vmul.f32 %v558, %v2329
      %v2365 = vmul.f32 %v563, %v2329
      %v2366 = vmul.f32 %v568, %v2329
      %v2367 = vmul.f32 %v573, %v2329
      %v2368 = vmul.f32 %v578, %v2329
      %v2369 = vmul.f32 %v583, %v2329
      %v2370 = vmul.f32 %v588, %v2329
      %v2371 = vmul.f32 %v593, %v2329
      %v2372 = vmul.f32 %v598, %v2329
      %v2373 = vmul.f32 %v603, %v2329
      %v2374 = vmul.f32 %v608, %v2329
      %v2375 = vmul.f32 %v613, %v2329
      %v2376 = vmul.f32 %v618, %v2329
      %v2377 = vmul.f32 %v623, %v2329
      %v2378 = vmul.f32 %v628, %v2329
      %v2379 = vmul.f32 %v633, %v2329
      %v2380 = vmul.f32 %v638, %v2329
      %v2381 = vmul.f32 %v643, %v2329
      %v2382 = vmul.f32 %v648, %v2329
      %v2383 = vmul.f32 %v653, %v2329
      %v2384 = vmul.f32 %v658, %v2329
      %v2385 = vmul.f32 %v663, %v2329
      %v2386 = vmul.f32 %v668, %v2329
      %v2387 = vmul.f32 %v673, %v2329
      %v2388 = vmul.f32 %v678, %v2329
      %v2389 = vmul.f32 %v683, %v2329
      %v2390 = vmul.f32 %v688, %v2329
      %v2391 = vmul.f32 %v693, %v2329
      %v2392 = vmul.f32 %v698, %v2329
      %v2393 = vmul.f32 %v703, %v2329
      %v2394 = vmul.f32 %v708, %v2329
      %v2395 = vmul.f32 %v713, %v2329
      %v2396 = vmul.f32 %v718, %v2329
      %v2397 = vmul.f32 %v723, %v2329
      %v2398 = vmul.f32 %v728, %v2329
      %v2399 = vmul.f32 %v733, %v2329
      %v2400 = vmul.f32 %v738, %v2329
      %v2401 = vmul.f32 %v743, %v2329
      %v2402 = vmul.f32 %v748, %v2329
      %v2403 = vmul.f32 %v753, %v2329
      %v2404 = vmul.f32 %v758, %v2329
      %v2405 = vmul.f32 %v763, %v2329
      %v2406 = vmul.f32 %v768, %v2329
      %v2407 = vmul.f32 %v773, %v2329
      %v2408 = vmul.f32 %v778, %v2329
      %v2409 = vmul.f32 %v783, %v2329
      %v2410 = vmul.f32 %v788, %v2329
      %v2411 = vmul.f32 %v793, %v2329
      %v2412 = vmul.f32 %v798, %v2329
      %v2413 = vmul.f32 %v803, %v2329
      %v2414 = vmul.f32 %v808, %v2329
      %v2415 = vmul.f32 %v813, %v2329
      %v2416 = vmul.f32 %v818, %v2329
      %v2417 = vmul.f32 %v823, %v2329
      %v2418 = vmul.f32 %v828, %v2329
      %v2419 = vmul.f32 %v833, %v2329
      %v2420 = vmul.f32 %v838, %v2329
      %v2421 = vmul.f32 %v843, %v2329
      %v2422 = vmul.f32 %v848, %v2329
      %v2423 = vmul.f32 %v853, %v2329
      %v2424 = vmul.f32 %v858, %v2329
      %v2425 = vmul.f32 %v863, %v2329
      %v2426 = vmul.f32 %v868, %v2329
      %v2427 = vmul.f32 %v873, %v2329
      %v2428 = vmul.f32 %v878, %v2329
      %v2429 = vmul.f32 %v883, %v2329
      %v2430 = vmul.f32 %v2309, %v2329
      %v2431 = vmul.f32 %v2314, %v2329
      %v2432 = vmul.f32 %v2319, %v2329
      %v2433 = vmul.f32 %v2324, %v2329
      %v2434 = vadd.f32 %v2201, %v2330
      %v2435 = vadd.f32 %v2202, %v2331
      %v2436 = vadd.f32 %v2203, %v2332
      %v2437 = vadd.f32 %v2204, %v2333
      %v2438 = vadd.f32 %v2205, %v2334
      %v2439 = vadd.f32 %v2206, %v2335
      %v2440 = vadd.f32 %v2207, %v2336
      %v2441 = vadd.f32 %v2208, %v2337
      %v2442 = vadd.f32 %v2209, %v2338
      %v2443 = vadd.f32 %v2210, %v2339
      %v2444 = vadd.f32 %v2211, %v2340
      %v2445 = vadd.f32 %v2212, %v2341
      %v2446 = vadd.f32 %v2213, %v2342
      %v2447 = vadd.f32 %v2214, %v2343
      %v2448 = vadd.f32 %v2215, %v2344
      %v2449 = vadd.f32 %v2216, %v2345
      %v2450 = vadd.f32 %v2217, %v2346
      %v2451 = vadd.f32 %v2218, %v2347
      %v2452 = vadd.f32 %v2219, %v2348
      %v2453 = vadd.f32 %v2220, %v2349
      %v2454 = vadd.f32 %v2221, %v2350
      %v2455 = vadd.f32 %v2222, %v2351
      %v2456 = vadd.f32 %v2223, %v2352
      %v2457 = vadd.f32 %v2224, %v2353
      %v2458 = vadd.f32 %v2225, %v2354
      %v2459 = vadd.f32 %v2226, %v2355
      %v2460 = vadd.f32 %v2227, %v2356
      %v2461 = vadd.f32 %v2228, %v2357
      %v2462 = vadd.f32 %v2229, %v2358
      %v2463 = vadd.f32 %v2230, %v2359
      %v2464 = vadd.f32 %v2231, %v2360
      %v2465 = vadd.f32 %v2232, %v2361
      %v2466 = vadd.f32 %v2233, %v2362
      %v2467 = vadd.f32 %v2234, %v2363
      %v2468 = vadd.f32 %v2235, %v2364
      %v2469 = vadd.f32 %v2236, %v2365
      %v2470 = vadd.f32 %v2237, %v2366
      %v2471 = vadd.f32 %v2238, %v2367
      %v2472 = vadd.f32 %v2239, %v2368
      %v2473 = vadd.f32 %v2240, %v2369
      %v2474 = vadd.f32 %v2241, %v2370
      %v2475 = vadd.f32 %v2242, %v2371
      %v2476 = vadd.f32 %v2243, %v2372
      %v2477 = vadd.f32 %v2244, %v2373
      %v2478 = vadd.f32 %v2245, %v2374
      %v2479 = vadd.f32 %v2246, %v2375
      %v2480 = vadd.f32 %v2247, %v2376
      %v2481 = vadd.f32 %v2248, %v2377
      %v2482 = vadd.f32 %v2249, %v2378
      %v2483 = vadd.f32 %v2250, %v2379
      %v2484 = vadd.f32 %v2251, %v2380
      %v2485 = vadd.f32 %v2252, %v2381
      %v2486 = vadd.f32 %v2253, %v2382
      %v2487 = vadd.f32 %v2254, %v2383
      %v2488 = vadd.f32 %v2255, %v2384
      %v2489 = vadd.f32 %v2256, %v2385
      %v2490 = vadd.f32 %v2257, %v2386
      %v2491 = vadd.f32 %v2258, %v2387
      %v2492 = vadd.f32 %v2259, %v2388
      %v2493 = vadd.f32 %v2260, %v2389
      %v2494 = vadd.f32 %v2261, %v2390
      %v2495 = vadd.f32 %v2262, %v2391
      %v2496 = vadd.f32 %v2263, %v2392
      %v2497 = vadd.f32 %v2264, %v2393
      %v2498 = vadd.f32 %v2265, %v2394
      %v2499 = vadd.f32 %v2266, %v2395
      %v2500 = vadd.f32 %v2267, %v2396
      %v2501 = vadd.f32 %v2268, %v2397
      %v2502 = vadd.f32 %v2269, %v2398
      %v2503 = vadd.f32 %v2270, %v2399
      %v2504 = vadd.f32 %v2271, %v2400
      %v2505 = vadd.f32 %v2272, %v2401
      %v2506 = vadd.f32 %v2273, %v2402
      %v2507 = vadd.f32 %v2274, %v2403
      %v2508 = vadd.f32 %v2275, %v2404
      %v2509 = vadd.f32 %v2276, %v2405
      %v2510 = vadd.f32 %v2277, %v2406
      %v2511 = vadd.f32 %v2278, %v2407
      %v2512 = vadd.f32 %v2279, %v2408
      %v2513 = vadd.f32 %v2280, %v2409
      %v2514 = vadd.f32 %v2281, %v2410
      %v2515 = vadd.f32 %v2282, %v2411
      %v2516 = vadd.f32 %v2283, %v2412
      %v2517 = vadd.f32 %v2284, %v2413
      %v2518 = vadd.f32 %v2285, %v2414
      %v2519 = vadd.f32 %v2286, %v2415
      %v2520 = vadd.f32 %v2287, %v2416
      %v2521 = vadd.f32 %v2288, %v2417
      %v2522 = vadd.f32 %v2289, %v2418
      %v2523 = vadd.f32 %v2290, %v2419
      %v2524 = vadd.f32 %v2291, %v2420
      %v2525 = vadd.f32 %v2292, %v2421
      %v2526 = vadd.f32 %v2293, %v2422
      %v2527 = vadd.f32 %v2294, %v2423
      %v2528 = vadd.f32 %v2295, %v2424
      %v2529 = vadd.f32 %v2296, %v2425
      %v2530 = vadd.f32 %v2297, %v2426
      %v2531 = vadd.f32 %v2298, %v2427
      %v2532 = vadd.f32 %v2299, %v2428
      %v2533 = vadd.f32 %v2300, %v2429
      %v2534 = vadd.f32 %v2301, %v2430
      %v2535 = vadd.f32 %v2302, %v2431
      %v2536 = vadd.f32 %v2303, %v2432
      %v2537 = vadd.f32 %v2304, %v2433
      %v2538 = vld [vmem:[%s1 + $0x4] sm:$0x1]
      %v2539 = vlaneseq
      %v2540 = vshrl.u32 %v2539, 7
      %v2541 = vsub.s32 0, %v2540
      %v2542 = vrot.slane %v2538, %v2541
      %v2543 = vmul.f32 %v388, %v2542
      %v2544 = vmul.f32 %v393, %v2542
      %v2545 = vmul.f32 %v398, %v2542
      %v2546 = vmul.f32 %v403, %v2542
      %v2547 = vmul.f32 %v408, %v2542
      %v2548 = vmul.f32 %v413, %v2542
      %v2549 = vmul.f32 %v418, %v2542
      %v2550 = vmul.f32 %v423, %v2542
      %v2551 = vmul.f32 %v428, %v2542
      %v2552 = vmul.f32 %v433, %v2542
      %v2553 = vmul.f32 %v438, %v2542
      %v2554 = vmul.f32 %v443, %v2542
      %v2555 = vmul.f32 %v448, %v2542
      %v2556 = vmul.f32 %v453, %v2542
      %v2557 = vmul.f32 %v458, %v2542
      %v2558 = vmul.f32 %v463, %v2542
      %v2559 = vmul.f32 %v468, %v2542
      %v2560 = vmul.f32 %v473, %v2542
      %v2561 = vmul.f32 %v478, %v2542
      %v2562 = vmul.f32 %v483, %v2542
      %v2563 = vmul.f32 %v488, %v2542
      %v2564 = vmul.f32 %v493, %v2542
      %v2565 = vmul.f32 %v498, %v2542
      %v2566 = vmul.f32 %v503, %v2542
      %v2567 = vmul.f32 %v508, %v2542
      %v2568 = vmul.f32 %v513, %v2542
      %v2569 = vmul.f32 %v518, %v2542
      %v2570 = vmul.f32 %v523, %v2542
      %v2571 = vmul.f32 %v528, %v2542
      %v2572 = vmul.f32 %v533, %v2542
      %v2573 = vmul.f32 %v538, %v2542
      %v2574 = vmul.f32 %v543, %v2542
      %v2575 = vmul.f32 %v548, %v2542
      %v2576 = vmul.f32 %v553, %v2542
      %v2577 = vmul.f32 %v558, %v2542
      %v2578 = vmul.f32 %v563, %v2542
      %v2579 = vmul.f32 %v568, %v2542
      %v2580 = vmul.f32 %v573, %v2542
      %v2581 = vmul.f32 %v578, %v2542
      %v2582 = vmul.f32 %v583, %v2542
      %v2583 = vmul.f32 %v588, %v2542
      %v2584 = vmul.f32 %v593, %v2542
      %v2585 = vmul.f32 %v598, %v2542
      %v2586 = vmul.f32 %v603, %v2542
      %v2587 = vmul.f32 %v608, %v2542
      %v2588 = vmul.f32 %v613, %v2542
      %v2589 = vmul.f32 %v618, %v2542
      %v2590 = vmul.f32 %v623, %v2542
      %v2591 = vmul.f32 %v628, %v2542
      %v2592 = vmul.f32 %v633, %v2542
      %v2593 = vmul.f32 %v638, %v2542
      %v2594 = vmul.f32 %v643, %v2542
      %v2595 = vmul.f32 %v648, %v2542
      %v2596 = vmul.f32 %v653, %v2542
      %v2597 = vmul.f32 %v658, %v2542
      %v2598 = vmul.f32 %v663, %v2542
      %v2599 = vmul.f32 %v668, %v2542
      %v2600 = vmul.f32 %v673, %v2542
      %v2601 = vmul.f32 %v678, %v2542
      %v2602 = vmul.f32 %v683, %v2542
      %v2603 = vmul.f32 %v688, %v2542
      %v2604 = vmul.f32 %v693, %v2542
      %v2605 = vmul.f32 %v698, %v2542
      %v2606 = vmul.f32 %v703, %v2542
      %v2607 = vmul.f32 %v708, %v2542
      %v2608 = vmul.f32 %v713, %v2542
      %v2609 = vmul.f32 %v718, %v2542
      %v2610 = vmul.f32 %v723, %v2542
      %v2611 = vmul.f32 %v728, %v2542
      %v2612 = vmul.f32 %v733, %v2542
      %v2613 = vmul.f32 %v738, %v2542
      %v2614 = vmul.f32 %v743, %v2542
      %v2615 = vmul.f32 %v748, %v2542
      %v2616 = vmul.f32 %v753, %v2542
      %v2617 = vmul.f32 %v758, %v2542
      %v2618 = vmul.f32 %v763, %v2542
      %v2619 = vmul.f32 %v768, %v2542
      %v2620 = vmul.f32 %v773, %v2542
      %v2621 = vmul.f32 %v778, %v2542
      %v2622 = vmul.f32 %v783, %v2542
      %v2623 = vmul.f32 %v788, %v2542
      %v2624 = vmul.f32 %v793, %v2542
      %v2625 = vmul.f32 %v798, %v2542
      %v2626 = vmul.f32 %v803, %v2542
      %v2627 = vmul.f32 %v808, %v2542
      %v2628 = vmul.f32 %v813, %v2542
      %v2629 = vmul.f32 %v818, %v2542
      %v2630 = vmul.f32 %v823, %v2542
      %v2631 = vmul.f32 %v828, %v2542
      %v2632 = vmul.f32 %v833, %v2542
      %v2633 = vmul.f32 %v838, %v2542
      %v2634 = vmul.f32 %v843, %v2542
      %v2635 = vmul.f32 %v848, %v2542
      %v2636 = vmul.f32 %v853, %v2542
      %v2637 = vmul.f32 %v858, %v2542
      %v2638 = vmul.f32 %v863, %v2542
      %v2639 = vmul.f32 %v868, %v2542
      %v2640 = vmul.f32 %v873, %v2542
      %v2641 = vmul.f32 %v878, %v2542
      %v2642 = vmul.f32 %v883, %v2542
      %v2643 = vmul.f32 %v2309, %v2542
      %v2644 = vmul.f32 %v2314, %v2542
      %v2645 = vmul.f32 %v2319, %v2542
      %v2646 = vmul.f32 %v2324, %v2542
      %v2751 = vrot.slane %v2543, 1
      %v2752 = vrot.slane %v2544, 1
      %v2753 = vsel %vm1310, %v2751, %v2752
      %v2754 = vrot.slane %v2545, 1
      %v2755 = vsel %vm1310, %v2752, %v2754
      %v2756 = vrot.slane %v2546, 1
      %v2757 = vsel %vm1310, %v2754, %v2756
      %v2758 = vrot.slane %v2547, 1
      %v2759 = vrot.slane %v2548, 1
      %v2760 = vsel %vm1310, %v2758, %v2759
      %v2761 = vrot.slane %v2549, 1
      %v2762 = vsel %vm1310, %v2759, %v2761
      %v2763 = vrot.slane %v2550, 1
      %v2764 = vsel %vm1310, %v2761, %v2763
      %v2765 = vrot.slane %v2551, 1
      %v2766 = vrot.slane %v2552, 1
      %v2767 = vsel %vm1310, %v2765, %v2766
      %v2768 = vrot.slane %v2553, 1
      %v2769 = vsel %vm1310, %v2766, %v2768
      %v2770 = vrot.slane %v2554, 1
      %v2771 = vsel %vm1310, %v2768, %v2770
      %v2772 = vrot.slane %v2555, 1
      %v2773 = vrot.slane %v2556, 1
      %v2774 = vsel %vm1310, %v2772, %v2773
      %v2775 = vrot.slane %v2557, 1
      %v2776 = vsel %vm1310, %v2773, %v2775
      %v2777 = vrot.slane %v2558, 1
      %v2778 = vsel %vm1310, %v2775, %v2777
      %v2779 = vrot.slane %v2559, 1
      %v2780 = vrot.slane %v2560, 1
      %v2781 = vsel %vm1310, %v2779, %v2780
      %v2782 = vrot.slane %v2561, 1
      %v2783 = vsel %vm1310, %v2780, %v2782
      %v2784 = vrot.slane %v2562, 1
      %v2785 = vsel %vm1310, %v2782, %v2784
      %v2786 = vrot.slane %v2563, 1
      %v2787 = vrot.slane %v2564, 1
      %v2788 = vsel %vm1310, %v2786, %v2787
      %v2789 = vrot.slane %v2565, 1
      %v2790 = vsel %vm1310, %v2787, %v2789
      %v2791 = vrot.slane %v2566, 1
      %v2792 = vsel %vm1310, %v2789, %v2791
      %v2793 = vrot.slane %v2567, 1
      %v2794 = vrot.slane %v2568, 1
      %v2795 = vsel %vm1310, %v2793, %v2794
      %v2796 = vrot.slane %v2569, 1
      %v2797 = vsel %vm1310, %v2794, %v2796
      %v2798 = vrot.slane %v2570, 1
      %v2799 = vsel %vm1310, %v2796, %v2798
      %v2800 = vrot.slane %v2571, 1
      %v2801 = vrot.slane %v2572, 1
      %v2802 = vsel %vm1310, %v2800, %v2801
      %v2803 = vrot.slane %v2573, 1
      %v2804 = vsel %vm1310, %v2801, %v2803
      %v2805 = vrot.slane %v2574, 1
      %v2806 = vsel %vm1310, %v2803, %v2805
      %v2807 = vrot.slane %v2575, 1
      %v2808 = vrot.slane %v2576, 1
      %v2809 = vsel %vm1310, %v2807, %v2808
      %v2810 = vrot.slane %v2577, 1
      %v2811 = vsel %vm1310, %v2808, %v2810
      %v2812 = vrot.slane %v2578, 1
      %v2813 = vsel %vm1310, %v2810, %v2812
      %v2814 = vrot.slane %v2579, 1
      %v2815 = vrot.slane %v2580, 1
      %v2816 = vsel %vm1310, %v2814, %v2815
      %v2817 = vrot.slane %v2581, 1
      %v2818 = vsel %vm1310, %v2815, %v2817
      %v2819 = vrot.slane %v2582, 1
      %v2820 = vsel %vm1310, %v2817, %v2819
      %v2821 = vrot.slane %v2583, 1
      %v2822 = vrot.slane %v2584, 1
      %v2823 = vsel %vm1310, %v2821, %v2822
      %v2824 = vrot.slane %v2585, 1
      %v2825 = vsel %vm1310, %v2822, %v2824
      %v2826 = vrot.slane %v2586, 1
      %v2827 = vsel %vm1310, %v2824, %v2826
      %v2828 = vrot.slane %v2587, 1
      %v2829 = vrot.slane %v2588, 1
      %v2830 = vsel %vm1310, %v2828, %v2829
      %v2831 = vrot.slane %v2589, 1
      %v2832 = vsel %vm1310, %v2829, %v2831
      %v2833 = vrot.slane %v2590, 1
      %v2834 = vsel %vm1310, %v2831, %v2833
      %v2835 = vrot.slane %v2591, 1
      %v2836 = vrot.slane %v2592, 1
      %v2837 = vsel %vm1310, %v2835, %v2836
      %v2838 = vrot.slane %v2593, 1
      %v2839 = vsel %vm1310, %v2836, %v2838
      %v2840 = vrot.slane %v2594, 1
      %v2841 = vsel %vm1310, %v2838, %v2840
      %v2842 = vrot.slane %v2595, 1
      %v2843 = vrot.slane %v2596, 1
      %v2844 = vsel %vm1310, %v2842, %v2843
      %v2845 = vrot.slane %v2597, 1
      %v2846 = vsel %vm1310, %v2843, %v2845
      %v2847 = vrot.slane %v2598, 1
      %v2848 = vsel %vm1310, %v2845, %v2847
      %v2849 = vrot.slane %v2599, 1
      %v2850 = vrot.slane %v2600, 1
      %v2851 = vsel %vm1310, %v2849, %v2850
      %v2852 = vrot.slane %v2601, 1
      %v2853 = vsel %vm1310, %v2850, %v2852
      %v2854 = vrot.slane %v2602, 1
      %v2855 = vsel %vm1310, %v2852, %v2854
      %v2856 = vrot.slane %v2603, 1
      %v2857 = vrot.slane %v2604, 1
      %v2858 = vsel %vm1310, %v2856, %v2857
      %v2859 = vrot.slane %v2605, 1
      %v2860 = vsel %vm1310, %v2857, %v2859
      %v2861 = vrot.slane %v2606, 1
      %v2862 = vsel %vm1310, %v2859, %v2861
      %v2863 = vrot.slane %v2607, 1
      %v2864 = vrot.slane %v2608, 1
      %v2865 = vsel %vm1310, %v2863, %v2864
      %v2866 = vrot.slane %v2609, 1
      %v2867 = vsel %vm1310, %v2864, %v2866
      %v2868 = vrot.slane %v2610, 1
      %v2869 = vsel %vm1310, %v2866, %v2868
      %v2870 = vrot.slane %v2611, 1
      %v2871 = vrot.slane %v2612, 1
      %v2872 = vsel %vm1310, %v2870, %v2871
      %v2873 = vrot.slane %v2613, 1
      %v2874 = vsel %vm1310, %v2871, %v2873
      %v2875 = vrot.slane %v2614, 1
      %v2876 = vsel %vm1310, %v2873, %v2875
      %v2877 = vrot.slane %v2615, 1
      %v2878 = vrot.slane %v2616, 1
      %v2879 = vsel %vm1310, %v2877, %v2878
      %v2880 = vrot.slane %v2617, 1
      %v2881 = vsel %vm1310, %v2878, %v2880
      %v2882 = vrot.slane %v2618, 1
      %v2883 = vsel %vm1310, %v2880, %v2882
      %v2884 = vrot.slane %v2619, 1
      %v2885 = vrot.slane %v2620, 1
      %v2886 = vsel %vm1310, %v2884, %v2885
      %v2887 = vrot.slane %v2621, 1
      %v2888 = vsel %vm1310, %v2885, %v2887
      %v2889 = vrot.slane %v2622, 1
      %v2890 = vsel %vm1310, %v2887, %v2889
      %v2891 = vrot.slane %v2623, 1
      %v2892 = vrot.slane %v2624, 1
      %v2893 = vsel %vm1310, %v2891, %v2892
      %v2894 = vrot.slane %v2625, 1
      %v2895 = vsel %vm1310, %v2892, %v2894
      %v2896 = vrot.slane %v2626, 1
      %v2897 = vsel %vm1310, %v2894, %v2896
      %v2898 = vrot.slane %v2627, 1
      %v2899 = vrot.slane %v2628, 1
      %v2900 = vsel %vm1310, %v2898, %v2899
      %v2901 = vrot.slane %v2629, 1
      %v2902 = vsel %vm1310, %v2899, %v2901
      %v2903 = vrot.slane %v2630, 1
      %v2904 = vsel %vm1310, %v2901, %v2903
      %v2905 = vrot.slane %v2631, 1
      %v2906 = vrot.slane %v2632, 1
      %v2907 = vsel %vm1310, %v2905, %v2906
      %v2908 = vrot.slane %v2633, 1
      %v2909 = vsel %vm1310, %v2906, %v2908
      %v2910 = vrot.slane %v2634, 1
      %v2911 = vsel %vm1310, %v2908, %v2910
      %v2912 = vrot.slane %v2635, 1
      %v2913 = vrot.slane %v2636, 1
      %v2914 = vsel %vm1310, %v2912, %v2913
      %v2915 = vrot.slane %v2637, 1
      %v2916 = vsel %vm1310, %v2913, %v2915
      %v2917 = vrot.slane %v2638, 1
      %v2918 = vsel %vm1310, %v2915, %v2917
      %v2919 = vrot.slane %v2639, 1
      %v2920 = vrot.slane %v2640, 1
      %v2921 = vsel %vm1310, %v2919, %v2920
      %v2922 = vrot.slane %v2641, 1
      %v2923 = vsel %vm1310, %v2920, %v2922
      %v2924 = vrot.slane %v2642, 1
      %v2925 = vsel %vm1310, %v2922, %v2924
      %v2926 = vrot.slane %v2643, 1
      %v2927 = vrot.slane %v2644, 1
      %v2928 = vsel %vm1310, %v2926, %v2927
      %v2929 = vrot.slane %v2645, 1
      %v2930 = vsel %vm1310, %v2927, %v2929
      %v2931 = vrot.slane %v2646, 1
      %v2932 = vsel %vm1310, %v2929, %v2931
      %v3037 = vadd.f32 %v2434, %v2753
      %v3038 = vadd.f32 %v2435, %v2755
      %v3039 = vadd.f32 %v2436, %v2757
      %v3040 = vadd.f32 %v2437, %v2756
      %v3041 = vadd.f32 %v2438, %v2760
      %v3042 = vadd.f32 %v2439, %v2762
      %v3043 = vadd.f32 %v2440, %v2764
      %v3044 = vadd.f32 %v2441, %v2763
      %v3045 = vadd.f32 %v2442, %v2767
      %v3046 = vadd.f32 %v2443, %v2769
      %v3047 = vadd.f32 %v2444, %v2771
      %v3048 = vadd.f32 %v2445, %v2770
      %v3049 = vadd.f32 %v2446, %v2774
      %v3050 = vadd.f32 %v2447, %v2776
      %v3051 = vadd.f32 %v2448, %v2778
      %v3052 = vadd.f32 %v2449, %v2777
      %v3053 = vadd.f32 %v2450, %v2781
      %v3054 = vadd.f32 %v2451, %v2783
      %v3055 = vadd.f32 %v2452, %v2785
      %v3056 = vadd.f32 %v2453, %v2784
      %v3057 = vadd.f32 %v2454, %v2788
      %v3058 = vadd.f32 %v2455, %v2790
      %v3059 = vadd.f32 %v2456, %v2792
      %v3060 = vadd.f32 %v2457, %v2791
      %v3061 = vadd.f32 %v2458, %v2795
      %v3062 = vadd.f32 %v2459, %v2797
      %v3063 = vadd.f32 %v2460, %v2799
      %v3064 = vadd.f32 %v2461, %v2798
      %v3065 = vadd.f32 %v2462, %v2802
      %v3066 = vadd.f32 %v2463, %v2804
      %v3067 = vadd.f32 %v2464, %v2806
      %v3068 = vadd.f32 %v2465, %v2805
      %v3069 = vadd.f32 %v2466, %v2809
      %v3070 = vadd.f32 %v2467, %v2811
      %v3071 = vadd.f32 %v2468, %v2813
      %v3072 = vadd.f32 %v2469, %v2812
      %v3073 = vadd.f32 %v2470, %v2816
      %v3074 = vadd.f32 %v2471, %v2818
      %v3075 = vadd.f32 %v2472, %v2820
      %v3076 = vadd.f32 %v2473, %v2819
      %v3077 = vadd.f32 %v2474, %v2823
      %v3078 = vadd.f32 %v2475, %v2825
      %v3079 = vadd.f32 %v2476, %v2827
      %v3080 = vadd.f32 %v2477, %v2826
      %v3081 = vadd.f32 %v2478, %v2830
      %v3082 = vadd.f32 %v2479, %v2832
      %v3083 = vadd.f32 %v2480, %v2834
      %v3084 = vadd.f32 %v2481, %v2833
      %v3085 = vadd.f32 %v2482, %v2837
      %v3086 = vadd.f32 %v2483, %v2839
      %v3087 = vadd.f32 %v2484, %v2841
      %v3088 = vadd.f32 %v2485, %v2840
      %v3089 = vadd.f32 %v2486, %v2844
      %v3090 = vadd.f32 %v2487, %v2846
      %v3091 = vadd.f32 %v2488, %v2848
      %v3092 = vadd.f32 %v2489, %v2847
      %v3093 = vadd.f32 %v2490, %v2851
      %v3094 = vadd.f32 %v2491, %v2853
      %v3095 = vadd.f32 %v2492, %v2855
      %v3096 = vadd.f32 %v2493, %v2854
      %v3097 = vadd.f32 %v2494, %v2858
      %v3098 = vadd.f32 %v2495, %v2860
      %v3099 = vadd.f32 %v2496, %v2862
      %v3100 = vadd.f32 %v2497, %v2861
      %v3101 = vadd.f32 %v2498, %v2865
      %v3102 = vadd.f32 %v2499, %v2867
      %v3103 = vadd.f32 %v2500, %v2869
      %v3104 = vadd.f32 %v2501, %v2868
      %v3105 = vadd.f32 %v2502, %v2872
      %v3106 = vadd.f32 %v2503, %v2874
      %v3107 = vadd.f32 %v2504, %v2876
      %v3108 = vadd.f32 %v2505, %v2875
      %v3109 = vadd.f32 %v2506, %v2879
      %v3110 = vadd.f32 %v2507, %v2881
      %v3111 = vadd.f32 %v2508, %v2883
      %v3112 = vadd.f32 %v2509, %v2882
      %v3113 = vadd.f32 %v2510, %v2886
      %v3114 = vadd.f32 %v2511, %v2888
      %v3115 = vadd.f32 %v2512, %v2890
      %v3116 = vadd.f32 %v2513, %v2889
      %v3117 = vadd.f32 %v2514, %v2893
      %v3118 = vadd.f32 %v2515, %v2895
      %v3119 = vadd.f32 %v2516, %v2897
      %v3120 = vadd.f32 %v2517, %v2896
      %v3121 = vadd.f32 %v2518, %v2900
      %v3122 = vadd.f32 %v2519, %v2902
      %v3123 = vadd.f32 %v2520, %v2904
      %v3124 = vadd.f32 %v2521, %v2903
      %v3125 = vadd.f32 %v2522, %v2907
      %v3126 = vadd.f32 %v2523, %v2909
      %v3127 = vadd.f32 %v2524, %v2911
      %v3128 = vadd.f32 %v2525, %v2910
      %v3129 = vadd.f32 %v2526, %v2914
      %v3130 = vadd.f32 %v2527, %v2916
      %v3131 = vadd.f32 %v2528, %v2918
      %v3132 = vadd.f32 %v2529, %v2917
      %v3133 = vadd.f32 %v2530, %v2921
      %v3134 = vadd.f32 %v2531, %v2923
      %v3135 = vadd.f32 %v2532, %v2925
      %v3136 = vadd.f32 %v2533, %v2924
      %v3137 = vadd.f32 %v2534, %v2928
      %v3138 = vadd.f32 %v2535, %v2930
      %v3139 = vadd.f32 %v2536, %v2932
      %v3140 = vadd.f32 %v2537, %v2931
      %v3141 = vld [vmem:[%s1 + $0x5] sm:$0x1]
      %v3142 = vlaneseq
      %v3143 = vshrl.u32 %v3142, 7
      %v3144 = vsub.s32 0, %v3143
      %v3145 = vrot.slane %v3141, %v3144
      %v3146 = vmul.f32 %v388, %v3145
      %v3147 = vmul.f32 %v393, %v3145
      %v3148 = vmul.f32 %v398, %v3145
      %v3149 = vmul.f32 %v403, %v3145
      %v3150 = vmul.f32 %v408, %v3145
      %v3151 = vmul.f32 %v413, %v3145
      %v3152 = vmul.f32 %v418, %v3145
      %v3153 = vmul.f32 %v423, %v3145
      %v3154 = vmul.f32 %v428, %v3145
      %v3155 = vmul.f32 %v433, %v3145
      %v3156 = vmul.f32 %v438, %v3145
      %v3157 = vmul.f32 %v443, %v3145
      %v3158 = vmul.f32 %v448, %v3145
      %v3159 = vmul.f32 %v453, %v3145
      %v3160 = vmul.f32 %v458, %v3145
      %v3161 = vmul.f32 %v463, %v3145
      %v3162 = vmul.f32 %v468, %v3145
      %v3163 = vmul.f32 %v473, %v3145
      %v3164 = vmul.f32 %v478, %v3145
      %v3165 = vmul.f32 %v483, %v3145
      %v3166 = vmul.f32 %v488, %v3145
      %v3167 = vmul.f32 %v493, %v3145
      %v3168 = vmul.f32 %v498, %v3145
      %v3169 = vmul.f32 %v503, %v3145
      %v3170 = vmul.f32 %v508, %v3145
      %v3171 = vmul.f32 %v513, %v3145
      %v3172 = vmul.f32 %v518, %v3145
      %v3173 = vmul.f32 %v523, %v3145
      %v3174 = vmul.f32 %v528, %v3145
      %v3175 = vmul.f32 %v533, %v3145
      %v3176 = vmul.f32 %v538, %v3145
      %v3177 = vmul.f32 %v543, %v3145
      %v3178 = vmul.f32 %v548, %v3145
      %v3179 = vmul.f32 %v553, %v3145
      %v3180 = vmul.f32 %v558, %v3145
      %v3181 = vmul.f32 %v563, %v3145
      %v3182 = vmul.f32 %v568, %v3145
      %v3183 = vmul.f32 %v573, %v3145
      %v3184 = vmul.f32 %v578, %v3145
      %v3185 = vmul.f32 %v583, %v3145
      %v3186 = vmul.f32 %v588, %v3145
      %v3187 = vmul.f32 %v593, %v3145
      %v3188 = vmul.f32 %v598, %v3145
      %v3189 = vmul.f32 %v603, %v3145
      %v3190 = vmul.f32 %v608, %v3145
      %v3191 = vmul.f32 %v613, %v3145
      %v3192 = vmul.f32 %v618, %v3145
      %v3193 = vmul.f32 %v623, %v3145
      %v3194 = vmul.f32 %v628, %v3145
      %v3195 = vmul.f32 %v633, %v3145
      %v3196 = vmul.f32 %v638, %v3145
      %v3197 = vmul.f32 %v643, %v3145
      %v3198 = vmul.f32 %v648, %v3145
      %v3199 = vmul.f32 %v653, %v3145
      %v3200 = vmul.f32 %v658, %v3145
      %v3201 = vmul.f32 %v663, %v3145
      %v3202 = vmul.f32 %v668, %v3145
      %v3203 = vmul.f32 %v673, %v3145
      %v3204 = vmul.f32 %v678, %v3145
      %v3205 = vmul.f32 %v683, %v3145
      %v3206 = vmul.f32 %v688, %v3145
      %v3207 = vmul.f32 %v693, %v3145
      %v3208 = vmul.f32 %v698, %v3145
      %v3209 = vmul.f32 %v703, %v3145
      %v3210 = vmul.f32 %v708, %v3145
      %v3211 = vmul.f32 %v713, %v3145
      %v3212 = vmul.f32 %v718, %v3145
      %v3213 = vmul.f32 %v723, %v3145
      %v3214 = vmul.f32 %v728, %v3145
      %v3215 = vmul.f32 %v733, %v3145
      %v3216 = vmul.f32 %v738, %v3145
      %v3217 = vmul.f32 %v743, %v3145
      %v3218 = vmul.f32 %v748, %v3145
      %v3219 = vmul.f32 %v753, %v3145
      %v3220 = vmul.f32 %v758, %v3145
      %v3221 = vmul.f32 %v763, %v3145
      %v3222 = vmul.f32 %v768, %v3145
      %v3223 = vmul.f32 %v773, %v3145
      %v3224 = vmul.f32 %v778, %v3145
      %v3225 = vmul.f32 %v783, %v3145
      %v3226 = vmul.f32 %v788, %v3145
      %v3227 = vmul.f32 %v793, %v3145
      %v3228 = vmul.f32 %v798, %v3145
      %v3229 = vmul.f32 %v803, %v3145
      %v3230 = vmul.f32 %v808, %v3145
      %v3231 = vmul.f32 %v813, %v3145
      %v3232 = vmul.f32 %v818, %v3145
      %v3233 = vmul.f32 %v823, %v3145
      %v3234 = vmul.f32 %v828, %v3145
      %v3235 = vmul.f32 %v833, %v3145
      %v3236 = vmul.f32 %v838, %v3145
      %v3237 = vmul.f32 %v843, %v3145
      %v3238 = vmul.f32 %v848, %v3145
      %v3239 = vmul.f32 %v853, %v3145
      %v3240 = vmul.f32 %v858, %v3145
      %v3241 = vmul.f32 %v863, %v3145
      %v3242 = vmul.f32 %v868, %v3145
      %v3243 = vmul.f32 %v873, %v3145
      %v3244 = vmul.f32 %v878, %v3145
      %v3245 = vmul.f32 %v883, %v3145
      %v3246 = vmul.f32 %v2309, %v3145
      %v3247 = vmul.f32 %v2314, %v3145
      %v3248 = vmul.f32 %v2319, %v3145
      %v3249 = vmul.f32 %v2324, %v3145
      %v3354 = vrot.slane %v3146, 2
      %v3355 = vrot.slane %v3147, 2
      %v3356 = vsel %vm1914, %v3354, %v3355
      %v3357 = vrot.slane %v3148, 2
      %v3358 = vsel %vm1914, %v3355, %v3357
      %v3359 = vrot.slane %v3149, 2
      %v3360 = vsel %vm1914, %v3357, %v3359
      %v3361 = vrot.slane %v3150, 2
      %v3362 = vrot.slane %v3151, 2
      %v3363 = vsel %vm1914, %v3361, %v3362
      %v3364 = vrot.slane %v3152, 2
      %v3365 = vsel %vm1914, %v3362, %v3364
      %v3366 = vrot.slane %v3153, 2
      %v3367 = vsel %vm1914, %v3364, %v3366
      %v3368 = vrot.slane %v3154, 2
      %v3369 = vrot.slane %v3155, 2
      %v3370 = vsel %vm1914, %v3368, %v3369
      %v3371 = vrot.slane %v3156, 2
      %v3372 = vsel %vm1914, %v3369, %v3371
      %v3373 = vrot.slane %v3157, 2
      %v3374 = vsel %vm1914, %v3371, %v3373
      %v3375 = vrot.slane %v3158, 2
      %v3376 = vrot.slane %v3159, 2
      %v3377 = vsel %vm1914, %v3375, %v3376
      %v3378 = vrot.slane %v3160, 2
      %v3379 = vsel %vm1914, %v3376, %v3378
      %v3380 = vrot.slane %v3161, 2
      %v3381 = vsel %vm1914, %v3378, %v3380
      %v3382 = vrot.slane %v3162, 2
      %v3383 = vrot.slane %v3163, 2
      %v3384 = vsel %vm1914, %v3382, %v3383
      %v3385 = vrot.slane %v3164, 2
      %v3386 = vsel %vm1914, %v3383, %v3385
      %v3387 = vrot.slane %v3165, 2
      %v3388 = vsel %vm1914, %v3385, %v3387
      %v3389 = vrot.slane %v3166, 2
      %v3390 = vrot.slane %v3167, 2
      %v3391 = vsel %vm1914, %v3389, %v3390
      %v3392 = vrot.slane %v3168, 2
      %v3393 = vsel %vm1914, %v3390, %v3392
      %v3394 = vrot.slane %v3169, 2
      %v3395 = vsel %vm1914, %v3392, %v3394
      %v3396 = vrot.slane %v3170, 2
      %v3397 = vrot.slane %v3171, 2
      %v3398 = vsel %vm1914, %v3396, %v3397
      %v3399 = vrot.slane %v3172, 2
      %v3400 = vsel %vm1914, %v3397, %v3399
      %v3401 = vrot.slane %v3173, 2
      %v3402 = vsel %vm1914, %v3399, %v3401
      %v3403 = vrot.slane %v3174, 2
      %v3404 = vrot.slane %v3175, 2
      %v3405 = vsel %vm1914, %v3403, %v3404
      %v3406 = vrot.slane %v3176, 2
      %v3407 = vsel %vm1914, %v3404, %v3406
      %v3408 = vrot.slane %v3177, 2
      %v3409 = vsel %vm1914, %v3406, %v3408
      %v3410 = vrot.slane %v3178, 2
      %v3411 = vrot.slane %v3179, 2
      %v3412 = vsel %vm1914, %v3410, %v3411
      %v3413 = vrot.slane %v3180, 2
      %v3414 = vsel %vm1914, %v3411, %v3413
      %v3415 = vrot.slane %v3181, 2
      %v3416 = vsel %vm1914, %v3413, %v3415
      %v3417 = vrot.slane %v3182, 2
      %v3418 = vrot.slane %v3183, 2
      %v3419 = vsel %vm1914, %v3417, %v3418
      %v3420 = vrot.slane %v3184, 2
      %v3421 = vsel %vm1914, %v3418, %v3420
      %v3422 = vrot.slane %v3185, 2
      %v3423 = vsel %vm1914, %v3420, %v3422
      %v3424 = vrot.slane %v3186, 2
      %v3425 = vrot.slane %v3187, 2
      %v3426 = vsel %vm1914, %v3424, %v3425
      %v3427 = vrot.slane %v3188, 2
      %v3428 = vsel %vm1914, %v3425, %v3427
      %v3429 = vrot.slane %v3189, 2
      %v3430 = vsel %vm1914, %v3427, %v3429
      %v3431 = vrot.slane %v3190, 2
      %v3432 = vrot.slane %v3191, 2
      %v3433 = vsel %vm1914, %v3431, %v3432
      %v3434 = vrot.slane %v3192, 2
      %v3435 = vsel %vm1914, %v3432, %v3434
      %v3436 = vrot.slane %v3193, 2
      %v3437 = vsel %vm1914, %v3434, %v3436
      %v3438 = vrot.slane %v3194, 2
      %v3439 = vrot.slane %v3195, 2
      %v3440 = vsel %vm1914, %v3438, %v3439
      %v3441 = vrot.slane %v3196, 2
      %v3442 = vsel %vm1914, %v3439, %v3441
      %v3443 = vrot.slane %v3197, 2
      %v3444 = vsel %vm1914, %v3441, %v3443
      %v3445 = vrot.slane %v3198, 2
      %v3446 = vrot.slane %v3199, 2
      %v3447 = vsel %vm1914, %v3445, %v3446
      %v3448 = vrot.slane %v3200, 2
      %v3449 = vsel %vm1914, %v3446, %v3448
      %v3450 = vrot.slane %v3201, 2
      %v3451 = vsel %vm1914, %v3448, %v3450
      %v3452 = vrot.slane %v3202, 2
      %v3453 = vrot.slane %v3203, 2
      %v3454 = vsel %vm1914, %v3452, %v3453
      %v3455 = vrot.slane %v3204, 2
      %v3456 = vsel %vm1914, %v3453, %v3455
      %v3457 = vrot.slane %v3205, 2
      %v3458 = vsel %vm1914, %v3455, %v3457
      %v3459 = vrot.slane %v3206, 2
      %v3460 = vrot.slane %v3207, 2
      %v3461 = vsel %vm1914, %v3459, %v3460
      %v3462 = vrot.slane %v3208, 2
      %v3463 = vsel %vm1914, %v3460, %v3462
      %v3464 = vrot.slane %v3209, 2
      %v3465 = vsel %vm1914, %v3462, %v3464
      %v3466 = vrot.slane %v3210, 2
      %v3467 = vrot.slane %v3211, 2
      %v3468 = vsel %vm1914, %v3466, %v3467
      %v3469 = vrot.slane %v3212, 2
      %v3470 = vsel %vm1914, %v3467, %v3469
      %v3471 = vrot.slane %v3213, 2
      %v3472 = vsel %vm1914, %v3469, %v3471
      %v3473 = vrot.slane %v3214, 2
      %v3474 = vrot.slane %v3215, 2
      %v3475 = vsel %vm1914, %v3473, %v3474
      %v3476 = vrot.slane %v3216, 2
      %v3477 = vsel %vm1914, %v3474, %v3476
      %v3478 = vrot.slane %v3217, 2
      %v3479 = vsel %vm1914, %v3476, %v3478
      %v3480 = vrot.slane %v3218, 2
      %v3481 = vrot.slane %v3219, 2
      %v3482 = vsel %vm1914, %v3480, %v3481
      %v3483 = vrot.slane %v3220, 2
      %v3484 = vsel %vm1914, %v3481, %v3483
      %v3485 = vrot.slane %v3221, 2
      %v3486 = vsel %vm1914, %v3483, %v3485
      %v3487 = vrot.slane %v3222, 2
      %v3488 = vrot.slane %v3223, 2
      %v3489 = vsel %vm1914, %v3487, %v3488
      %v3490 = vrot.slane %v3224, 2
      %v3491 = vsel %vm1914, %v3488, %v3490
      %v3492 = vrot.slane %v3225, 2
      %v3493 = vsel %vm1914, %v3490, %v3492
      %v3494 = vrot.slane %v3226, 2
      %v3495 = vrot.slane %v3227, 2
      %v3496 = vsel %vm1914, %v3494, %v3495
      %v3497 = vrot.slane %v3228, 2
      %v3498 = vsel %vm1914, %v3495, %v3497
      %v3499 = vrot.slane %v3229, 2
      %v3500 = vsel %vm1914, %v3497, %v3499
      %v3501 = vrot.slane %v3230, 2
      %v3502 = vrot.slane %v3231, 2
      %v3503 = vsel %vm1914, %v3501, %v3502
      %v3504 = vrot.slane %v3232, 2
      %v3505 = vsel %vm1914, %v3502, %v3504
      %v3506 = vrot.slane %v3233, 2
      %v3507 = vsel %vm1914, %v3504, %v3506
      %v3508 = vrot.slane %v3234, 2
      %v3509 = vrot.slane %v3235, 2
      %v3510 = vsel %vm1914, %v3508, %v3509
      %v3511 = vrot.slane %v3236, 2
      %v3512 = vsel %vm1914, %v3509, %v3511
      %v3513 = vrot.slane %v3237, 2
      %v3514 = vsel %vm1914, %v3511, %v3513
      %v3515 = vrot.slane %v3238, 2
      %v3516 = vrot.slane %v3239, 2
      %v3517 = vsel %vm1914, %v3515, %v3516
      %v3518 = vrot.slane %v3240, 2
      %v3519 = vsel %vm1914, %v3516, %v3518
      %v3520 = vrot.slane %v3241, 2
      %v3521 = vsel %vm1914, %v3518, %v3520
      %v3522 = vrot.slane %v3242, 2
      %v3523 = vrot.slane %v3243, 2
      %v3524 = vsel %vm1914, %v3522, %v3523
      %v3525 = vrot.slane %v3244, 2
      %v3526 = vsel %vm1914, %v3523, %v3525
      %v3527 = vrot.slane %v3245, 2
      %v3528 = vsel %vm1914, %v3525, %v3527
      %v3529 = vrot.slane %v3246, 2
      %v3530 = vrot.slane %v3247, 2
      %v3531 = vsel %vm1914, %v3529, %v3530
      %v3532 = vrot.slane %v3248, 2
      %v3533 = vsel %vm1914, %v3530, %v3532
      %v3534 = vrot.slane %v3249, 2
      %v3535 = vsel %vm1914, %v3532, %v3534
      %v3640 = vadd.f32 %v3037, %v3356
      %v3641 = vadd.f32 %v3038, %v3358
      %v3642 = vadd.f32 %v3039, %v3360
      %v3643 = vadd.f32 %v3040, %v3359
      %v3644 = vadd.f32 %v3041, %v3363
      %v3645 = vadd.f32 %v3042, %v3365
      %v3646 = vadd.f32 %v3043, %v3367
      %v3647 = vadd.f32 %v3044, %v3366
      %v3648 = vadd.f32 %v3045, %v3370
      %v3649 = vadd.f32 %v3046, %v3372
      %v3650 = vadd.f32 %v3047, %v3374
      %v3651 = vadd.f32 %v3048, %v3373
      %v3652 = vadd.f32 %v3049, %v3377
      %v3653 = vadd.f32 %v3050, %v3379
      %v3654 = vadd.f32 %v3051, %v3381
      %v3655 = vadd.f32 %v3052, %v3380
      %v3656 = vadd.f32 %v3053, %v3384
      %v3657 = vadd.f32 %v3054, %v3386
      %v3658 = vadd.f32 %v3055, %v3388
      %v3659 = vadd.f32 %v3056, %v3387
      %v3660 = vadd.f32 %v3057, %v3391
      %v3661 = vadd.f32 %v3058, %v3393
      %v3662 = vadd.f32 %v3059, %v3395
      %v3663 = vadd.f32 %v3060, %v3394
      %v3664 = vadd.f32 %v3061, %v3398
      %v3665 = vadd.f32 %v3062, %v3400
      %v3666 = vadd.f32 %v3063, %v3402
      %v3667 = vadd.f32 %v3064, %v3401
      %v3668 = vadd.f32 %v3065, %v3405
      %v3669 = vadd.f32 %v3066, %v3407
      %v3670 = vadd.f32 %v3067, %v3409
      %v3671 = vadd.f32 %v3068, %v3408
      %v3672 = vadd.f32 %v3069, %v3412
      %v3673 = vadd.f32 %v3070, %v3414
      %v3674 = vadd.f32 %v3071, %v3416
      %v3675 = vadd.f32 %v3072, %v3415
      %v3676 = vadd.f32 %v3073, %v3419
      %v3677 = vadd.f32 %v3074, %v3421
      %v3678 = vadd.f32 %v3075, %v3423
      %v3679 = vadd.f32 %v3076, %v3422
      %v3680 = vadd.f32 %v3077, %v3426
      %v3681 = vadd.f32 %v3078, %v3428
      %v3682 = vadd.f32 %v3079, %v3430
      %v3683 = vadd.f32 %v3080, %v3429
      %v3684 = vadd.f32 %v3081, %v3433
      %v3685 = vadd.f32 %v3082, %v3435
      %v3686 = vadd.f32 %v3083, %v3437
      %v3687 = vadd.f32 %v3084, %v3436
      %v3688 = vadd.f32 %v3085, %v3440
      %v3689 = vadd.f32 %v3086, %v3442
      %v3690 = vadd.f32 %v3087, %v3444
      %v3691 = vadd.f32 %v3088, %v3443
      %v3692 = vadd.f32 %v3089, %v3447
      %v3693 = vadd.f32 %v3090, %v3449
      %v3694 = vadd.f32 %v3091, %v3451
      %v3695 = vadd.f32 %v3092, %v3450
      %v3696 = vadd.f32 %v3093, %v3454
      %v3697 = vadd.f32 %v3094, %v3456
      %v3698 = vadd.f32 %v3095, %v3458
      %v3699 = vadd.f32 %v3096, %v3457
      %v3700 = vadd.f32 %v3097, %v3461
      %v3701 = vadd.f32 %v3098, %v3463
      %v3702 = vadd.f32 %v3099, %v3465
      %v3703 = vadd.f32 %v3100, %v3464
      %v3704 = vadd.f32 %v3101, %v3468
      %v3705 = vadd.f32 %v3102, %v3470
      %v3706 = vadd.f32 %v3103, %v3472
      %v3707 = vadd.f32 %v3104, %v3471
      %v3708 = vadd.f32 %v3105, %v3475
      %v3709 = vadd.f32 %v3106, %v3477
      %v3710 = vadd.f32 %v3107, %v3479
      %v3711 = vadd.f32 %v3108, %v3478
      %v3712 = vadd.f32 %v3109, %v3482
      %v3713 = vadd.f32 %v3110, %v3484
      %v3714 = vadd.f32 %v3111, %v3486
      %v3715 = vadd.f32 %v3112, %v3485
      %v3716 = vadd.f32 %v3113, %v3489
      %v3717 = vadd.f32 %v3114, %v3491
      %v3718 = vadd.f32 %v3115, %v3493
      %v3719 = vadd.f32 %v3116, %v3492
      %v3720 = vadd.f32 %v3117, %v3496
      %v3721 = vadd.f32 %v3118, %v3498
      %v3722 = vadd.f32 %v3119, %v3500
      %v3723 = vadd.f32 %v3120, %v3499
      %v3724 = vadd.f32 %v3121, %v3503
      %v3725 = vadd.f32 %v3122, %v3505
      %v3726 = vadd.f32 %v3123, %v3507
      %v3727 = vadd.f32 %v3124, %v3506
      %v3728 = vadd.f32 %v3125, %v3510
      %v3729 = vadd.f32 %v3126, %v3512
      %v3730 = vadd.f32 %v3127, %v3514
      %v3731 = vadd.f32 %v3128, %v3513
      %v3732 = vadd.f32 %v3129, %v3517
      %v3733 = vadd.f32 %v3130, %v3519
      %v3734 = vadd.f32 %v3131, %v3521
      %v3735 = vadd.f32 %v3132, %v3520
      %v3736 = vadd.f32 %v3133, %v3524
      %v3737 = vadd.f32 %v3134, %v3526
      %v3738 = vadd.f32 %v3135, %v3528
      %v3739 = vadd.f32 %v3136, %v3527
      %v3740 = vadd.f32 %v3137, %v3531
      %v3741 = vadd.f32 %v3138, %v3533
      %v3742 = vadd.f32 %v3139, %v3535
      %v3743 = vadd.f32 %v3140, %v3534
      %v3744 = vld [vmem:[%s1 + $0x6] sm:$0x1]
      %3746 = vset.pattern.permute.xlu0 0
      %3747 = vperm.xlu0 %3746, %v360
      %v3748 = vpop.permute.xlu0 %3747
      %3751 = vset.pattern.permute.xlu0 0
      %3752 = vperm.xlu0 %3751, %v361
      %v3753 = vpop.permute.xlu0 %3752
      %3756 = vset.pattern.permute.xlu0 0
      %3757 = vperm.xlu0 %3756, %v362
      %v3758 = vpop.permute.xlu0 %3757
      %3761 = vset.pattern.permute.xlu0 0
      %3762 = vperm.xlu0 %3761, %v363
      %v3763 = vpop.permute.xlu0 %3762
      %v3765 = vlaneseq
      %v3766 = vshrl.u32 %v3765, 7
      %v3767 = vsub.s32 0, %v3766
      %v3768 = vrot.slane %v3744, %v3767
      %v3769 = vmul.f32 %v408, %v3768
      %v3770 = vmul.f32 %v413, %v3768
      %v3771 = vmul.f32 %v418, %v3768
      %v3772 = vmul.f32 %v423, %v3768
      %v3773 = vmul.f32 %v428, %v3768
      %v3774 = vmul.f32 %v433, %v3768
      %v3775 = vmul.f32 %v438, %v3768
      %v3776 = vmul.f32 %v443, %v3768
      %v3777 = vmul.f32 %v448, %v3768
      %v3778 = vmul.f32 %v453, %v3768
      %v3779 = vmul.f32 %v458, %v3768
      %v3780 = vmul.f32 %v463, %v3768
      %v3781 = vmul.f32 %v468, %v3768
      %v3782 = vmul.f32 %v473, %v3768
      %v3783 = vmul.f32 %v478, %v3768
      %v3784 = vmul.f32 %v483, %v3768
      %v3785 = vmul.f32 %v488, %v3768
      %v3786 = vmul.f32 %v493, %v3768
      %v3787 = vmul.f32 %v498, %v3768
      %v3788 = vmul.f32 %v503, %v3768
      %v3789 = vmul.f32 %v508, %v3768
      %v3790 = vmul.f32 %v513, %v3768
      %v3791 = vmul.f32 %v518, %v3768
      %v3792 = vmul.f32 %v523, %v3768
      %v3793 = vmul.f32 %v528, %v3768
      %v3794 = vmul.f32 %v533, %v3768
      %v3795 = vmul.f32 %v538, %v3768
      %v3796 = vmul.f32 %v543, %v3768
      %v3797 = vmul.f32 %v548, %v3768
      %v3798 = vmul.f32 %v553, %v3768
      %v3799 = vmul.f32 %v558, %v3768
      %v3800 = vmul.f32 %v563, %v3768
      %v3801 = vmul.f32 %v568, %v3768
      %v3802 = vmul.f32 %v573, %v3768
      %v3803 = vmul.f32 %v578, %v3768
      %v3804 = vmul.f32 %v583, %v3768
      %v3805 = vmul.f32 %v588, %v3768
      %v3806 = vmul.f32 %v593, %v3768
      %v3807 = vmul.f32 %v598, %v3768
      %v3808 = vmul.f32 %v603, %v3768
      %v3809 = vmul.f32 %v608, %v3768
      %v3810 = vmul.f32 %v613, %v3768
      %v3811 = vmul.f32 %v618, %v3768
      %v3812 = vmul.f32 %v623, %v3768
      %v3813 = vmul.f32 %v628, %v3768
      %v3814 = vmul.f32 %v633, %v3768
      %v3815 = vmul.f32 %v638, %v3768
      %v3816 = vmul.f32 %v643, %v3768
      %v3817 = vmul.f32 %v648, %v3768
      %v3818 = vmul.f32 %v653, %v3768
      %v3819 = vmul.f32 %v658, %v3768
      %v3820 = vmul.f32 %v663, %v3768
      %v3821 = vmul.f32 %v668, %v3768
      %v3822 = vmul.f32 %v673, %v3768
      %v3823 = vmul.f32 %v678, %v3768
      %v3824 = vmul.f32 %v683, %v3768
      %v3825 = vmul.f32 %v688, %v3768
      %v3826 = vmul.f32 %v693, %v3768
      %v3827 = vmul.f32 %v698, %v3768
      %v3828 = vmul.f32 %v703, %v3768
      %v3829 = vmul.f32 %v708, %v3768
      %v3830 = vmul.f32 %v713, %v3768
      %v3831 = vmul.f32 %v718, %v3768
      %v3832 = vmul.f32 %v723, %v3768
      %v3833 = vmul.f32 %v728, %v3768
      %v3834 = vmul.f32 %v733, %v3768
      %v3835 = vmul.f32 %v738, %v3768
      %v3836 = vmul.f32 %v743, %v3768
      %v3837 = vmul.f32 %v748, %v3768
      %v3838 = vmul.f32 %v753, %v3768
      %v3839 = vmul.f32 %v758, %v3768
      %v3840 = vmul.f32 %v763, %v3768
      %v3841 = vmul.f32 %v768, %v3768
      %v3842 = vmul.f32 %v773, %v3768
      %v3843 = vmul.f32 %v778, %v3768
      %v3844 = vmul.f32 %v783, %v3768
      %v3845 = vmul.f32 %v788, %v3768
      %v3846 = vmul.f32 %v793, %v3768
      %v3847 = vmul.f32 %v798, %v3768
      %v3848 = vmul.f32 %v803, %v3768
      %v3849 = vmul.f32 %v808, %v3768
      %v3850 = vmul.f32 %v813, %v3768
      %v3851 = vmul.f32 %v818, %v3768
      %v3852 = vmul.f32 %v823, %v3768
      %v3853 = vmul.f32 %v828, %v3768
      %v3854 = vmul.f32 %v833, %v3768
      %v3855 = vmul.f32 %v838, %v3768
      %v3856 = vmul.f32 %v843, %v3768
      %v3857 = vmul.f32 %v848, %v3768
      %v3858 = vmul.f32 %v853, %v3768
      %v3859 = vmul.f32 %v858, %v3768
      %v3860 = vmul.f32 %v863, %v3768
      %v3861 = vmul.f32 %v868, %v3768
      %v3862 = vmul.f32 %v873, %v3768
      %v3863 = vmul.f32 %v878, %v3768
      %v3864 = vmul.f32 %v883, %v3768
      %v3865 = vmul.f32 %v2309, %v3768
      %v3866 = vmul.f32 %v2314, %v3768
      %v3867 = vmul.f32 %v2319, %v3768
      %v3868 = vmul.f32 %v2324, %v3768
      %v3869 = vmul.f32 %v3748, %v3768
      %v3870 = vmul.f32 %v3753, %v3768
      %v3871 = vmul.f32 %v3758, %v3768
      %v3872 = vmul.f32 %v3763, %v3768
      %v3873 = vadd.f32 %v3640, %v3769
      %v3874 = vadd.f32 %v3641, %v3770
      %v3875 = vadd.f32 %v3642, %v3771
      %v3876 = vadd.f32 %v3643, %v3772
      %v3877 = vadd.f32 %v3644, %v3773
      %v3878 = vadd.f32 %v3645, %v3774
      %v3879 = vadd.f32 %v3646, %v3775
      %v3880 = vadd.f32 %v3647, %v3776
      %v3881 = vadd.f32 %v3648, %v3777
      %v3882 = vadd.f32 %v3649, %v3778
      %v3883 = vadd.f32 %v3650, %v3779
      %v3884 = vadd.f32 %v3651, %v3780
      %v3885 = vadd.f32 %v3652, %v3781
      %v3886 = vadd.f32 %v3653, %v3782
      %v3887 = vadd.f32 %v3654, %v3783
      %v3888 = vadd.f32 %v3655, %v3784
      %v3889 = vadd.f32 %v3656, %v3785
      %v3890 = vadd.f32 %v3657, %v3786
      %v3891 = vadd.f32 %v3658, %v3787
      %v3892 = vadd.f32 %v3659, %v3788
      %v3893 = vadd.f32 %v3660, %v3789
      %v3894 = vadd.f32 %v3661, %v3790
      %v3895 = vadd.f32 %v3662, %v3791
      %v3896 = vadd.f32 %v3663, %v3792
      %v3897 = vadd.f32 %v3664, %v3793
      %v3898 = vadd.f32 %v3665, %v3794
      %v3899 = vadd.f32 %v3666, %v3795
      %v3900 = vadd.f32 %v3667, %v3796
      %v3901 = vadd.f32 %v3668, %v3797
      %v3902 = vadd.f32 %v3669, %v3798
      %v3903 = vadd.f32 %v3670, %v3799
      %v3904 = vadd.f32 %v3671, %v3800
      %v3905 = vadd.f32 %v3672, %v3801
      %v3906 = vadd.f32 %v3673, %v3802
      %v3907 = vadd.f32 %v3674, %v3803
      %v3908 = vadd.f32 %v3675, %v3804
      %v3909 = vadd.f32 %v3676, %v3805
      %v3910 = vadd.f32 %v3677, %v3806
      %v3911 = vadd.f32 %v3678, %v3807
      %v3912 = vadd.f32 %v3679, %v3808
      %v3913 = vadd.f32 %v3680, %v3809
      %v3914 = vadd.f32 %v3681, %v3810
      %v3915 = vadd.f32 %v3682, %v3811
      %v3916 = vadd.f32 %v3683, %v3812
      %v3917 = vadd.f32 %v3684, %v3813
      %v3918 = vadd.f32 %v3685, %v3814
      %v3919 = vadd.f32 %v3686, %v3815
      %v3920 = vadd.f32 %v3687, %v3816
      %v3921 = vadd.f32 %v3688, %v3817
      %v3922 = vadd.f32 %v3689, %v3818
      %v3923 = vadd.f32 %v3690, %v3819
      %v3924 = vadd.f32 %v3691, %v3820
      %v3925 = vadd.f32 %v3692, %v3821
      %v3926 = vadd.f32 %v3693, %v3822
      %v3927 = vadd.f32 %v3694, %v3823
      %v3928 = vadd.f32 %v3695, %v3824
      %v3929 = vadd.f32 %v3696, %v3825
      %v3930 = vadd.f32 %v3697, %v3826
      %v3931 = vadd.f32 %v3698, %v3827
      %v3932 = vadd.f32 %v3699, %v3828
      %v3933 = vadd.f32 %v3700, %v3829
      %v3934 = vadd.f32 %v3701, %v3830
      %v3935 = vadd.f32 %v3702, %v3831
      %v3936 = vadd.f32 %v3703, %v3832
      %v3937 = vadd.f32 %v3704, %v3833
      %v3938 = vadd.f32 %v3705, %v3834
      %v3939 = vadd.f32 %v3706, %v3835
      %v3940 = vadd.f32 %v3707, %v3836
      %v3941 = vadd.f32 %v3708, %v3837
      %v3942 = vadd.f32 %v3709, %v3838
      %v3943 = vadd.f32 %v3710, %v3839
      %v3944 = vadd.f32 %v3711, %v3840
      %v3945 = vadd.f32 %v3712, %v3841
      %v3946 = vadd.f32 %v3713, %v3842
      %v3947 = vadd.f32 %v3714, %v3843
      %v3948 = vadd.f32 %v3715, %v3844
      %v3949 = vadd.f32 %v3716, %v3845
      %v3950 = vadd.f32 %v3717, %v3846
      %v3951 = vadd.f32 %v3718, %v3847
      %v3952 = vadd.f32 %v3719, %v3848
      %v3953 = vadd.f32 %v3720, %v3849
      %v3954 = vadd.f32 %v3721, %v3850
      %v3955 = vadd.f32 %v3722, %v3851
      %v3956 = vadd.f32 %v3723, %v3852
      %v3957 = vadd.f32 %v3724, %v3853
      %v3958 = vadd.f32 %v3725, %v3854
      %v3959 = vadd.f32 %v3726, %v3855
      %v3960 = vadd.f32 %v3727, %v3856
      %v3961 = vadd.f32 %v3728, %v3857
      %v3962 = vadd.f32 %v3729, %v3858
      %v3963 = vadd.f32 %v3730, %v3859
      %v3964 = vadd.f32 %v3731, %v3860
      %v3965 = vadd.f32 %v3732, %v3861
      %v3966 = vadd.f32 %v3733, %v3862
      %v3967 = vadd.f32 %v3734, %v3863
      %v3968 = vadd.f32 %v3735, %v3864
      %v3969 = vadd.f32 %v3736, %v3865
      %v3970 = vadd.f32 %v3737, %v3866
      %v3971 = vadd.f32 %v3738, %v3867
      %v3972 = vadd.f32 %v3739, %v3868
      %v3973 = vadd.f32 %v3740, %v3869
      %v3974 = vadd.f32 %v3741, %v3870
      %v3975 = vadd.f32 %v3742, %v3871
      %v3976 = vadd.f32 %v3743, %v3872
      %v3977 = vld [vmem:[%s1 + $0x7] sm:$0x1]
      %v3978 = vlaneseq
      %v3979 = vshrl.u32 %v3978, 7
      %v3980 = vsub.s32 0, %v3979
      %v3981 = vrot.slane %v3977, %v3980
      %v3982 = vmul.f32 %v408, %v3981
      %v3983 = vmul.f32 %v413, %v3981
      %v3984 = vmul.f32 %v418, %v3981
      %v3985 = vmul.f32 %v423, %v3981
      %v3986 = vmul.f32 %v428, %v3981
      %v3987 = vmul.f32 %v433, %v3981
      %v3988 = vmul.f32 %v438, %v3981
      %v3989 = vmul.f32 %v443, %v3981
      %v3990 = vmul.f32 %v448, %v3981
      %v3991 = vmul.f32 %v453, %v3981
      %v3992 = vmul.f32 %v458, %v3981
      %v3993 = vmul.f32 %v463, %v3981
      %v3994 = vmul.f32 %v468, %v3981
      %v3995 = vmul.f32 %v473, %v3981
      %v3996 = vmul.f32 %v478, %v3981
      %v3997 = vmul.f32 %v483, %v3981
      %v3998 = vmul.f32 %v488, %v3981
      %v3999 = vmul.f32 %v493, %v3981
      %v4000 = vmul.f32 %v498, %v3981
      %v4001 = vmul.f32 %v503, %v3981
      %v4002 = vmul.f32 %v508, %v3981
      %v4003 = vmul.f32 %v513, %v3981
      %v4004 = vmul.f32 %v518, %v3981
      %v4005 = vmul.f32 %v523, %v3981
      %v4006 = vmul.f32 %v528, %v3981
      %v4007 = vmul.f32 %v533, %v3981
      %v4008 = vmul.f32 %v538, %v3981
      %v4009 = vmul.f32 %v543, %v3981
      %v4010 = vmul.f32 %v548, %v3981
      %v4011 = vmul.f32 %v553, %v3981
      %v4012 = vmul.f32 %v558, %v3981
      %v4013 = vmul.f32 %v563, %v3981
      %v4014 = vmul.f32 %v568, %v3981
      %v4015 = vmul.f32 %v573, %v3981
      %v4016 = vmul.f32 %v578, %v3981
      %v4017 = vmul.f32 %v583, %v3981
      %v4018 = vmul.f32 %v588, %v3981
      %v4019 = vmul.f32 %v593, %v3981
      %v4020 = vmul.f32 %v598, %v3981
      %v4021 = vmul.f32 %v603, %v3981
      %v4022 = vmul.f32 %v608, %v3981
      %v4023 = vmul.f32 %v613, %v3981
      %v4024 = vmul.f32 %v618, %v3981
      %v4025 = vmul.f32 %v623, %v3981
      %v4026 = vmul.f32 %v628, %v3981
      %v4027 = vmul.f32 %v633, %v3981
      %v4028 = vmul.f32 %v638, %v3981
      %v4029 = vmul.f32 %v643, %v3981
      %v4030 = vmul.f32 %v648, %v3981
      %v4031 = vmul.f32 %v653, %v3981
      %v4032 = vmul.f32 %v658, %v3981
      %v4033 = vmul.f32 %v663, %v3981
      %v4034 = vmul.f32 %v668, %v3981
      %v4035 = vmul.f32 %v673, %v3981
      %v4036 = vmul.f32 %v678, %v3981
      %v4037 = vmul.f32 %v683, %v3981
      %v4038 = vmul.f32 %v688, %v3981
      %v4039 = vmul.f32 %v693, %v3981
      %v4040 = vmul.f32 %v698, %v3981
      %v4041 = vmul.f32 %v703, %v3981
      %v4042 = vmul.f32 %v708, %v3981
      %v4043 = vmul.f32 %v713, %v3981
      %v4044 = vmul.f32 %v718, %v3981
      %v4045 = vmul.f32 %v723, %v3981
      %v4046 = vmul.f32 %v728, %v3981
      %v4047 = vmul.f32 %v733, %v3981
      %v4048 = vmul.f32 %v738, %v3981
      %v4049 = vmul.f32 %v743, %v3981
      %v4050 = vmul.f32 %v748, %v3981
      %v4051 = vmul.f32 %v753, %v3981
      %v4052 = vmul.f32 %v758, %v3981
      %v4053 = vmul.f32 %v763, %v3981
      %v4054 = vmul.f32 %v768, %v3981
      %v4055 = vmul.f32 %v773, %v3981
      %v4056 = vmul.f32 %v778, %v3981
      %v4057 = vmul.f32 %v783, %v3981
      %v4058 = vmul.f32 %v788, %v3981
      %v4059 = vmul.f32 %v793, %v3981
      %v4060 = vmul.f32 %v798, %v3981
      %v4061 = vmul.f32 %v803, %v3981
      %v4062 = vmul.f32 %v808, %v3981
      %v4063 = vmul.f32 %v813, %v3981
      %v4064 = vmul.f32 %v818, %v3981
      %v4065 = vmul.f32 %v823, %v3981
      %v4066 = vmul.f32 %v828, %v3981
      %v4067 = vmul.f32 %v833, %v3981
      %v4068 = vmul.f32 %v838, %v3981
      %v4069 = vmul.f32 %v843, %v3981
      %v4070 = vmul.f32 %v848, %v3981
      %v4071 = vmul.f32 %v853, %v3981
      %v4072 = vmul.f32 %v858, %v3981
      %v4073 = vmul.f32 %v863, %v3981
      %v4074 = vmul.f32 %v868, %v3981
      %v4075 = vmul.f32 %v873, %v3981
      %v4076 = vmul.f32 %v878, %v3981
      %v4077 = vmul.f32 %v883, %v3981
      %v4078 = vmul.f32 %v2309, %v3981
      %v4079 = vmul.f32 %v2314, %v3981
      %v4080 = vmul.f32 %v2319, %v3981
      %v4081 = vmul.f32 %v2324, %v3981
      %v4082 = vmul.f32 %v3748, %v3981
      %v4083 = vmul.f32 %v3753, %v3981
      %v4084 = vmul.f32 %v3758, %v3981
      %v4085 = vmul.f32 %v3763, %v3981
      %v4190 = vrot.slane %v3982, 1
      %v4191 = vrot.slane %v3983, 1
      %v4192 = vsel %vm1310, %v4190, %v4191
      %v4193 = vrot.slane %v3984, 1
      %v4194 = vsel %vm1310, %v4191, %v4193
      %v4195 = vrot.slane %v3985, 1
      %v4196 = vsel %vm1310, %v4193, %v4195
      %v4197 = vrot.slane %v3986, 1
      %v4198 = vrot.slane %v3987, 1
      %v4199 = vsel %vm1310, %v4197, %v4198
      %v4200 = vrot.slane %v3988, 1
      %v4201 = vsel %vm1310, %v4198, %v4200
      %v4202 = vrot.slane %v3989, 1
      %v4203 = vsel %vm1310, %v4200, %v4202
      %v4204 = vrot.slane %v3990, 1
      %v4205 = vrot.slane %v3991, 1
      %v4206 = vsel %vm1310, %v4204, %v4205
      %v4207 = vrot.slane %v3992, 1
      %v4208 = vsel %vm1310, %v4205, %v4207
      %v4209 = vrot.slane %v3993, 1
      %v4210 = vsel %vm1310, %v4207, %v4209
      %v4211 = vrot.slane %v3994, 1
      %v4212 = vrot.slane %v3995, 1
      %v4213 = vsel %vm1310, %v4211, %v4212
      %v4214 = vrot.slane %v3996, 1
      %v4215 = vsel %vm1310, %v4212, %v4214
      %v4216 = vrot.slane %v3997, 1
      %v4217 = vsel %vm1310, %v4214, %v4216
      %v4218 = vrot.slane %v3998, 1
      %v4219 = vrot.slane %v3999, 1
      %v4220 = vsel %vm1310, %v4218, %v4219
      %v4221 = vrot.slane %v4000, 1
      %v4222 = vsel %vm1310, %v4219, %v4221
      %v4223 = vrot.slane %v4001, 1
      %v4224 = vsel %vm1310, %v4221, %v4223
      %v4225 = vrot.slane %v4002, 1
      %v4226 = vrot.slane %v4003, 1
      %v4227 = vsel %vm1310, %v4225, %v4226
      %v4228 = vrot.slane %v4004, 1
      %v4229 = vsel %vm1310, %v4226, %v4228
      %v4230 = vrot.slane %v4005, 1
      %v4231 = vsel %vm1310, %v4228, %v4230
      %v4232 = vrot.slane %v4006, 1
      %v4233 = vrot.slane %v4007, 1
      %v4234 = vsel %vm1310, %v4232, %v4233
      %v4235 = vrot.slane %v4008, 1
      %v4236 = vsel %vm1310, %v4233, %v4235
      %v4237 = vrot.slane %v4009, 1
      %v4238 = vsel %vm1310, %v4235, %v4237
      %v4239 = vrot.slane %v4010, 1
      %v4240 = vrot.slane %v4011, 1
      %v4241 = vsel %vm1310, %v4239, %v4240
      %v4242 = vrot.slane %v4012, 1
      %v4243 = vsel %vm1310, %v4240, %v4242
      %v4244 = vrot.slane %v4013, 1
      %v4245 = vsel %vm1310, %v4242, %v4244
      %v4246 = vrot.slane %v4014, 1
      %v4247 = vrot.slane %v4015, 1
      %v4248 = vsel %vm1310, %v4246, %v4247
      %v4249 = vrot.slane %v4016, 1
      %v4250 = vsel %vm1310, %v4247, %v4249
      %v4251 = vrot.slane %v4017, 1
      %v4252 = vsel %vm1310, %v4249, %v4251
      %v4253 = vrot.slane %v4018, 1
      %v4254 = vrot.slane %v4019, 1
      %v4255 = vsel %vm1310, %v4253, %v4254
      %v4256 = vrot.slane %v4020, 1
      %v4257 = vsel %vm1310, %v4254, %v4256
      %v4258 = vrot.slane %v4021, 1
      %v4259 = vsel %vm1310, %v4256, %v4258
      %v4260 = vrot.slane %v4022, 1
      %v4261 = vrot.slane %v4023, 1
      %v4262 = vsel %vm1310, %v4260, %v4261
      %v4263 = vrot.slane %v4024, 1
      %v4264 = vsel %vm1310, %v4261, %v4263
      %v4265 = vrot.slane %v4025, 1
      %v4266 = vsel %vm1310, %v4263, %v4265
      %v4267 = vrot.slane %v4026, 1
      %v4268 = vrot.slane %v4027, 1
      %v4269 = vsel %vm1310, %v4267, %v4268
      %v4270 = vrot.slane %v4028, 1
      %v4271 = vsel %vm1310, %v4268, %v4270
      %v4272 = vrot.slane %v4029, 1
      %v4273 = vsel %vm1310, %v4270, %v4272
      %v4274 = vrot.slane %v4030, 1
      %v4275 = vrot.slane %v4031, 1
      %v4276 = vsel %vm1310, %v4274, %v4275
      %v4277 = vrot.slane %v4032, 1
      %v4278 = vsel %vm1310, %v4275, %v4277
      %v4279 = vrot.slane %v4033, 1
      %v4280 = vsel %vm1310, %v4277, %v4279
      %v4281 = vrot.slane %v4034, 1
      %v4282 = vrot.slane %v4035, 1
      %v4283 = vsel %vm1310, %v4281, %v4282
      %v4284 = vrot.slane %v4036, 1
      %v4285 = vsel %vm1310, %v4282, %v4284
      %v4286 = vrot.slane %v4037, 1
      %v4287 = vsel %vm1310, %v4284, %v4286
      %v4288 = vrot.slane %v4038, 1
      %v4289 = vrot.slane %v4039, 1
      %v4290 = vsel %vm1310, %v4288, %v4289
      %v4291 = vrot.slane %v4040, 1
      %v4292 = vsel %vm1310, %v4289, %v4291
      %v4293 = vrot.slane %v4041, 1
      %v4294 = vsel %vm1310, %v4291, %v4293
      %v4295 = vrot.slane %v4042, 1
      %v4296 = vrot.slane %v4043, 1
      %v4297 = vsel %vm1310, %v4295, %v4296
      %v4298 = vrot.slane %v4044, 1
      %v4299 = vsel %vm1310, %v4296, %v4298
      %v4300 = vrot.slane %v4045, 1
      %v4301 = vsel %vm1310, %v4298, %v4300
      %v4302 = vrot.slane %v4046, 1
      %v4303 = vrot.slane %v4047, 1
      %v4304 = vsel %vm1310, %v4302, %v4303
      %v4305 = vrot.slane %v4048, 1
      %v4306 = vsel %vm1310, %v4303, %v4305
      %v4307 = vrot.slane %v4049, 1
      %v4308 = vsel %vm1310, %v4305, %v4307
      %v4309 = vrot.slane %v4050, 1
      %v4310 = vrot.slane %v4051, 1
      %v4311 = vsel %vm1310, %v4309, %v4310
      %v4312 = vrot.slane %v4052, 1
      %v4313 = vsel %vm1310, %v4310, %v4312
      %v4314 = vrot.slane %v4053, 1
      %v4315 = vsel %vm1310, %v4312, %v4314
      %v4316 = vrot.slane %v4054, 1
      %v4317 = vrot.slane %v4055, 1
      %v4318 = vsel %vm1310, %v4316, %v4317
      %v4319 = vrot.slane %v4056, 1
      %v4320 = vsel %vm1310, %v4317, %v4319
      %v4321 = vrot.slane %v4057, 1
      %v4322 = vsel %vm1310, %v4319, %v4321
      %v4323 = vrot.slane %v4058, 1
      %v4324 = vrot.slane %v4059, 1
      %v4325 = vsel %vm1310, %v4323, %v4324
      %v4326 = vrot.slane %v4060, 1
      %v4327 = vsel %vm1310, %v4324, %v4326
      %v4328 = vrot.slane %v4061, 1
      %v4329 = vsel %vm1310, %v4326, %v4328
      %v4330 = vrot.slane %v4062, 1
      %v4331 = vrot.slane %v4063, 1
      %v4332 = vsel %vm1310, %v4330, %v4331
      %v4333 = vrot.slane %v4064, 1
      %v4334 = vsel %vm1310, %v4331, %v4333
      %v4335 = vrot.slane %v4065, 1
      %v4336 = vsel %vm1310, %v4333, %v4335
      %v4337 = vrot.slane %v4066, 1
      %v4338 = vrot.slane %v4067, 1
      %v4339 = vsel %vm1310, %v4337, %v4338
      %v4340 = vrot.slane %v4068, 1
      %v4341 = vsel %vm1310, %v4338, %v4340
      %v4342 = vrot.slane %v4069, 1
      %v4343 = vsel %vm1310, %v4340, %v4342
      %v4344 = vrot.slane %v4070, 1
      %v4345 = vrot.slane %v4071, 1
      %v4346 = vsel %vm1310, %v4344, %v4345
      %v4347 = vrot.slane %v4072, 1
      %v4348 = vsel %vm1310, %v4345, %v4347
      %v4349 = vrot.slane %v4073, 1
      %v4350 = vsel %vm1310, %v4347, %v4349
      %v4351 = vrot.slane %v4074, 1
      %v4352 = vrot.slane %v4075, 1
      %v4353 = vsel %vm1310, %v4351, %v4352
      %v4354 = vrot.slane %v4076, 1
      %v4355 = vsel %vm1310, %v4352, %v4354
      %v4356 = vrot.slane %v4077, 1
      %v4357 = vsel %vm1310, %v4354, %v4356
      %v4358 = vrot.slane %v4078, 1
      %v4359 = vrot.slane %v4079, 1
      %v4360 = vsel %vm1310, %v4358, %v4359
      %v4361 = vrot.slane %v4080, 1
      %v4362 = vsel %vm1310, %v4359, %v4361
      %v4363 = vrot.slane %v4081, 1
      %v4364 = vsel %vm1310, %v4361, %v4363
      %v4365 = vrot.slane %v4082, 1
      %v4366 = vrot.slane %v4083, 1
      %v4367 = vsel %vm1310, %v4365, %v4366
      %v4368 = vrot.slane %v4084, 1
      %v4369 = vsel %vm1310, %v4366, %v4368
      %v4370 = vrot.slane %v4085, 1
      %v4371 = vsel %vm1310, %v4368, %v4370
      %v4476 = vadd.f32 %v3873, %v4192
      %v4477 = vadd.f32 %v3874, %v4194
      %v4478 = vadd.f32 %v3875, %v4196
      %v4479 = vadd.f32 %v3876, %v4195
      %v4480 = vadd.f32 %v3877, %v4199
      %v4481 = vadd.f32 %v3878, %v4201
      %v4482 = vadd.f32 %v3879, %v4203
      %v4483 = vadd.f32 %v3880, %v4202
      %v4484 = vadd.f32 %v3881, %v4206
      %v4485 = vadd.f32 %v3882, %v4208
      %v4486 = vadd.f32 %v3883, %v4210
      %v4487 = vadd.f32 %v3884, %v4209
      %v4488 = vadd.f32 %v3885, %v4213
      %v4489 = vadd.f32 %v3886, %v4215
      %v4490 = vadd.f32 %v3887, %v4217
      %v4491 = vadd.f32 %v3888, %v4216
      %v4492 = vadd.f32 %v3889, %v4220
      %v4493 = vadd.f32 %v3890, %v4222
      %v4494 = vadd.f32 %v3891, %v4224
      %v4495 = vadd.f32 %v3892, %v4223
      %v4496 = vadd.f32 %v3893, %v4227
      %v4497 = vadd.f32 %v3894, %v4229
      %v4498 = vadd.f32 %v3895, %v4231
      %v4499 = vadd.f32 %v3896, %v4230
      %v4500 = vadd.f32 %v3897, %v4234
      %v4501 = vadd.f32 %v3898, %v4236
      %v4502 = vadd.f32 %v3899, %v4238
      %v4503 = vadd.f32 %v3900, %v4237
      %v4504 = vadd.f32 %v3901, %v4241
      %v4505 = vadd.f32 %v3902, %v4243
      %v4506 = vadd.f32 %v3903, %v4245
      %v4507 = vadd.f32 %v3904, %v4244
      %v4508 = vadd.f32 %v3905, %v4248
      %v4509 = vadd.f32 %v3906, %v4250
      %v4510 = vadd.f32 %v3907, %v4252
      %v4511 = vadd.f32 %v3908, %v4251
      %v4512 = vadd.f32 %v3909, %v4255
      %v4513 = vadd.f32 %v3910, %v4257
      %v4514 = vadd.f32 %v3911, %v4259
      %v4515 = vadd.f32 %v3912, %v4258
      %v4516 = vadd.f32 %v3913, %v4262
      %v4517 = vadd.f32 %v3914, %v4264
      %v4518 = vadd.f32 %v3915, %v4266
      %v4519 = vadd.f32 %v3916, %v4265
      %v4520 = vadd.f32 %v3917, %v4269
      %v4521 = vadd.f32 %v3918, %v4271
      %v4522 = vadd.f32 %v3919, %v4273
      %v4523 = vadd.f32 %v3920, %v4272
      %v4524 = vadd.f32 %v3921, %v4276
      %v4525 = vadd.f32 %v3922, %v4278
      %v4526 = vadd.f32 %v3923, %v4280
      %v4527 = vadd.f32 %v3924, %v4279
      %v4528 = vadd.f32 %v3925, %v4283
      %v4529 = vadd.f32 %v3926, %v4285
      %v4530 = vadd.f32 %v3927, %v4287
      %v4531 = vadd.f32 %v3928, %v4286
      %v4532 = vadd.f32 %v3929, %v4290
      %v4533 = vadd.f32 %v3930, %v4292
      %v4534 = vadd.f32 %v3931, %v4294
      %v4535 = vadd.f32 %v3932, %v4293
      %v4536 = vadd.f32 %v3933, %v4297
      %v4537 = vadd.f32 %v3934, %v4299
      %v4538 = vadd.f32 %v3935, %v4301
      %v4539 = vadd.f32 %v3936, %v4300
      %v4540 = vadd.f32 %v3937, %v4304
      %v4541 = vadd.f32 %v3938, %v4306
      %v4542 = vadd.f32 %v3939, %v4308
      %v4543 = vadd.f32 %v3940, %v4307
      %v4544 = vadd.f32 %v3941, %v4311
      %v4545 = vadd.f32 %v3942, %v4313
      %v4546 = vadd.f32 %v3943, %v4315
      %v4547 = vadd.f32 %v3944, %v4314
      %v4548 = vadd.f32 %v3945, %v4318
      %v4549 = vadd.f32 %v3946, %v4320
      %v4550 = vadd.f32 %v3947, %v4322
      %v4551 = vadd.f32 %v3948, %v4321
      %v4552 = vadd.f32 %v3949, %v4325
      %v4553 = vadd.f32 %v3950, %v4327
      %v4554 = vadd.f32 %v3951, %v4329
      %v4555 = vadd.f32 %v3952, %v4328
      %v4556 = vadd.f32 %v3953, %v4332
      %v4557 = vadd.f32 %v3954, %v4334
      %v4558 = vadd.f32 %v3955, %v4336
      %v4559 = vadd.f32 %v3956, %v4335
      %v4560 = vadd.f32 %v3957, %v4339
      %v4561 = vadd.f32 %v3958, %v4341
      %v4562 = vadd.f32 %v3959, %v4343
      %v4563 = vadd.f32 %v3960, %v4342
      %v4564 = vadd.f32 %v3961, %v4346
      %v4565 = vadd.f32 %v3962, %v4348
      %v4566 = vadd.f32 %v3963, %v4350
      %v4567 = vadd.f32 %v3964, %v4349
      %v4568 = vadd.f32 %v3965, %v4353
      %v4569 = vadd.f32 %v3966, %v4355
      %v4570 = vadd.f32 %v3967, %v4357
      %v4571 = vadd.f32 %v3968, %v4356
      %v4572 = vadd.f32 %v3969, %v4360
      %v4573 = vadd.f32 %v3970, %v4362
      %v4574 = vadd.f32 %v3971, %v4364
      %v4575 = vadd.f32 %v3972, %v4363
      %v4576 = vadd.f32 %v3973, %v4367
      %v4577 = vadd.f32 %v3974, %v4369
      %v4578 = vadd.f32 %v3975, %v4371
      %v4579 = vadd.f32 %v3976, %v4370
      %v4580 = vld [vmem:[%s1 + $0x8] sm:$0x1]
      %v4581 = vlaneseq
      %v4582 = vshrl.u32 %v4581, 7
      %v4583 = vsub.s32 0, %v4582
      %v4584 = vrot.slane %v4580, %v4583
      %v4585 = vmul.f32 %v408, %v4584
      %v4586 = vmul.f32 %v413, %v4584
      %v4587 = vmul.f32 %v418, %v4584
      %v4588 = vmul.f32 %v423, %v4584
      %v4589 = vmul.f32 %v428, %v4584
      %v4590 = vmul.f32 %v433, %v4584
      %v4591 = vmul.f32 %v438, %v4584
      %v4592 = vmul.f32 %v443, %v4584
      %v4593 = vmul.f32 %v448, %v4584
      %v4594 = vmul.f32 %v453, %v4584
      %v4595 = vmul.f32 %v458, %v4584
      %v4596 = vmul.f32 %v463, %v4584
      %v4597 = vmul.f32 %v468, %v4584
      %v4598 = vmul.f32 %v473, %v4584
      %v4599 = vmul.f32 %v478, %v4584
      %v4600 = vmul.f32 %v483, %v4584
      %v4601 = vmul.f32 %v488, %v4584
      %v4602 = vmul.f32 %v493, %v4584
      %v4603 = vmul.f32 %v498, %v4584
      %v4604 = vmul.f32 %v503, %v4584
      %v4605 = vmul.f32 %v508, %v4584
      %v4606 = vmul.f32 %v513, %v4584
      %v4607 = vmul.f32 %v518, %v4584
      %v4608 = vmul.f32 %v523, %v4584
      %v4609 = vmul.f32 %v528, %v4584
      %v4610 = vmul.f32 %v533, %v4584
      %v4611 = vmul.f32 %v538, %v4584
      %v4612 = vmul.f32 %v543, %v4584
      %v4613 = vmul.f32 %v548, %v4584
      %v4614 = vmul.f32 %v553, %v4584
      %v4615 = vmul.f32 %v558, %v4584
      %v4616 = vmul.f32 %v563, %v4584
      %v4617 = vmul.f32 %v568, %v4584
      %v4618 = vmul.f32 %v573, %v4584
      %v4619 = vmul.f32 %v578, %v4584
      %v4620 = vmul.f32 %v583, %v4584
      %v4621 = vmul.f32 %v588, %v4584
      %v4622 = vmul.f32 %v593, %v4584
      %v4623 = vmul.f32 %v598, %v4584
      %v4624 = vmul.f32 %v603, %v4584
      %v4625 = vmul.f32 %v608, %v4584
      %v4626 = vmul.f32 %v613, %v4584
      %v4627 = vmul.f32 %v618, %v4584
      %v4628 = vmul.f32 %v623, %v4584
      %v4629 = vmul.f32 %v628, %v4584
      %v4630 = vmul.f32 %v633, %v4584
      %v4631 = vmul.f32 %v638, %v4584
      %v4632 = vmul.f32 %v643, %v4584
      %v4633 = vmul.f32 %v648, %v4584
      %v4634 = vmul.f32 %v653, %v4584
      %v4635 = vmul.f32 %v658, %v4584
      %v4636 = vmul.f32 %v663, %v4584
      %v4637 = vmul.f32 %v668, %v4584
      %v4638 = vmul.f32 %v673, %v4584
      %v4639 = vmul.f32 %v678, %v4584
      %v4640 = vmul.f32 %v683, %v4584
      %v4641 = vmul.f32 %v688, %v4584
      %v4642 = vmul.f32 %v693, %v4584
      %v4643 = vmul.f32 %v698, %v4584
      %v4644 = vmul.f32 %v703, %v4584
      %v4645 = vmul.f32 %v708, %v4584
      %v4646 = vmul.f32 %v713, %v4584
      %v4647 = vmul.f32 %v718, %v4584
      %v4648 = vmul.f32 %v723, %v4584
      %v4649 = vmul.f32 %v728, %v4584
      %v4650 = vmul.f32 %v733, %v4584
      %v4651 = vmul.f32 %v738, %v4584
      %v4652 = vmul.f32 %v743, %v4584
      %v4653 = vmul.f32 %v748, %v4584
      %v4654 = vmul.f32 %v753, %v4584
      %v4655 = vmul.f32 %v758, %v4584
      %v4656 = vmul.f32 %v763, %v4584
      %v4657 = vmul.f32 %v768, %v4584
      %v4658 = vmul.f32 %v773, %v4584
      %v4659 = vmul.f32 %v778, %v4584
      %v4660 = vmul.f32 %v783, %v4584
      %v4661 = vmul.f32 %v788, %v4584
      %v4662 = vmul.f32 %v793, %v4584
      %v4663 = vmul.f32 %v798, %v4584
      %v4664 = vmul.f32 %v803, %v4584
      %v4665 = vmul.f32 %v808, %v4584
      %v4666 = vmul.f32 %v813, %v4584
      %v4667 = vmul.f32 %v818, %v4584
      %v4668 = vmul.f32 %v823, %v4584
      %v4669 = vmul.f32 %v828, %v4584
      %v4670 = vmul.f32 %v833, %v4584
      %v4671 = vmul.f32 %v838, %v4584
      %v4672 = vmul.f32 %v843, %v4584
      %v4673 = vmul.f32 %v848, %v4584
      %v4674 = vmul.f32 %v853, %v4584
      %v4675 = vmul.f32 %v858, %v4584
      %v4676 = vmul.f32 %v863, %v4584
      %v4677 = vmul.f32 %v868, %v4584
      %v4678 = vmul.f32 %v873, %v4584
      %v4679 = vmul.f32 %v878, %v4584
      %v4680 = vmul.f32 %v883, %v4584
      %v4681 = vmul.f32 %v2309, %v4584
      %v4682 = vmul.f32 %v2314, %v4584
      %v4683 = vmul.f32 %v2319, %v4584
      %v4684 = vmul.f32 %v2324, %v4584
      %v4685 = vmul.f32 %v3748, %v4584
      %v4686 = vmul.f32 %v3753, %v4584
      %v4687 = vmul.f32 %v3758, %v4584
      %v4688 = vmul.f32 %v3763, %v4584
      %v4793 = vrot.slane %v4585, 2
      %v4794 = vrot.slane %v4586, 2
      %v4795 = vsel %vm1914, %v4793, %v4794
      %v4796 = vrot.slane %v4587, 2
      %v4797 = vsel %vm1914, %v4794, %v4796
      %v4798 = vrot.slane %v4588, 2
      %v4799 = vsel %vm1914, %v4796, %v4798
      %v4800 = vrot.slane %v4589, 2
      %v4801 = vrot.slane %v4590, 2
      %v4802 = vsel %vm1914, %v4800, %v4801
      %v4803 = vrot.slane %v4591, 2
      %v4804 = vsel %vm1914, %v4801, %v4803
      %v4805 = vrot.slane %v4592, 2
      %v4806 = vsel %vm1914, %v4803, %v4805
      %v4807 = vrot.slane %v4593, 2
      %v4808 = vrot.slane %v4594, 2
      %v4809 = vsel %vm1914, %v4807, %v4808
      %v4810 = vrot.slane %v4595, 2
      %v4811 = vsel %vm1914, %v4808, %v4810
      %v4812 = vrot.slane %v4596, 2
      %v4813 = vsel %vm1914, %v4810, %v4812
      %v4814 = vrot.slane %v4597, 2
      %v4815 = vrot.slane %v4598, 2
      %v4816 = vsel %vm1914, %v4814, %v4815
      %v4817 = vrot.slane %v4599, 2
      %v4818 = vsel %vm1914, %v4815, %v4817
      %v4819 = vrot.slane %v4600, 2
      %v4820 = vsel %vm1914, %v4817, %v4819
      %v4821 = vrot.slane %v4601, 2
      %v4822 = vrot.slane %v4602, 2
      %v4823 = vsel %vm1914, %v4821, %v4822
      %v4824 = vrot.slane %v4603, 2
      %v4825 = vsel %vm1914, %v4822, %v4824
      %v4826 = vrot.slane %v4604, 2
      %v4827 = vsel %vm1914, %v4824, %v4826
      %v4828 = vrot.slane %v4605, 2
      %v4829 = vrot.slane %v4606, 2
      %v4830 = vsel %vm1914, %v4828, %v4829
      %v4831 = vrot.slane %v4607, 2
      %v4832 = vsel %vm1914, %v4829, %v4831
      %v4833 = vrot.slane %v4608, 2
      %v4834 = vsel %vm1914, %v4831, %v4833
      %v4835 = vrot.slane %v4609, 2
      %v4836 = vrot.slane %v4610, 2
      %v4837 = vsel %vm1914, %v4835, %v4836
      %v4838 = vrot.slane %v4611, 2
      %v4839 = vsel %vm1914, %v4836, %v4838
      %v4840 = vrot.slane %v4612, 2
      %v4841 = vsel %vm1914, %v4838, %v4840
      %v4842 = vrot.slane %v4613, 2
      %v4843 = vrot.slane %v4614, 2
      %v4844 = vsel %vm1914, %v4842, %v4843
      %v4845 = vrot.slane %v4615, 2
      %v4846 = vsel %vm1914, %v4843, %v4845
      %v4847 = vrot.slane %v4616, 2
      %v4848 = vsel %vm1914, %v4845, %v4847
      %v4849 = vrot.slane %v4617, 2
      %v4850 = vrot.slane %v4618, 2
      %v4851 = vsel %vm1914, %v4849, %v4850
      %v4852 = vrot.slane %v4619, 2
      %v4853 = vsel %vm1914, %v4850, %v4852
      %v4854 = vrot.slane %v4620, 2
      %v4855 = vsel %vm1914, %v4852, %v4854
      %v4856 = vrot.slane %v4621, 2
      %v4857 = vrot.slane %v4622, 2
      %v4858 = vsel %vm1914, %v4856, %v4857
      %v4859 = vrot.slane %v4623, 2
      %v4860 = vsel %vm1914, %v4857, %v4859
      %v4861 = vrot.slane %v4624, 2
      %v4862 = vsel %vm1914, %v4859, %v4861
      %v4863 = vrot.slane %v4625, 2
      %v4864 = vrot.slane %v4626, 2
      %v4865 = vsel %vm1914, %v4863, %v4864
      %v4866 = vrot.slane %v4627, 2
      %v4867 = vsel %vm1914, %v4864, %v4866
      %v4868 = vrot.slane %v4628, 2
      %v4869 = vsel %vm1914, %v4866, %v4868
      %v4870 = vrot.slane %v4629, 2
      %v4871 = vrot.slane %v4630, 2
      %v4872 = vsel %vm1914, %v4870, %v4871
      %v4873 = vrot.slane %v4631, 2
      %v4874 = vsel %vm1914, %v4871, %v4873
      %v4875 = vrot.slane %v4632, 2
      %v4876 = vsel %vm1914, %v4873, %v4875
      %v4877 = vrot.slane %v4633, 2
      %v4878 = vrot.slane %v4634, 2
      %v4879 = vsel %vm1914, %v4877, %v4878
      %v4880 = vrot.slane %v4635, 2
      %v4881 = vsel %vm1914, %v4878, %v4880
      %v4882 = vrot.slane %v4636, 2
      %v4883 = vsel %vm1914, %v4880, %v4882
      %v4884 = vrot.slane %v4637, 2
      %v4885 = vrot.slane %v4638, 2
      %v4886 = vsel %vm1914, %v4884, %v4885
      %v4887 = vrot.slane %v4639, 2
      %v4888 = vsel %vm1914, %v4885, %v4887
      %v4889 = vrot.slane %v4640, 2
      %v4890 = vsel %vm1914, %v4887, %v4889
      %v4891 = vrot.slane %v4641, 2
      %v4892 = vrot.slane %v4642, 2
      %v4893 = vsel %vm1914, %v4891, %v4892
      %v4894 = vrot.slane %v4643, 2
      %v4895 = vsel %vm1914, %v4892, %v4894
      %v4896 = vrot.slane %v4644, 2
      %v4897 = vsel %vm1914, %v4894, %v4896
      %v4898 = vrot.slane %v4645, 2
      %v4899 = vrot.slane %v4646, 2
      %v4900 = vsel %vm1914, %v4898, %v4899
      %v4901 = vrot.slane %v4647, 2
      %v4902 = vsel %vm1914, %v4899, %v4901
      %v4903 = vrot.slane %v4648, 2
      %v4904 = vsel %vm1914, %v4901, %v4903
      %v4905 = vrot.slane %v4649, 2
      %v4906 = vrot.slane %v4650, 2
      %v4907 = vsel %vm1914, %v4905, %v4906
      %v4908 = vrot.slane %v4651, 2
      %v4909 = vsel %vm1914, %v4906, %v4908
      %v4910 = vrot.slane %v4652, 2
      %v4911 = vsel %vm1914, %v4908, %v4910
      %v4912 = vrot.slane %v4653, 2
      %v4913 = vrot.slane %v4654, 2
      %v4914 = vsel %vm1914, %v4912, %v4913
      %v4915 = vrot.slane %v4655, 2
      %v4916 = vsel %vm1914, %v4913, %v4915
      %v4917 = vrot.slane %v4656, 2
      %v4918 = vsel %vm1914, %v4915, %v4917
      %v4919 = vrot.slane %v4657, 2
      %v4920 = vrot.slane %v4658, 2
      %v4921 = vsel %vm1914, %v4919, %v4920
      %v4922 = vrot.slane %v4659, 2
      %v4923 = vsel %vm1914, %v4920, %v4922
      %v4924 = vrot.slane %v4660, 2
      %v4925 = vsel %vm1914, %v4922, %v4924
      %v4926 = vrot.slane %v4661, 2
      %v4927 = vrot.slane %v4662, 2
      %v4928 = vsel %vm1914, %v4926, %v4927
      %v4929 = vrot.slane %v4663, 2
      %v4930 = vsel %vm1914, %v4927, %v4929
      %v4931 = vrot.slane %v4664, 2
      %v4932 = vsel %vm1914, %v4929, %v4931
      %v4933 = vrot.slane %v4665, 2
      %v4934 = vrot.slane %v4666, 2
      %v4935 = vsel %vm1914, %v4933, %v4934
      %v4936 = vrot.slane %v4667, 2
      %v4937 = vsel %vm1914, %v4934, %v4936
      %v4938 = vrot.slane %v4668, 2
      %v4939 = vsel %vm1914, %v4936, %v4938
      %v4940 = vrot.slane %v4669, 2
      %v4941 = vrot.slane %v4670, 2
      %v4942 = vsel %vm1914, %v4940, %v4941
      %v4943 = vrot.slane %v4671, 2
      %v4944 = vsel %vm1914, %v4941, %v4943
      %v4945 = vrot.slane %v4672, 2
      %v4946 = vsel %vm1914, %v4943, %v4945
      %v4947 = vrot.slane %v4673, 2
      %v4948 = vrot.slane %v4674, 2
      %v4949 = vsel %vm1914, %v4947, %v4948
      %v4950 = vrot.slane %v4675, 2
      %v4951 = vsel %vm1914, %v4948, %v4950
      %v4952 = vrot.slane %v4676, 2
      %v4953 = vsel %vm1914, %v4950, %v4952
      %v4954 = vrot.slane %v4677, 2
      %v4955 = vrot.slane %v4678, 2
      %v4956 = vsel %vm1914, %v4954, %v4955
      %v4957 = vrot.slane %v4679, 2
      %v4958 = vsel %vm1914, %v4955, %v4957
      %v4959 = vrot.slane %v4680, 2
      %v4960 = vsel %vm1914, %v4957, %v4959
      %v4961 = vrot.slane %v4681, 2
      %v4962 = vrot.slane %v4682, 2
      %v4963 = vsel %vm1914, %v4961, %v4962
      %v4964 = vrot.slane %v4683, 2
      %v4965 = vsel %vm1914, %v4962, %v4964
      %v4966 = vrot.slane %v4684, 2
      %v4967 = vsel %vm1914, %v4964, %v4966
      %v4968 = vrot.slane %v4685, 2
      %v4969 = vrot.slane %v4686, 2
      %v4970 = vsel %vm1914, %v4968, %v4969
      %v4971 = vrot.slane %v4687, 2
      %v4972 = vsel %vm1914, %v4969, %v4971
      %v4973 = vrot.slane %v4688, 2
      %v4974 = vsel %vm1914, %v4971, %v4973
      %v5079 = vadd.f32 %v4476, %v4795
      %v5080 = vadd.f32 %v4477, %v4797
      %v5081 = vadd.f32 %v4478, %v4799
      %v5082 = vadd.f32 %v4479, %v4798
      %v5083 = vadd.f32 %v4480, %v4802
      %v5084 = vadd.f32 %v4481, %v4804
      %v5085 = vadd.f32 %v4482, %v4806
      %v5086 = vadd.f32 %v4483, %v4805
      %v5087 = vadd.f32 %v4484, %v4809
      %v5088 = vadd.f32 %v4485, %v4811
      %v5089 = vadd.f32 %v4486, %v4813
      %v5090 = vadd.f32 %v4487, %v4812
      %v5091 = vadd.f32 %v4488, %v4816
      %v5092 = vadd.f32 %v4489, %v4818
      %v5093 = vadd.f32 %v4490, %v4820
      %v5094 = vadd.f32 %v4491, %v4819
      %v5095 = vadd.f32 %v4492, %v4823
      %v5096 = vadd.f32 %v4493, %v4825
      %v5097 = vadd.f32 %v4494, %v4827
      %v5098 = vadd.f32 %v4495, %v4826
      %v5099 = vadd.f32 %v4496, %v4830
      %v5100 = vadd.f32 %v4497, %v4832
      %v5101 = vadd.f32 %v4498, %v4834
      %v5102 = vadd.f32 %v4499, %v4833
      %v5103 = vadd.f32 %v4500, %v4837
      %v5104 = vadd.f32 %v4501, %v4839
      %v5105 = vadd.f32 %v4502, %v4841
      %v5106 = vadd.f32 %v4503, %v4840
      %v5107 = vadd.f32 %v4504, %v4844
      %v5108 = vadd.f32 %v4505, %v4846
      %v5109 = vadd.f32 %v4506, %v4848
      %v5110 = vadd.f32 %v4507, %v4847
      %v5111 = vadd.f32 %v4508, %v4851
      %v5112 = vadd.f32 %v4509, %v4853
      %v5113 = vadd.f32 %v4510, %v4855
      %v5114 = vadd.f32 %v4511, %v4854
      %v5115 = vadd.f32 %v4512, %v4858
      %v5116 = vadd.f32 %v4513, %v4860
      %v5117 = vadd.f32 %v4514, %v4862
      %v5118 = vadd.f32 %v4515, %v4861
      %v5119 = vadd.f32 %v4516, %v4865
      %v5120 = vadd.f32 %v4517, %v4867
      %v5121 = vadd.f32 %v4518, %v4869
      %v5122 = vadd.f32 %v4519, %v4868
      %v5123 = vadd.f32 %v4520, %v4872
      %v5124 = vadd.f32 %v4521, %v4874
      %v5125 = vadd.f32 %v4522, %v4876
      %v5126 = vadd.f32 %v4523, %v4875
      %v5127 = vadd.f32 %v4524, %v4879
      %v5128 = vadd.f32 %v4525, %v4881
      %v5129 = vadd.f32 %v4526, %v4883
      %v5130 = vadd.f32 %v4527, %v4882
      %v5131 = vadd.f32 %v4528, %v4886
      %v5132 = vadd.f32 %v4529, %v4888
      %v5133 = vadd.f32 %v4530, %v4890
      %v5134 = vadd.f32 %v4531, %v4889
      %v5135 = vadd.f32 %v4532, %v4893
      %v5136 = vadd.f32 %v4533, %v4895
      %v5137 = vadd.f32 %v4534, %v4897
      %v5138 = vadd.f32 %v4535, %v4896
      %v5139 = vadd.f32 %v4536, %v4900
      %v5140 = vadd.f32 %v4537, %v4902
      %v5141 = vadd.f32 %v4538, %v4904
      %v5142 = vadd.f32 %v4539, %v4903
      %v5143 = vadd.f32 %v4540, %v4907
      %v5144 = vadd.f32 %v4541, %v4909
      %v5145 = vadd.f32 %v4542, %v4911
      %v5146 = vadd.f32 %v4543, %v4910
      %v5147 = vadd.f32 %v4544, %v4914
      %v5148 = vadd.f32 %v4545, %v4916
      %v5149 = vadd.f32 %v4546, %v4918
      %v5150 = vadd.f32 %v4547, %v4917
      %v5151 = vadd.f32 %v4548, %v4921
      %v5152 = vadd.f32 %v4549, %v4923
      %v5153 = vadd.f32 %v4550, %v4925
      %v5154 = vadd.f32 %v4551, %v4924
      %v5155 = vadd.f32 %v4552, %v4928
      %v5156 = vadd.f32 %v4553, %v4930
      %v5157 = vadd.f32 %v4554, %v4932
      %v5158 = vadd.f32 %v4555, %v4931
      %v5159 = vadd.f32 %v4556, %v4935
      %v5160 = vadd.f32 %v4557, %v4937
      %v5161 = vadd.f32 %v4558, %v4939
      %v5162 = vadd.f32 %v4559, %v4938
      %v5163 = vadd.f32 %v4560, %v4942
      %v5164 = vadd.f32 %v4561, %v4944
      %v5165 = vadd.f32 %v4562, %v4946
      %v5166 = vadd.f32 %v4563, %v4945
      %v5167 = vadd.f32 %v4564, %v4949
      %v5168 = vadd.f32 %v4565, %v4951
      %v5169 = vadd.f32 %v4566, %v4953
      %v5170 = vadd.f32 %v4567, %v4952
      %v5171 = vadd.f32 %v4568, %v4956
      %v5172 = vadd.f32 %v4569, %v4958
      %v5173 = vadd.f32 %v4570, %v4960
      %v5174 = vadd.f32 %v4571, %v4959
      %v5175 = vadd.f32 %v4572, %v4963
      %v5176 = vadd.f32 %v4573, %v4965
      %v5177 = vadd.f32 %v4574, %v4967
      %v5178 = vadd.f32 %v4575, %v4966
      %v5179 = vadd.f32 %v4576, %v4970
      %v5180 = vadd.f32 %v4577, %v4972
      %v5181 = vadd.f32 %v4578, %v4974
      %v5182 = vadd.f32 %v4579, %v4973
      %v5183 = vld [vmem:[%s2] sm:$0x1]
      %v5185 = vlaneseq
      %v5186 = vshrl.u32 %v5185, 7
      %v5187 = vsub.s32 0, %v5186
      %v5188 = vrot.slane %v5183, %v5187
      %v5190 = vadd.f32 %v5079, %v5188
      %v5191 = vadd.f32 %v5080, %v5188
      %v5192 = vadd.f32 %v5081, %v5188
      %v5193 = vadd.f32 %v5082, %v5188
      %v5194 = vadd.f32 %v5083, %v5188
      %v5195 = vadd.f32 %v5084, %v5188
      %v5196 = vadd.f32 %v5085, %v5188
      %v5197 = vadd.f32 %v5086, %v5188
      %v5198 = vadd.f32 %v5087, %v5188
      %v5199 = vadd.f32 %v5088, %v5188
      %v5200 = vadd.f32 %v5089, %v5188
      %v5201 = vadd.f32 %v5090, %v5188
      %v5202 = vadd.f32 %v5091, %v5188
      %v5203 = vadd.f32 %v5092, %v5188
      %v5204 = vadd.f32 %v5093, %v5188
      %v5205 = vadd.f32 %v5094, %v5188
      %v5206 = vadd.f32 %v5095, %v5188
      %v5207 = vadd.f32 %v5096, %v5188
      %v5208 = vadd.f32 %v5097, %v5188
      %v5209 = vadd.f32 %v5098, %v5188
      %v5210 = vadd.f32 %v5099, %v5188
      %v5211 = vadd.f32 %v5100, %v5188
      %v5212 = vadd.f32 %v5101, %v5188
      %v5213 = vadd.f32 %v5102, %v5188
      %v5214 = vadd.f32 %v5103, %v5188
      %v5215 = vadd.f32 %v5104, %v5188
      %v5216 = vadd.f32 %v5105, %v5188
      %v5217 = vadd.f32 %v5106, %v5188
      %v5218 = vadd.f32 %v5107, %v5188
      %v5219 = vadd.f32 %v5108, %v5188
      %v5220 = vadd.f32 %v5109, %v5188
      %v5221 = vadd.f32 %v5110, %v5188
      %v5222 = vadd.f32 %v5111, %v5188
      %v5223 = vadd.f32 %v5112, %v5188
      %v5224 = vadd.f32 %v5113, %v5188
      %v5225 = vadd.f32 %v5114, %v5188
      %v5226 = vadd.f32 %v5115, %v5188
      %v5227 = vadd.f32 %v5116, %v5188
      %v5228 = vadd.f32 %v5117, %v5188
      %v5229 = vadd.f32 %v5118, %v5188
      %v5230 = vadd.f32 %v5119, %v5188
      %v5231 = vadd.f32 %v5120, %v5188
      %v5232 = vadd.f32 %v5121, %v5188
      %v5233 = vadd.f32 %v5122, %v5188
      %v5234 = vadd.f32 %v5123, %v5188
      %v5235 = vadd.f32 %v5124, %v5188
      %v5236 = vadd.f32 %v5125, %v5188
      %v5237 = vadd.f32 %v5126, %v5188
      %v5238 = vadd.f32 %v5127, %v5188
      %v5239 = vadd.f32 %v5128, %v5188
      %v5240 = vadd.f32 %v5129, %v5188
      %v5241 = vadd.f32 %v5130, %v5188
      %v5242 = vadd.f32 %v5131, %v5188
      %v5243 = vadd.f32 %v5132, %v5188
      %v5244 = vadd.f32 %v5133, %v5188
      %v5245 = vadd.f32 %v5134, %v5188
      %v5246 = vadd.f32 %v5135, %v5188
      %v5247 = vadd.f32 %v5136, %v5188
      %v5248 = vadd.f32 %v5137, %v5188
      %v5249 = vadd.f32 %v5138, %v5188
      %v5250 = vadd.f32 %v5139, %v5188
      %v5251 = vadd.f32 %v5140, %v5188
      %v5252 = vadd.f32 %v5141, %v5188
      %v5253 = vadd.f32 %v5142, %v5188
      %v5254 = vadd.f32 %v5143, %v5188
      %v5255 = vadd.f32 %v5144, %v5188
      %v5256 = vadd.f32 %v5145, %v5188
      %v5257 = vadd.f32 %v5146, %v5188
      %v5258 = vadd.f32 %v5147, %v5188
      %v5259 = vadd.f32 %v5148, %v5188
      %v5260 = vadd.f32 %v5149, %v5188
      %v5261 = vadd.f32 %v5150, %v5188
      %v5262 = vadd.f32 %v5151, %v5188
      %v5263 = vadd.f32 %v5152, %v5188
      %v5264 = vadd.f32 %v5153, %v5188
      %v5265 = vadd.f32 %v5154, %v5188
      %v5266 = vadd.f32 %v5155, %v5188
      %v5267 = vadd.f32 %v5156, %v5188
      %v5268 = vadd.f32 %v5157, %v5188
      %v5269 = vadd.f32 %v5158, %v5188
      %v5270 = vadd.f32 %v5159, %v5188
      %v5271 = vadd.f32 %v5160, %v5188
      %v5272 = vadd.f32 %v5161, %v5188
      %v5273 = vadd.f32 %v5162, %v5188
      %v5274 = vadd.f32 %v5163, %v5188
      %v5275 = vadd.f32 %v5164, %v5188
      %v5276 = vadd.f32 %v5165, %v5188
      %v5277 = vadd.f32 %v5166, %v5188
      %v5278 = vadd.f32 %v5167, %v5188
      %v5279 = vadd.f32 %v5168, %v5188
      %v5280 = vadd.f32 %v5169, %v5188
      %v5281 = vadd.f32 %v5170, %v5188
      %v5282 = vadd.f32 %v5171, %v5188
      %v5283 = vadd.f32 %v5172, %v5188
      %v5284 = vadd.f32 %v5173, %v5188
      %v5285 = vadd.f32 %v5174, %v5188
      %v5286 = vadd.f32 %v5175, %v5188
      %v5287 = vadd.f32 %v5176, %v5188
      %v5288 = vadd.f32 %v5177, %v5188
      %v5289 = vadd.f32 %v5178, %v5188
      %v5290 = vadd.f32 %v5179, %v5188
      %v5291 = vadd.f32 %v5180, %v5188
      %v5292 = vadd.f32 %v5181, %v5188
      %v5293 = vadd.f32 %v5182, %v5188
      %v5294 = vmax.f32 %v5190, 0.0
      %v5295 = vmax.f32 %v5191, 0.0
      %v5296 = vmax.f32 %v5192, 0.0
      %v5297 = vmax.f32 %v5193, 0.0
      %v5298 = vmax.f32 %v5194, 0.0
      %v5299 = vmax.f32 %v5195, 0.0
      %v5300 = vmax.f32 %v5196, 0.0
      %v5301 = vmax.f32 %v5197, 0.0
      %v5302 = vmax.f32 %v5198, 0.0
      %v5303 = vmax.f32 %v5199, 0.0
      %v5304 = vmax.f32 %v5200, 0.0
      %v5305 = vmax.f32 %v5201, 0.0
      %v5306 = vmax.f32 %v5202, 0.0
      %v5307 = vmax.f32 %v5203, 0.0
      %v5308 = vmax.f32 %v5204, 0.0
      %v5309 = vmax.f32 %v5205, 0.0
      %v5310 = vmax.f32 %v5206, 0.0
      %v5311 = vmax.f32 %v5207, 0.0
      %v5312 = vmax.f32 %v5208, 0.0
      %v5313 = vmax.f32 %v5209, 0.0
      %v5314 = vmax.f32 %v5210, 0.0
      %v5315 = vmax.f32 %v5211, 0.0
      %v5316 = vmax.f32 %v5212, 0.0
      %v5317 = vmax.f32 %v5213, 0.0
      %v5318 = vmax.f32 %v5214, 0.0
      %v5319 = vmax.f32 %v5215, 0.0
      %v5320 = vmax.f32 %v5216, 0.0
      %v5321 = vmax.f32 %v5217, 0.0
      %v5322 = vmax.f32 %v5218, 0.0
      %v5323 = vmax.f32 %v5219, 0.0
      %v5324 = vmax.f32 %v5220, 0.0
      %v5325 = vmax.f32 %v5221, 0.0
      %v5326 = vmax.f32 %v5222, 0.0
      %v5327 = vmax.f32 %v5223, 0.0
      %v5328 = vmax.f32 %v5224, 0.0
      %v5329 = vmax.f32 %v5225, 0.0
      %v5330 = vmax.f32 %v5226, 0.0
      %v5331 = vmax.f32 %v5227, 0.0
      %v5332 = vmax.f32 %v5228, 0.0
      %v5333 = vmax.f32 %v5229, 0.0
      %v5334 = vmax.f32 %v5230, 0.0
      %v5335 = vmax.f32 %v5231, 0.0
      %v5336 = vmax.f32 %v5232, 0.0
      %v5337 = vmax.f32 %v5233, 0.0
      %v5338 = vmax.f32 %v5234, 0.0
      %v5339 = vmax.f32 %v5235, 0.0
      %v5340 = vmax.f32 %v5236, 0.0
      %v5341 = vmax.f32 %v5237, 0.0
      %v5342 = vmax.f32 %v5238, 0.0
      %v5343 = vmax.f32 %v5239, 0.0
      %v5344 = vmax.f32 %v5240, 0.0
      %v5345 = vmax.f32 %v5241, 0.0
      %v5346 = vmax.f32 %v5242, 0.0
      %v5347 = vmax.f32 %v5243, 0.0
      %v5348 = vmax.f32 %v5244, 0.0
      %v5349 = vmax.f32 %v5245, 0.0
      %v5350 = vmax.f32 %v5246, 0.0
      %v5351 = vmax.f32 %v5247, 0.0
      %v5352 = vmax.f32 %v5248, 0.0
      %v5353 = vmax.f32 %v5249, 0.0
      %v5354 = vmax.f32 %v5250, 0.0
      %v5355 = vmax.f32 %v5251, 0.0
      %v5356 = vmax.f32 %v5252, 0.0
      %v5357 = vmax.f32 %v5253, 0.0
      %v5358 = vmax.f32 %v5254, 0.0
      %v5359 = vmax.f32 %v5255, 0.0
      %v5360 = vmax.f32 %v5256, 0.0
      %v5361 = vmax.f32 %v5257, 0.0
      %v5362 = vmax.f32 %v5258, 0.0
      %v5363 = vmax.f32 %v5259, 0.0
      %v5364 = vmax.f32 %v5260, 0.0
      %v5365 = vmax.f32 %v5261, 0.0
      %v5366 = vmax.f32 %v5262, 0.0
      %v5367 = vmax.f32 %v5263, 0.0
      %v5368 = vmax.f32 %v5264, 0.0
      %v5369 = vmax.f32 %v5265, 0.0
      %v5370 = vmax.f32 %v5266, 0.0
      %v5371 = vmax.f32 %v5267, 0.0
      %v5372 = vmax.f32 %v5268, 0.0
      %v5373 = vmax.f32 %v5269, 0.0
      %v5374 = vmax.f32 %v5270, 0.0
      %v5375 = vmax.f32 %v5271, 0.0
      %v5376 = vmax.f32 %v5272, 0.0
      %v5377 = vmax.f32 %v5273, 0.0
      %v5378 = vmax.f32 %v5274, 0.0
      %v5379 = vmax.f32 %v5275, 0.0
      %v5380 = vmax.f32 %v5276, 0.0
      %v5381 = vmax.f32 %v5277, 0.0
      %v5382 = vmax.f32 %v5278, 0.0
      %v5383 = vmax.f32 %v5279, 0.0
      %v5384 = vmax.f32 %v5280, 0.0
      %v5385 = vmax.f32 %v5281, 0.0
      %v5386 = vmax.f32 %v5282, 0.0
      %v5387 = vmax.f32 %v5283, 0.0
      %v5388 = vmax.f32 %v5284, 0.0
      %v5389 = vmax.f32 %v5285, 0.0
      %v5390 = vmax.f32 %v5286, 0.0
      %v5391 = vmax.f32 %v5287, 0.0
      %v5392 = vmax.f32 %v5288, 0.0
      %v5393 = vmax.f32 %v5289, 0.0
      %v5394 = vmax.f32 %v5290, 0.0
      %v5395 = vmax.f32 %v5291, 0.0
      %v5396 = vmax.f32 %v5292, 0.0
      %v5397 = vmax.f32 %v5293, 0.0
      %v5398 = vld [vmem:[%s3] sm:$0xff]
      %v5399 = vld [vmem:[%s3 + $0x8] sm:$0xff]
      %v5400 = vld [vmem:[%s3 + $0x10] sm:$0xff]
      %v5401 = vld [vmem:[%s3 + $0x18] sm:$0xff]
      %v5498 = vrot.slane %v5294, 1
      %v5499 = vrot.slane %v5295, 1
      %v5500 = vsel %vm1310, %v5498, %v5499
      %v5501 = vrot.slane %v5296, 1
      %v5502 = vsel %vm1310, %v5499, %v5501
      %v5503 = vrot.slane %v5297, 1
      %v5504 = vsel %vm1310, %v5501, %v5503
      %v5505 = vrot.slane %v5298, 1
      %v5506 = vrot.slane %v5299, 1
      %v5507 = vsel %vm1310, %v5505, %v5506
      %v5508 = vrot.slane %v5300, 1
      %v5509 = vsel %vm1310, %v5506, %v5508
      %v5510 = vrot.slane %v5301, 1
      %v5511 = vsel %vm1310, %v5508, %v5510
      %v5512 = vrot.slane %v5302, 1
      %v5513 = vrot.slane %v5303, 1
      %v5514 = vsel %vm1310, %v5512, %v5513
      %v5515 = vrot.slane %v5304, 1
      %v5516 = vsel %vm1310, %v5513, %v5515
      %v5517 = vrot.slane %v5305, 1
      %v5518 = vsel %vm1310, %v5515, %v5517
      %v5519 = vrot.slane %v5306, 1
      %v5520 = vrot.slane %v5307, 1
      %v5521 = vsel %vm1310, %v5519, %v5520
      %v5522 = vrot.slane %v5308, 1
      %v5523 = vsel %vm1310, %v5520, %v5522
      %v5524 = vrot.slane %v5309, 1
      %v5525 = vsel %vm1310, %v5522, %v5524
      %v5526 = vrot.slane %v5310, 1
      %v5527 = vrot.slane %v5311, 1
      %v5528 = vsel %vm1310, %v5526, %v5527
      %v5529 = vrot.slane %v5312, 1
      %v5530 = vsel %vm1310, %v5527, %v5529
      %v5531 = vrot.slane %v5313, 1
      %v5532 = vsel %vm1310, %v5529, %v5531
      %v5533 = vrot.slane %v5314, 1
      %v5534 = vrot.slane %v5315, 1
      %v5535 = vsel %vm1310, %v5533, %v5534
      %v5536 = vrot.slane %v5316, 1
      %v5537 = vsel %vm1310, %v5534, %v5536
      %v5538 = vrot.slane %v5317, 1
      %v5539 = vsel %vm1310, %v5536, %v5538
      %v5540 = vrot.slane %v5318, 1
      %v5541 = vrot.slane %v5319, 1
      %v5542 = vsel %vm1310, %v5540, %v5541
      %v5543 = vrot.slane %v5320, 1
      %v5544 = vsel %vm1310, %v5541, %v5543
      %v5545 = vrot.slane %v5321, 1
      %v5546 = vsel %vm1310, %v5543, %v5545
      %v5547 = vrot.slane %v5322, 1
      %v5548 = vrot.slane %v5323, 1
      %v5549 = vsel %vm1310, %v5547, %v5548
      %v5550 = vrot.slane %v5324, 1
      %v5551 = vsel %vm1310, %v5548, %v5550
      %v5552 = vrot.slane %v5325, 1
      %v5553 = vsel %vm1310, %v5550, %v5552
      %v5554 = vrot.slane %v5326, 1
      %v5555 = vrot.slane %v5327, 1
      %v5556 = vsel %vm1310, %v5554, %v5555
      %v5557 = vrot.slane %v5328, 1
      %v5558 = vsel %vm1310, %v5555, %v5557
      %v5559 = vrot.slane %v5329, 1
      %v5560 = vsel %vm1310, %v5557, %v5559
      %v5561 = vrot.slane %v5330, 1
      %v5562 = vrot.slane %v5331, 1
      %v5563 = vsel %vm1310, %v5561, %v5562
      %v5564 = vrot.slane %v5332, 1
      %v5565 = vsel %vm1310, %v5562, %v5564
      %v5566 = vrot.slane %v5333, 1
      %v5567 = vsel %vm1310, %v5564, %v5566
      %v5568 = vrot.slane %v5334, 1
      %v5569 = vrot.slane %v5335, 1
      %v5570 = vsel %vm1310, %v5568, %v5569
      %v5571 = vrot.slane %v5336, 1
      %v5572 = vsel %vm1310, %v5569, %v5571
      %v5573 = vrot.slane %v5337, 1
      %v5574 = vsel %vm1310, %v5571, %v5573
      %v5575 = vrot.slane %v5338, 1
      %v5576 = vrot.slane %v5339, 1
      %v5577 = vsel %vm1310, %v5575, %v5576
      %v5578 = vrot.slane %v5340, 1
      %v5579 = vsel %vm1310, %v5576, %v5578
      %v5580 = vrot.slane %v5341, 1
      %v5581 = vsel %vm1310, %v5578, %v5580
      %v5582 = vrot.slane %v5342, 1
      %v5583 = vrot.slane %v5343, 1
      %v5584 = vsel %vm1310, %v5582, %v5583
      %v5585 = vrot.slane %v5344, 1
      %v5586 = vsel %vm1310, %v5583, %v5585
      %v5587 = vrot.slane %v5345, 1
      %v5588 = vsel %vm1310, %v5585, %v5587
      %v5589 = vrot.slane %v5346, 1
      %v5590 = vrot.slane %v5347, 1
      %v5591 = vsel %vm1310, %v5589, %v5590
      %v5592 = vrot.slane %v5348, 1
      %v5593 = vsel %vm1310, %v5590, %v5592
      %v5594 = vrot.slane %v5349, 1
      %v5595 = vsel %vm1310, %v5592, %v5594
      %v5596 = vrot.slane %v5350, 1
      %v5597 = vrot.slane %v5351, 1
      %v5598 = vsel %vm1310, %v5596, %v5597
      %v5599 = vrot.slane %v5352, 1
      %v5600 = vsel %vm1310, %v5597, %v5599
      %v5601 = vrot.slane %v5353, 1
      %v5602 = vsel %vm1310, %v5599, %v5601
      %v5603 = vrot.slane %v5354, 1
      %v5604 = vrot.slane %v5355, 1
      %v5605 = vsel %vm1310, %v5603, %v5604
      %v5606 = vrot.slane %v5356, 1
      %v5607 = vsel %vm1310, %v5604, %v5606
      %v5608 = vrot.slane %v5357, 1
      %v5609 = vsel %vm1310, %v5606, %v5608
      %v5610 = vrot.slane %v5358, 1
      %v5611 = vrot.slane %v5359, 1
      %v5612 = vsel %vm1310, %v5610, %v5611
      %v5613 = vrot.slane %v5360, 1
      %v5614 = vsel %vm1310, %v5611, %v5613
      %v5615 = vrot.slane %v5361, 1
      %v5616 = vsel %vm1310, %v5613, %v5615
      %v5617 = vrot.slane %v5362, 1
      %v5618 = vrot.slane %v5363, 1
      %v5619 = vsel %vm1310, %v5617, %v5618
      %v5620 = vrot.slane %v5364, 1
      %v5621 = vsel %vm1310, %v5618, %v5620
      %v5622 = vrot.slane %v5365, 1
      %v5623 = vsel %vm1310, %v5620, %v5622
      %v5624 = vrot.slane %v5366, 1
      %v5625 = vrot.slane %v5367, 1
      %v5626 = vsel %vm1310, %v5624, %v5625
      %v5627 = vrot.slane %v5368, 1
      %v5628 = vsel %vm1310, %v5625, %v5627
      %v5629 = vrot.slane %v5369, 1
      %v5630 = vsel %vm1310, %v5627, %v5629
      %v5631 = vrot.slane %v5370, 1
      %v5632 = vrot.slane %v5371, 1
      %v5633 = vsel %vm1310, %v5631, %v5632
      %v5634 = vrot.slane %v5372, 1
      %v5635 = vsel %vm1310, %v5632, %v5634
      %v5636 = vrot.slane %v5373, 1
      %v5637 = vsel %vm1310, %v5634, %v5636
      %v5638 = vrot.slane %v5374, 1
      %v5639 = vrot.slane %v5375, 1
      %v5640 = vsel %vm1310, %v5638, %v5639
      %v5641 = vrot.slane %v5376, 1
      %v5642 = vsel %vm1310, %v5639, %v5641
      %v5643 = vrot.slane %v5377, 1
      %v5644 = vsel %vm1310, %v5641, %v5643
      %v5645 = vrot.slane %v5378, 1
      %v5646 = vrot.slane %v5379, 1
      %v5647 = vsel %vm1310, %v5645, %v5646
      %v5648 = vrot.slane %v5380, 1
      %v5649 = vsel %vm1310, %v5646, %v5648
      %v5650 = vrot.slane %v5381, 1
      %v5651 = vsel %vm1310, %v5648, %v5650
      %v5652 = vrot.slane %v5382, 1
      %v5653 = vrot.slane %v5383, 1
      %v5654 = vsel %vm1310, %v5652, %v5653
      %v5655 = vrot.slane %v5384, 1
      %v5656 = vsel %vm1310, %v5653, %v5655
      %v5657 = vrot.slane %v5385, 1
      %v5658 = vsel %vm1310, %v5655, %v5657
      %v5659 = vrot.slane %v5386, 1
      %v5660 = vrot.slane %v5387, 1
      %v5661 = vsel %vm1310, %v5659, %v5660
      %v5662 = vrot.slane %v5388, 1
      %v5663 = vsel %vm1310, %v5660, %v5662
      %v5664 = vrot.slane %v5389, 1
      %v5665 = vsel %vm1310, %v5662, %v5664
      %v5666 = vld [vmem:[%s3 + $0x20] sm:$0xff]
      %v5667 = vld [vmem:[%s3 + $0x28] sm:$0xff]
      %v5668 = vld [vmem:[%s3 + $0x30] sm:$0xff]
      %v5669 = vld [vmem:[%s3 + $0x38] sm:$0xff]
      %vm5670 = vcmask 261120
      %v5671 = vsel %vm5670, %v5500, 0
      %v5673 = vsel %vm5670, %v5502, 0
      %v5675 = vsel %vm5670, %v5504, 0
      %v5677 = vsel %vm5670, %v5507, 0
      %v5679 = vsel %vm5670, %v5509, 0
      %v5681 = vsel %vm5670, %v5511, 0
      %v5683 = vsel %vm5670, %v5514, 0
      %v5685 = vsel %vm5670, %v5516, 0
      %v5687 = vsel %vm5670, %v5518, 0
      %v5689 = vsel %vm5670, %v5521, 0
      %v5691 = vsel %vm5670, %v5523, 0
      %v5693 = vsel %vm5670, %v5525, 0
      %v5695 = vsel %vm5670, %v5528, 0
      %v5697 = vsel %vm5670, %v5530, 0
      %v5699 = vsel %vm5670, %v5532, 0
      %v5701 = vsel %vm5670, %v5535, 0
      %v5703 = vsel %vm5670, %v5537, 0
      %v5705 = vsel %vm5670, %v5539, 0
      %v5707 = vsel %vm5670, %v5542, 0
      %v5709 = vsel %vm5670, %v5544, 0
      %v5711 = vsel %vm5670, %v5546, 0
      %v5713 = vsel %vm5670, %v5549, 0
      %v5715 = vsel %vm5670, %v5551, 0
      %v5717 = vsel %vm5670, %v5553, 0
      %v5719 = vsel %vm5670, %v5556, 0
      %v5721 = vsel %vm5670, %v5558, 0
      %v5723 = vsel %vm5670, %v5560, 0
      %v5725 = vsel %vm5670, %v5563, 0
      %v5727 = vsel %vm5670, %v5565, 0
      %v5729 = vsel %vm5670, %v5567, 0
      %v5731 = vsel %vm5670, %v5570, 0
      %v5733 = vsel %vm5670, %v5572, 0
      %v5735 = vsel %vm5670, %v5574, 0
      %v5737 = vsel %vm5670, %v5577, 0
      %v5739 = vsel %vm5670, %v5579, 0
      %v5741 = vsel %vm5670, %v5581, 0
      %v5743 = vsel %vm5670, %v5584, 0
      %v5745 = vsel %vm5670, %v5586, 0
      %v5747 = vsel %vm5670, %v5588, 0
      %v5749 = vsel %vm5670, %v5591, 0
      %v5751 = vsel %vm5670, %v5593, 0
      %v5753 = vsel %vm5670, %v5595, 0
      %v5755 = vsel %vm5670, %v5598, 0
      %v5757 = vsel %vm5670, %v5600, 0
      %v5759 = vsel %vm5670, %v5602, 0
      %v5761 = vsel %vm5670, %v5605, 0
      %v5763 = vsel %vm5670, %v5607, 0
      %v5765 = vsel %vm5670, %v5609, 0
      %v5767 = vsel %vm5670, %v5612, 0
      %v5769 = vsel %vm5670, %v5614, 0
      %v5771 = vsel %vm5670, %v5616, 0
      %v5773 = vsel %vm5670, %v5619, 0
      %v5775 = vsel %vm5670, %v5621, 0
      %v5777 = vsel %vm5670, %v5623, 0
      %v5779 = vsel %vm5670, %v5626, 0
      %v5781 = vsel %vm5670, %v5628, 0
      %v5783 = vsel %vm5670, %v5630, 0
      %v5785 = vsel %vm5670, %v5633, 0
      %v5787 = vsel %vm5670, %v5635, 0
      %v5789 = vsel %vm5670, %v5637, 0
      %v5791 = vsel %vm5670, %v5640, 0
      %v5793 = vsel %vm5670, %v5642, 0
      %v5795 = vsel %vm5670, %v5644, 0
      %v5797 = vsel %vm5670, %v5647, 0
      %v5799 = vsel %vm5670, %v5649, 0
      %v5801 = vsel %vm5670, %v5651, 0
      %v5803 = vsel %vm5670, %v5654, 0
      %v5805 = vsel %vm5670, %v5656, 0
      %v5807 = vsel %vm5670, %v5658, 0
      %v5809 = vsel %vm5670, %v5661, 0
      %v5811 = vsel %vm5670, %v5663, 0
      %v5813 = vsel %vm5670, %v5665, 0
      %5815 = vmatprep.subr.mxu0 0.0
      %5816 = vmatpush1.msra.mxu0 %v5666
      %5817 = vmatprep.subr.mxu0 0.0
      %5818 = vmatpush1.msra.mxu0 %v5667
      %5819 = vmatprep.subr.mxu0 0.0
      %5820 = vmatpush1.msra.mxu0 %v5668
      %5821 = vmatprep.subr.mxu0 0.0
      %5822 = vmatpush1.msra.mxu0 %v5669
      %5823 = vmatprep.subr.mxu0 0.0
      %5824 = vmatpush1.msra.mxu0 0.0
      %5825 = vmatprep.subr.mxu0 0.0
      %5826 = vmatpush1.msra.mxu0 0.0
      %5827 = vmatprep.subr.mxu0 0.0
      %5828 = vmatpush1.msra.mxu0 0.0
      %5829 = vmatprep.subr.mxu0 0.0
      %5830 = vmatpush1.msra.mxu0 0.0
      %5831 = vmatprep.subr.mxu0 0.0
      %5832 = vmatpush1.msra.mxu0 0.0
      %5833 = vmatprep.subr.mxu0 0.0
      %5834 = vmatpush1.msra.mxu0 0.0
      %5835 = vmatprep.subr.mxu0 0.0
      %5836 = vmatpush1.msra.mxu0 0.0
      %5837 = vmatprep.subr.mxu0 0.0
      %5838 = vmatpush1.msra.mxu0 0.0
      %5839 = vmatprep.subr.mxu0 0.0
      %5840 = vmatpush1.msra.mxu0 0.0
      %5841 = vmatprep.subr.mxu0 0.0
      %5842 = vmatpush1.msra.mxu0 0.0
      %5843 = vmatprep.subr.mxu0 0.0
      %5844 = vmatpush1.msra.mxu0 0.0
      %5845 = vmatprep.subr.mxu0 0.0
      %5846 = vmatpush1.msra.mxu0 0.0
      %5847 = vmatprep.subr.mxu0 0.0
      %5848 = vmatpush1.msra.mxu0 0.0
      %5849 = vmatprep.subr.mxu0 0.0
      %5850 = vmatpush1.msra.mxu0 0.0
      %5851 = vmatprep.subr.mxu0 0.0
      %5852 = vmatpush1.msra.mxu0 0.0
      %5853 = vmatprep.subr.mxu0 0.0
      %5854 = vmatpush1.msra.mxu0 0.0
      %5855 = vmatprep.subr.mxu0 0.0
      %5856 = vmatpush1.msra.mxu0 0.0
      %5857 = vmatprep.subr.mxu0 0.0
      %5858 = vmatpush1.msra.mxu0 0.0
      %5859 = vmatprep.subr.mxu0 0.0
      %5860 = vmatpush1.msra.mxu0 0.0
      %5861 = vmatprep.subr.mxu0 0.0
      %5862 = vmatpush1.msra.mxu0 0.0
      %5863 = vmatprep.subr.mxu0 0.0
      %5864 = vmatpush1.msra.mxu0 0.0
      %5865 = vmatprep.subr.mxu0 0.0
      %5866 = vmatpush1.msra.mxu0 0.0
      %5867 = vmatprep.subr.mxu0 0.0
      %5868 = vmatpush1.msra.mxu0 0.0
      %5869 = vmatprep.subr.mxu0 0.0
      %5870 = vmatpush1.msra.mxu0 0.0
      %5871 = vmatprep.subr.mxu0 0.0
      %5872 = vmatpush1.msra.mxu0 0.0
      %5873 = vmatprep.subr.mxu0 0.0
      %5874 = vmatpush1.msra.mxu0 0.0
      %5875 = vmatprep.subr.mxu0 0.0
      %5876 = vmatpush1.msra.mxu0 0.0
      %5877 = vmatprep.subr.mxu0 0.0
      %5878 = vmatpush1.msra.mxu0 0.0
      %5879 = vmatprep.mubr.f32.mxu0 0.0
      %5880 = vmatmul.mubr.f32.gmra.mrb[0].mxu0 %v5671
      %v5881 = vpop.f32.mrb[0].mxu0
      %v5882 = vadd.f32 0.0, %v5881
      %v5883 = vpop.f32.mrb[0].mxu0
      %5884 = vmatprep.mubr.f32.mxu0 0.0
      %5885 = vmatmul.mubr.f32.gmra.mrb[0].mxu0 %v5673
      %v5886 = vpop.f32.mrb[0].mxu0
      %v5887 = vadd.f32 0.0, %v5886
      %v5888 = vpop.f32.mrb[0].mxu0
      %5889 = vmatprep.mubr.f32.mxu0 0.0
      %5890 = vmatmul.mubr.f32.gmra.mrb[0].mxu0 %v5675
      %v5891 = vpop.f32.mrb[0].mxu0
      %v5892 = vadd.f32 0.0, %v5891
      %v5893 = vpop.f32.mrb[0].mxu0
      %5894 = vmatprep.mubr.f32.mxu0 0.0
      %5895 = vmatmul.mubr.f32.gmra.mrb[0].mxu0 %v5677
      %v5896 = vpop.f32.mrb[0].mxu0
      %v5897 = vadd.f32 0.0, %v5896
      %v5898 = vpop.f32.mrb[0].mxu0
      %5899 = vmatprep.mubr.f32.mxu0 0.0
      %5900 = vmatmul.mubr.f32.gmra.mrb[0].mxu0 %v5679
      %v5901 = vpop.f32.mrb[0].mxu0
      %v5902 = vadd.f32 0.0, %v5901
      %v5903 = vpop.f32.mrb[0].mxu0
      %5904 = vmatprep.mubr.f32.mxu0 0.0
      %5905 = vmatmul.mubr.f32.gmra.mrb[0].mxu0 %v5681
      %v5906 = vpop.f32.mrb[0].mxu0
      %v5907 = vadd.f32 0.0, %v5906
      %v5908 = vpop.f32.mrb[0].mxu0
      %5909 = vmatprep.mubr.f32.mxu0 0.0
      %5910 = vmatmul.mubr.f32.gmra.mrb[0].mxu0 %v5683
      %v5911 = vpop.f32.mrb[0].mxu0
      %v5912 = vadd.f32 0.0, %v5911
      %v5913 = vpop.f32.mrb[0].mxu0
      %5914 = vmatprep.mubr.f32.mxu0 0.0
      %5915 = vmatmul.mubr.f32.gmra.mrb[0].mxu0 %v5685
      %v5916 = vpop.f32.mrb[0].mxu0
      %v5917 = vadd.f32 0.0, %v5916
      %v5918 = vpop.f32.mrb[0].mxu0
      %5919 = vmatprep.mubr.f32.mxu0 0.0
      %5920 = vmatmul.mubr.f32.gmra.mrb[0].mxu0 %v5687
      %v5921 = vpop.f32.mrb[0].mxu0
      %v5922 = vadd.f32 0.0, %v5921
      %v5923 = vpop.f32.mrb[0].mxu0
      %5924 = vmatprep.mubr.f32.mxu0 0.0
      %5925 = vmatmul.mubr.f32.gmra.mrb[0].mxu0 %v5689
      %v5926 = vpop.f32.mrb[0].mxu0
      %v5927 = vadd.f32 0.0, %v5926
      %v5928 = vpop.f32.mrb[0].mxu0
      %5929 = vmatprep.mubr.f32.mxu0 0.0
      %5930 = vmatmul.mubr.f32.gmra.mrb[0].mxu0 %v5691
      %v5931 = vpop.f32.mrb[0].mxu0
      %v5932 = vadd.f32 0.0, %v5931
      %v5933 = vpop.f32.mrb[0].mxu0
      %5934 = vmatprep.mubr.f32.mxu0 0.0
      %5935 = vmatmul.mubr.f32.gmra.mrb[0].mxu0 %v5693
      %v5936 = vpop.f32.mrb[0].mxu0
      %v5937 = vadd.f32 0.0, %v5936
      %v5938 = vpop.f32.mrb[0].mxu0
      %5939 = vmatprep.mubr.f32.mxu0 0.0
      %5940 = vmatmul.mubr.f32.gmra.mrb[0].mxu0 %v5695
      %v5941 = vpop.f32.mrb[0].mxu0
      %v5942 = vadd.f32 0.0, %v5941
      %v5943 = vpop.f32.mrb[0].mxu0
      %5944 = vmatprep.mubr.f32.mxu0 0.0
      %5945 = vmatmul.mubr.f32.gmra.mrb[0].mxu0 %v5697
      %v5946 = vpop.f32.mrb[0].mxu0
      %v5947 = vadd.f32 0.0, %v5946
      %v5948 = vpop.f32.mrb[0].mxu0
      %5949 = vmatprep.mubr.f32.mxu0 0.0
      %5950 = vmatmul.mubr.f32.gmra.mrb[0].mxu0 %v5699
      %v5951 = vpop.f32.mrb[0].mxu0
      %v5952 = vadd.f32 0.0, %v5951
      %v5953 = vpop.f32.mrb[0].mxu0
      %5954 = vmatprep.mubr.f32.mxu0 0.0
      %5955 = vmatmul.mubr.f32.gmra.mrb[0].mxu0 %v5701
      %v5956 = vpop.f32.mrb[0].mxu0
      %v5957 = vadd.f32 0.0, %v5956
      %v5958 = vpop.f32.mrb[0].mxu0
      %5959 = vmatprep.mubr.f32.mxu0 0.0
      %5960 = vmatmul.mubr.f32.gmra.mrb[0].mxu0 %v5703
      %v5961 = vpop.f32.mrb[0].mxu0
      %v5962 = vadd.f32 0.0, %v5961
      %v5963 = vpop.f32.mrb[0].mxu0
      %5964 = vmatprep.mubr.f32.mxu0 0.0
      %5965 = vmatmul.mubr.f32.gmra.mrb[0].mxu0 %v5705
      %v5966 = vpop.f32.mrb[0].mxu0
      %v5967 = vadd.f32 0.0, %v5966
      %v5968 = vpop.f32.mrb[0].mxu0
      %5969 = vmatprep.mubr.f32.mxu0 0.0
      %5970 = vmatmul.mubr.f32.gmra.mrb[0].mxu0 %v5707
      %v5971 = vpop.f32.mrb[0].mxu0
      %v5972 = vadd.f32 0.0, %v5971
      %v5973 = vpop.f32.mrb[0].mxu0
      %5974 = vmatprep.mubr.f32.mxu0 0.0
      %5975 = vmatmul.mubr.f32.gmra.mrb[0].mxu0 %v5709
      %v5976 = vpop.f32.mrb[0].mxu0
      %v5977 = vadd.f32 0.0, %v5976
      %v5978 = vpop.f32.mrb[0].mxu0
      %5979 = vmatprep.mubr.f32.mxu0 0.0
      %5980 = vmatmul.mubr.f32.gmra.mrb[0].mxu0 %v5711
      %v5981 = vpop.f32.mrb[0].mxu0
      %v5982 = vadd.f32 0.0, %v5981
      %v5983 = vpop.f32.mrb[0].mxu0
      %5984 = vmatprep.mubr.f32.mxu0 0.0
      %5985 = vmatmul.mubr.f32.gmra.mrb[0].mxu0 %v5713
      %v5986 = vpop.f32.mrb[0].mxu0
      %v5987 = vadd.f32 0.0, %v5986
      %v5988 = vpop.f32.mrb[0].mxu0
      %5989 = vmatprep.mubr.f32.mxu0 0.0
      %5990 = vmatmul.mubr.f32.gmra.mrb[0].mxu0 %v5715
      %v5991 = vpop.f32.mrb[0].mxu0
      %v5992 = vadd.f32 0.0, %v5991
      %v5993 = vpop.f32.mrb[0].mxu0
      %5994 = vmatprep.mubr.f32.mxu0 0.0
      %5995 = vmatmul.mubr.f32.gmra.mrb[0].mxu0 %v5717
      %v5996 = vpop.f32.mrb[0].mxu0
      %v5997 = vadd.f32 0.0, %v5996
      %v5998 = vpop.f32.mrb[0].mxu0
      %5999 = vmatprep.mubr.f32.mxu0 0.0
      %6000 = vmatmul.mubr.f32.gmra.mrb[0].mxu0 %v5719
      %v6001 = vpop.f32.mrb[0].mxu0
      %v6002 = vadd.f32 0.0, %v6001
      %v6003 = vpop.f32.mrb[0].mxu0
      %6004 = vmatprep.mubr.f32.mxu0 0.0
      %6005 = vmatmul.mubr.f32.gmra.mrb[0].mxu0 %v5721
      %v6006 = vpop.f32.mrb[0].mxu0
      %v6007 = vadd.f32 0.0, %v6006
      %v6008 = vpop.f32.mrb[0].mxu0
      %6009 = vmatprep.mubr.f32.mxu0 0.0
      %6010 = vmatmul.mubr.f32.gmra.mrb[0].mxu0 %v5723
      %v6011 = vpop.f32.mrb[0].mxu0
      %v6012 = vadd.f32 0.0, %v6011
      %v6013 = vpop.f32.mrb[0].mxu0
      %6014 = vmatprep.mubr.f32.mxu0 0.0
      %6015 = vmatmul.mubr.f32.gmra.mrb[0].mxu0 %v5725
      %v6016 = vpop.f32.mrb[0].mxu0
      %v6017 = vadd.f32 0.0, %v6016
      %v6018 = vpop.f32.mrb[0].mxu0
      %6019 = vmatprep.mubr.f32.mxu0 0.0
      %6020 = vmatmul.mubr.f32.gmra.mrb[0].mxu0 %v5727
      %v6021 = vpop.f32.mrb[0].mxu0
      %v6022 = vadd.f32 0.0, %v6021
      %v6023 = vpop.f32.mrb[0].mxu0
      %6024 = vmatprep.mubr.f32.mxu0 0.0
      %6025 = vmatmul.mubr.f32.gmra.mrb[0].mxu0 %v5729
      %v6026 = vpop.f32.mrb[0].mxu0
      %v6027 = vadd.f32 0.0, %v6026
      %v6028 = vpop.f32.mrb[0].mxu0
      %6029 = vmatprep.mubr.f32.mxu0 0.0
      %6030 = vmatmul.mubr.f32.gmra.mrb[0].mxu0 %v5731
      %v6031 = vpop.f32.mrb[0].mxu0
      %v6032 = vadd.f32 0.0, %v6031
      %v6033 = vpop.f32.mrb[0].mxu0
      %6034 = vmatprep.mubr.f32.mxu0 0.0
      %6035 = vmatmul.mubr.f32.gmra.mrb[0].mxu0 %v5733
      %v6036 = vpop.f32.mrb[0].mxu0
      %v6037 = vadd.f32 0.0, %v6036
      %v6038 = vpop.f32.mrb[0].mxu0
      %6039 = vmatprep.mubr.f32.mxu0 0.0
      %6040 = vmatmul.mubr.f32.gmra.mrb[0].mxu0 %v5735
      %v6041 = vpop.f32.mrb[0].mxu0
      %v6042 = vadd.f32 0.0, %v6041
      %v6043 = vpop.f32.mrb[0].mxu0
      %6044 = vmatprep.mubr.f32.mxu0 0.0
      %6045 = vmatmul.mubr.f32.gmra.mrb[0].mxu0 %v5737
      %v6046 = vpop.f32.mrb[0].mxu0
      %v6047 = vadd.f32 0.0, %v6046
      %v6048 = vpop.f32.mrb[0].mxu0
      %6049 = vmatprep.mubr.f32.mxu0 0.0
      %6050 = vmatmul.mubr.f32.gmra.mrb[0].mxu0 %v5739
      %v6051 = vpop.f32.mrb[0].mxu0
      %v6052 = vadd.f32 0.0, %v6051
      %v6053 = vpop.f32.mrb[0].mxu0
      %6054 = vmatprep.mubr.f32.mxu0 0.0
      %6055 = vmatmul.mubr.f32.gmra.mrb[0].mxu0 %v5741
      %v6056 = vpop.f32.mrb[0].mxu0
      %v6057 = vadd.f32 0.0, %v6056
      %v6058 = vpop.f32.mrb[0].mxu0
      %6059 = vmatprep.mubr.f32.mxu0 0.0
      %6060 = vmatmul.mubr.f32.gmra.mrb[0].mxu0 %v5743
      %v6061 = vpop.f32.mrb[0].mxu0
      %v6062 = vadd.f32 0.0, %v6061
      %v6063 = vpop.f32.mrb[0].mxu0
      %6064 = vmatprep.mubr.f32.mxu0 0.0
      %6065 = vmatmul.mubr.f32.gmra.mrb[0].mxu0 %v5745
      %v6066 = vpop.f32.mrb[0].mxu0
      %v6067 = vadd.f32 0.0, %v6066
      %v6068 = vpop.f32.mrb[0].mxu0
      %6069 = vmatprep.mubr.f32.mxu0 0.0
      %6070 = vmatmul.mubr.f32.gmra.mrb[0].mxu0 %v5747
      %v6071 = vpop.f32.mrb[0].mxu0
      %v6072 = vadd.f32 0.0, %v6071
      %v6073 = vpop.f32.mrb[0].mxu0
      %6074 = vmatprep.mubr.f32.mxu0 0.0
      %6075 = vmatmul.mubr.f32.gmra.mrb[0].mxu0 %v5749
      %v6076 = vpop.f32.mrb[0].mxu0
      %v6077 = vadd.f32 0.0, %v6076
      %v6078 = vpop.f32.mrb[0].mxu0
      %6079 = vmatprep.mubr.f32.mxu0 0.0
      %6080 = vmatmul.mubr.f32.gmra.mrb[0].mxu0 %v5751
      %v6081 = vpop.f32.mrb[0].mxu0
      %v6082 = vadd.f32 0.0, %v6081
      %v6083 = vpop.f32.mrb[0].mxu0
      %6084 = vmatprep.mubr.f32.mxu0 0.0
      %6085 = vmatmul.mubr.f32.gmra.mrb[0].mxu0 %v5753
      %v6086 = vpop.f32.mrb[0].mxu0
      %v6087 = vadd.f32 0.0, %v6086
      %v6088 = vpop.f32.mrb[0].mxu0
      %6089 = vmatprep.mubr.f32.mxu0 0.0
      %6090 = vmatmul.mubr.f32.gmra.mrb[0].mxu0 %v5755
      %v6091 = vpop.f32.mrb[0].mxu0
      %v6092 = vadd.f32 0.0, %v6091
      %v6093 = vpop.f32.mrb[0].mxu0
      %6094 = vmatprep.mubr.f32.mxu0 0.0
      %6095 = vmatmul.mubr.f32.gmra.mrb[0].mxu0 %v5757
      %v6096 = vpop.f32.mrb[0].mxu0
      %v6097 = vadd.f32 0.0, %v6096
      %v6098 = vpop.f32.mrb[0].mxu0
      %6099 = vmatprep.mubr.f32.mxu0 0.0
      %6100 = vmatmul.mubr.f32.gmra.mrb[0].mxu0 %v5759
      %v6101 = vpop.f32.mrb[0].mxu0
      %v6102 = vadd.f32 0.0, %v6101
      %v6103 = vpop.f32.mrb[0].mxu0
      %6104 = vmatprep.mubr.f32.mxu0 0.0
      %6105 = vmatmul.mubr.f32.gmra.mrb[0].mxu0 %v5761
      %v6106 = vpop.f32.mrb[0].mxu0
      %v6107 = vadd.f32 0.0, %v6106
      %v6108 = vpop.f32.mrb[0].mxu0
      %6109 = vmatprep.mubr.f32.mxu0 0.0
      %6110 = vmatmul.mubr.f32.gmra.mrb[0].mxu0 %v5763
      %v6111 = vpop.f32.mrb[0].mxu0
      %v6112 = vadd.f32 0.0, %v6111
      %v6113 = vpop.f32.mrb[0].mxu0
      %6114 = vmatprep.mubr.f32.mxu0 0.0
      %6115 = vmatmul.mubr.f32.gmra.mrb[0].mxu0 %v5765
      %v6116 = vpop.f32.mrb[0].mxu0
      %v6117 = vadd.f32 0.0, %v6116
      %v6118 = vpop.f32.mrb[0].mxu0
      %6119 = vmatprep.mubr.f32.mxu0 0.0
      %6120 = vmatmul.mubr.f32.gmra.mrb[0].mxu0 %v5767
      %v6121 = vpop.f32.mrb[0].mxu0
      %v6122 = vadd.f32 0.0, %v6121
      %v6123 = vpop.f32.mrb[0].mxu0
      %6124 = vmatprep.mubr.f32.mxu0 0.0
      %6125 = vmatmul.mubr.f32.gmra.mrb[0].mxu0 %v5769
      %v6126 = vpop.f32.mrb[0].mxu0
      %v6127 = vadd.f32 0.0, %v6126
      %v6128 = vpop.f32.mrb[0].mxu0
      %6129 = vmatprep.mubr.f32.mxu0 0.0
      %6130 = vmatmul.mubr.f32.gmra.mrb[0].mxu0 %v5771
      %v6131 = vpop.f32.mrb[0].mxu0
      %v6132 = vadd.f32 0.0, %v6131
      %v6133 = vpop.f32.mrb[0].mxu0
      %6134 = vmatprep.mubr.f32.mxu0 0.0
      %6135 = vmatmul.mubr.f32.gmra.mrb[0].mxu0 %v5773
      %v6136 = vpop.f32.mrb[0].mxu0
      %v6137 = vadd.f32 0.0, %v6136
      %v6138 = vpop.f32.mrb[0].mxu0
      %6139 = vmatprep.mubr.f32.mxu0 0.0
      %6140 = vmatmul.mubr.f32.gmra.mrb[0].mxu0 %v5775
      %v6141 = vpop.f32.mrb[0].mxu0
      %v6142 = vadd.f32 0.0, %v6141
      %v6143 = vpop.f32.mrb[0].mxu0
      %6144 = vmatprep.mubr.f32.mxu0 0.0
      %6145 = vmatmul.mubr.f32.gmra.mrb[0].mxu0 %v5777
      %v6146 = vpop.f32.mrb[0].mxu0
      %v6147 = vadd.f32 0.0, %v6146
      %v6148 = vpop.f32.mrb[0].mxu0
      %6149 = vmatprep.mubr.f32.mxu0 0.0
      %6150 = vmatmul.mubr.f32.gmra.mrb[0].mxu0 %v5779
      %v6151 = vpop.f32.mrb[0].mxu0
      %v6152 = vadd.f32 0.0, %v6151
      %v6153 = vpop.f32.mrb[0].mxu0
      %6154 = vmatprep.mubr.f32.mxu0 0.0
      %6155 = vmatmul.mubr.f32.gmra.mrb[0].mxu0 %v5781
      %v6156 = vpop.f32.mrb[0].mxu0
      %v6157 = vadd.f32 0.0, %v6156
      %v6158 = vpop.f32.mrb[0].mxu0
      %6159 = vmatprep.mubr.f32.mxu0 0.0
      %6160 = vmatmul.mubr.f32.gmra.mrb[0].mxu0 %v5783
      %v6161 = vpop.f32.mrb[0].mxu0
      %v6162 = vadd.f32 0.0, %v6161
      %v6163 = vpop.f32.mrb[0].mxu0
      %6164 = vmatprep.mubr.f32.mxu0 0.0
      %6165 = vmatmul.mubr.f32.gmra.mrb[0].mxu0 %v5785
      %v6166 = vpop.f32.mrb[0].mxu0
      %v6167 = vadd.f32 0.0, %v6166
      %v6168 = vpop.f32.mrb[0].mxu0
      %6169 = vmatprep.mubr.f32.mxu0 0.0
      %6170 = vmatmul.mubr.f32.gmra.mrb[0].mxu0 %v5787
      %v6171 = vpop.f32.mrb[0].mxu0
      %v6172 = vadd.f32 0.0, %v6171
      %v6173 = vpop.f32.mrb[0].mxu0
      %6174 = vmatprep.mubr.f32.mxu0 0.0
      %6175 = vmatmul.mubr.f32.gmra.mrb[0].mxu0 %v5789
      %v6176 = vpop.f32.mrb[0].mxu0
      %v6177 = vadd.f32 0.0, %v6176
      %v6178 = vpop.f32.mrb[0].mxu0
      %6179 = vmatprep.mubr.f32.mxu0 0.0
      %6180 = vmatmul.mubr.f32.gmra.mrb[0].mxu0 %v5791
      %v6181 = vpop.f32.mrb[0].mxu0
      %v6182 = vadd.f32 0.0, %v6181
      %v6183 = vpop.f32.mrb[0].mxu0
      %6184 = vmatprep.mubr.f32.mxu0 0.0
      %6185 = vmatmul.mubr.f32.gmra.mrb[0].mxu0 %v5793
      %v6186 = vpop.f32.mrb[0].mxu0
      %v6187 = vadd.f32 0.0, %v6186
      %v6188 = vpop.f32.mrb[0].mxu0
      %6189 = vmatprep.mubr.f32.mxu0 0.0
      %6190 = vmatmul.mubr.f32.gmra.mrb[0].mxu0 %v5795
      %v6191 = vpop.f32.mrb[0].mxu0
      %v6192 = vadd.f32 0.0, %v6191
      %v6193 = vpop.f32.mrb[0].mxu0
      %6194 = vmatprep.mubr.f32.mxu0 0.0
      %6195 = vmatmul.mubr.f32.gmra.mrb[0].mxu0 %v5797
      %v6196 = vpop.f32.mrb[0].mxu0
      %v6197 = vadd.f32 0.0, %v6196
      %v6198 = vpop.f32.mrb[0].mxu0
      %6199 = vmatprep.mubr.f32.mxu0 0.0
      %6200 = vmatmul.mubr.f32.gmra.mrb[0].mxu0 %v5799
      %v6201 = vpop.f32.mrb[0].mxu0
      %v6202 = vadd.f32 0.0, %v6201
      %v6203 = vpop.f32.mrb[0].mxu0
      %6204 = vmatprep.mubr.f32.mxu0 0.0
      %6205 = vmatmul.mubr.f32.gmra.mrb[0].mxu0 %v5801
      %v6206 = vpop.f32.mrb[0].mxu0
      %v6207 = vadd.f32 0.0, %v6206
      %v6208 = vpop.f32.mrb[0].mxu0
      %6209 = vmatprep.mubr.f32.mxu0 0.0
      %6210 = vmatmul.mubr.f32.gmra.mrb[0].mxu0 %v5803
      %v6211 = vpop.f32.mrb[0].mxu0
      %v6212 = vadd.f32 0.0, %v6211
      %v6213 = vpop.f32.mrb[0].mxu0
      %6214 = vmatprep.mubr.f32.mxu0 0.0
      %6215 = vmatmul.mubr.f32.gmra.mrb[0].mxu0 %v5805
      %v6216 = vpop.f32.mrb[0].mxu0
      %v6217 = vadd.f32 0.0, %v6216
      %v6218 = vpop.f32.mrb[0].mxu0
      %6219 = vmatprep.mubr.f32.mxu0 0.0
      %6220 = vmatmul.mubr.f32.gmra.mrb[0].mxu0 %v5807
      %v6221 = vpop.f32.mrb[0].mxu0
      %v6222 = vadd.f32 0.0, %v6221
      %v6223 = vpop.f32.mrb[0].mxu0
      %6224 = vmatprep.mubr.f32.mxu0 0.0
      %6225 = vmatmul.mubr.f32.gmra.mrb[0].mxu0 %v5809
      %v6226 = vpop.f32.mrb[0].mxu0
      %v6227 = vadd.f32 0.0, %v6226
      %v6228 = vpop.f32.mrb[0].mxu0
      %6229 = vmatprep.mubr.f32.mxu0 0.0
      %6230 = vmatmul.mubr.f32.gmra.mrb[0].mxu0 %v5811
      %v6231 = vpop.f32.mrb[0].mxu0
      %v6232 = vadd.f32 0.0, %v6231
      %v6233 = vpop.f32.mrb[0].mxu0
      %6234 = vmatprep.mubr.f32.mxu0 0.0
      %6235 = vmatmul.mubr.f32.gmra.mrb[0].mxu0 %v5813
      %v6236 = vpop.f32.mrb[0].mxu0
      %v6237 = vadd.f32 0.0, %v6236
      %v6238 = vpop.f32.mrb[0].mxu0
      %6239 = vdwg.mxu0
      %v6240 = vsel %vm5670, %v5294, 0
      %v6242 = vsel %vm5670, %v5295, 0
      %v6244 = vsel %vm5670, %v5296, 0
      %v6246 = vsel %vm5670, %v5298, 0
      %v6248 = vsel %vm5670, %v5299, 0
      %v6250 = vsel %vm5670, %v5300, 0
      %v6252 = vsel %vm5670, %v5302, 0
      %v6254 = vsel %vm5670, %v5303, 0
      %v6256 = vsel %vm5670, %v5304, 0
      %v6258 = vsel %vm5670, %v5306, 0
      %v6260 = vsel %vm5670, %v5307, 0
      %v6262 = vsel %vm5670, %v5308, 0
      %v6264 = vsel %vm5670, %v5310, 0
      %v6266 = vsel %vm5670, %v5311, 0
      %v6268 = vsel %vm5670, %v5312, 0
      %v6270 = vsel %vm5670, %v5314, 0
      %v6272 = vsel %vm5670, %v5315, 0
      %v6274 = vsel %vm5670, %v5316, 0
      %v6276 = vsel %vm5670, %v5318, 0
      %v6278 = vsel %vm5670, %v5319, 0
      %v6280 = vsel %vm5670, %v5320, 0
      %v6282 = vsel %vm5670, %v5322, 0
      %v6284 = vsel %vm5670, %v5323, 0
      %v6286 = vsel %vm5670, %v5324, 0
      %v6288 = vsel %vm5670, %v5326, 0
      %v6290 = vsel %vm5670, %v5327, 0
      %v6292 = vsel %vm5670, %v5328, 0
      %v6294 = vsel %vm5670, %v5330, 0
      %v6296 = vsel %vm5670, %v5331, 0
      %v6298 = vsel %vm5670, %v5332, 0
      %v6300 = vsel %vm5670, %v5334, 0
      %v6302 = vsel %vm5670, %v5335, 0
      %v6304 = vsel %vm5670, %v5336, 0
      %v6306 = vsel %vm5670, %v5338, 0
      %v6308 = vsel %vm5670, %v5339, 0
      %v6310 = vsel %vm5670, %v5340, 0
      %v6312 = vsel %vm5670, %v5342, 0
      %v6314 = vsel %vm5670, %v5343, 0
      %v6316 = vsel %vm5670, %v5344, 0
      %v6318 = vsel %vm5670, %v5346, 0
      %v6320 = vsel %vm5670, %v5347, 0
      %v6322 = vsel %vm5670, %v5348, 0
      %v6324 = vsel %vm5670, %v5350, 0
      %v6326 = vsel %vm5670, %v5351, 0
      %v6328 = vsel %vm5670, %v5352, 0
      %v6330 = vsel %vm5670, %v5354, 0
      %v6332 = vsel %vm5670, %v5355, 0
      %v6334 = vsel %vm5670, %v5356, 0
      %v6336 = vsel %vm5670, %v5358, 0
      %v6338 = vsel %vm5670, %v5359, 0
      %v6340 = vsel %vm5670, %v5360, 0
      %v6342 = vsel %vm5670, %v5362, 0
      %v6344 = vsel %vm5670, %v5363, 0
      %v6346 = vsel %vm5670, %v5364, 0
      %v6348 = vsel %vm5670, %v5366, 0
      %v6350 = vsel %vm5670, %v5367, 0
      %v6352 = vsel %vm5670, %v5368, 0
      %v6354 = vsel %vm5670, %v5370, 0
      %v6356 = vsel %vm5670, %v5371, 0
      %v6358 = vsel %vm5670, %v5372, 0
      %v6360 = vsel %vm5670, %v5374, 0
      %v6362 = vsel %vm5670, %v5375, 0
      %v6364 = vsel %vm5670, %v5376, 0
      %v6366 = vsel %vm5670, %v5378, 0
      %v6368 = vsel %vm5670, %v5379, 0
      %v6370 = vsel %vm5670, %v5380, 0
      %v6372 = vsel %vm5670, %v5382, 0
      %v6374 = vsel %vm5670, %v5383, 0
      %v6376 = vsel %vm5670, %v5384, 0
      %v6378 = vsel %vm5670, %v5386, 0
      %v6380 = vsel %vm5670, %v5387, 0
      %v6382 = vsel %vm5670, %v5388, 0
      %6384 = vmatprep.subr.mxu0 0.0
      %6385 = vmatpush1.msra.mxu0 %v5398
      %6386 = vmatprep.subr.mxu0 0.0
      %6387 = vmatpush1.msra.mxu0 %v5399
      %6388 = vmatprep.subr.mxu0 0.0
      %6389 = vmatpush1.msra.mxu0 %v5400
      %6390 = vmatprep.subr.mxu0 0.0
      %6391 = vmatpush1.msra.mxu0 %v5401
      %6392 = vmatprep.subr.mxu0 0.0
      %6393 = vmatpush1.msra.mxu0 0.0
      %6394 = vmatprep.subr.mxu0 0.0
      %6395 = vmatpush1.msra.mxu0 0.0
      %6396 = vmatprep.subr.mxu0 0.0
      %6397 = vmatpush1.msra.mxu0 0.0
      %6398 = vmatprep.subr.mxu0 0.0
      %6399 = vmatpush1.msra.mxu0 0.0
      %6400 = vmatprep.subr.mxu0 0.0
      %6401 = vmatpush1.msra.mxu0 0.0
      %6402 = vmatprep.subr.mxu0 0.0
      %6403 = vmatpush1.msra.mxu0 0.0
      %6404 = vmatprep.subr.mxu0 0.0
      %6405 = vmatpush1.msra.mxu0 0.0
      %6406 = vmatprep.subr.mxu0 0.0
      %6407 = vmatpush1.msra.mxu0 0.0
      %6408 = vmatprep.subr.mxu0 0.0
      %6409 = vmatpush1.msra.mxu0 0.0
      %6410 = vmatprep.subr.mxu0 0.0
      %6411 = vmatpush1.msra.mxu0 0.0
      %6412 = vmatprep.subr.mxu0 0.0
      %6413 = vmatpush1.msra.mxu0 0.0
      %6414 = vmatprep.subr.mxu0 0.0
      %6415 = vmatpush1.msra.mxu0 0.0
      %6416 = vmatprep.subr.mxu0 0.0
      %6417 = vmatpush1.msra.mxu0 0.0
      %6418 = vmatprep.subr.mxu0 0.0
      %6419 = vmatpush1.msra.mxu0 0.0
      %6420 = vmatprep.subr.mxu0 0.0
      %6421 = vmatpush1.msra.mxu0 0.0
      %6422 = vmatprep.subr.mxu0 0.0
      %6423 = vmatpush1.msra.mxu0 0.0
      %6424 = vmatprep.subr.mxu0 0.0
      %6425 = vmatpush1.msra.mxu0 0.0
      %6426 = vmatprep.subr.mxu0 0.0
      %6427 = vmatpush1.msra.mxu0 0.0
      %6428 = vmatprep.subr.mxu0 0.0
      %6429 = vmatpush1.msra.mxu0 0.0
      %6430 = vmatprep.subr.mxu0 0.0
      %6431 = vmatpush1.msra.mxu0 0.0
      %6432 = vmatprep.subr.mxu0 0.0
      %6433 = vmatpush1.msra.mxu0 0.0
      %6434 = vmatprep.subr.mxu0 0.0
      %6435 = vmatpush1.msra.mxu0 0.0
      %6436 = vmatprep.subr.mxu0 0.0
      %6437 = vmatpush1.msra.mxu0 0.0
      %6438 = vmatprep.subr.mxu0 0.0
      %6439 = vmatpush1.msra.mxu0 0.0
      %6440 = vmatprep.subr.mxu0 0.0
      %6441 = vmatpush1.msra.mxu0 0.0
      %6442 = vmatprep.subr.mxu0 0.0
      %6443 = vmatpush1.msra.mxu0 0.0
      %6444 = vmatprep.subr.mxu0 0.0
      %6445 = vmatpush1.msra.mxu0 0.0
      %6446 = vmatprep.subr.mxu0 0.0
      %6447 = vmatpush1.msra.mxu0 0.0
      %6448 = vmatprep.mubr.f32.mxu0 0.0
      %6449 = vmatmul.mubr.f32.gmra.mrb[0].mxu0 %v6240
      %v6450 = vpop.f32.mrb[0].mxu0
      %v6451 = vadd.f32 %v5882, %v6450
      %v6452 = vpop.f32.mrb[0].mxu0
      %6453 = vmatprep.mubr.f32.mxu0 0.0
      %6454 = vmatmul.mubr.f32.gmra.mrb[0].mxu0 %v6242
      %v6455 = vpop.f32.mrb[0].mxu0
      %v6456 = vadd.f32 %v5887, %v6455
      %v6457 = vpop.f32.mrb[0].mxu0
      %6458 = vmatprep.mubr.f32.mxu0 0.0
      %6459 = vmatmul.mubr.f32.gmra.mrb[0].mxu0 %v6244
      %v6460 = vpop.f32.mrb[0].mxu0
      %v6461 = vadd.f32 %v5892, %v6460
      %v6462 = vpop.f32.mrb[0].mxu0
      %6463 = vmatprep.mubr.f32.mxu0 0.0
      %6464 = vmatmul.mubr.f32.gmra.mrb[0].mxu0 %v6246
      %v6465 = vpop.f32.mrb[0].mxu0
      %v6466 = vadd.f32 %v5897, %v6465
      %v6467 = vpop.f32.mrb[0].mxu0
      %6468 = vmatprep.mubr.f32.mxu0 0.0
      %6469 = vmatmul.mubr.f32.gmra.mrb[0].mxu0 %v6248
      %v6470 = vpop.f32.mrb[0].mxu0
      %v6471 = vadd.f32 %v5902, %v6470
      %v6472 = vpop.f32.mrb[0].mxu0
      %6473 = vmatprep.mubr.f32.mxu0 0.0
      %6474 = vmatmul.mubr.f32.gmra.mrb[0].mxu0 %v6250
      %v6475 = vpop.f32.mrb[0].mxu0
      %v6476 = vadd.f32 %v5907, %v6475
      %v6477 = vpop.f32.mrb[0].mxu0
      %6478 = vmatprep.mubr.f32.mxu0 0.0
      %6479 = vmatmul.mubr.f32.gmra.mrb[0].mxu0 %v6252
      %v6480 = vpop.f32.mrb[0].mxu0
      %v6481 = vadd.f32 %v5912, %v6480
      %v6482 = vpop.f32.mrb[0].mxu0
      %6483 = vmatprep.mubr.f32.mxu0 0.0
      %6484 = vmatmul.mubr.f32.gmra.mrb[0].mxu0 %v6254
      %v6485 = vpop.f32.mrb[0].mxu0
      %v6486 = vadd.f32 %v5917, %v6485
      %v6487 = vpop.f32.mrb[0].mxu0
      %6488 = vmatprep.mubr.f32.mxu0 0.0
      %6489 = vmatmul.mubr.f32.gmra.mrb[0].mxu0 %v6256
      %v6490 = vpop.f32.mrb[0].mxu0
      %v6491 = vadd.f32 %v5922, %v6490
      %v6492 = vpop.f32.mrb[0].mxu0
      %6493 = vmatprep.mubr.f32.mxu0 0.0
      %6494 = vmatmul.mubr.f32.gmra.mrb[0].mxu0 %v6258
      %v6495 = vpop.f32.mrb[0].mxu0
      %v6496 = vadd.f32 %v5927, %v6495
      %v6497 = vpop.f32.mrb[0].mxu0
      %6498 = vmatprep.mubr.f32.mxu0 0.0
      %6499 = vmatmul.mubr.f32.gmra.mrb[0].mxu0 %v6260
      %v6500 = vpop.f32.mrb[0].mxu0
      %v6501 = vadd.f32 %v5932, %v6500
      %v6502 = vpop.f32.mrb[0].mxu0
      %6503 = vmatprep.mubr.f32.mxu0 0.0
      %6504 = vmatmul.mubr.f32.gmra.mrb[0].mxu0 %v6262
      %v6505 = vpop.f32.mrb[0].mxu0
      %v6506 = vadd.f32 %v5937, %v6505
      %v6507 = vpop.f32.mrb[0].mxu0
      %6508 = vmatprep.mubr.f32.mxu0 0.0
      %6509 = vmatmul.mubr.f32.gmra.mrb[0].mxu0 %v6264
      %v6510 = vpop.f32.mrb[0].mxu0
      %v6511 = vadd.f32 %v5942, %v6510
      %v6512 = vpop.f32.mrb[0].mxu0
      %6513 = vmatprep.mubr.f32.mxu0 0.0
      %6514 = vmatmul.mubr.f32.gmra.mrb[0].mxu0 %v6266
      %v6515 = vpop.f32.mrb[0].mxu0
      %v6516 = vadd.f32 %v5947, %v6515
      %v6517 = vpop.f32.mrb[0].mxu0
      %6518 = vmatprep.mubr.f32.mxu0 0.0
      %6519 = vmatmul.mubr.f32.gmra.mrb[0].mxu0 %v6268
      %v6520 = vpop.f32.mrb[0].mxu0
      %v6521 = vadd.f32 %v5952, %v6520
      %v6522 = vpop.f32.mrb[0].mxu0
      %6523 = vmatprep.mubr.f32.mxu0 0.0
      %6524 = vmatmul.mubr.f32.gmra.mrb[0].mxu0 %v6270
      %v6525 = vpop.f32.mrb[0].mxu0
      %v6526 = vadd.f32 %v5957, %v6525
      %v6527 = vpop.f32.mrb[0].mxu0
      %6528 = vmatprep.mubr.f32.mxu0 0.0
      %6529 = vmatmul.mubr.f32.gmra.mrb[0].mxu0 %v6272
      %v6530 = vpop.f32.mrb[0].mxu0
      %v6531 = vadd.f32 %v5962, %v6530
      %v6532 = vpop.f32.mrb[0].mxu0
      %6533 = vmatprep.mubr.f32.mxu0 0.0
      %6534 = vmatmul.mubr.f32.gmra.mrb[0].mxu0 %v6274
      %v6535 = vpop.f32.mrb[0].mxu0
      %v6536 = vadd.f32 %v5967, %v6535
      %v6537 = vpop.f32.mrb[0].mxu0
      %6538 = vmatprep.mubr.f32.mxu0 0.0
      %6539 = vmatmul.mubr.f32.gmra.mrb[0].mxu0 %v6276
      %v6540 = vpop.f32.mrb[0].mxu0
      %v6541 = vadd.f32 %v5972, %v6540
      %v6542 = vpop.f32.mrb[0].mxu0
      %6543 = vmatprep.mubr.f32.mxu0 0.0
      %6544 = vmatmul.mubr.f32.gmra.mrb[0].mxu0 %v6278
      %v6545 = vpop.f32.mrb[0].mxu0
      %v6546 = vadd.f32 %v5977, %v6545
      %v6547 = vpop.f32.mrb[0].mxu0
      %6548 = vmatprep.mubr.f32.mxu0 0.0
      %6549 = vmatmul.mubr.f32.gmra.mrb[0].mxu0 %v6280
      %v6550 = vpop.f32.mrb[0].mxu0
      %v6551 = vadd.f32 %v5982, %v6550
      %v6552 = vpop.f32.mrb[0].mxu0
      %6553 = vmatprep.mubr.f32.mxu0 0.0
      %6554 = vmatmul.mubr.f32.gmra.mrb[0].mxu0 %v6282
      %v6555 = vpop.f32.mrb[0].mxu0
      %v6556 = vadd.f32 %v5987, %v6555
      %v6557 = vpop.f32.mrb[0].mxu0
      %6558 = vmatprep.mubr.f32.mxu0 0.0
      %6559 = vmatmul.mubr.f32.gmra.mrb[0].mxu0 %v6284
      %v6560 = vpop.f32.mrb[0].mxu0
      %v6561 = vadd.f32 %v5992, %v6560
      %v6562 = vpop.f32.mrb[0].mxu0
      %6563 = vmatprep.mubr.f32.mxu0 0.0
      %6564 = vmatmul.mubr.f32.gmra.mrb[0].mxu0 %v6286
      %v6565 = vpop.f32.mrb[0].mxu0
      %v6566 = vadd.f32 %v5997, %v6565
      %v6567 = vpop.f32.mrb[0].mxu0
      %6568 = vmatprep.mubr.f32.mxu0 0.0
      %6569 = vmatmul.mubr.f32.gmra.mrb[0].mxu0 %v6288
      %v6570 = vpop.f32.mrb[0].mxu0
      %v6571 = vadd.f32 %v6002, %v6570
      %v6572 = vpop.f32.mrb[0].mxu0
      %6573 = vmatprep.mubr.f32.mxu0 0.0
      %6574 = vmatmul.mubr.f32.gmra.mrb[0].mxu0 %v6290
      %v6575 = vpop.f32.mrb[0].mxu0
      %v6576 = vadd.f32 %v6007, %v6575
      %v6577 = vpop.f32.mrb[0].mxu0
      %6578 = vmatprep.mubr.f32.mxu0 0.0
      %6579 = vmatmul.mubr.f32.gmra.mrb[0].mxu0 %v6292
      %v6580 = vpop.f32.mrb[0].mxu0
      %v6581 = vadd.f32 %v6012, %v6580
      %v6582 = vpop.f32.mrb[0].mxu0
      %6583 = vmatprep.mubr.f32.mxu0 0.0
      %6584 = vmatmul.mubr.f32.gmra.mrb[0].mxu0 %v6294
      %v6585 = vpop.f32.mrb[0].mxu0
      %v6586 = vadd.f32 %v6017, %v6585
      %v6587 = vpop.f32.mrb[0].mxu0
      %6588 = vmatprep.mubr.f32.mxu0 0.0
      %6589 = vmatmul.mubr.f32.gmra.mrb[0].mxu0 %v6296
      %v6590 = vpop.f32.mrb[0].mxu0
      %v6591 = vadd.f32 %v6022, %v6590
      %v6592 = vpop.f32.mrb[0].mxu0
      %6593 = vmatprep.mubr.f32.mxu0 0.0
      %6594 = vmatmul.mubr.f32.gmra.mrb[0].mxu0 %v6298
      %v6595 = vpop.f32.mrb[0].mxu0
      %v6596 = vadd.f32 %v6027, %v6595
      %v6597 = vpop.f32.mrb[0].mxu0
      %6598 = vmatprep.mubr.f32.mxu0 0.0
      %6599 = vmatmul.mubr.f32.gmra.mrb[0].mxu0 %v6300
      %v6600 = vpop.f32.mrb[0].mxu0
      %v6601 = vadd.f32 %v6032, %v6600
      %v6602 = vpop.f32.mrb[0].mxu0
      %6603 = vmatprep.mubr.f32.mxu0 0.0
      %6604 = vmatmul.mubr.f32.gmra.mrb[0].mxu0 %v6302
      %v6605 = vpop.f32.mrb[0].mxu0
      %v6606 = vadd.f32 %v6037, %v6605
      %v6607 = vpop.f32.mrb[0].mxu0
      %6608 = vmatprep.mubr.f32.mxu0 0.0
      %6609 = vmatmul.mubr.f32.gmra.mrb[0].mxu0 %v6304
      %v6610 = vpop.f32.mrb[0].mxu0
      %v6611 = vadd.f32 %v6042, %v6610
      %v6612 = vpop.f32.mrb[0].mxu0
      %6613 = vmatprep.mubr.f32.mxu0 0.0
      %6614 = vmatmul.mubr.f32.gmra.mrb[0].mxu0 %v6306
      %v6615 = vpop.f32.mrb[0].mxu0
      %v6616 = vadd.f32 %v6047, %v6615
      %v6617 = vpop.f32.mrb[0].mxu0
      %6618 = vmatprep.mubr.f32.mxu0 0.0
      %6619 = vmatmul.mubr.f32.gmra.mrb[0].mxu0 %v6308
      %v6620 = vpop.f32.mrb[0].mxu0
      %v6621 = vadd.f32 %v6052, %v6620
      %v6622 = vpop.f32.mrb[0].mxu0
      %6623 = vmatprep.mubr.f32.mxu0 0.0
      %6624 = vmatmul.mubr.f32.gmra.mrb[0].mxu0 %v6310
      %v6625 = vpop.f32.mrb[0].mxu0
      %v6626 = vadd.f32 %v6057, %v6625
      %v6627 = vpop.f32.mrb[0].mxu0
      %6628 = vmatprep.mubr.f32.mxu0 0.0
      %6629 = vmatmul.mubr.f32.gmra.mrb[0].mxu0 %v6312
      %v6630 = vpop.f32.mrb[0].mxu0
      %v6631 = vadd.f32 %v6062, %v6630
      %v6632 = vpop.f32.mrb[0].mxu0
      %6633 = vmatprep.mubr.f32.mxu0 0.0
      %6634 = vmatmul.mubr.f32.gmra.mrb[0].mxu0 %v6314
      %v6635 = vpop.f32.mrb[0].mxu0
      %v6636 = vadd.f32 %v6067, %v6635
      %v6637 = vpop.f32.mrb[0].mxu0
      %6638 = vmatprep.mubr.f32.mxu0 0.0
      %6639 = vmatmul.mubr.f32.gmra.mrb[0].mxu0 %v6316
      %v6640 = vpop.f32.mrb[0].mxu0
      %v6641 = vadd.f32 %v6072, %v6640
      %v6642 = vpop.f32.mrb[0].mxu0
      %6643 = vmatprep.mubr.f32.mxu0 0.0
      %6644 = vmatmul.mubr.f32.gmra.mrb[0].mxu0 %v6318
      %v6645 = vpop.f32.mrb[0].mxu0
      %v6646 = vadd.f32 %v6077, %v6645
      %v6647 = vpop.f32.mrb[0].mxu0
      %6648 = vmatprep.mubr.f32.mxu0 0.0
      %6649 = vmatmul.mubr.f32.gmra.mrb[0].mxu0 %v6320
      %v6650 = vpop.f32.mrb[0].mxu0
      %v6651 = vadd.f32 %v6082, %v6650
      %v6652 = vpop.f32.mrb[0].mxu0
      %6653 = vmatprep.mubr.f32.mxu0 0.0
      %6654 = vmatmul.mubr.f32.gmra.mrb[0].mxu0 %v6322
      %v6655 = vpop.f32.mrb[0].mxu0
      %v6656 = vadd.f32 %v6087, %v6655
      %v6657 = vpop.f32.mrb[0].mxu0
      %6658 = vmatprep.mubr.f32.mxu0 0.0
      %6659 = vmatmul.mubr.f32.gmra.mrb[0].mxu0 %v6324
      %v6660 = vpop.f32.mrb[0].mxu0
      %v6661 = vadd.f32 %v6092, %v6660
      %v6662 = vpop.f32.mrb[0].mxu0
      %6663 = vmatprep.mubr.f32.mxu0 0.0
      %6664 = vmatmul.mubr.f32.gmra.mrb[0].mxu0 %v6326
      %v6665 = vpop.f32.mrb[0].mxu0
      %v6666 = vadd.f32 %v6097, %v6665
      %v6667 = vpop.f32.mrb[0].mxu0
      %6668 = vmatprep.mubr.f32.mxu0 0.0
      %6669 = vmatmul.mubr.f32.gmra.mrb[0].mxu0 %v6328
      %v6670 = vpop.f32.mrb[0].mxu0
      %v6671 = vadd.f32 %v6102, %v6670
      %v6672 = vpop.f32.mrb[0].mxu0
      %6673 = vmatprep.mubr.f32.mxu0 0.0
      %6674 = vmatmul.mubr.f32.gmra.mrb[0].mxu0 %v6330
      %v6675 = vpop.f32.mrb[0].mxu0
      %v6676 = vadd.f32 %v6107, %v6675
      %v6677 = vpop.f32.mrb[0].mxu0
      %6678 = vmatprep.mubr.f32.mxu0 0.0
      %6679 = vmatmul.mubr.f32.gmra.mrb[0].mxu0 %v6332
      %v6680 = vpop.f32.mrb[0].mxu0
      %v6681 = vadd.f32 %v6112, %v6680
      %v6682 = vpop.f32.mrb[0].mxu0
      %6683 = vmatprep.mubr.f32.mxu0 0.0
      %6684 = vmatmul.mubr.f32.gmra.mrb[0].mxu0 %v6334
      %v6685 = vpop.f32.mrb[0].mxu0
      %v6686 = vadd.f32 %v6117, %v6685
      %v6687 = vpop.f32.mrb[0].mxu0
      %6688 = vmatprep.mubr.f32.mxu0 0.0
      %6689 = vmatmul.mubr.f32.gmra.mrb[0].mxu0 %v6336
      %v6690 = vpop.f32.mrb[0].mxu0
      %v6691 = vadd.f32 %v6122, %v6690
      %v6692 = vpop.f32.mrb[0].mxu0
      %6693 = vmatprep.mubr.f32.mxu0 0.0
      %6694 = vmatmul.mubr.f32.gmra.mrb[0].mxu0 %v6338
      %v6695 = vpop.f32.mrb[0].mxu0
      %v6696 = vadd.f32 %v6127, %v6695
      %v6697 = vpop.f32.mrb[0].mxu0
      %6698 = vmatprep.mubr.f32.mxu0 0.0
      %6699 = vmatmul.mubr.f32.gmra.mrb[0].mxu0 %v6340
      %v6700 = vpop.f32.mrb[0].mxu0
      %v6701 = vadd.f32 %v6132, %v6700
      %v6702 = vpop.f32.mrb[0].mxu0
      %6703 = vmatprep.mubr.f32.mxu0 0.0
      %6704 = vmatmul.mubr.f32.gmra.mrb[0].mxu0 %v6342
      %v6705 = vpop.f32.mrb[0].mxu0
      %v6706 = vadd.f32 %v6137, %v6705
      %v6707 = vpop.f32.mrb[0].mxu0
      %6708 = vmatprep.mubr.f32.mxu0 0.0
      %6709 = vmatmul.mubr.f32.gmra.mrb[0].mxu0 %v6344
      %v6710 = vpop.f32.mrb[0].mxu0
      %v6711 = vadd.f32 %v6142, %v6710
      %v6712 = vpop.f32.mrb[0].mxu0
      %6713 = vmatprep.mubr.f32.mxu0 0.0
      %6714 = vmatmul.mubr.f32.gmra.mrb[0].mxu0 %v6346
      %v6715 = vpop.f32.mrb[0].mxu0
      %v6716 = vadd.f32 %v6147, %v6715
      %v6717 = vpop.f32.mrb[0].mxu0
      %6718 = vmatprep.mubr.f32.mxu0 0.0
      %6719 = vmatmul.mubr.f32.gmra.mrb[0].mxu0 %v6348
      %v6720 = vpop.f32.mrb[0].mxu0
      %v6721 = vadd.f32 %v6152, %v6720
      %v6722 = vpop.f32.mrb[0].mxu0
      %6723 = vmatprep.mubr.f32.mxu0 0.0
      %6724 = vmatmul.mubr.f32.gmra.mrb[0].mxu0 %v6350
      %v6725 = vpop.f32.mrb[0].mxu0
      %v6726 = vadd.f32 %v6157, %v6725
      %v6727 = vpop.f32.mrb[0].mxu0
      %6728 = vmatprep.mubr.f32.mxu0 0.0
      %6729 = vmatmul.mubr.f32.gmra.mrb[0].mxu0 %v6352
      %v6730 = vpop.f32.mrb[0].mxu0
      %v6731 = vadd.f32 %v6162, %v6730
      %v6732 = vpop.f32.mrb[0].mxu0
      %6733 = vmatprep.mubr.f32.mxu0 0.0
      %6734 = vmatmul.mubr.f32.gmra.mrb[0].mxu0 %v6354
      %v6735 = vpop.f32.mrb[0].mxu0
      %v6736 = vadd.f32 %v6167, %v6735
      %v6737 = vpop.f32.mrb[0].mxu0
      %6738 = vmatprep.mubr.f32.mxu0 0.0
      %6739 = vmatmul.mubr.f32.gmra.mrb[0].mxu0 %v6356
      %v6740 = vpop.f32.mrb[0].mxu0
      %v6741 = vadd.f32 %v6172, %v6740
      %v6742 = vpop.f32.mrb[0].mxu0
      %6743 = vmatprep.mubr.f32.mxu0 0.0
      %6744 = vmatmul.mubr.f32.gmra.mrb[0].mxu0 %v6358
      %v6745 = vpop.f32.mrb[0].mxu0
      %v6746 = vadd.f32 %v6177, %v6745
      %v6747 = vpop.f32.mrb[0].mxu0
      %6748 = vmatprep.mubr.f32.mxu0 0.0
      %6749 = vmatmul.mubr.f32.gmra.mrb[0].mxu0 %v6360
      %v6750 = vpop.f32.mrb[0].mxu0
      %v6751 = vadd.f32 %v6182, %v6750
      %v6752 = vpop.f32.mrb[0].mxu0
      %6753 = vmatprep.mubr.f32.mxu0 0.0
      %6754 = vmatmul.mubr.f32.gmra.mrb[0].mxu0 %v6362
      %v6755 = vpop.f32.mrb[0].mxu0
      %v6756 = vadd.f32 %v6187, %v6755
      %v6757 = vpop.f32.mrb[0].mxu0
      %6758 = vmatprep.mubr.f32.mxu0 0.0
      %6759 = vmatmul.mubr.f32.gmra.mrb[0].mxu0 %v6364
      %v6760 = vpop.f32.mrb[0].mxu0
      %v6761 = vadd.f32 %v6192, %v6760
      %v6762 = vpop.f32.mrb[0].mxu0
      %6763 = vmatprep.mubr.f32.mxu0 0.0
      %6764 = vmatmul.mubr.f32.gmra.mrb[0].mxu0 %v6366
      %v6765 = vpop.f32.mrb[0].mxu0
      %v6766 = vadd.f32 %v6197, %v6765
      %v6767 = vpop.f32.mrb[0].mxu0
      %6768 = vmatprep.mubr.f32.mxu0 0.0
      %6769 = vmatmul.mubr.f32.gmra.mrb[0].mxu0 %v6368
      %v6770 = vpop.f32.mrb[0].mxu0
      %v6771 = vadd.f32 %v6202, %v6770
      %v6772 = vpop.f32.mrb[0].mxu0
      %6773 = vmatprep.mubr.f32.mxu0 0.0
      %6774 = vmatmul.mubr.f32.gmra.mrb[0].mxu0 %v6370
      %v6775 = vpop.f32.mrb[0].mxu0
      %v6776 = vadd.f32 %v6207, %v6775
      %v6777 = vpop.f32.mrb[0].mxu0
      %6778 = vmatprep.mubr.f32.mxu0 0.0
      %6779 = vmatmul.mubr.f32.gmra.mrb[0].mxu0 %v6372
      %v6780 = vpop.f32.mrb[0].mxu0
      %v6781 = vadd.f32 %v6212, %v6780
      %v6782 = vpop.f32.mrb[0].mxu0
      %6783 = vmatprep.mubr.f32.mxu0 0.0
      %6784 = vmatmul.mubr.f32.gmra.mrb[0].mxu0 %v6374
      %v6785 = vpop.f32.mrb[0].mxu0
      %v6786 = vadd.f32 %v6217, %v6785
      %v6787 = vpop.f32.mrb[0].mxu0
      %6788 = vmatprep.mubr.f32.mxu0 0.0
      %6789 = vmatmul.mubr.f32.gmra.mrb[0].mxu0 %v6376
      %v6790 = vpop.f32.mrb[0].mxu0
      %v6791 = vadd.f32 %v6222, %v6790
      %v6792 = vpop.f32.mrb[0].mxu0
      %6793 = vmatprep.mubr.f32.mxu0 0.0
      %6794 = vmatmul.mubr.f32.gmra.mrb[0].mxu0 %v6378
      %v6795 = vpop.f32.mrb[0].mxu0
      %v6796 = vadd.f32 %v6227, %v6795
      %v6797 = vpop.f32.mrb[0].mxu0
      %6798 = vmatprep.mubr.f32.mxu0 0.0
      %6799 = vmatmul.mubr.f32.gmra.mrb[0].mxu0 %v6380
      %v6800 = vpop.f32.mrb[0].mxu0
      %v6801 = vadd.f32 %v6232, %v6800
      %v6802 = vpop.f32.mrb[0].mxu0
      %6803 = vmatprep.mubr.f32.mxu0 0.0
      %6804 = vmatmul.mubr.f32.gmra.mrb[0].mxu0 %v6382
      %v6805 = vpop.f32.mrb[0].mxu0
      %v6806 = vadd.f32 %v6237, %v6805
      %v6807 = vpop.f32.mrb[0].mxu0
      %6808 = vdwg.mxu0
      %v6809 = vrot.slane %v5294, 2
      %v6810 = vrot.slane %v5295, 2
      %v6811 = vsel %vm1914, %v6809, %v6810
      %v6812 = vrot.slane %v5296, 2
      %v6813 = vsel %vm1914, %v6810, %v6812
      %v6814 = vrot.slane %v5297, 2
      %v6815 = vsel %vm1914, %v6812, %v6814
      %v6816 = vrot.slane %v5298, 2
      %v6817 = vrot.slane %v5299, 2
      %v6818 = vsel %vm1914, %v6816, %v6817
      %v6819 = vrot.slane %v5300, 2
      %v6820 = vsel %vm1914, %v6817, %v6819
      %v6821 = vrot.slane %v5301, 2
      %v6822 = vsel %vm1914, %v6819, %v6821
      %v6823 = vrot.slane %v5302, 2
      %v6824 = vrot.slane %v5303, 2
      %v6825 = vsel %vm1914, %v6823, %v6824
      %v6826 = vrot.slane %v5304, 2
      %v6827 = vsel %vm1914, %v6824, %v6826
      %v6828 = vrot.slane %v5305, 2
      %v6829 = vsel %vm1914, %v6826, %v6828
      %v6830 = vrot.slane %v5306, 2
      %v6831 = vrot.slane %v5307, 2
      %v6832 = vsel %vm1914, %v6830, %v6831
      %v6833 = vrot.slane %v5308, 2
      %v6834 = vsel %vm1914, %v6831, %v6833
      %v6835 = vrot.slane %v5309, 2
      %v6836 = vsel %vm1914, %v6833, %v6835
      %v6837 = vrot.slane %v5310, 2
      %v6838 = vrot.slane %v5311, 2
      %v6839 = vsel %vm1914, %v6837, %v6838
      %v6840 = vrot.slane %v5312, 2
      %v6841 = vsel %vm1914, %v6838, %v6840
      %v6842 = vrot.slane %v5313, 2
      %v6843 = vsel %vm1914, %v6840, %v6842
      %v6844 = vrot.slane %v5314, 2
      %v6845 = vrot.slane %v5315, 2
      %v6846 = vsel %vm1914, %v6844, %v6845
      %v6847 = vrot.slane %v5316, 2
      %v6848 = vsel %vm1914, %v6845, %v6847
      %v6849 = vrot.slane %v5317, 2
      %v6850 = vsel %vm1914, %v6847, %v6849
      %v6851 = vrot.slane %v5318, 2
      %v6852 = vrot.slane %v5319, 2
      %v6853 = vsel %vm1914, %v6851, %v6852
      %v6854 = vrot.slane %v5320, 2
      %v6855 = vsel %vm1914, %v6852, %v6854
      %v6856 = vrot.slane %v5321, 2
      %v6857 = vsel %vm1914, %v6854, %v6856
      %v6858 = vrot.slane %v5322, 2
      %v6859 = vrot.slane %v5323, 2
      %v6860 = vsel %vm1914, %v6858, %v6859
      %v6861 = vrot.slane %v5324, 2
      %v6862 = vsel %vm1914, %v6859, %v6861
      %v6863 = vrot.slane %v5325, 2
      %v6864 = vsel %vm1914, %v6861, %v6863
      %v6865 = vrot.slane %v5326, 2
      %v6866 = vrot.slane %v5327, 2
      %v6867 = vsel %vm1914, %v6865, %v6866
      %v6868 = vrot.slane %v5328, 2
      %v6869 = vsel %vm1914, %v6866, %v6868
      %v6870 = vrot.slane %v5329, 2
      %v6871 = vsel %vm1914, %v6868, %v6870
      %v6872 = vrot.slane %v5330, 2
      %v6873 = vrot.slane %v5331, 2
      %v6874 = vsel %vm1914, %v6872, %v6873
      %v6875 = vrot.slane %v5332, 2
      %v6876 = vsel %vm1914, %v6873, %v6875
      %v6877 = vrot.slane %v5333, 2
      %v6878 = vsel %vm1914, %v6875, %v6877
      %v6879 = vrot.slane %v5334, 2
      %v6880 = vrot.slane %v5335, 2
      %v6881 = vsel %vm1914, %v6879, %v6880
      %v6882 = vrot.slane %v5336, 2
      %v6883 = vsel %vm1914, %v6880, %v6882
      %v6884 = vrot.slane %v5337, 2
      %v6885 = vsel %vm1914, %v6882, %v6884
      %v6886 = vrot.slane %v5338, 2
      %v6887 = vrot.slane %v5339, 2
      %v6888 = vsel %vm1914, %v6886, %v6887
      %v6889 = vrot.slane %v5340, 2
      %v6890 = vsel %vm1914, %v6887, %v6889
      %v6891 = vrot.slane %v5341, 2
      %v6892 = vsel %vm1914, %v6889, %v6891
      %v6893 = vrot.slane %v5342, 2
      %v6894 = vrot.slane %v5343, 2
      %v6895 = vsel %vm1914, %v6893, %v6894
      %v6896 = vrot.slane %v5344, 2
      %v6897 = vsel %vm1914, %v6894, %v6896
      %v6898 = vrot.slane %v5345, 2
      %v6899 = vsel %vm1914, %v6896, %v6898
      %v6900 = vrot.slane %v5346, 2
      %v6901 = vrot.slane %v5347, 2
      %v6902 = vsel %vm1914, %v6900, %v6901
      %v6903 = vrot.slane %v5348, 2
      %v6904 = vsel %vm1914, %v6901, %v6903
      %v6905 = vrot.slane %v5349, 2
      %v6906 = vsel %vm1914, %v6903, %v6905
      %v6907 = vrot.slane %v5350, 2
      %v6908 = vrot.slane %v5351, 2
      %v6909 = vsel %vm1914, %v6907, %v6908
      %v6910 = vrot.slane %v5352, 2
      %v6911 = vsel %vm1914, %v6908, %v6910
      %v6912 = vrot.slane %v5353, 2
      %v6913 = vsel %vm1914, %v6910, %v6912
      %v6914 = vrot.slane %v5354, 2
      %v6915 = vrot.slane %v5355, 2
      %v6916 = vsel %vm1914, %v6914, %v6915
      %v6917 = vrot.slane %v5356, 2
      %v6918 = vsel %vm1914, %v6915, %v6917
      %v6919 = vrot.slane %v5357, 2
      %v6920 = vsel %vm1914, %v6917, %v6919
      %v6921 = vrot.slane %v5358, 2
      %v6922 = vrot.slane %v5359, 2
      %v6923 = vsel %vm1914, %v6921, %v6922
      %v6924 = vrot.slane %v5360, 2
      %v6925 = vsel %vm1914, %v6922, %v6924
      %v6926 = vrot.slane %v5361, 2
      %v6927 = vsel %vm1914, %v6924, %v6926
      %v6928 = vrot.slane %v5362, 2
      %v6929 = vrot.slane %v5363, 2
      %v6930 = vsel %vm1914, %v6928, %v6929
      %v6931 = vrot.slane %v5364, 2
      %v6932 = vsel %vm1914, %v6929, %v6931
      %v6933 = vrot.slane %v5365, 2
      %v6934 = vsel %vm1914, %v6931, %v6933
      %v6935 = vrot.slane %v5366, 2
      %v6936 = vrot.slane %v5367, 2
      %v6937 = vsel %vm1914, %v6935, %v6936
      %v6938 = vrot.slane %v5368, 2
      %v6939 = vsel %vm1914, %v6936, %v6938
      %v6940 = vrot.slane %v5369, 2
      %v6941 = vsel %vm1914, %v6938, %v6940
      %v6942 = vrot.slane %v5370, 2
      %v6943 = vrot.slane %v5371, 2
      %v6944 = vsel %vm1914, %v6942, %v6943
      %v6945 = vrot.slane %v5372, 2
      %v6946 = vsel %vm1914, %v6943, %v6945
      %v6947 = vrot.slane %v5373, 2
      %v6948 = vsel %vm1914, %v6945, %v6947
      %v6949 = vrot.slane %v5374, 2
      %v6950 = vrot.slane %v5375, 2
      %v6951 = vsel %vm1914, %v6949, %v6950
      %v6952 = vrot.slane %v5376, 2
      %v6953 = vsel %vm1914, %v6950, %v6952
      %v6954 = vrot.slane %v5377, 2
      %v6955 = vsel %vm1914, %v6952, %v6954
      %v6956 = vrot.slane %v5378, 2
      %v6957 = vrot.slane %v5379, 2
      %v6958 = vsel %vm1914, %v6956, %v6957
      %v6959 = vrot.slane %v5380, 2
      %v6960 = vsel %vm1914, %v6957, %v6959
      %v6961 = vrot.slane %v5381, 2
      %v6962 = vsel %vm1914, %v6959, %v6961
      %v6963 = vrot.slane %v5382, 2
      %v6964 = vrot.slane %v5383, 2
      %v6965 = vsel %vm1914, %v6963, %v6964
      %v6966 = vrot.slane %v5384, 2
      %v6967 = vsel %vm1914, %v6964, %v6966
      %v6968 = vrot.slane %v5385, 2
      %v6969 = vsel %vm1914, %v6966, %v6968
      %v6970 = vrot.slane %v5386, 2
      %v6971 = vrot.slane %v5387, 2
      %v6972 = vsel %vm1914, %v6970, %v6971
      %v6973 = vrot.slane %v5388, 2
      %v6974 = vsel %vm1914, %v6971, %v6973
      %v6975 = vrot.slane %v5389, 2
      %v6976 = vsel %vm1914, %v6973, %v6975
      %v6977 = vld [vmem:[%s3 + $0x40] sm:$0xff]
      %v6978 = vld [vmem:[%s3 + $0x48] sm:$0xff]
      %v6979 = vld [vmem:[%s3 + $0x50] sm:$0xff]
      %v6980 = vld [vmem:[%s3 + $0x58] sm:$0xff]
      %v6981 = vsel %vm5670, %v6811, 0
      %v6983 = vsel %vm5670, %v6813, 0
      %v6985 = vsel %vm5670, %v6815, 0
      %v6987 = vsel %vm5670, %v6818, 0
      %v6989 = vsel %vm5670, %v6820, 0
      %v6991 = vsel %vm5670, %v6822, 0
      %v6993 = vsel %vm5670, %v6825, 0
      %v6995 = vsel %vm5670, %v6827, 0
      %v6997 = vsel %vm5670, %v6829, 0
      %v6999 = vsel %vm5670, %v6832, 0
      %v7001 = vsel %vm5670, %v6834, 0
      %v7003 = vsel %vm5670, %v6836, 0
      %v7005 = vsel %vm5670, %v6839, 0
      %v7007 = vsel %vm5670, %v6841, 0
      %v7009 = vsel %vm5670, %v6843, 0
      %v7011 = vsel %vm5670, %v6846, 0
      %v7013 = vsel %vm5670, %v6848, 0
      %v7015 = vsel %vm5670, %v6850, 0
      %v7017 = vsel %vm5670, %v6853, 0
      %v7019 = vsel %vm5670, %v6855, 0
      %v7021 = vsel %vm5670, %v6857, 0
      %v7023 = vsel %vm5670, %v6860, 0
      %v7025 = vsel %vm5670, %v6862, 0
      %v7027 = vsel %vm5670, %v6864, 0
      %v7029 = vsel %vm5670, %v6867, 0
      %v7031 = vsel %vm5670, %v6869, 0
      %v7033 = vsel %vm5670, %v6871, 0
      %v7035 = vsel %vm5670, %v6874, 0
      %v7037 = vsel %vm5670, %v6876, 0
      %v7039 = vsel %vm5670, %v6878, 0
      %v7041 = vsel %vm5670, %v6881, 0
      %v7043 = vsel %vm5670, %v6883, 0
      %v7045 = vsel %vm5670, %v6885, 0
      %v7047 = vsel %vm5670, %v6888, 0
      %v7049 = vsel %vm5670, %v6890, 0
      %v7051 = vsel %vm5670, %v6892, 0
      %v7053 = vsel %vm5670, %v6895, 0
      %v7055 = vsel %vm5670, %v6897, 0
      %v7057 = vsel %vm5670, %v6899, 0
      %v7059 = vsel %vm5670, %v6902, 0
      %v7061 = vsel %vm5670, %v6904, 0
      %v7063 = vsel %vm5670, %v6906, 0
      %v7065 = vsel %vm5670, %v6909, 0
      %v7067 = vsel %vm5670, %v6911, 0
      %v7069 = vsel %vm5670, %v6913, 0
      %v7071 = vsel %vm5670, %v6916, 0
      %v7073 = vsel %vm5670, %v6918, 0
      %v7075 = vsel %vm5670, %v6920, 0
      %v7077 = vsel %vm5670, %v6923, 0
      %v7079 = vsel %vm5670, %v6925, 0
      %v7081 = vsel %vm5670, %v6927, 0
      %v7083 = vsel %vm5670, %v6930, 0
      %v7085 = vsel %vm5670, %v6932, 0
      %v7087 = vsel %vm5670, %v6934, 0
      %v7089 = vsel %vm5670, %v6937, 0
      %v7091 = vsel %vm5670, %v6939, 0
      %v7093 = vsel %vm5670, %v6941, 0
      %v7095 = vsel %vm5670, %v6944, 0
      %v7097 = vsel %vm5670, %v6946, 0
      %v7099 = vsel %vm5670, %v6948, 0
      %v7101 = vsel %vm5670, %v6951, 0
      %v7103 = vsel %vm5670, %v6953, 0
      %v7105 = vsel %vm5670, %v6955, 0
      %v7107 = vsel %vm5670, %v6958, 0
      %v7109 = vsel %vm5670, %v6960, 0
      %v7111 = vsel %vm5670, %v6962, 0
      %v7113 = vsel %vm5670, %v6965, 0
      %v7115 = vsel %vm5670, %v6967, 0
      %v7117 = vsel %vm5670, %v6969, 0
      %v7119 = vsel %vm5670, %v6972, 0
      %v7121 = vsel %vm5670, %v6974, 0
      %v7123 = vsel %vm5670, %v6976, 0
      %7125 = vmatprep.subr.mxu0 0.0
      %7126 = vmatpush1.msra.mxu0 %v6977
      %7127 = vmatprep.subr.mxu0 0.0
      %7128 = vmatpush1.msra.mxu0 %v6978
      %7129 = vmatprep.subr.mxu0 0.0
      %7130 = vmatpush1.msra.mxu0 %v6979
      %7131 = vmatprep.subr.mxu0 0.0
      %7132 = vmatpush1.msra.mxu0 %v6980
      %7133 = vmatprep.subr.mxu0 0.0
      %7134 = vmatpush1.msra.mxu0 0.0
      %7135 = vmatprep.subr.mxu0 0.0
      %7136 = vmatpush1.msra.mxu0 0.0
      %7137 = vmatprep.subr.mxu0 0.0
      %7138 = vmatpush1.msra.mxu0 0.0
      %7139 = vmatprep.subr.mxu0 0.0
      %7140 = vmatpush1.msra.mxu0 0.0
      %7141 = vmatprep.subr.mxu0 0.0
      %7142 = vmatpush1.msra.mxu0 0.0
      %7143 = vmatprep.subr.mxu0 0.0
      %7144 = vmatpush1.msra.mxu0 0.0
      %7145 = vmatprep.subr.mxu0 0.0
      %7146 = vmatpush1.msra.mxu0 0.0
      %7147 = vmatprep.subr.mxu0 0.0
      %7148 = vmatpush1.msra.mxu0 0.0
      %7149 = vmatprep.subr.mxu0 0.0
      %7150 = vmatpush1.msra.mxu0 0.0
      %7151 = vmatprep.subr.mxu0 0.0
      %7152 = vmatpush1.msra.mxu0 0.0
      %7153 = vmatprep.subr.mxu0 0.0
      %7154 = vmatpush1.msra.mxu0 0.0
      %7155 = vmatprep.subr.mxu0 0.0
      %7156 = vmatpush1.msra.mxu0 0.0
      %7157 = vmatprep.subr.mxu0 0.0
      %7158 = vmatpush1.msra.mxu0 0.0
      %7159 = vmatprep.subr.mxu0 0.0
      %7160 = vmatpush1.msra.mxu0 0.0
      %7161 = vmatprep.subr.mxu0 0.0
      %7162 = vmatpush1.msra.mxu0 0.0
      %7163 = vmatprep.subr.mxu0 0.0
      %7164 = vmatpush1.msra.mxu0 0.0
      %7165 = vmatprep.subr.mxu0 0.0
      %7166 = vmatpush1.msra.mxu0 0.0
      %7167 = vmatprep.subr.mxu0 0.0
      %7168 = vmatpush1.msra.mxu0 0.0
      %7169 = vmatprep.subr.mxu0 0.0
      %7170 = vmatpush1.msra.mxu0 0.0
      %7171 = vmatprep.subr.mxu0 0.0
      %7172 = vmatpush1.msra.mxu0 0.0
      %7173 = vmatprep.subr.mxu0 0.0
      %7174 = vmatpush1.msra.mxu0 0.0
      %7175 = vmatprep.subr.mxu0 0.0
      %7176 = vmatpush1.msra.mxu0 0.0
      %7177 = vmatprep.subr.mxu0 0.0
      %7178 = vmatpush1.msra.mxu0 0.0
      %7179 = vmatprep.subr.mxu0 0.0
      %7180 = vmatpush1.msra.mxu0 0.0
      %7181 = vmatprep.subr.mxu0 0.0
      %7182 = vmatpush1.msra.mxu0 0.0
      %7183 = vmatprep.subr.mxu0 0.0
      %7184 = vmatpush1.msra.mxu0 0.0
      %7185 = vmatprep.subr.mxu0 0.0
      %7186 = vmatpush1.msra.mxu0 0.0
      %7187 = vmatprep.subr.mxu0 0.0
      %7188 = vmatpush1.msra.mxu0 0.0
      %7189 = vmatprep.mubr.f32.mxu0 0.0
      %7190 = vmatmul.mubr.f32.gmra.mrb[0].mxu0 %v6981
      %v7191 = vpop.f32.mrb[0].mxu0
      %v7192 = vadd.f32 0.0, %v7191
      %v7193 = vpop.f32.mrb[0].mxu0
      %7194 = vmatprep.mubr.f32.mxu0 0.0
      %7195 = vmatmul.mubr.f32.gmra.mrb[0].mxu0 %v6983
      %v7196 = vpop.f32.mrb[0].mxu0
      %v7197 = vadd.f32 0.0, %v7196
      %v7198 = vpop.f32.mrb[0].mxu0
      %7199 = vmatprep.mubr.f32.mxu0 0.0
      %7200 = vmatmul.mubr.f32.gmra.mrb[0].mxu0 %v6985
      %v7201 = vpop.f32.mrb[0].mxu0
      %v7202 = vadd.f32 0.0, %v7201
      %v7203 = vpop.f32.mrb[0].mxu0
      %7204 = vmatprep.mubr.f32.mxu0 0.0
      %7205 = vmatmul.mubr.f32.gmra.mrb[0].mxu0 %v6987
      %v7206 = vpop.f32.mrb[0].mxu0
      %v7207 = vadd.f32 0.0, %v7206
      %v7208 = vpop.f32.mrb[0].mxu0
      %7209 = vmatprep.mubr.f32.mxu0 0.0
      %7210 = vmatmul.mubr.f32.gmra.mrb[0].mxu0 %v6989
      %v7211 = vpop.f32.mrb[0].mxu0
      %v7212 = vadd.f32 0.0, %v7211
      %v7213 = vpop.f32.mrb[0].mxu0
      %7214 = vmatprep.mubr.f32.mxu0 0.0
      %7215 = vmatmul.mubr.f32.gmra.mrb[0].mxu0 %v6991
      %v7216 = vpop.f32.mrb[0].mxu0
      %v7217 = vadd.f32 0.0, %v7216
      %v7218 = vpop.f32.mrb[0].mxu0
      %7219 = vmatprep.mubr.f32.mxu0 0.0
      %7220 = vmatmul.mubr.f32.gmra.mrb[0].mxu0 %v6993
      %v7221 = vpop.f32.mrb[0].mxu0
      %v7222 = vadd.f32 0.0, %v7221
      %v7223 = vpop.f32.mrb[0].mxu0
      %7224 = vmatprep.mubr.f32.mxu0 0.0
      %7225 = vmatmul.mubr.f32.gmra.mrb[0].mxu0 %v6995
      %v7226 = vpop.f32.mrb[0].mxu0
      %v7227 = vadd.f32 0.0, %v7226
      %v7228 = vpop.f32.mrb[0].mxu0
      %7229 = vmatprep.mubr.f32.mxu0 0.0
      %7230 = vmatmul.mubr.f32.gmra.mrb[0].mxu0 %v6997
      %v7231 = vpop.f32.mrb[0].mxu0
      %v7232 = vadd.f32 0.0, %v7231
      %v7233 = vpop.f32.mrb[0].mxu0
      %7234 = vmatprep.mubr.f32.mxu0 0.0
      %7235 = vmatmul.mubr.f32.gmra.mrb[0].mxu0 %v6999
      %v7236 = vpop.f32.mrb[0].mxu0
      %v7237 = vadd.f32 0.0, %v7236
      %v7238 = vpop.f32.mrb[0].mxu0
      %7239 = vmatprep.mubr.f32.mxu0 0.0
      %7240 = vmatmul.mubr.f32.gmra.mrb[0].mxu0 %v7001
      %v7241 = vpop.f32.mrb[0].mxu0
      %v7242 = vadd.f32 0.0, %v7241
      %v7243 = vpop.f32.mrb[0].mxu0
      %7244 = vmatprep.mubr.f32.mxu0 0.0
      %7245 = vmatmul.mubr.f32.gmra.mrb[0].mxu0 %v7003
      %v7246 = vpop.f32.mrb[0].mxu0
      %v7247 = vadd.f32 0.0, %v7246
      %v7248 = vpop.f32.mrb[0].mxu0
      %7249 = vmatprep.mubr.f32.mxu0 0.0
      %7250 = vmatmul.mubr.f32.gmra.mrb[0].mxu0 %v7005
      %v7251 = vpop.f32.mrb[0].mxu0
      %v7252 = vadd.f32 0.0, %v7251
      %v7253 = vpop.f32.mrb[0].mxu0
      %7254 = vmatprep.mubr.f32.mxu0 0.0
      %7255 = vmatmul.mubr.f32.gmra.mrb[0].mxu0 %v7007
      %v7256 = vpop.f32.mrb[0].mxu0
      %v7257 = vadd.f32 0.0, %v7256
      %v7258 = vpop.f32.mrb[0].mxu0
      %7259 = vmatprep.mubr.f32.mxu0 0.0
      %7260 = vmatmul.mubr.f32.gmra.mrb[0].mxu0 %v7009
      %v7261 = vpop.f32.mrb[0].mxu0
      %v7262 = vadd.f32 0.0, %v7261
      %v7263 = vpop.f32.mrb[0].mxu0
      %7264 = vmatprep.mubr.f32.mxu0 0.0
      %7265 = vmatmul.mubr.f32.gmra.mrb[0].mxu0 %v7011
      %v7266 = vpop.f32.mrb[0].mxu0
      %v7267 = vadd.f32 0.0, %v7266
      %v7268 = vpop.f32.mrb[0].mxu0
      %7269 = vmatprep.mubr.f32.mxu0 0.0
      %7270 = vmatmul.mubr.f32.gmra.mrb[0].mxu0 %v7013
      %v7271 = vpop.f32.mrb[0].mxu0
      %v7272 = vadd.f32 0.0, %v7271
      %v7273 = vpop.f32.mrb[0].mxu0
      %7274 = vmatprep.mubr.f32.mxu0 0.0
      %7275 = vmatmul.mubr.f32.gmra.mrb[0].mxu0 %v7015
      %v7276 = vpop.f32.mrb[0].mxu0
      %v7277 = vadd.f32 0.0, %v7276
      %v7278 = vpop.f32.mrb[0].mxu0
      %7279 = vmatprep.mubr.f32.mxu0 0.0
      %7280 = vmatmul.mubr.f32.gmra.mrb[0].mxu0 %v7017
      %v7281 = vpop.f32.mrb[0].mxu0
      %v7282 = vadd.f32 0.0, %v7281
      %v7283 = vpop.f32.mrb[0].mxu0
      %7284 = vmatprep.mubr.f32.mxu0 0.0
      %7285 = vmatmul.mubr.f32.gmra.mrb[0].mxu0 %v7019
      %v7286 = vpop.f32.mrb[0].mxu0
      %v7287 = vadd.f32 0.0, %v7286
      %v7288 = vpop.f32.mrb[0].mxu0
      %7289 = vmatprep.mubr.f32.mxu0 0.0
      %7290 = vmatmul.mubr.f32.gmra.mrb[0].mxu0 %v7021
      %v7291 = vpop.f32.mrb[0].mxu0
      %v7292 = vadd.f32 0.0, %v7291
      %v7293 = vpop.f32.mrb[0].mxu0
      %7294 = vmatprep.mubr.f32.mxu0 0.0
      %7295 = vmatmul.mubr.f32.gmra.mrb[0].mxu0 %v7023
      %v7296 = vpop.f32.mrb[0].mxu0
      %v7297 = vadd.f32 0.0, %v7296
      %v7298 = vpop.f32.mrb[0].mxu0
      %7299 = vmatprep.mubr.f32.mxu0 0.0
      %7300 = vmatmul.mubr.f32.gmra.mrb[0].mxu0 %v7025
      %v7301 = vpop.f32.mrb[0].mxu0
      %v7302 = vadd.f32 0.0, %v7301
      %v7303 = vpop.f32.mrb[0].mxu0
      %7304 = vmatprep.mubr.f32.mxu0 0.0
      %7305 = vmatmul.mubr.f32.gmra.mrb[0].mxu0 %v7027
      %v7306 = vpop.f32.mrb[0].mxu0
      %v7307 = vadd.f32 0.0, %v7306
      %v7308 = vpop.f32.mrb[0].mxu0
      %7309 = vmatprep.mubr.f32.mxu0 0.0
      %7310 = vmatmul.mubr.f32.gmra.mrb[0].mxu0 %v7029
      %v7311 = vpop.f32.mrb[0].mxu0
      %v7312 = vadd.f32 0.0, %v7311
      %v7313 = vpop.f32.mrb[0].mxu0
      %7314 = vmatprep.mubr.f32.mxu0 0.0
      %7315 = vmatmul.mubr.f32.gmra.mrb[0].mxu0 %v7031
      %v7316 = vpop.f32.mrb[0].mxu0
      %v7317 = vadd.f32 0.0, %v7316
      %v7318 = vpop.f32.mrb[0].mxu0
      %7319 = vmatprep.mubr.f32.mxu0 0.0
      %7320 = vmatmul.mubr.f32.gmra.mrb[0].mxu0 %v7033
      %v7321 = vpop.f32.mrb[0].mxu0
      %v7322 = vadd.f32 0.0, %v7321
      %v7323 = vpop.f32.mrb[0].mxu0
      %7324 = vmatprep.mubr.f32.mxu0 0.0
      %7325 = vmatmul.mubr.f32.gmra.mrb[0].mxu0 %v7035
      %v7326 = vpop.f32.mrb[0].mxu0
      %v7327 = vadd.f32 0.0, %v7326
      %v7328 = vpop.f32.mrb[0].mxu0
      %7329 = vmatprep.mubr.f32.mxu0 0.0
      %7330 = vmatmul.mubr.f32.gmra.mrb[0].mxu0 %v7037
      %v7331 = vpop.f32.mrb[0].mxu0
      %v7332 = vadd.f32 0.0, %v7331
      %v7333 = vpop.f32.mrb[0].mxu0
      %7334 = vmatprep.mubr.f32.mxu0 0.0
      %7335 = vmatmul.mubr.f32.gmra.mrb[0].mxu0 %v7039
      %v7336 = vpop.f32.mrb[0].mxu0
      %v7337 = vadd.f32 0.0, %v7336
      %v7338 = vpop.f32.mrb[0].mxu0
      %7339 = vmatprep.mubr.f32.mxu0 0.0
      %7340 = vmatmul.mubr.f32.gmra.mrb[0].mxu0 %v7041
      %v7341 = vpop.f32.mrb[0].mxu0
      %v7342 = vadd.f32 0.0, %v7341
      %v7343 = vpop.f32.mrb[0].mxu0
      %7344 = vmatprep.mubr.f32.mxu0 0.0
      %7345 = vmatmul.mubr.f32.gmra.mrb[0].mxu0 %v7043
      %v7346 = vpop.f32.mrb[0].mxu0
      %v7347 = vadd.f32 0.0, %v7346
      %v7348 = vpop.f32.mrb[0].mxu0
      %7349 = vmatprep.mubr.f32.mxu0 0.0
      %7350 = vmatmul.mubr.f32.gmra.mrb[0].mxu0 %v7045
      %v7351 = vpop.f32.mrb[0].mxu0
      %v7352 = vadd.f32 0.0, %v7351
      %v7353 = vpop.f32.mrb[0].mxu0
      %7354 = vmatprep.mubr.f32.mxu0 0.0
      %7355 = vmatmul.mubr.f32.gmra.mrb[0].mxu0 %v7047
      %v7356 = vpop.f32.mrb[0].mxu0
      %v7357 = vadd.f32 0.0, %v7356
      %v7358 = vpop.f32.mrb[0].mxu0
      %7359 = vmatprep.mubr.f32.mxu0 0.0
      %7360 = vmatmul.mubr.f32.gmra.mrb[0].mxu0 %v7049
      %v7361 = vpop.f32.mrb[0].mxu0
      %v7362 = vadd.f32 0.0, %v7361
      %v7363 = vpop.f32.mrb[0].mxu0
      %7364 = vmatprep.mubr.f32.mxu0 0.0
      %7365 = vmatmul.mubr.f32.gmra.mrb[0].mxu0 %v7051
      %v7366 = vpop.f32.mrb[0].mxu0
      %v7367 = vadd.f32 0.0, %v7366
      %v7368 = vpop.f32.mrb[0].mxu0
      %7369 = vmatprep.mubr.f32.mxu0 0.0
      %7370 = vmatmul.mubr.f32.gmra.mrb[0].mxu0 %v7053
      %v7371 = vpop.f32.mrb[0].mxu0
      %v7372 = vadd.f32 0.0, %v7371
      %v7373 = vpop.f32.mrb[0].mxu0
      %7374 = vmatprep.mubr.f32.mxu0 0.0
      %7375 = vmatmul.mubr.f32.gmra.mrb[0].mxu0 %v7055
      %v7376 = vpop.f32.mrb[0].mxu0
      %v7377 = vadd.f32 0.0, %v7376
      %v7378 = vpop.f32.mrb[0].mxu0
      %7379 = vmatprep.mubr.f32.mxu0 0.0
      %7380 = vmatmul.mubr.f32.gmra.mrb[0].mxu0 %v7057
      %v7381 = vpop.f32.mrb[0].mxu0
      %v7382 = vadd.f32 0.0, %v7381
      %v7383 = vpop.f32.mrb[0].mxu0
      %7384 = vmatprep.mubr.f32.mxu0 0.0
      %7385 = vmatmul.mubr.f32.gmra.mrb[0].mxu0 %v7059
      %v7386 = vpop.f32.mrb[0].mxu0
      %v7387 = vadd.f32 0.0, %v7386
      %v7388 = vpop.f32.mrb[0].mxu0
      %7389 = vmatprep.mubr.f32.mxu0 0.0
      %7390 = vmatmul.mubr.f32.gmra.mrb[0].mxu0 %v7061
      %v7391 = vpop.f32.mrb[0].mxu0
      %v7392 = vadd.f32 0.0, %v7391
      %v7393 = vpop.f32.mrb[0].mxu0
      %7394 = vmatprep.mubr.f32.mxu0 0.0
      %7395 = vmatmul.mubr.f32.gmra.mrb[0].mxu0 %v7063
      %v7396 = vpop.f32.mrb[0].mxu0
      %v7397 = vadd.f32 0.0, %v7396
      %v7398 = vpop.f32.mrb[0].mxu0
      %7399 = vmatprep.mubr.f32.mxu0 0.0
      %7400 = vmatmul.mubr.f32.gmra.mrb[0].mxu0 %v7065
      %v7401 = vpop.f32.mrb[0].mxu0
      %v7402 = vadd.f32 0.0, %v7401
      %v7403 = vpop.f32.mrb[0].mxu0
      %7404 = vmatprep.mubr.f32.mxu0 0.0
      %7405 = vmatmul.mubr.f32.gmra.mrb[0].mxu0 %v7067
      %v7406 = vpop.f32.mrb[0].mxu0
      %v7407 = vadd.f32 0.0, %v7406
      %v7408 = vpop.f32.mrb[0].mxu0
      %7409 = vmatprep.mubr.f32.mxu0 0.0
      %7410 = vmatmul.mubr.f32.gmra.mrb[0].mxu0 %v7069
      %v7411 = vpop.f32.mrb[0].mxu0
      %v7412 = vadd.f32 0.0, %v7411
      %v7413 = vpop.f32.mrb[0].mxu0
      %7414 = vmatprep.mubr.f32.mxu0 0.0
      %7415 = vmatmul.mubr.f32.gmra.mrb[0].mxu0 %v7071
      %v7416 = vpop.f32.mrb[0].mxu0
      %v7417 = vadd.f32 0.0, %v7416
      %v7418 = vpop.f32.mrb[0].mxu0
      %7419 = vmatprep.mubr.f32.mxu0 0.0
      %7420 = vmatmul.mubr.f32.gmra.mrb[0].mxu0 %v7073
      %v7421 = vpop.f32.mrb[0].mxu0
      %v7422 = vadd.f32 0.0, %v7421
      %v7423 = vpop.f32.mrb[0].mxu0
      %7424 = vmatprep.mubr.f32.mxu0 0.0
      %7425 = vmatmul.mubr.f32.gmra.mrb[0].mxu0 %v7075
      %v7426 = vpop.f32.mrb[0].mxu0
      %v7427 = vadd.f32 0.0, %v7426
      %v7428 = vpop.f32.mrb[0].mxu0
      %7429 = vmatprep.mubr.f32.mxu0 0.0
      %7430 = vmatmul.mubr.f32.gmra.mrb[0].mxu0 %v7077
      %v7431 = vpop.f32.mrb[0].mxu0
      %v7432 = vadd.f32 0.0, %v7431
      %v7433 = vpop.f32.mrb[0].mxu0
      %7434 = vmatprep.mubr.f32.mxu0 0.0
      %7435 = vmatmul.mubr.f32.gmra.mrb[0].mxu0 %v7079
      %v7436 = vpop.f32.mrb[0].mxu0
      %v7437 = vadd.f32 0.0, %v7436
      %v7438 = vpop.f32.mrb[0].mxu0
      %7439 = vmatprep.mubr.f32.mxu0 0.0
      %7440 = vmatmul.mubr.f32.gmra.mrb[0].mxu0 %v7081
      %v7441 = vpop.f32.mrb[0].mxu0
      %v7442 = vadd.f32 0.0, %v7441
      %v7443 = vpop.f32.mrb[0].mxu0
      %7444 = vmatprep.mubr.f32.mxu0 0.0
      %7445 = vmatmul.mubr.f32.gmra.mrb[0].mxu0 %v7083
      %v7446 = vpop.f32.mrb[0].mxu0
      %v7447 = vadd.f32 0.0, %v7446
      %v7448 = vpop.f32.mrb[0].mxu0
      %7449 = vmatprep.mubr.f32.mxu0 0.0
      %7450 = vmatmul.mubr.f32.gmra.mrb[0].mxu0 %v7085
      %v7451 = vpop.f32.mrb[0].mxu0
      %v7452 = vadd.f32 0.0, %v7451
      %v7453 = vpop.f32.mrb[0].mxu0
      %7454 = vmatprep.mubr.f32.mxu0 0.0
      %7455 = vmatmul.mubr.f32.gmra.mrb[0].mxu0 %v7087
      %v7456 = vpop.f32.mrb[0].mxu0
      %v7457 = vadd.f32 0.0, %v7456
      %v7458 = vpop.f32.mrb[0].mxu0
      %7459 = vmatprep.mubr.f32.mxu0 0.0
      %7460 = vmatmul.mubr.f32.gmra.mrb[0].mxu0 %v7089
      %v7461 = vpop.f32.mrb[0].mxu0
      %v7462 = vadd.f32 0.0, %v7461
      %v7463 = vpop.f32.mrb[0].mxu0
      %7464 = vmatprep.mubr.f32.mxu0 0.0
      %7465 = vmatmul.mubr.f32.gmra.mrb[0].mxu0 %v7091
      %v7466 = vpop.f32.mrb[0].mxu0
      %v7467 = vadd.f32 0.0, %v7466
      %v7468 = vpop.f32.mrb[0].mxu0
      %7469 = vmatprep.mubr.f32.mxu0 0.0
      %7470 = vmatmul.mubr.f32.gmra.mrb[0].mxu0 %v7093
      %v7471 = vpop.f32.mrb[0].mxu0
      %v7472 = vadd.f32 0.0, %v7471
      %v7473 = vpop.f32.mrb[0].mxu0
      %7474 = vmatprep.mubr.f32.mxu0 0.0
      %7475 = vmatmul.mubr.f32.gmra.mrb[0].mxu0 %v7095
      %v7476 = vpop.f32.mrb[0].mxu0
      %v7477 = vadd.f32 0.0, %v7476
      %v7478 = vpop.f32.mrb[0].mxu0
      %7479 = vmatprep.mubr.f32.mxu0 0.0
      %7480 = vmatmul.mubr.f32.gmra.mrb[0].mxu0 %v7097
      %v7481 = vpop.f32.mrb[0].mxu0
      %v7482 = vadd.f32 0.0, %v7481
      %v7483 = vpop.f32.mrb[0].mxu0
      %7484 = vmatprep.mubr.f32.mxu0 0.0
      %7485 = vmatmul.mubr.f32.gmra.mrb[0].mxu0 %v7099
      %v7486 = vpop.f32.mrb[0].mxu0
      %v7487 = vadd.f32 0.0, %v7486
      %v7488 = vpop.f32.mrb[0].mxu0
      %7489 = vmatprep.mubr.f32.mxu0 0.0
      %7490 = vmatmul.mubr.f32.gmra.mrb[0].mxu0 %v7101
      %v7491 = vpop.f32.mrb[0].mxu0
      %v7492 = vadd.f32 0.0, %v7491
      %v7493 = vpop.f32.mrb[0].mxu0
      %7494 = vmatprep.mubr.f32.mxu0 0.0
      %7495 = vmatmul.mubr.f32.gmra.mrb[0].mxu0 %v7103
      %v7496 = vpop.f32.mrb[0].mxu0
      %v7497 = vadd.f32 0.0, %v7496
      %v7498 = vpop.f32.mrb[0].mxu0
      %7499 = vmatprep.mubr.f32.mxu0 0.0
      %7500 = vmatmul.mubr.f32.gmra.mrb[0].mxu0 %v7105
      %v7501 = vpop.f32.mrb[0].mxu0
      %v7502 = vadd.f32 0.0, %v7501
      %v7503 = vpop.f32.mrb[0].mxu0
      %7504 = vmatprep.mubr.f32.mxu0 0.0
      %7505 = vmatmul.mubr.f32.gmra.mrb[0].mxu0 %v7107
      %v7506 = vpop.f32.mrb[0].mxu0
      %v7507 = vadd.f32 0.0, %v7506
      %v7508 = vpop.f32.mrb[0].mxu0
      %7509 = vmatprep.mubr.f32.mxu0 0.0
      %7510 = vmatmul.mubr.f32.gmra.mrb[0].mxu0 %v7109
      %v7511 = vpop.f32.mrb[0].mxu0
      %v7512 = vadd.f32 0.0, %v7511
      %v7513 = vpop.f32.mrb[0].mxu0
      %7514 = vmatprep.mubr.f32.mxu0 0.0
      %7515 = vmatmul.mubr.f32.gmra.mrb[0].mxu0 %v7111
      %v7516 = vpop.f32.mrb[0].mxu0
      %v7517 = vadd.f32 0.0, %v7516
      %v7518 = vpop.f32.mrb[0].mxu0
      %7519 = vmatprep.mubr.f32.mxu0 0.0
      %7520 = vmatmul.mubr.f32.gmra.mrb[0].mxu0 %v7113
      %v7521 = vpop.f32.mrb[0].mxu0
      %v7522 = vadd.f32 0.0, %v7521
      %v7523 = vpop.f32.mrb[0].mxu0
      %7524 = vmatprep.mubr.f32.mxu0 0.0
      %7525 = vmatmul.mubr.f32.gmra.mrb[0].mxu0 %v7115
      %v7526 = vpop.f32.mrb[0].mxu0
      %v7527 = vadd.f32 0.0, %v7526
      %v7528 = vpop.f32.mrb[0].mxu0
      %7529 = vmatprep.mubr.f32.mxu0 0.0
      %7530 = vmatmul.mubr.f32.gmra.mrb[0].mxu0 %v7117
      %v7531 = vpop.f32.mrb[0].mxu0
      %v7532 = vadd.f32 0.0, %v7531
      %v7533 = vpop.f32.mrb[0].mxu0
      %7534 = vmatprep.mubr.f32.mxu0 0.0
      %7535 = vmatmul.mubr.f32.gmra.mrb[0].mxu0 %v7119
      %v7536 = vpop.f32.mrb[0].mxu0
      %v7537 = vadd.f32 0.0, %v7536
      %v7538 = vpop.f32.mrb[0].mxu0
      %7539 = vmatprep.mubr.f32.mxu0 0.0
      %7540 = vmatmul.mubr.f32.gmra.mrb[0].mxu0 %v7121
      %v7541 = vpop.f32.mrb[0].mxu0
      %v7542 = vadd.f32 0.0, %v7541
      %v7543 = vpop.f32.mrb[0].mxu0
      %7544 = vmatprep.mubr.f32.mxu0 0.0
      %7545 = vmatmul.mubr.f32.gmra.mrb[0].mxu0 %v7123
      %v7546 = vpop.f32.mrb[0].mxu0
      %v7547 = vadd.f32 0.0, %v7546
      %v7548 = vpop.f32.mrb[0].mxu0
      %7549 = vdwg.mxu0
      %v7550 = vadd.f32 %v6451, %v7192
      %v7551 = vadd.f32 %v6456, %v7197
      %v7552 = vadd.f32 %v6461, %v7202
      %v7553 = vadd.f32 %v6466, %v7207
      %v7554 = vadd.f32 %v6471, %v7212
      %v7555 = vadd.f32 %v6476, %v7217
      %v7556 = vadd.f32 %v6481, %v7222
      %v7557 = vadd.f32 %v6486, %v7227
      %v7558 = vadd.f32 %v6491, %v7232
      %v7559 = vadd.f32 %v6496, %v7237
      %v7560 = vadd.f32 %v6501, %v7242
      %v7561 = vadd.f32 %v6506, %v7247
      %v7562 = vadd.f32 %v6511, %v7252
      %v7563 = vadd.f32 %v6516, %v7257
      %v7564 = vadd.f32 %v6521, %v7262
      %v7565 = vadd.f32 %v6526, %v7267
      %v7566 = vadd.f32 %v6531, %v7272
      %v7567 = vadd.f32 %v6536, %v7277
      %v7568 = vadd.f32 %v6541, %v7282
      %v7569 = vadd.f32 %v6546, %v7287
      %v7570 = vadd.f32 %v6551, %v7292
      %v7571 = vadd.f32 %v6556, %v7297
      %v7572 = vadd.f32 %v6561, %v7302
      %v7573 = vadd.f32 %v6566, %v7307
      %v7574 = vadd.f32 %v6571, %v7312
      %v7575 = vadd.f32 %v6576, %v7317
      %v7576 = vadd.f32 %v6581, %v7322
      %v7577 = vadd.f32 %v6586, %v7327
      %v7578 = vadd.f32 %v6591, %v7332
      %v7579 = vadd.f32 %v6596, %v7337
      %v7580 = vadd.f32 %v6601, %v7342
      %v7581 = vadd.f32 %v6606, %v7347
      %v7582 = vadd.f32 %v6611, %v7352
      %v7583 = vadd.f32 %v6616, %v7357
      %v7584 = vadd.f32 %v6621, %v7362
      %v7585 = vadd.f32 %v6626, %v7367
      %v7586 = vadd.f32 %v6631, %v7372
      %v7587 = vadd.f32 %v6636, %v7377
      %v7588 = vadd.f32 %v6641, %v7382
      %v7589 = vadd.f32 %v6646, %v7387
      %v7590 = vadd.f32 %v6651, %v7392
      %v7591 = vadd.f32 %v6656, %v7397
      %v7592 = vadd.f32 %v6661, %v7402
      %v7593 = vadd.f32 %v6666, %v7407
      %v7594 = vadd.f32 %v6671, %v7412
      %v7595 = vadd.f32 %v6676, %v7417
      %v7596 = vadd.f32 %v6681, %v7422
      %v7597 = vadd.f32 %v6686, %v7427
      %v7598 = vadd.f32 %v6691, %v7432
      %v7599 = vadd.f32 %v6696, %v7437
      %v7600 = vadd.f32 %v6701, %v7442
      %v7601 = vadd.f32 %v6706, %v7447
      %v7602 = vadd.f32 %v6711, %v7452
      %v7603 = vadd.f32 %v6716, %v7457
      %v7604 = vadd.f32 %v6721, %v7462
      %v7605 = vadd.f32 %v6726, %v7467
      %v7606 = vadd.f32 %v6731, %v7472
      %v7607 = vadd.f32 %v6736, %v7477
      %v7608 = vadd.f32 %v6741, %v7482
      %v7609 = vadd.f32 %v6746, %v7487
      %v7610 = vadd.f32 %v6751, %v7492
      %v7611 = vadd.f32 %v6756, %v7497
      %v7612 = vadd.f32 %v6761, %v7502
      %v7613 = vadd.f32 %v6766, %v7507
      %v7614 = vadd.f32 %v6771, %v7512
      %v7615 = vadd.f32 %v6776, %v7517
      %v7616 = vadd.f32 %v6781, %v7522
      %v7617 = vadd.f32 %v6786, %v7527
      %v7618 = vadd.f32 %v6791, %v7532
      %v7619 = vadd.f32 %v6796, %v7537
      %v7620 = vadd.f32 %v6801, %v7542
      %v7621 = vadd.f32 %v6806, %v7547
      %v7622 = vld [vmem:[%s3 + $0x60] sm:$0xff]
      %v7623 = vld [vmem:[%s3 + $0x68] sm:$0xff]
      %v7624 = vld [vmem:[%s3 + $0x70] sm:$0xff]
      %v7625 = vld [vmem:[%s3 + $0x78] sm:$0xff]
      %v7627 = vsel %vm5670, %v5390, 0
      %v7630 = vsel %vm5670, %v5391, 0
      %v7633 = vsel %vm5670, %v5392, 0
      %7635 = vmatprep.subr.mxu0 0.0
      %7636 = vmatpush1.msra.mxu0 %v7622
      %7637 = vmatprep.subr.mxu0 0.0
      %7638 = vmatpush1.msra.mxu0 %v7623
      %7639 = vmatprep.subr.mxu0 0.0
      %7640 = vmatpush1.msra.mxu0 %v7624
      %7641 = vmatprep.subr.mxu0 0.0
      %7642 = vmatpush1.msra.mxu0 %v7625
      %7643 = vmatprep.subr.mxu0 0.0
      %7644 = vmatpush1.msra.mxu0 0.0
      %7645 = vmatprep.subr.mxu0 0.0
      %7646 = vmatpush1.msra.mxu0 0.0
      %7647 = vmatprep.subr.mxu0 0.0
      %7648 = vmatpush1.msra.mxu0 0.0
      %7649 = vmatprep.subr.mxu0 0.0
      %7650 = vmatpush1.msra.mxu0 0.0
      %7651 = vmatprep.subr.mxu0 0.0
      %7652 = vmatpush1.msra.mxu0 0.0
      %7653 = vmatprep.subr.mxu0 0.0
      %7654 = vmatpush1.msra.mxu0 0.0
      %7655 = vmatprep.subr.mxu0 0.0
      %7656 = vmatpush1.msra.mxu0 0.0
      %7657 = vmatprep.subr.mxu0 0.0
      %7658 = vmatpush1.msra.mxu0 0.0
      %7659 = vmatprep.subr.mxu0 0.0
      %7660 = vmatpush1.msra.mxu0 0.0
      %7661 = vmatprep.subr.mxu0 0.0
      %7662 = vmatpush1.msra.mxu0 0.0
      %7663 = vmatprep.subr.mxu0 0.0
      %7664 = vmatpush1.msra.mxu0 0.0
      %7665 = vmatprep.subr.mxu0 0.0
      %7666 = vmatpush1.msra.mxu0 0.0
      %7667 = vmatprep.subr.mxu0 0.0
      %7668 = vmatpush1.msra.mxu0 0.0
      %7669 = vmatprep.subr.mxu0 0.0
      %7670 = vmatpush1.msra.mxu0 0.0
      %7671 = vmatprep.subr.mxu0 0.0
      %7672 = vmatpush1.msra.mxu0 0.0
      %7673 = vmatprep.subr.mxu0 0.0
      %7674 = vmatpush1.msra.mxu0 0.0
      %7675 = vmatprep.subr.mxu0 0.0
      %7676 = vmatpush1.msra.mxu0 0.0
      %7677 = vmatprep.subr.mxu0 0.0
      %7678 = vmatpush1.msra.mxu0 0.0
      %7679 = vmatprep.subr.mxu0 0.0
      %7680 = vmatpush1.msra.mxu0 0.0
      %7681 = vmatprep.subr.mxu0 0.0
      %7682 = vmatpush1.msra.mxu0 0.0
      %7683 = vmatprep.subr.mxu0 0.0
      %7684 = vmatpush1.msra.mxu0 0.0
      %7685 = vmatprep.subr.mxu0 0.0
      %7686 = vmatpush1.msra.mxu0 0.0
      %7687 = vmatprep.subr.mxu0 0.0
      %7688 = vmatpush1.msra.mxu0 0.0
      %7689 = vmatprep.subr.mxu0 0.0
      %7690 = vmatpush1.msra.mxu0 0.0
      %7691 = vmatprep.subr.mxu0 0.0
      %7692 = vmatpush1.msra.mxu0 0.0
      %7693 = vmatprep.subr.mxu0 0.0
      %7694 = vmatpush1.msra.mxu0 0.0
      %7695 = vmatprep.subr.mxu0 0.0
      %7696 = vmatpush1.msra.mxu0 0.0
      %7697 = vmatprep.subr.mxu0 0.0
      %7698 = vmatpush1.msra.mxu0 0.0
      %7699 = vmatprep.mubr.f32.mxu0 0.0
      %7700 = vmatmul.mubr.f32.gmra.mrb[0].mxu0 %v6246
      %v7701 = vpop.f32.mrb[0].mxu0
      %v7702 = vadd.f32 0.0, %v7701
      %v7703 = vpop.f32.mrb[0].mxu0
      %7704 = vmatprep.mubr.f32.mxu0 0.0
      %7705 = vmatmul.mubr.f32.gmra.mrb[0].mxu0 %v6248
      %v7706 = vpop.f32.mrb[0].mxu0
      %v7707 = vadd.f32 0.0, %v7706
      %v7708 = vpop.f32.mrb[0].mxu0
      %7709 = vmatprep.mubr.f32.mxu0 0.0
      %7710 = vmatmul.mubr.f32.gmra.mrb[0].mxu0 %v6250
      %v7711 = vpop.f32.mrb[0].mxu0
      %v7712 = vadd.f32 0.0, %v7711
      %v7713 = vpop.f32.mrb[0].mxu0
      %7714 = vmatprep.mubr.f32.mxu0 0.0
      %7715 = vmatmul.mubr.f32.gmra.mrb[0].mxu0 %v6252
      %v7716 = vpop.f32.mrb[0].mxu0
      %v7717 = vadd.f32 0.0, %v7716
      %v7718 = vpop.f32.mrb[0].mxu0
      %7719 = vmatprep.mubr.f32.mxu0 0.0
      %7720 = vmatmul.mubr.f32.gmra.mrb[0].mxu0 %v6254
      %v7721 = vpop.f32.mrb[0].mxu0
      %v7722 = vadd.f32 0.0, %v7721
      %v7723 = vpop.f32.mrb[0].mxu0
      %7724 = vmatprep.mubr.f32.mxu0 0.0
      %7725 = vmatmul.mubr.f32.gmra.mrb[0].mxu0 %v6256
      %v7726 = vpop.f32.mrb[0].mxu0
      %v7727 = vadd.f32 0.0, %v7726
      %v7728 = vpop.f32.mrb[0].mxu0
      %7729 = vmatprep.mubr.f32.mxu0 0.0
      %7730 = vmatmul.mubr.f32.gmra.mrb[0].mxu0 %v6258
      %v7731 = vpop.f32.mrb[0].mxu0
      %v7732 = vadd.f32 0.0, %v7731
      %v7733 = vpop.f32.mrb[0].mxu0
      %7734 = vmatprep.mubr.f32.mxu0 0.0
      %7735 = vmatmul.mubr.f32.gmra.mrb[0].mxu0 %v6260
      %v7736 = vpop.f32.mrb[0].mxu0
      %v7737 = vadd.f32 0.0, %v7736
      %v7738 = vpop.f32.mrb[0].mxu0
      %7739 = vmatprep.mubr.f32.mxu0 0.0
      %7740 = vmatmul.mubr.f32.gmra.mrb[0].mxu0 %v6262
      %v7741 = vpop.f32.mrb[0].mxu0
      %v7742 = vadd.f32 0.0, %v7741
      %v7743 = vpop.f32.mrb[0].mxu0
      %7744 = vmatprep.mubr.f32.mxu0 0.0
      %7745 = vmatmul.mubr.f32.gmra.mrb[0].mxu0 %v6264
      %v7746 = vpop.f32.mrb[0].mxu0
      %v7747 = vadd.f32 0.0, %v7746
      %v7748 = vpop.f32.mrb[0].mxu0
      %7749 = vmatprep.mubr.f32.mxu0 0.0
      %7750 = vmatmul.mubr.f32.gmra.mrb[0].mxu0 %v6266
      %v7751 = vpop.f32.mrb[0].mxu0
      %v7752 = vadd.f32 0.0, %v7751
      %v7753 = vpop.f32.mrb[0].mxu0
      %7754 = vmatprep.mubr.f32.mxu0 0.0
      %7755 = vmatmul.mubr.f32.gmra.mrb[0].mxu0 %v6268
      %v7756 = vpop.f32.mrb[0].mxu0
      %v7757 = vadd.f32 0.0, %v7756
      %v7758 = vpop.f32.mrb[0].mxu0
      %7759 = vmatprep.mubr.f32.mxu0 0.0
      %7760 = vmatmul.mubr.f32.gmra.mrb[0].mxu0 %v6270
      %v7761 = vpop.f32.mrb[0].mxu0
      %v7762 = vadd.f32 0.0, %v7761
      %v7763 = vpop.f32.mrb[0].mxu0
      %7764 = vmatprep.mubr.f32.mxu0 0.0
      %7765 = vmatmul.mubr.f32.gmra.mrb[0].mxu0 %v6272
      %v7766 = vpop.f32.mrb[0].mxu0
      %v7767 = vadd.f32 0.0, %v7766
      %v7768 = vpop.f32.mrb[0].mxu0
      %7769 = vmatprep.mubr.f32.mxu0 0.0
      %7770 = vmatmul.mubr.f32.gmra.mrb[0].mxu0 %v6274
      %v7771 = vpop.f32.mrb[0].mxu0
      %v7772 = vadd.f32 0.0, %v7771
      %v7773 = vpop.f32.mrb[0].mxu0
      %7774 = vmatprep.mubr.f32.mxu0 0.0
      %7775 = vmatmul.mubr.f32.gmra.mrb[0].mxu0 %v6276
      %v7776 = vpop.f32.mrb[0].mxu0
      %v7777 = vadd.f32 0.0, %v7776
      %v7778 = vpop.f32.mrb[0].mxu0
      %7779 = vmatprep.mubr.f32.mxu0 0.0
      %7780 = vmatmul.mubr.f32.gmra.mrb[0].mxu0 %v6278
      %v7781 = vpop.f32.mrb[0].mxu0
      %v7782 = vadd.f32 0.0, %v7781
      %v7783 = vpop.f32.mrb[0].mxu0
      %7784 = vmatprep.mubr.f32.mxu0 0.0
      %7785 = vmatmul.mubr.f32.gmra.mrb[0].mxu0 %v6280
      %v7786 = vpop.f32.mrb[0].mxu0
      %v7787 = vadd.f32 0.0, %v7786
      %v7788 = vpop.f32.mrb[0].mxu0
      %7789 = vmatprep.mubr.f32.mxu0 0.0
      %7790 = vmatmul.mubr.f32.gmra.mrb[0].mxu0 %v6282
      %v7791 = vpop.f32.mrb[0].mxu0
      %v7792 = vadd.f32 0.0, %v7791
      %v7793 = vpop.f32.mrb[0].mxu0
      %7794 = vmatprep.mubr.f32.mxu0 0.0
      %7795 = vmatmul.mubr.f32.gmra.mrb[0].mxu0 %v6284
      %v7796 = vpop.f32.mrb[0].mxu0
      %v7797 = vadd.f32 0.0, %v7796
      %v7798 = vpop.f32.mrb[0].mxu0
      %7799 = vmatprep.mubr.f32.mxu0 0.0
      %7800 = vmatmul.mubr.f32.gmra.mrb[0].mxu0 %v6286
      %v7801 = vpop.f32.mrb[0].mxu0
      %v7802 = vadd.f32 0.0, %v7801
      %v7803 = vpop.f32.mrb[0].mxu0
      %7804 = vmatprep.mubr.f32.mxu0 0.0
      %7805 = vmatmul.mubr.f32.gmra.mrb[0].mxu0 %v6288
      %v7806 = vpop.f32.mrb[0].mxu0
      %v7807 = vadd.f32 0.0, %v7806
      %v7808 = vpop.f32.mrb[0].mxu0
      %7809 = vmatprep.mubr.f32.mxu0 0.0
      %7810 = vmatmul.mubr.f32.gmra.mrb[0].mxu0 %v6290
      %v7811 = vpop.f32.mrb[0].mxu0
      %v7812 = vadd.f32 0.0, %v7811
      %v7813 = vpop.f32.mrb[0].mxu0
      %7814 = vmatprep.mubr.f32.mxu0 0.0
      %7815 = vmatmul.mubr.f32.gmra.mrb[0].mxu0 %v6292
      %v7816 = vpop.f32.mrb[0].mxu0
      %v7817 = vadd.f32 0.0, %v7816
      %v7818 = vpop.f32.mrb[0].mxu0
      %7819 = vmatprep.mubr.f32.mxu0 0.0
      %7820 = vmatmul.mubr.f32.gmra.mrb[0].mxu0 %v6294
      %v7821 = vpop.f32.mrb[0].mxu0
      %v7822 = vadd.f32 0.0, %v7821
      %v7823 = vpop.f32.mrb[0].mxu0
      %7824 = vmatprep.mubr.f32.mxu0 0.0
      %7825 = vmatmul.mubr.f32.gmra.mrb[0].mxu0 %v6296
      %v7826 = vpop.f32.mrb[0].mxu0
      %v7827 = vadd.f32 0.0, %v7826
      %v7828 = vpop.f32.mrb[0].mxu0
      %7829 = vmatprep.mubr.f32.mxu0 0.0
      %7830 = vmatmul.mubr.f32.gmra.mrb[0].mxu0 %v6298
      %v7831 = vpop.f32.mrb[0].mxu0
      %v7832 = vadd.f32 0.0, %v7831
      %v7833 = vpop.f32.mrb[0].mxu0
      %7834 = vmatprep.mubr.f32.mxu0 0.0
      %7835 = vmatmul.mubr.f32.gmra.mrb[0].mxu0 %v6300
      %v7836 = vpop.f32.mrb[0].mxu0
      %v7837 = vadd.f32 0.0, %v7836
      %v7838 = vpop.f32.mrb[0].mxu0
      %7839 = vmatprep.mubr.f32.mxu0 0.0
      %7840 = vmatmul.mubr.f32.gmra.mrb[0].mxu0 %v6302
      %v7841 = vpop.f32.mrb[0].mxu0
      %v7842 = vadd.f32 0.0, %v7841
      %v7843 = vpop.f32.mrb[0].mxu0
      %7844 = vmatprep.mubr.f32.mxu0 0.0
      %7845 = vmatmul.mubr.f32.gmra.mrb[0].mxu0 %v6304
      %v7846 = vpop.f32.mrb[0].mxu0
      %v7847 = vadd.f32 0.0, %v7846
      %v7848 = vpop.f32.mrb[0].mxu0
      %7849 = vmatprep.mubr.f32.mxu0 0.0
      %7850 = vmatmul.mubr.f32.gmra.mrb[0].mxu0 %v6306
      %v7851 = vpop.f32.mrb[0].mxu0
      %v7852 = vadd.f32 0.0, %v7851
      %v7853 = vpop.f32.mrb[0].mxu0
      %7854 = vmatprep.mubr.f32.mxu0 0.0
      %7855 = vmatmul.mubr.f32.gmra.mrb[0].mxu0 %v6308
      %v7856 = vpop.f32.mrb[0].mxu0
      %v7857 = vadd.f32 0.0, %v7856
      %v7858 = vpop.f32.mrb[0].mxu0
      %7859 = vmatprep.mubr.f32.mxu0 0.0
      %7860 = vmatmul.mubr.f32.gmra.mrb[0].mxu0 %v6310
      %v7861 = vpop.f32.mrb[0].mxu0
      %v7862 = vadd.f32 0.0, %v7861
      %v7863 = vpop.f32.mrb[0].mxu0
      %7864 = vmatprep.mubr.f32.mxu0 0.0
      %7865 = vmatmul.mubr.f32.gmra.mrb[0].mxu0 %v6312
      %v7866 = vpop.f32.mrb[0].mxu0
      %v7867 = vadd.f32 0.0, %v7866
      %v7868 = vpop.f32.mrb[0].mxu0
      %7869 = vmatprep.mubr.f32.mxu0 0.0
      %7870 = vmatmul.mubr.f32.gmra.mrb[0].mxu0 %v6314
      %v7871 = vpop.f32.mrb[0].mxu0
      %v7872 = vadd.f32 0.0, %v7871
      %v7873 = vpop.f32.mrb[0].mxu0
      %7874 = vmatprep.mubr.f32.mxu0 0.0
      %7875 = vmatmul.mubr.f32.gmra.mrb[0].mxu0 %v6316
      %v7876 = vpop.f32.mrb[0].mxu0
      %v7877 = vadd.f32 0.0, %v7876
      %v7878 = vpop.f32.mrb[0].mxu0
      %7879 = vmatprep.mubr.f32.mxu0 0.0
      %7880 = vmatmul.mubr.f32.gmra.mrb[0].mxu0 %v6318
      %v7881 = vpop.f32.mrb[0].mxu0
      %v7882 = vadd.f32 0.0, %v7881
      %v7883 = vpop.f32.mrb[0].mxu0
      %7884 = vmatprep.mubr.f32.mxu0 0.0
      %7885 = vmatmul.mubr.f32.gmra.mrb[0].mxu0 %v6320
      %v7886 = vpop.f32.mrb[0].mxu0
      %v7887 = vadd.f32 0.0, %v7886
      %v7888 = vpop.f32.mrb[0].mxu0
      %7889 = vmatprep.mubr.f32.mxu0 0.0
      %7890 = vmatmul.mubr.f32.gmra.mrb[0].mxu0 %v6322
      %v7891 = vpop.f32.mrb[0].mxu0
      %v7892 = vadd.f32 0.0, %v7891
      %v7893 = vpop.f32.mrb[0].mxu0
      %7894 = vmatprep.mubr.f32.mxu0 0.0
      %7895 = vmatmul.mubr.f32.gmra.mrb[0].mxu0 %v6324
      %v7896 = vpop.f32.mrb[0].mxu0
      %v7897 = vadd.f32 0.0, %v7896
      %v7898 = vpop.f32.mrb[0].mxu0
      %7899 = vmatprep.mubr.f32.mxu0 0.0
      %7900 = vmatmul.mubr.f32.gmra.mrb[0].mxu0 %v6326
      %v7901 = vpop.f32.mrb[0].mxu0
      %v7902 = vadd.f32 0.0, %v7901
      %v7903 = vpop.f32.mrb[0].mxu0
      %7904 = vmatprep.mubr.f32.mxu0 0.0
      %7905 = vmatmul.mubr.f32.gmra.mrb[0].mxu0 %v6328
      %v7906 = vpop.f32.mrb[0].mxu0
      %v7907 = vadd.f32 0.0, %v7906
      %v7908 = vpop.f32.mrb[0].mxu0
      %7909 = vmatprep.mubr.f32.mxu0 0.0
      %7910 = vmatmul.mubr.f32.gmra.mrb[0].mxu0 %v6330
      %v7911 = vpop.f32.mrb[0].mxu0
      %v7912 = vadd.f32 0.0, %v7911
      %v7913 = vpop.f32.mrb[0].mxu0
      %7914 = vmatprep.mubr.f32.mxu0 0.0
      %7915 = vmatmul.mubr.f32.gmra.mrb[0].mxu0 %v6332
      %v7916 = vpop.f32.mrb[0].mxu0
      %v7917 = vadd.f32 0.0, %v7916
      %v7918 = vpop.f32.mrb[0].mxu0
      %7919 = vmatprep.mubr.f32.mxu0 0.0
      %7920 = vmatmul.mubr.f32.gmra.mrb[0].mxu0 %v6334
      %v7921 = vpop.f32.mrb[0].mxu0
      %v7922 = vadd.f32 0.0, %v7921
      %v7923 = vpop.f32.mrb[0].mxu0
      %7924 = vmatprep.mubr.f32.mxu0 0.0
      %7925 = vmatmul.mubr.f32.gmra.mrb[0].mxu0 %v6336
      %v7926 = vpop.f32.mrb[0].mxu0
      %v7927 = vadd.f32 0.0, %v7926
      %v7928 = vpop.f32.mrb[0].mxu0
      %7929 = vmatprep.mubr.f32.mxu0 0.0
      %7930 = vmatmul.mubr.f32.gmra.mrb[0].mxu0 %v6338
      %v7931 = vpop.f32.mrb[0].mxu0
      %v7932 = vadd.f32 0.0, %v7931
      %v7933 = vpop.f32.mrb[0].mxu0
      %7934 = vmatprep.mubr.f32.mxu0 0.0
      %7935 = vmatmul.mubr.f32.gmra.mrb[0].mxu0 %v6340
      %v7936 = vpop.f32.mrb[0].mxu0
      %v7937 = vadd.f32 0.0, %v7936
      %v7938 = vpop.f32.mrb[0].mxu0
      %7939 = vmatprep.mubr.f32.mxu0 0.0
      %7940 = vmatmul.mubr.f32.gmra.mrb[0].mxu0 %v6342
      %v7941 = vpop.f32.mrb[0].mxu0
      %v7942 = vadd.f32 0.0, %v7941
      %v7943 = vpop.f32.mrb[0].mxu0
      %7944 = vmatprep.mubr.f32.mxu0 0.0
      %7945 = vmatmul.mubr.f32.gmra.mrb[0].mxu0 %v6344
      %v7946 = vpop.f32.mrb[0].mxu0
      %v7947 = vadd.f32 0.0, %v7946
      %v7948 = vpop.f32.mrb[0].mxu0
      %7949 = vmatprep.mubr.f32.mxu0 0.0
      %7950 = vmatmul.mubr.f32.gmra.mrb[0].mxu0 %v6346
      %v7951 = vpop.f32.mrb[0].mxu0
      %v7952 = vadd.f32 0.0, %v7951
      %v7953 = vpop.f32.mrb[0].mxu0
      %7954 = vmatprep.mubr.f32.mxu0 0.0
      %7955 = vmatmul.mubr.f32.gmra.mrb[0].mxu0 %v6348
      %v7956 = vpop.f32.mrb[0].mxu0
      %v7957 = vadd.f32 0.0, %v7956
      %v7958 = vpop.f32.mrb[0].mxu0
      %7959 = vmatprep.mubr.f32.mxu0 0.0
      %7960 = vmatmul.mubr.f32.gmra.mrb[0].mxu0 %v6350
      %v7961 = vpop.f32.mrb[0].mxu0
      %v7962 = vadd.f32 0.0, %v7961
      %v7963 = vpop.f32.mrb[0].mxu0
      %7964 = vmatprep.mubr.f32.mxu0 0.0
      %7965 = vmatmul.mubr.f32.gmra.mrb[0].mxu0 %v6352
      %v7966 = vpop.f32.mrb[0].mxu0
      %v7967 = vadd.f32 0.0, %v7966
      %v7968 = vpop.f32.mrb[0].mxu0
      %7969 = vmatprep.mubr.f32.mxu0 0.0
      %7970 = vmatmul.mubr.f32.gmra.mrb[0].mxu0 %v6354
      %v7971 = vpop.f32.mrb[0].mxu0
      %v7972 = vadd.f32 0.0, %v7971
      %v7973 = vpop.f32.mrb[0].mxu0
      %7974 = vmatprep.mubr.f32.mxu0 0.0
      %7975 = vmatmul.mubr.f32.gmra.mrb[0].mxu0 %v6356
      %v7976 = vpop.f32.mrb[0].mxu0
      %v7977 = vadd.f32 0.0, %v7976
      %v7978 = vpop.f32.mrb[0].mxu0
      %7979 = vmatprep.mubr.f32.mxu0 0.0
      %7980 = vmatmul.mubr.f32.gmra.mrb[0].mxu0 %v6358
      %v7981 = vpop.f32.mrb[0].mxu0
      %v7982 = vadd.f32 0.0, %v7981
      %v7983 = vpop.f32.mrb[0].mxu0
      %7984 = vmatprep.mubr.f32.mxu0 0.0
      %7985 = vmatmul.mubr.f32.gmra.mrb[0].mxu0 %v6360
      %v7986 = vpop.f32.mrb[0].mxu0
      %v7987 = vadd.f32 0.0, %v7986
      %v7988 = vpop.f32.mrb[0].mxu0
      %7989 = vmatprep.mubr.f32.mxu0 0.0
      %7990 = vmatmul.mubr.f32.gmra.mrb[0].mxu0 %v6362
      %v7991 = vpop.f32.mrb[0].mxu0
      %v7992 = vadd.f32 0.0, %v7991
      %v7993 = vpop.f32.mrb[0].mxu0
      %7994 = vmatprep.mubr.f32.mxu0 0.0
      %7995 = vmatmul.mubr.f32.gmra.mrb[0].mxu0 %v6364
      %v7996 = vpop.f32.mrb[0].mxu0
      %v7997 = vadd.f32 0.0, %v7996
      %v7998 = vpop.f32.mrb[0].mxu0
      %7999 = vmatprep.mubr.f32.mxu0 0.0
      %8000 = vmatmul.mubr.f32.gmra.mrb[0].mxu0 %v6366
      %v8001 = vpop.f32.mrb[0].mxu0
      %v8002 = vadd.f32 0.0, %v8001
      %v8003 = vpop.f32.mrb[0].mxu0
      %8004 = vmatprep.mubr.f32.mxu0 0.0
      %8005 = vmatmul.mubr.f32.gmra.mrb[0].mxu0 %v6368
      %v8006 = vpop.f32.mrb[0].mxu0
      %v8007 = vadd.f32 0.0, %v8006
      %v8008 = vpop.f32.mrb[0].mxu0
      %8009 = vmatprep.mubr.f32.mxu0 0.0
      %8010 = vmatmul.mubr.f32.gmra.mrb[0].mxu0 %v6370
      %v8011 = vpop.f32.mrb[0].mxu0
      %v8012 = vadd.f32 0.0, %v8011
      %v8013 = vpop.f32.mrb[0].mxu0
      %8014 = vmatprep.mubr.f32.mxu0 0.0
      %8015 = vmatmul.mubr.f32.gmra.mrb[0].mxu0 %v6372
      %v8016 = vpop.f32.mrb[0].mxu0
      %v8017 = vadd.f32 0.0, %v8016
      %v8018 = vpop.f32.mrb[0].mxu0
      %8019 = vmatprep.mubr.f32.mxu0 0.0
      %8020 = vmatmul.mubr.f32.gmra.mrb[0].mxu0 %v6374
      %v8021 = vpop.f32.mrb[0].mxu0
      %v8022 = vadd.f32 0.0, %v8021
      %v8023 = vpop.f32.mrb[0].mxu0
      %8024 = vmatprep.mubr.f32.mxu0 0.0
      %8025 = vmatmul.mubr.f32.gmra.mrb[0].mxu0 %v6376
      %v8026 = vpop.f32.mrb[0].mxu0
      %v8027 = vadd.f32 0.0, %v8026
      %v8028 = vpop.f32.mrb[0].mxu0
      %8029 = vmatprep.mubr.f32.mxu0 0.0
      %8030 = vmatmul.mubr.f32.gmra.mrb[0].mxu0 %v6378
      %v8031 = vpop.f32.mrb[0].mxu0
      %v8032 = vadd.f32 0.0, %v8031
      %v8033 = vpop.f32.mrb[0].mxu0
      %8034 = vmatprep.mubr.f32.mxu0 0.0
      %8035 = vmatmul.mubr.f32.gmra.mrb[0].mxu0 %v6380
      %v8036 = vpop.f32.mrb[0].mxu0
      %v8037 = vadd.f32 0.0, %v8036
      %v8038 = vpop.f32.mrb[0].mxu0
      %8039 = vmatprep.mubr.f32.mxu0 0.0
      %8040 = vmatmul.mubr.f32.gmra.mrb[0].mxu0 %v6382
      %v8041 = vpop.f32.mrb[0].mxu0
      %v8042 = vadd.f32 0.0, %v8041
      %v8043 = vpop.f32.mrb[0].mxu0
      %8044 = vmatprep.mubr.f32.mxu0 0.0
      %8045 = vmatmul.mubr.f32.gmra.mrb[0].mxu0 %v7627
      %v8046 = vpop.f32.mrb[0].mxu0
      %v8047 = vadd.f32 0.0, %v8046
      %v8048 = vpop.f32.mrb[0].mxu0
      %8049 = vmatprep.mubr.f32.mxu0 0.0
      %8050 = vmatmul.mubr.f32.gmra.mrb[0].mxu0 %v7630
      %v8051 = vpop.f32.mrb[0].mxu0
      %v8052 = vadd.f32 0.0, %v8051
      %v8053 = vpop.f32.mrb[0].mxu0
      %8054 = vmatprep.mubr.f32.mxu0 0.0
      %8055 = vmatmul.mubr.f32.gmra.mrb[0].mxu0 %v7633
      %v8056 = vpop.f32.mrb[0].mxu0
      %v8057 = vadd.f32 0.0, %v8056
      %v8058 = vpop.f32.mrb[0].mxu0
      %8059 = vdwg.mxu0
      %v8060 = vadd.f32 %v7550, %v7702
      %v8061 = vadd.f32 %v7551, %v7707
      %v8062 = vadd.f32 %v7552, %v7712
      %v8063 = vadd.f32 %v7553, %v7717
      %v8064 = vadd.f32 %v7554, %v7722
      %v8065 = vadd.f32 %v7555, %v7727
      %v8066 = vadd.f32 %v7556, %v7732
      %v8067 = vadd.f32 %v7557, %v7737
      %v8068 = vadd.f32 %v7558, %v7742
      %v8069 = vadd.f32 %v7559, %v7747
      %v8070 = vadd.f32 %v7560, %v7752
      %v8071 = vadd.f32 %v7561, %v7757
      %v8072 = vadd.f32 %v7562, %v7762
      %v8073 = vadd.f32 %v7563, %v7767
      %v8074 = vadd.f32 %v7564, %v7772
      %v8075 = vadd.f32 %v7565, %v7777
      %v8076 = vadd.f32 %v7566, %v7782
      %v8077 = vadd.f32 %v7567, %v7787
      %v8078 = vadd.f32 %v7568, %v7792
      %v8079 = vadd.f32 %v7569, %v7797
      %v8080 = vadd.f32 %v7570, %v7802
      %v8081 = vadd.f32 %v7571, %v7807
      %v8082 = vadd.f32 %v7572, %v7812
      %v8083 = vadd.f32 %v7573, %v7817
      %v8084 = vadd.f32 %v7574, %v7822
      %v8085 = vadd.f32 %v7575, %v7827
      %v8086 = vadd.f32 %v7576, %v7832
      %v8087 = vadd.f32 %v7577, %v7837
      %v8088 = vadd.f32 %v7578, %v7842
      %v8089 = vadd.f32 %v7579, %v7847
      %v8090 = vadd.f32 %v7580, %v7852
      %v8091 = vadd.f32 %v7581, %v7857
      %v8092 = vadd.f32 %v7582, %v7862
      %v8093 = vadd.f32 %v7583, %v7867
      %v8094 = vadd.f32 %v7584, %v7872
      %v8095 = vadd.f32 %v7585, %v7877
      %v8096 = vadd.f32 %v7586, %v7882
      %v8097 = vadd.f32 %v7587, %v7887
      %v8098 = vadd.f32 %v7588, %v7892
      %v8099 = vadd.f32 %v7589, %v7897
      %v8100 = vadd.f32 %v7590, %v7902
      %v8101 = vadd.f32 %v7591, %v7907
      %v8102 = vadd.f32 %v7592, %v7912
      %v8103 = vadd.f32 %v7593, %v7917
      %v8104 = vadd.f32 %v7594, %v7922
      %v8105 = vadd.f32 %v7595, %v7927
      %v8106 = vadd.f32 %v7596, %v7932
      %v8107 = vadd.f32 %v7597, %v7937
      %v8108 = vadd.f32 %v7598, %v7942
      %v8109 = vadd.f32 %v7599, %v7947
      %v8110 = vadd.f32 %v7600, %v7952
      %v8111 = vadd.f32 %v7601, %v7957
      %v8112 = vadd.f32 %v7602, %v7962
      %v8113 = vadd.f32 %v7603, %v7967
      %v8114 = vadd.f32 %v7604, %v7972
      %v8115 = vadd.f32 %v7605, %v7977
      %v8116 = vadd.f32 %v7606, %v7982
      %v8117 = vadd.f32 %v7607, %v7987
      %v8118 = vadd.f32 %v7608, %v7992
      %v8119 = vadd.f32 %v7609, %v7997
      %v8120 = vadd.f32 %v7610, %v8002
      %v8121 = vadd.f32 %v7611, %v8007
      %v8122 = vadd.f32 %v7612, %v8012
      %v8123 = vadd.f32 %v7613, %v8017
      %v8124 = vadd.f32 %v7614, %v8022
      %v8125 = vadd.f32 %v7615, %v8027
      %v8126 = vadd.f32 %v7616, %v8032
      %v8127 = vadd.f32 %v7617, %v8037
      %v8128 = vadd.f32 %v7618, %v8042
      %v8129 = vadd.f32 %v7619, %v8047
      %v8130 = vadd.f32 %v7620, %v8052
      %v8131 = vadd.f32 %v7621, %v8057
      %v8133 = vrot.slane %v5390, 1
      %v8134 = vrot.slane %v5391, 1
      %v8135 = vsel %vm1310, %v8133, %v8134
      %v8136 = vrot.slane %v5392, 1
      %v8137 = vsel %vm1310, %v8134, %v8136
      %v8138 = vrot.slane %v5393, 1
      %v8139 = vsel %vm1310, %v8136, %v8138
      %v8140 = vld [vmem:[%s3 + $0x80] sm:$0xff]
      %v8141 = vld [vmem:[%s3 + $0x88] sm:$0xff]
      %v8142 = vld [vmem:[%s3 + $0x90] sm:$0xff]
      %v8143 = vld [vmem:[%s3 + $0x98] sm:$0xff]
      %v8144 = vsel %vm5670, %v8135, 0
      %v8146 = vsel %vm5670, %v8137, 0
      %v8148 = vsel %vm5670, %v8139, 0
      %8150 = vmatprep.subr.mxu0 0.0
      %8151 = vmatpush1.msra.mxu0 %v8140
      %8152 = vmatprep.subr.mxu0 0.0
      %8153 = vmatpush1.msra.mxu0 %v8141
      %8154 = vmatprep.subr.mxu0 0.0
      %8155 = vmatpush1.msra.mxu0 %v8142
      %8156 = vmatprep.subr.mxu0 0.0
      %8157 = vmatpush1.msra.mxu0 %v8143
      %8158 = vmatprep.subr.mxu0 0.0
      %8159 = vmatpush1.msra.mxu0 0.0
      %8160 = vmatprep.subr.mxu0 0.0
      %8161 = vmatpush1.msra.mxu0 0.0
      %8162 = vmatprep.subr.mxu0 0.0
      %8163 = vmatpush1.msra.mxu0 0.0
      %8164 = vmatprep.subr.mxu0 0.0
      %8165 = vmatpush1.msra.mxu0 0.0
      %8166 = vmatprep.subr.mxu0 0.0
      %8167 = vmatpush1.msra.mxu0 0.0
      %8168 = vmatprep.subr.mxu0 0.0
      %8169 = vmatpush1.msra.mxu0 0.0
      %8170 = vmatprep.subr.mxu0 0.0
      %8171 = vmatpush1.msra.mxu0 0.0
      %8172 = vmatprep.subr.mxu0 0.0
      %8173 = vmatpush1.msra.mxu0 0.0
      %8174 = vmatprep.subr.mxu0 0.0
      %8175 = vmatpush1.msra.mxu0 0.0
      %8176 = vmatprep.subr.mxu0 0.0
      %8177 = vmatpush1.msra.mxu0 0.0
      %8178 = vmatprep.subr.mxu0 0.0
      %8179 = vmatpush1.msra.mxu0 0.0
      %8180 = vmatprep.subr.mxu0 0.0
      %8181 = vmatpush1.msra.mxu0 0.0
      %8182 = vmatprep.subr.mxu0 0.0
      %8183 = vmatpush1.msra.mxu0 0.0
      %8184 = vmatprep.subr.mxu0 0.0
      %8185 = vmatpush1.msra.mxu0 0.0
      %8186 = vmatprep.subr.mxu0 0.0
      %8187 = vmatpush1.msra.mxu0 0.0
      %8188 = vmatprep.subr.mxu0 0.0
      %8189 = vmatpush1.msra.mxu0 0.0
      %8190 = vmatprep.subr.mxu0 0.0
      %8191 = vmatpush1.msra.mxu0 0.0
      %8192 = vmatprep.subr.mxu0 0.0
      %8193 = vmatpush1.msra.mxu0 0.0
      %8194 = vmatprep.subr.mxu0 0.0
      %8195 = vmatpush1.msra.mxu0 0.0
      %8196 = vmatprep.subr.mxu0 0.0
      %8197 = vmatpush1.msra.mxu0 0.0
      %8198 = vmatprep.subr.mxu0 0.0
      %8199 = vmatpush1.msra.mxu0 0.0
      %8200 = vmatprep.subr.mxu0 0.0
      %8201 = vmatpush1.msra.mxu0 0.0
      %8202 = vmatprep.subr.mxu0 0.0
      %8203 = vmatpush1.msra.mxu0 0.0
      %8204 = vmatprep.subr.mxu0 0.0
      %8205 = vmatpush1.msra.mxu0 0.0
      %8206 = vmatprep.subr.mxu0 0.0
      %8207 = vmatpush1.msra.mxu0 0.0
      %8208 = vmatprep.subr.mxu0 0.0
      %8209 = vmatpush1.msra.mxu0 0.0
      %8210 = vmatprep.subr.mxu0 0.0
      %8211 = vmatpush1.msra.mxu0 0.0
      %8212 = vmatprep.subr.mxu0 0.0
      %8213 = vmatpush1.msra.mxu0 0.0
      %8214 = vmatprep.mubr.f32.mxu0 0.0
      %8215 = vmatmul.mubr.f32.gmra.mrb[0].mxu0 %v5677
      %v8216 = vpop.f32.mrb[0].mxu0
      %v8217 = vadd.f32 0.0, %v8216
      %v8218 = vpop.f32.mrb[0].mxu0
      %8219 = vmatprep.mubr.f32.mxu0 0.0
      %8220 = vmatmul.mubr.f32.gmra.mrb[0].mxu0 %v5679
      %v8221 = vpop.f32.mrb[0].mxu0
      %v8222 = vadd.f32 0.0, %v8221
      %v8223 = vpop.f32.mrb[0].mxu0
      %8224 = vmatprep.mubr.f32.mxu0 0.0
      %8225 = vmatmul.mubr.f32.gmra.mrb[0].mxu0 %v5681
      %v8226 = vpop.f32.mrb[0].mxu0
      %v8227 = vadd.f32 0.0, %v8226
      %v8228 = vpop.f32.mrb[0].mxu0
      %8229 = vmatprep.mubr.f32.mxu0 0.0
      %8230 = vmatmul.mubr.f32.gmra.mrb[0].mxu0 %v5683
      %v8231 = vpop.f32.mrb[0].mxu0
      %v8232 = vadd.f32 0.0, %v8231
      %v8233 = vpop.f32.mrb[0].mxu0
      %8234 = vmatprep.mubr.f32.mxu0 0.0
      %8235 = vmatmul.mubr.f32.gmra.mrb[0].mxu0 %v5685
      %v8236 = vpop.f32.mrb[0].mxu0
      %v8237 = vadd.f32 0.0, %v8236
      %v8238 = vpop.f32.mrb[0].mxu0
      %8239 = vmatprep.mubr.f32.mxu0 0.0
      %8240 = vmatmul.mubr.f32.gmra.mrb[0].mxu0 %v5687
      %v8241 = vpop.f32.mrb[0].mxu0
      %v8242 = vadd.f32 0.0, %v8241
      %v8243 = vpop.f32.mrb[0].mxu0
      %8244 = vmatprep.mubr.f32.mxu0 0.0
      %8245 = vmatmul.mubr.f32.gmra.mrb[0].mxu0 %v5689
      %v8246 = vpop.f32.mrb[0].mxu0
      %v8247 = vadd.f32 0.0, %v8246
      %v8248 = vpop.f32.mrb[0].mxu0
      %8249 = vmatprep.mubr.f32.mxu0 0.0
      %8250 = vmatmul.mubr.f32.gmra.mrb[0].mxu0 %v5691
      %v8251 = vpop.f32.mrb[0].mxu0
      %v8252 = vadd.f32 0.0, %v8251
      %v8253 = vpop.f32.mrb[0].mxu0
      %8254 = vmatprep.mubr.f32.mxu0 0.0
      %8255 = vmatmul.mubr.f32.gmra.mrb[0].mxu0 %v5693
      %v8256 = vpop.f32.mrb[0].mxu0
      %v8257 = vadd.f32 0.0, %v8256
      %v8258 = vpop.f32.mrb[0].mxu0
      %8259 = vmatprep.mubr.f32.mxu0 0.0
      %8260 = vmatmul.mubr.f32.gmra.mrb[0].mxu0 %v5695
      %v8261 = vpop.f32.mrb[0].mxu0
      %v8262 = vadd.f32 0.0, %v8261
      %v8263 = vpop.f32.mrb[0].mxu0
      %8264 = vmatprep.mubr.f32.mxu0 0.0
      %8265 = vmatmul.mubr.f32.gmra.mrb[0].mxu0 %v5697
      %v8266 = vpop.f32.mrb[0].mxu0
      %v8267 = vadd.f32 0.0, %v8266
      %v8268 = vpop.f32.mrb[0].mxu0
      %8269 = vmatprep.mubr.f32.mxu0 0.0
      %8270 = vmatmul.mubr.f32.gmra.mrb[0].mxu0 %v5699
      %v8271 = vpop.f32.mrb[0].mxu0
      %v8272 = vadd.f32 0.0, %v8271
      %v8273 = vpop.f32.mrb[0].mxu0
      %8274 = vmatprep.mubr.f32.mxu0 0.0
      %8275 = vmatmul.mubr.f32.gmra.mrb[0].mxu0 %v5701
      %v8276 = vpop.f32.mrb[0].mxu0
      %v8277 = vadd.f32 0.0, %v8276
      %v8278 = vpop.f32.mrb[0].mxu0
      %8279 = vmatprep.mubr.f32.mxu0 0.0
      %8280 = vmatmul.mubr.f32.gmra.mrb[0].mxu0 %v5703
      %v8281 = vpop.f32.mrb[0].mxu0
      %v8282 = vadd.f32 0.0, %v8281
      %v8283 = vpop.f32.mrb[0].mxu0
      %8284 = vmatprep.mubr.f32.mxu0 0.0
      %8285 = vmatmul.mubr.f32.gmra.mrb[0].mxu0 %v5705
      %v8286 = vpop.f32.mrb[0].mxu0
      %v8287 = vadd.f32 0.0, %v8286
      %v8288 = vpop.f32.mrb[0].mxu0
      %8289 = vmatprep.mubr.f32.mxu0 0.0
      %8290 = vmatmul.mubr.f32.gmra.mrb[0].mxu0 %v5707
      %v8291 = vpop.f32.mrb[0].mxu0
      %v8292 = vadd.f32 0.0, %v8291
      %v8293 = vpop.f32.mrb[0].mxu0
      %8294 = vmatprep.mubr.f32.mxu0 0.0
      %8295 = vmatmul.mubr.f32.gmra.mrb[0].mxu0 %v5709
      %v8296 = vpop.f32.mrb[0].mxu0
      %v8297 = vadd.f32 0.0, %v8296
      %v8298 = vpop.f32.mrb[0].mxu0
      %8299 = vmatprep.mubr.f32.mxu0 0.0
      %8300 = vmatmul.mubr.f32.gmra.mrb[0].mxu0 %v5711
      %v8301 = vpop.f32.mrb[0].mxu0
      %v8302 = vadd.f32 0.0, %v8301
      %v8303 = vpop.f32.mrb[0].mxu0
      %8304 = vmatprep.mubr.f32.mxu0 0.0
      %8305 = vmatmul.mubr.f32.gmra.mrb[0].mxu0 %v5713
      %v8306 = vpop.f32.mrb[0].mxu0
      %v8307 = vadd.f32 0.0, %v8306
      %v8308 = vpop.f32.mrb[0].mxu0
      %8309 = vmatprep.mubr.f32.mxu0 0.0
      %8310 = vmatmul.mubr.f32.gmra.mrb[0].mxu0 %v5715
      %v8311 = vpop.f32.mrb[0].mxu0
      %v8312 = vadd.f32 0.0, %v8311
      %v8313 = vpop.f32.mrb[0].mxu0
      %8314 = vmatprep.mubr.f32.mxu0 0.0
      %8315 = vmatmul.mubr.f32.gmra.mrb[0].mxu0 %v5717
      %v8316 = vpop.f32.mrb[0].mxu0
      %v8317 = vadd.f32 0.0, %v8316
      %v8318 = vpop.f32.mrb[0].mxu0
      %8319 = vmatprep.mubr.f32.mxu0 0.0
      %8320 = vmatmul.mubr.f32.gmra.mrb[0].mxu0 %v5719
      %v8321 = vpop.f32.mrb[0].mxu0
      %v8322 = vadd.f32 0.0, %v8321
      %v8323 = vpop.f32.mrb[0].mxu0
      %8324 = vmatprep.mubr.f32.mxu0 0.0
      %8325 = vmatmul.mubr.f32.gmra.mrb[0].mxu0 %v5721
      %v8326 = vpop.f32.mrb[0].mxu0
      %v8327 = vadd.f32 0.0, %v8326
      %v8328 = vpop.f32.mrb[0].mxu0
      %8329 = vmatprep.mubr.f32.mxu0 0.0
      %8330 = vmatmul.mubr.f32.gmra.mrb[0].mxu0 %v5723
      %v8331 = vpop.f32.mrb[0].mxu0
      %v8332 = vadd.f32 0.0, %v8331
      %v8333 = vpop.f32.mrb[0].mxu0
      %8334 = vmatprep.mubr.f32.mxu0 0.0
      %8335 = vmatmul.mubr.f32.gmra.mrb[0].mxu0 %v5725
      %v8336 = vpop.f32.mrb[0].mxu0
      %v8337 = vadd.f32 0.0, %v8336
      %v8338 = vpop.f32.mrb[0].mxu0
      %8339 = vmatprep.mubr.f32.mxu0 0.0
      %8340 = vmatmul.mubr.f32.gmra.mrb[0].mxu0 %v5727
      %v8341 = vpop.f32.mrb[0].mxu0
      %v8342 = vadd.f32 0.0, %v8341
      %v8343 = vpop.f32.mrb[0].mxu0
      %8344 = vmatprep.mubr.f32.mxu0 0.0
      %8345 = vmatmul.mubr.f32.gmra.mrb[0].mxu0 %v5729
      %v8346 = vpop.f32.mrb[0].mxu0
      %v8347 = vadd.f32 0.0, %v8346
      %v8348 = vpop.f32.mrb[0].mxu0
      %8349 = vmatprep.mubr.f32.mxu0 0.0
      %8350 = vmatmul.mubr.f32.gmra.mrb[0].mxu0 %v5731
      %v8351 = vpop.f32.mrb[0].mxu0
      %v8352 = vadd.f32 0.0, %v8351
      %v8353 = vpop.f32.mrb[0].mxu0
      %8354 = vmatprep.mubr.f32.mxu0 0.0
      %8355 = vmatmul.mubr.f32.gmra.mrb[0].mxu0 %v5733
      %v8356 = vpop.f32.mrb[0].mxu0
      %v8357 = vadd.f32 0.0, %v8356
      %v8358 = vpop.f32.mrb[0].mxu0
      %8359 = vmatprep.mubr.f32.mxu0 0.0
      %8360 = vmatmul.mubr.f32.gmra.mrb[0].mxu0 %v5735
      %v8361 = vpop.f32.mrb[0].mxu0
      %v8362 = vadd.f32 0.0, %v8361
      %v8363 = vpop.f32.mrb[0].mxu0
      %8364 = vmatprep.mubr.f32.mxu0 0.0
      %8365 = vmatmul.mubr.f32.gmra.mrb[0].mxu0 %v5737
      %v8366 = vpop.f32.mrb[0].mxu0
      %v8367 = vadd.f32 0.0, %v8366
      %v8368 = vpop.f32.mrb[0].mxu0
      %8369 = vmatprep.mubr.f32.mxu0 0.0
      %8370 = vmatmul.mubr.f32.gmra.mrb[0].mxu0 %v5739
      %v8371 = vpop.f32.mrb[0].mxu0
      %v8372 = vadd.f32 0.0, %v8371
      %v8373 = vpop.f32.mrb[0].mxu0
      %8374 = vmatprep.mubr.f32.mxu0 0.0
      %8375 = vmatmul.mubr.f32.gmra.mrb[0].mxu0 %v5741
      %v8376 = vpop.f32.mrb[0].mxu0
      %v8377 = vadd.f32 0.0, %v8376
      %v8378 = vpop.f32.mrb[0].mxu0
      %8379 = vmatprep.mubr.f32.mxu0 0.0
      %8380 = vmatmul.mubr.f32.gmra.mrb[0].mxu0 %v5743
      %v8381 = vpop.f32.mrb[0].mxu0
      %v8382 = vadd.f32 0.0, %v8381
      %v8383 = vpop.f32.mrb[0].mxu0
      %8384 = vmatprep.mubr.f32.mxu0 0.0
      %8385 = vmatmul.mubr.f32.gmra.mrb[0].mxu0 %v5745
      %v8386 = vpop.f32.mrb[0].mxu0
      %v8387 = vadd.f32 0.0, %v8386
      %v8388 = vpop.f32.mrb[0].mxu0
      %8389 = vmatprep.mubr.f32.mxu0 0.0
      %8390 = vmatmul.mubr.f32.gmra.mrb[0].mxu0 %v5747
      %v8391 = vpop.f32.mrb[0].mxu0
      %v8392 = vadd.f32 0.0, %v8391
      %v8393 = vpop.f32.mrb[0].mxu0
      %8394 = vmatprep.mubr.f32.mxu0 0.0
      %8395 = vmatmul.mubr.f32.gmra.mrb[0].mxu0 %v5749
      %v8396 = vpop.f32.mrb[0].mxu0
      %v8397 = vadd.f32 0.0, %v8396
      %v8398 = vpop.f32.mrb[0].mxu0
      %8399 = vmatprep.mubr.f32.mxu0 0.0
      %8400 = vmatmul.mubr.f32.gmra.mrb[0].mxu0 %v5751
      %v8401 = vpop.f32.mrb[0].mxu0
      %v8402 = vadd.f32 0.0, %v8401
      %v8403 = vpop.f32.mrb[0].mxu0
      %8404 = vmatprep.mubr.f32.mxu0 0.0
      %8405 = vmatmul.mubr.f32.gmra.mrb[0].mxu0 %v5753
      %v8406 = vpop.f32.mrb[0].mxu0
      %v8407 = vadd.f32 0.0, %v8406
      %v8408 = vpop.f32.mrb[0].mxu0
      %8409 = vmatprep.mubr.f32.mxu0 0.0
      %8410 = vmatmul.mubr.f32.gmra.mrb[0].mxu0 %v5755
      %v8411 = vpop.f32.mrb[0].mxu0
      %v8412 = vadd.f32 0.0, %v8411
      %v8413 = vpop.f32.mrb[0].mxu0
      %8414 = vmatprep.mubr.f32.mxu0 0.0
      %8415 = vmatmul.mubr.f32.gmra.mrb[0].mxu0 %v5757
      %v8416 = vpop.f32.mrb[0].mxu0
      %v8417 = vadd.f32 0.0, %v8416
      %v8418 = vpop.f32.mrb[0].mxu0
      %8419 = vmatprep.mubr.f32.mxu0 0.0
      %8420 = vmatmul.mubr.f32.gmra.mrb[0].mxu0 %v5759
      %v8421 = vpop.f32.mrb[0].mxu0
      %v8422 = vadd.f32 0.0, %v8421
      %v8423 = vpop.f32.mrb[0].mxu0
      %8424 = vmatprep.mubr.f32.mxu0 0.0
      %8425 = vmatmul.mubr.f32.gmra.mrb[0].mxu0 %v5761
      %v8426 = vpop.f32.mrb[0].mxu0
      %v8427 = vadd.f32 0.0, %v8426
      %v8428 = vpop.f32.mrb[0].mxu0
      %8429 = vmatprep.mubr.f32.mxu0 0.0
      %8430 = vmatmul.mubr.f32.gmra.mrb[0].mxu0 %v5763
      %v8431 = vpop.f32.mrb[0].mxu0
      %v8432 = vadd.f32 0.0, %v8431
      %v8433 = vpop.f32.mrb[0].mxu0
      %8434 = vmatprep.mubr.f32.mxu0 0.0
      %8435 = vmatmul.mubr.f32.gmra.mrb[0].mxu0 %v5765
      %v8436 = vpop.f32.mrb[0].mxu0
      %v8437 = vadd.f32 0.0, %v8436
      %v8438 = vpop.f32.mrb[0].mxu0
      %8439 = vmatprep.mubr.f32.mxu0 0.0
      %8440 = vmatmul.mubr.f32.gmra.mrb[0].mxu0 %v5767
      %v8441 = vpop.f32.mrb[0].mxu0
      %v8442 = vadd.f32 0.0, %v8441
      %v8443 = vpop.f32.mrb[0].mxu0
      %8444 = vmatprep.mubr.f32.mxu0 0.0
      %8445 = vmatmul.mubr.f32.gmra.mrb[0].mxu0 %v5769
      %v8446 = vpop.f32.mrb[0].mxu0
      %v8447 = vadd.f32 0.0, %v8446
      %v8448 = vpop.f32.mrb[0].mxu0
      %8449 = vmatprep.mubr.f32.mxu0 0.0
      %8450 = vmatmul.mubr.f32.gmra.mrb[0].mxu0 %v5771
      %v8451 = vpop.f32.mrb[0].mxu0
      %v8452 = vadd.f32 0.0, %v8451
      %v8453 = vpop.f32.mrb[0].mxu0
      %8454 = vmatprep.mubr.f32.mxu0 0.0
      %8455 = vmatmul.mubr.f32.gmra.mrb[0].mxu0 %v5773
      %v8456 = vpop.f32.mrb[0].mxu0
      %v8457 = vadd.f32 0.0, %v8456
      %v8458 = vpop.f32.mrb[0].mxu0
      %8459 = vmatprep.mubr.f32.mxu0 0.0
      %8460 = vmatmul.mubr.f32.gmra.mrb[0].mxu0 %v5775
      %v8461 = vpop.f32.mrb[0].mxu0
      %v8462 = vadd.f32 0.0, %v8461
      %v8463 = vpop.f32.mrb[0].mxu0
      %8464 = vmatprep.mubr.f32.mxu0 0.0
      %8465 = vmatmul.mubr.f32.gmra.mrb[0].mxu0 %v5777
      %v8466 = vpop.f32.mrb[0].mxu0
      %v8467 = vadd.f32 0.0, %v8466
      %v8468 = vpop.f32.mrb[0].mxu0
      %8469 = vmatprep.mubr.f32.mxu0 0.0
      %8470 = vmatmul.mubr.f32.gmra.mrb[0].mxu0 %v5779
      %v8471 = vpop.f32.mrb[0].mxu0
      %v8472 = vadd.f32 0.0, %v8471
      %v8473 = vpop.f32.mrb[0].mxu0
      %8474 = vmatprep.mubr.f32.mxu0 0.0
      %8475 = vmatmul.mubr.f32.gmra.mrb[0].mxu0 %v5781
      %v8476 = vpop.f32.mrb[0].mxu0
      %v8477 = vadd.f32 0.0, %v8476
      %v8478 = vpop.f32.mrb[0].mxu0
      %8479 = vmatprep.mubr.f32.mxu0 0.0
      %8480 = vmatmul.mubr.f32.gmra.mrb[0].mxu0 %v5783
      %v8481 = vpop.f32.mrb[0].mxu0
      %v8482 = vadd.f32 0.0, %v8481
      %v8483 = vpop.f32.mrb[0].mxu0
      %8484 = vmatprep.mubr.f32.mxu0 0.0
      %8485 = vmatmul.mubr.f32.gmra.mrb[0].mxu0 %v5785
      %v8486 = vpop.f32.mrb[0].mxu0
      %v8487 = vadd.f32 0.0, %v8486
      %v8488 = vpop.f32.mrb[0].mxu0
      %8489 = vmatprep.mubr.f32.mxu0 0.0
      %8490 = vmatmul.mubr.f32.gmra.mrb[0].mxu0 %v5787
      %v8491 = vpop.f32.mrb[0].mxu0
      %v8492 = vadd.f32 0.0, %v8491
      %v8493 = vpop.f32.mrb[0].mxu0
      %8494 = vmatprep.mubr.f32.mxu0 0.0
      %8495 = vmatmul.mubr.f32.gmra.mrb[0].mxu0 %v5789
      %v8496 = vpop.f32.mrb[0].mxu0
      %v8497 = vadd.f32 0.0, %v8496
      %v8498 = vpop.f32.mrb[0].mxu0
      %8499 = vmatprep.mubr.f32.mxu0 0.0
      %8500 = vmatmul.mubr.f32.gmra.mrb[0].mxu0 %v5791
      %v8501 = vpop.f32.mrb[0].mxu0
      %v8502 = vadd.f32 0.0, %v8501
      %v8503 = vpop.f32.mrb[0].mxu0
      %8504 = vmatprep.mubr.f32.mxu0 0.0
      %8505 = vmatmul.mubr.f32.gmra.mrb[0].mxu0 %v5793
      %v8506 = vpop.f32.mrb[0].mxu0
      %v8507 = vadd.f32 0.0, %v8506
      %v8508 = vpop.f32.mrb[0].mxu0
      %8509 = vmatprep.mubr.f32.mxu0 0.0
      %8510 = vmatmul.mubr.f32.gmra.mrb[0].mxu0 %v5795
      %v8511 = vpop.f32.mrb[0].mxu0
      %v8512 = vadd.f32 0.0, %v8511
      %v8513 = vpop.f32.mrb[0].mxu0
      %8514 = vmatprep.mubr.f32.mxu0 0.0
      %8515 = vmatmul.mubr.f32.gmra.mrb[0].mxu0 %v5797
      %v8516 = vpop.f32.mrb[0].mxu0
      %v8517 = vadd.f32 0.0, %v8516
      %v8518 = vpop.f32.mrb[0].mxu0
      %8519 = vmatprep.mubr.f32.mxu0 0.0
      %8520 = vmatmul.mubr.f32.gmra.mrb[0].mxu0 %v5799
      %v8521 = vpop.f32.mrb[0].mxu0
      %v8522 = vadd.f32 0.0, %v8521
      %v8523 = vpop.f32.mrb[0].mxu0
      %8524 = vmatprep.mubr.f32.mxu0 0.0
      %8525 = vmatmul.mubr.f32.gmra.mrb[0].mxu0 %v5801
      %v8526 = vpop.f32.mrb[0].mxu0
      %v8527 = vadd.f32 0.0, %v8526
      %v8528 = vpop.f32.mrb[0].mxu0
      %8529 = vmatprep.mubr.f32.mxu0 0.0
      %8530 = vmatmul.mubr.f32.gmra.mrb[0].mxu0 %v5803
      %v8531 = vpop.f32.mrb[0].mxu0
      %v8532 = vadd.f32 0.0, %v8531
      %v8533 = vpop.f32.mrb[0].mxu0
      %8534 = vmatprep.mubr.f32.mxu0 0.0
      %8535 = vmatmul.mubr.f32.gmra.mrb[0].mxu0 %v5805
      %v8536 = vpop.f32.mrb[0].mxu0
      %v8537 = vadd.f32 0.0, %v8536
      %v8538 = vpop.f32.mrb[0].mxu0
      %8539 = vmatprep.mubr.f32.mxu0 0.0
      %8540 = vmatmul.mubr.f32.gmra.mrb[0].mxu0 %v5807
      %v8541 = vpop.f32.mrb[0].mxu0
      %v8542 = vadd.f32 0.0, %v8541
      %v8543 = vpop.f32.mrb[0].mxu0
      %8544 = vmatprep.mubr.f32.mxu0 0.0
      %8545 = vmatmul.mubr.f32.gmra.mrb[0].mxu0 %v5809
      %v8546 = vpop.f32.mrb[0].mxu0
      %v8547 = vadd.f32 0.0, %v8546
      %v8548 = vpop.f32.mrb[0].mxu0
      %8549 = vmatprep.mubr.f32.mxu0 0.0
      %8550 = vmatmul.mubr.f32.gmra.mrb[0].mxu0 %v5811
      %v8551 = vpop.f32.mrb[0].mxu0
      %v8552 = vadd.f32 0.0, %v8551
      %v8553 = vpop.f32.mrb[0].mxu0
      %8554 = vmatprep.mubr.f32.mxu0 0.0
      %8555 = vmatmul.mubr.f32.gmra.mrb[0].mxu0 %v5813
      %v8556 = vpop.f32.mrb[0].mxu0
      %v8557 = vadd.f32 0.0, %v8556
      %v8558 = vpop.f32.mrb[0].mxu0
      %8559 = vmatprep.mubr.f32.mxu0 0.0
      %8560 = vmatmul.mubr.f32.gmra.mrb[0].mxu0 %v8144
      %v8561 = vpop.f32.mrb[0].mxu0
      %v8562 = vadd.f32 0.0, %v8561
      %v8563 = vpop.f32.mrb[0].mxu0
      %8564 = vmatprep.mubr.f32.mxu0 0.0
      %8565 = vmatmul.mubr.f32.gmra.mrb[0].mxu0 %v8146
      %v8566 = vpop.f32.mrb[0].mxu0
      %v8567 = vadd.f32 0.0, %v8566
      %v8568 = vpop.f32.mrb[0].mxu0
      %8569 = vmatprep.mubr.f32.mxu0 0.0
      %8570 = vmatmul.mubr.f32.gmra.mrb[0].mxu0 %v8148
      %v8571 = vpop.f32.mrb[0].mxu0
      %v8572 = vadd.f32 0.0, %v8571
      %v8573 = vpop.f32.mrb[0].mxu0
      %8574 = vdwg.mxu0
      %v8575 = vadd.f32 %v8060, %v8217
      %v8576 = vadd.f32 %v8061, %v8222
      %v8577 = vadd.f32 %v8062, %v8227
      %v8578 = vadd.f32 %v8063, %v8232
      %v8579 = vadd.f32 %v8064, %v8237
      %v8580 = vadd.f32 %v8065, %v8242
      %v8581 = vadd.f32 %v8066, %v8247
      %v8582 = vadd.f32 %v8067, %v8252
      %v8583 = vadd.f32 %v8068, %v8257
      %v8584 = vadd.f32 %v8069, %v8262
      %v8585 = vadd.f32 %v8070, %v8267
      %v8586 = vadd.f32 %v8071, %v8272
      %v8587 = vadd.f32 %v8072, %v8277
      %v8588 = vadd.f32 %v8073, %v8282
      %v8589 = vadd.f32 %v8074, %v8287
      %v8590 = vadd.f32 %v8075, %v8292
      %v8591 = vadd.f32 %v8076, %v8297
      %v8592 = vadd.f32 %v8077, %v8302
      %v8593 = vadd.f32 %v8078, %v8307
      %v8594 = vadd.f32 %v8079, %v8312
      %v8595 = vadd.f32 %v8080, %v8317
      %v8596 = vadd.f32 %v8081, %v8322
      %v8597 = vadd.f32 %v8082, %v8327
      %v8598 = vadd.f32 %v8083, %v8332
      %v8599 = vadd.f32 %v8084, %v8337
      %v8600 = vadd.f32 %v8085, %v8342
      %v8601 = vadd.f32 %v8086, %v8347
      %v8602 = vadd.f32 %v8087, %v8352
      %v8603 = vadd.f32 %v8088, %v8357
      %v8604 = vadd.f32 %v8089, %v8362
      %v8605 = vadd.f32 %v8090, %v8367
      %v8606 = vadd.f32 %v8091, %v8372
      %v8607 = vadd.f32 %v8092, %v8377
      %v8608 = vadd.f32 %v8093, %v8382
      %v8609 = vadd.f32 %v8094, %v8387
      %v8610 = vadd.f32 %v8095, %v8392
      %v8611 = vadd.f32 %v8096, %v8397
      %v8612 = vadd.f32 %v8097, %v8402
      %v8613 = vadd.f32 %v8098, %v8407
      %v8614 = vadd.f32 %v8099, %v8412
      %v8615 = vadd.f32 %v8100, %v8417
      %v8616 = vadd.f32 %v8101, %v8422
      %v8617 = vadd.f32 %v8102, %v8427
      %v8618 = vadd.f32 %v8103, %v8432
      %v8619 = vadd.f32 %v8104, %v8437
      %v8620 = vadd.f32 %v8105, %v8442
      %v8621 = vadd.f32 %v8106, %v8447
      %v8622 = vadd.f32 %v8107, %v8452
      %v8623 = vadd.f32 %v8108, %v8457
      %v8624 = vadd.f32 %v8109, %v8462
      %v8625 = vadd.f32 %v8110, %v8467
      %v8626 = vadd.f32 %v8111, %v8472
      %v8627 = vadd.f32 %v8112, %v8477
      %v8628 = vadd.f32 %v8113, %v8482
      %v8629 = vadd.f32 %v8114, %v8487
      %v8630 = vadd.f32 %v8115, %v8492
      %v8631 = vadd.f32 %v8116, %v8497
      %v8632 = vadd.f32 %v8117, %v8502
      %v8633 = vadd.f32 %v8118, %v8507
      %v8634 = vadd.f32 %v8119, %v8512
      %v8635 = vadd.f32 %v8120, %v8517
      %v8636 = vadd.f32 %v8121, %v8522
      %v8637 = vadd.f32 %v8122, %v8527
      %v8638 = vadd.f32 %v8123, %v8532
      %v8639 = vadd.f32 %v8124, %v8537
      %v8640 = vadd.f32 %v8125, %v8542
      %v8641 = vadd.f32 %v8126, %v8547
      %v8642 = vadd.f32 %v8127, %v8552
      %v8643 = vadd.f32 %v8128, %v8557
      %v8644 = vadd.f32 %v8129, %v8562
      %v8645 = vadd.f32 %v8130, %v8567
      %v8646 = vadd.f32 %v8131, %v8572
      %v8647 = vrot.slane %v5390, 2
      %v8648 = vrot.slane %v5391, 2
      %v8649 = vsel %vm1914, %v8647, %v8648
      %v8650 = vrot.slane %v5392, 2
      %v8651 = vsel %vm1914, %v8648, %v8650
      %v8652 = vrot.slane %v5393, 2
      %v8653 = vsel %vm1914, %v8650, %v8652
      %v8654 = vld [vmem:[%s3 + $0xa0] sm:$0xff]
      %v8655 = vld [vmem:[%s3 + $0xa8] sm:$0xff]
      %v8656 = vld [vmem:[%s3 + $0xb0] sm:$0xff]
      %v8657 = vld [vmem:[%s3 + $0xb8] sm:$0xff]
      %v8658 = vsel %vm5670, %v8649, 0
      %v8660 = vsel %vm5670, %v8651, 0
      %v8662 = vsel %vm5670, %v8653, 0
      %8664 = vmatprep.subr.mxu0 0.0
      %8665 = vmatpush1.msra.mxu0 %v8654
      %8666 = vmatprep.subr.mxu0 0.0
      %8667 = vmatpush1.msra.mxu0 %v8655
      %8668 = vmatprep.subr.mxu0 0.0
      %8669 = vmatpush1.msra.mxu0 %v8656
      %8670 = vmatprep.subr.mxu0 0.0
      %8671 = vmatpush1.msra.mxu0 %v8657
      %8672 = vmatprep.subr.mxu0 0.0
      %8673 = vmatpush1.msra.mxu0 0.0
      %8674 = vmatprep.subr.mxu0 0.0
      %8675 = vmatpush1.msra.mxu0 0.0
      %8676 = vmatprep.subr.mxu0 0.0
      %8677 = vmatpush1.msra.mxu0 0.0
      %8678 = vmatprep.subr.mxu0 0.0
      %8679 = vmatpush1.msra.mxu0 0.0
      %8680 = vmatprep.subr.mxu0 0.0
      %8681 = vmatpush1.msra.mxu0 0.0
      %8682 = vmatprep.subr.mxu0 0.0
      %8683 = vmatpush1.msra.mxu0 0.0
      %8684 = vmatprep.subr.mxu0 0.0
      %8685 = vmatpush1.msra.mxu0 0.0
      %8686 = vmatprep.subr.mxu0 0.0
      %8687 = vmatpush1.msra.mxu0 0.0
      %8688 = vmatprep.subr.mxu0 0.0
      %8689 = vmatpush1.msra.mxu0 0.0
      %8690 = vmatprep.subr.mxu0 0.0
      %8691 = vmatpush1.msra.mxu0 0.0
      %8692 = vmatprep.subr.mxu0 0.0
      %8693 = vmatpush1.msra.mxu0 0.0
      %8694 = vmatprep.subr.mxu0 0.0
      %8695 = vmatpush1.msra.mxu0 0.0
      %8696 = vmatprep.subr.mxu0 0.0
      %8697 = vmatpush1.msra.mxu0 0.0
      %8698 = vmatprep.subr.mxu0 0.0
      %8699 = vmatpush1.msra.mxu0 0.0
      %8700 = vmatprep.subr.mxu0 0.0
      %8701 = vmatpush1.msra.mxu0 0.0
      %8702 = vmatprep.subr.mxu0 0.0
      %8703 = vmatpush1.msra.mxu0 0.0
      %8704 = vmatprep.subr.mxu0 0.0
      %8705 = vmatpush1.msra.mxu0 0.0
      %8706 = vmatprep.subr.mxu0 0.0
      %8707 = vmatpush1.msra.mxu0 0.0
      %8708 = vmatprep.subr.mxu0 0.0
      %8709 = vmatpush1.msra.mxu0 0.0
      %8710 = vmatprep.subr.mxu0 0.0
      %8711 = vmatpush1.msra.mxu0 0.0
      %8712 = vmatprep.subr.mxu0 0.0
      %8713 = vmatpush1.msra.mxu0 0.0
      %8714 = vmatprep.subr.mxu0 0.0
      %8715 = vmatpush1.msra.mxu0 0.0
      %8716 = vmatprep.subr.mxu0 0.0
      %8717 = vmatpush1.msra.mxu0 0.0
      %8718 = vmatprep.subr.mxu0 0.0
      %8719 = vmatpush1.msra.mxu0 0.0
      %8720 = vmatprep.subr.mxu0 0.0
      %8721 = vmatpush1.msra.mxu0 0.0
      %8722 = vmatprep.subr.mxu0 0.0
      %8723 = vmatpush1.msra.mxu0 0.0
      %8724 = vmatprep.subr.mxu0 0.0
      %8725 = vmatpush1.msra.mxu0 0.0
      %8726 = vmatprep.subr.mxu0 0.0
      %8727 = vmatpush1.msra.mxu0 0.0
      %8728 = vmatprep.mubr.f32.mxu0 0.0
      %8729 = vmatmul.mubr.f32.gmra.mrb[0].mxu0 %v6987
      %v8730 = vpop.f32.mrb[0].mxu0
      %v8731 = vadd.f32 0.0, %v8730
      %v8732 = vpop.f32.mrb[0].mxu0
      %8733 = vmatprep.mubr.f32.mxu0 0.0
      %8734 = vmatmul.mubr.f32.gmra.mrb[0].mxu0 %v6989
      %v8735 = vpop.f32.mrb[0].mxu0
      %v8736 = vadd.f32 0.0, %v8735
      %v8737 = vpop.f32.mrb[0].mxu0
      %8738 = vmatprep.mubr.f32.mxu0 0.0
      %8739 = vmatmul.mubr.f32.gmra.mrb[0].mxu0 %v6991
      %v8740 = vpop.f32.mrb[0].mxu0
      %v8741 = vadd.f32 0.0, %v8740
      %v8742 = vpop.f32.mrb[0].mxu0
      %8743 = vmatprep.mubr.f32.mxu0 0.0
      %8744 = vmatmul.mubr.f32.gmra.mrb[0].mxu0 %v6993
      %v8745 = vpop.f32.mrb[0].mxu0
      %v8746 = vadd.f32 0.0, %v8745
      %v8747 = vpop.f32.mrb[0].mxu0
      %8748 = vmatprep.mubr.f32.mxu0 0.0
      %8749 = vmatmul.mubr.f32.gmra.mrb[0].mxu0 %v6995
      %v8750 = vpop.f32.mrb[0].mxu0
      %v8751 = vadd.f32 0.0, %v8750
      %v8752 = vpop.f32.mrb[0].mxu0
      %8753 = vmatprep.mubr.f32.mxu0 0.0
      %8754 = vmatmul.mubr.f32.gmra.mrb[0].mxu0 %v6997
      %v8755 = vpop.f32.mrb[0].mxu0
      %v8756 = vadd.f32 0.0, %v8755
      %v8757 = vpop.f32.mrb[0].mxu0
      %8758 = vmatprep.mubr.f32.mxu0 0.0
      %8759 = vmatmul.mubr.f32.gmra.mrb[0].mxu0 %v6999
      %v8760 = vpop.f32.mrb[0].mxu0
      %v8761 = vadd.f32 0.0, %v8760
      %v8762 = vpop.f32.mrb[0].mxu0
      %8763 = vmatprep.mubr.f32.mxu0 0.0
      %8764 = vmatmul.mubr.f32.gmra.mrb[0].mxu0 %v7001
      %v8765 = vpop.f32.mrb[0].mxu0
      %v8766 = vadd.f32 0.0, %v8765
      %v8767 = vpop.f32.mrb[0].mxu0
      %8768 = vmatprep.mubr.f32.mxu0 0.0
      %8769 = vmatmul.mubr.f32.gmra.mrb[0].mxu0 %v7003
      %v8770 = vpop.f32.mrb[0].mxu0
      %v8771 = vadd.f32 0.0, %v8770
      %v8772 = vpop.f32.mrb[0].mxu0
      %8773 = vmatprep.mubr.f32.mxu0 0.0
      %8774 = vmatmul.mubr.f32.gmra.mrb[0].mxu0 %v7005
      %v8775 = vpop.f32.mrb[0].mxu0
      %v8776 = vadd.f32 0.0, %v8775
      %v8777 = vpop.f32.mrb[0].mxu0
      %8778 = vmatprep.mubr.f32.mxu0 0.0
      %8779 = vmatmul.mubr.f32.gmra.mrb[0].mxu0 %v7007
      %v8780 = vpop.f32.mrb[0].mxu0
      %v8781 = vadd.f32 0.0, %v8780
      %v8782 = vpop.f32.mrb[0].mxu0
      %8783 = vmatprep.mubr.f32.mxu0 0.0
      %8784 = vmatmul.mubr.f32.gmra.mrb[0].mxu0 %v7009
      %v8785 = vpop.f32.mrb[0].mxu0
      %v8786 = vadd.f32 0.0, %v8785
      %v8787 = vpop.f32.mrb[0].mxu0
      %8788 = vmatprep.mubr.f32.mxu0 0.0
      %8789 = vmatmul.mubr.f32.gmra.mrb[0].mxu0 %v7011
      %v8790 = vpop.f32.mrb[0].mxu0
      %v8791 = vadd.f32 0.0, %v8790
      %v8792 = vpop.f32.mrb[0].mxu0
      %8793 = vmatprep.mubr.f32.mxu0 0.0
      %8794 = vmatmul.mubr.f32.gmra.mrb[0].mxu0 %v7013
      %v8795 = vpop.f32.mrb[0].mxu0
      %v8796 = vadd.f32 0.0, %v8795
      %v8797 = vpop.f32.mrb[0].mxu0
      %8798 = vmatprep.mubr.f32.mxu0 0.0
      %8799 = vmatmul.mubr.f32.gmra.mrb[0].mxu0 %v7015
      %v8800 = vpop.f32.mrb[0].mxu0
      %v8801 = vadd.f32 0.0, %v8800
      %v8802 = vpop.f32.mrb[0].mxu0
      %8803 = vmatprep.mubr.f32.mxu0 0.0
      %8804 = vmatmul.mubr.f32.gmra.mrb[0].mxu0 %v7017
      %v8805 = vpop.f32.mrb[0].mxu0
      %v8806 = vadd.f32 0.0, %v8805
      %v8807 = vpop.f32.mrb[0].mxu0
      %8808 = vmatprep.mubr.f32.mxu0 0.0
      %8809 = vmatmul.mubr.f32.gmra.mrb[0].mxu0 %v7019
      %v8810 = vpop.f32.mrb[0].mxu0
      %v8811 = vadd.f32 0.0, %v8810
      %v8812 = vpop.f32.mrb[0].mxu0
      %8813 = vmatprep.mubr.f32.mxu0 0.0
      %8814 = vmatmul.mubr.f32.gmra.mrb[0].mxu0 %v7021
      %v8815 = vpop.f32.mrb[0].mxu0
      %v8816 = vadd.f32 0.0, %v8815
      %v8817 = vpop.f32.mrb[0].mxu0
      %8818 = vmatprep.mubr.f32.mxu0 0.0
      %8819 = vmatmul.mubr.f32.gmra.mrb[0].mxu0 %v7023
      %v8820 = vpop.f32.mrb[0].mxu0
      %v8821 = vadd.f32 0.0, %v8820
      %v8822 = vpop.f32.mrb[0].mxu0
      %8823 = vmatprep.mubr.f32.mxu0 0.0
      %8824 = vmatmul.mubr.f32.gmra.mrb[0].mxu0 %v7025
      %v8825 = vpop.f32.mrb[0].mxu0
      %v8826 = vadd.f32 0.0, %v8825
      %v8827 = vpop.f32.mrb[0].mxu0
      %8828 = vmatprep.mubr.f32.mxu0 0.0
      %8829 = vmatmul.mubr.f32.gmra.mrb[0].mxu0 %v7027
      %v8830 = vpop.f32.mrb[0].mxu0
      %v8831 = vadd.f32 0.0, %v8830
      %v8832 = vpop.f32.mrb[0].mxu0
      %8833 = vmatprep.mubr.f32.mxu0 0.0
      %8834 = vmatmul.mubr.f32.gmra.mrb[0].mxu0 %v7029
      %v8835 = vpop.f32.mrb[0].mxu0
      %v8836 = vadd.f32 0.0, %v8835
      %v8837 = vpop.f32.mrb[0].mxu0
      %8838 = vmatprep.mubr.f32.mxu0 0.0
      %8839 = vmatmul.mubr.f32.gmra.mrb[0].mxu0 %v7031
      %v8840 = vpop.f32.mrb[0].mxu0
      %v8841 = vadd.f32 0.0, %v8840
      %v8842 = vpop.f32.mrb[0].mxu0
      %8843 = vmatprep.mubr.f32.mxu0 0.0
      %8844 = vmatmul.mubr.f32.gmra.mrb[0].mxu0 %v7033
      %v8845 = vpop.f32.mrb[0].mxu0
      %v8846 = vadd.f32 0.0, %v8845
      %v8847 = vpop.f32.mrb[0].mxu0
      %8848 = vmatprep.mubr.f32.mxu0 0.0
      %8849 = vmatmul.mubr.f32.gmra.mrb[0].mxu0 %v7035
      %v8850 = vpop.f32.mrb[0].mxu0
      %v8851 = vadd.f32 0.0, %v8850
      %v8852 = vpop.f32.mrb[0].mxu0
      %8853 = vmatprep.mubr.f32.mxu0 0.0
      %8854 = vmatmul.mubr.f32.gmra.mrb[0].mxu0 %v7037
      %v8855 = vpop.f32.mrb[0].mxu0
      %v8856 = vadd.f32 0.0, %v8855
      %v8857 = vpop.f32.mrb[0].mxu0
      %8858 = vmatprep.mubr.f32.mxu0 0.0
      %8859 = vmatmul.mubr.f32.gmra.mrb[0].mxu0 %v7039
      %v8860 = vpop.f32.mrb[0].mxu0
      %v8861 = vadd.f32 0.0, %v8860
      %v8862 = vpop.f32.mrb[0].mxu0
      %8863 = vmatprep.mubr.f32.mxu0 0.0
      %8864 = vmatmul.mubr.f32.gmra.mrb[0].mxu0 %v7041
      %v8865 = vpop.f32.mrb[0].mxu0
      %v8866 = vadd.f32 0.0, %v8865
      %v8867 = vpop.f32.mrb[0].mxu0
      %8868 = vmatprep.mubr.f32.mxu0 0.0
      %8869 = vmatmul.mubr.f32.gmra.mrb[0].mxu0 %v7043
      %v8870 = vpop.f32.mrb[0].mxu0
      %v8871 = vadd.f32 0.0, %v8870
      %v8872 = vpop.f32.mrb[0].mxu0
      %8873 = vmatprep.mubr.f32.mxu0 0.0
      %8874 = vmatmul.mubr.f32.gmra.mrb[0].mxu0 %v7045
      %v8875 = vpop.f32.mrb[0].mxu0
      %v8876 = vadd.f32 0.0, %v8875
      %v8877 = vpop.f32.mrb[0].mxu0
      %8878 = vmatprep.mubr.f32.mxu0 0.0
      %8879 = vmatmul.mubr.f32.gmra.mrb[0].mxu0 %v7047
      %v8880 = vpop.f32.mrb[0].mxu0
      %v8881 = vadd.f32 0.0, %v8880
      %v8882 = vpop.f32.mrb[0].mxu0
      %8883 = vmatprep.mubr.f32.mxu0 0.0
      %8884 = vmatmul.mubr.f32.gmra.mrb[0].mxu0 %v7049
      %v8885 = vpop.f32.mrb[0].mxu0
      %v8886 = vadd.f32 0.0, %v8885
      %v8887 = vpop.f32.mrb[0].mxu0
      %8888 = vmatprep.mubr.f32.mxu0 0.0
      %8889 = vmatmul.mubr.f32.gmra.mrb[0].mxu0 %v7051
      %v8890 = vpop.f32.mrb[0].mxu0
      %v8891 = vadd.f32 0.0, %v8890
      %v8892 = vpop.f32.mrb[0].mxu0
      %8893 = vmatprep.mubr.f32.mxu0 0.0
      %8894 = vmatmul.mubr.f32.gmra.mrb[0].mxu0 %v7053
      %v8895 = vpop.f32.mrb[0].mxu0
      %v8896 = vadd.f32 0.0, %v8895
      %v8897 = vpop.f32.mrb[0].mxu0
      %8898 = vmatprep.mubr.f32.mxu0 0.0
      %8899 = vmatmul.mubr.f32.gmra.mrb[0].mxu0 %v7055
      %v8900 = vpop.f32.mrb[0].mxu0
      %v8901 = vadd.f32 0.0, %v8900
      %v8902 = vpop.f32.mrb[0].mxu0
      %8903 = vmatprep.mubr.f32.mxu0 0.0
      %8904 = vmatmul.mubr.f32.gmra.mrb[0].mxu0 %v7057
      %v8905 = vpop.f32.mrb[0].mxu0
      %v8906 = vadd.f32 0.0, %v8905
      %v8907 = vpop.f32.mrb[0].mxu0
      %8908 = vmatprep.mubr.f32.mxu0 0.0
      %8909 = vmatmul.mubr.f32.gmra.mrb[0].mxu0 %v7059
      %v8910 = vpop.f32.mrb[0].mxu0
      %v8911 = vadd.f32 0.0, %v8910
      %v8912 = vpop.f32.mrb[0].mxu0
      %8913 = vmatprep.mubr.f32.mxu0 0.0
      %8914 = vmatmul.mubr.f32.gmra.mrb[0].mxu0 %v7061
      %v8915 = vpop.f32.mrb[0].mxu0
      %v8916 = vadd.f32 0.0, %v8915
      %v8917 = vpop.f32.mrb[0].mxu0
      %8918 = vmatprep.mubr.f32.mxu0 0.0
      %8919 = vmatmul.mubr.f32.gmra.mrb[0].mxu0 %v7063
      %v8920 = vpop.f32.mrb[0].mxu0
      %v8921 = vadd.f32 0.0, %v8920
      %v8922 = vpop.f32.mrb[0].mxu0
      %8923 = vmatprep.mubr.f32.mxu0 0.0
      %8924 = vmatmul.mubr.f32.gmra.mrb[0].mxu0 %v7065
      %v8925 = vpop.f32.mrb[0].mxu0
      %v8926 = vadd.f32 0.0, %v8925
      %v8927 = vpop.f32.mrb[0].mxu0
      %8928 = vmatprep.mubr.f32.mxu0 0.0
      %8929 = vmatmul.mubr.f32.gmra.mrb[0].mxu0 %v7067
      %v8930 = vpop.f32.mrb[0].mxu0
      %v8931 = vadd.f32 0.0, %v8930
      %v8932 = vpop.f32.mrb[0].mxu0
      %8933 = vmatprep.mubr.f32.mxu0 0.0
      %8934 = vmatmul.mubr.f32.gmra.mrb[0].mxu0 %v7069
      %v8935 = vpop.f32.mrb[0].mxu0
      %v8936 = vadd.f32 0.0, %v8935
      %v8937 = vpop.f32.mrb[0].mxu0
      %8938 = vmatprep.mubr.f32.mxu0 0.0
      %8939 = vmatmul.mubr.f32.gmra.mrb[0].mxu0 %v7071
      %v8940 = vpop.f32.mrb[0].mxu0
      %v8941 = vadd.f32 0.0, %v8940
      %v8942 = vpop.f32.mrb[0].mxu0
      %8943 = vmatprep.mubr.f32.mxu0 0.0
      %8944 = vmatmul.mubr.f32.gmra.mrb[0].mxu0 %v7073
      %v8945 = vpop.f32.mrb[0].mxu0
      %v8946 = vadd.f32 0.0, %v8945
      %v8947 = vpop.f32.mrb[0].mxu0
      %8948 = vmatprep.mubr.f32.mxu0 0.0
      %8949 = vmatmul.mubr.f32.gmra.mrb[0].mxu0 %v7075
      %v8950 = vpop.f32.mrb[0].mxu0
      %v8951 = vadd.f32 0.0, %v8950
      %v8952 = vpop.f32.mrb[0].mxu0
      %8953 = vmatprep.mubr.f32.mxu0 0.0
      %8954 = vmatmul.mubr.f32.gmra.mrb[0].mxu0 %v7077
      %v8955 = vpop.f32.mrb[0].mxu0
      %v8956 = vadd.f32 0.0, %v8955
      %v8957 = vpop.f32.mrb[0].mxu0
      %8958 = vmatprep.mubr.f32.mxu0 0.0
      %8959 = vmatmul.mubr.f32.gmra.mrb[0].mxu0 %v7079
      %v8960 = vpop.f32.mrb[0].mxu0
      %v8961 = vadd.f32 0.0, %v8960
      %v8962 = vpop.f32.mrb[0].mxu0
      %8963 = vmatprep.mubr.f32.mxu0 0.0
      %8964 = vmatmul.mubr.f32.gmra.mrb[0].mxu0 %v7081
      %v8965 = vpop.f32.mrb[0].mxu0
      %v8966 = vadd.f32 0.0, %v8965
      %v8967 = vpop.f32.mrb[0].mxu0
      %8968 = vmatprep.mubr.f32.mxu0 0.0
      %8969 = vmatmul.mubr.f32.gmra.mrb[0].mxu0 %v7083
      %v8970 = vpop.f32.mrb[0].mxu0
      %v8971 = vadd.f32 0.0, %v8970
      %v8972 = vpop.f32.mrb[0].mxu0
      %8973 = vmatprep.mubr.f32.mxu0 0.0
      %8974 = vmatmul.mubr.f32.gmra.mrb[0].mxu0 %v7085
      %v8975 = vpop.f32.mrb[0].mxu0
      %v8976 = vadd.f32 0.0, %v8975
      %v8977 = vpop.f32.mrb[0].mxu0
      %8978 = vmatprep.mubr.f32.mxu0 0.0
      %8979 = vmatmul.mubr.f32.gmra.mrb[0].mxu0 %v7087
      %v8980 = vpop.f32.mrb[0].mxu0
      %v8981 = vadd.f32 0.0, %v8980
      %v8982 = vpop.f32.mrb[0].mxu0
      %8983 = vmatprep.mubr.f32.mxu0 0.0
      %8984 = vmatmul.mubr.f32.gmra.mrb[0].mxu0 %v7089
      %v8985 = vpop.f32.mrb[0].mxu0
      %v8986 = vadd.f32 0.0, %v8985
      %v8987 = vpop.f32.mrb[0].mxu0
      %8988 = vmatprep.mubr.f32.mxu0 0.0
      %8989 = vmatmul.mubr.f32.gmra.mrb[0].mxu0 %v7091
      %v8990 = vpop.f32.mrb[0].mxu0
      %v8991 = vadd.f32 0.0, %v8990
      %v8992 = vpop.f32.mrb[0].mxu0
      %8993 = vmatprep.mubr.f32.mxu0 0.0
      %8994 = vmatmul.mubr.f32.gmra.mrb[0].mxu0 %v7093
      %v8995 = vpop.f32.mrb[0].mxu0
      %v8996 = vadd.f32 0.0, %v8995
      %v8997 = vpop.f32.mrb[0].mxu0
      %8998 = vmatprep.mubr.f32.mxu0 0.0
      %8999 = vmatmul.mubr.f32.gmra.mrb[0].mxu0 %v7095
      %v9000 = vpop.f32.mrb[0].mxu0
      %v9001 = vadd.f32 0.0, %v9000
      %v9002 = vpop.f32.mrb[0].mxu0
      %9003 = vmatprep.mubr.f32.mxu0 0.0
      %9004 = vmatmul.mubr.f32.gmra.mrb[0].mxu0 %v7097
      %v9005 = vpop.f32.mrb[0].mxu0
      %v9006 = vadd.f32 0.0, %v9005
      %v9007 = vpop.f32.mrb[0].mxu0
      %9008 = vmatprep.mubr.f32.mxu0 0.0
      %9009 = vmatmul.mubr.f32.gmra.mrb[0].mxu0 %v7099
      %v9010 = vpop.f32.mrb[0].mxu0
      %v9011 = vadd.f32 0.0, %v9010
      %v9012 = vpop.f32.mrb[0].mxu0
      %9013 = vmatprep.mubr.f32.mxu0 0.0
      %9014 = vmatmul.mubr.f32.gmra.mrb[0].mxu0 %v7101
      %v9015 = vpop.f32.mrb[0].mxu0
      %v9016 = vadd.f32 0.0, %v9015
      %v9017 = vpop.f32.mrb[0].mxu0
      %9018 = vmatprep.mubr.f32.mxu0 0.0
      %9019 = vmatmul.mubr.f32.gmra.mrb[0].mxu0 %v7103
      %v9020 = vpop.f32.mrb[0].mxu0
      %v9021 = vadd.f32 0.0, %v9020
      %v9022 = vpop.f32.mrb[0].mxu0
      %9023 = vmatprep.mubr.f32.mxu0 0.0
      %9024 = vmatmul.mubr.f32.gmra.mrb[0].mxu0 %v7105
      %v9025 = vpop.f32.mrb[0].mxu0
      %v9026 = vadd.f32 0.0, %v9025
      %v9027 = vpop.f32.mrb[0].mxu0
      %9028 = vmatprep.mubr.f32.mxu0 0.0
      %9029 = vmatmul.mubr.f32.gmra.mrb[0].mxu0 %v7107
      %v9030 = vpop.f32.mrb[0].mxu0
      %v9031 = vadd.f32 0.0, %v9030
      %v9032 = vpop.f32.mrb[0].mxu0
      %9033 = vmatprep.mubr.f32.mxu0 0.0
      %9034 = vmatmul.mubr.f32.gmra.mrb[0].mxu0 %v7109
      %v9035 = vpop.f32.mrb[0].mxu0
      %v9036 = vadd.f32 0.0, %v9035
      %v9037 = vpop.f32.mrb[0].mxu0
      %9038 = vmatprep.mubr.f32.mxu0 0.0
      %9039 = vmatmul.mubr.f32.gmra.mrb[0].mxu0 %v7111
      %v9040 = vpop.f32.mrb[0].mxu0
      %v9041 = vadd.f32 0.0, %v9040
      %v9042 = vpop.f32.mrb[0].mxu0
      %9043 = vmatprep.mubr.f32.mxu0 0.0
      %9044 = vmatmul.mubr.f32.gmra.mrb[0].mxu0 %v7113
      %v9045 = vpop.f32.mrb[0].mxu0
      %v9046 = vadd.f32 0.0, %v9045
      %v9047 = vpop.f32.mrb[0].mxu0
      %9048 = vmatprep.mubr.f32.mxu0 0.0
      %9049 = vmatmul.mubr.f32.gmra.mrb[0].mxu0 %v7115
      %v9050 = vpop.f32.mrb[0].mxu0
      %v9051 = vadd.f32 0.0, %v9050
      %v9052 = vpop.f32.mrb[0].mxu0
      %9053 = vmatprep.mubr.f32.mxu0 0.0
      %9054 = vmatmul.mubr.f32.gmra.mrb[0].mxu0 %v7117
      %v9055 = vpop.f32.mrb[0].mxu0
      %v9056 = vadd.f32 0.0, %v9055
      %v9057 = vpop.f32.mrb[0].mxu0
      %9058 = vmatprep.mubr.f32.mxu0 0.0
      %9059 = vmatmul.mubr.f32.gmra.mrb[0].mxu0 %v7119
      %v9060 = vpop.f32.mrb[0].mxu0
      %v9061 = vadd.f32 0.0, %v9060
      %v9062 = vpop.f32.mrb[0].mxu0
      %9063 = vmatprep.mubr.f32.mxu0 0.0
      %9064 = vmatmul.mubr.f32.gmra.mrb[0].mxu0 %v7121
      %v9065 = vpop.f32.mrb[0].mxu0
      %v9066 = vadd.f32 0.0, %v9065
      %v9067 = vpop.f32.mrb[0].mxu0
      %9068 = vmatprep.mubr.f32.mxu0 0.0
      %9069 = vmatmul.mubr.f32.gmra.mrb[0].mxu0 %v7123
      %v9070 = vpop.f32.mrb[0].mxu0
      %v9071 = vadd.f32 0.0, %v9070
      %v9072 = vpop.f32.mrb[0].mxu0
      %9073 = vmatprep.mubr.f32.mxu0 0.0
      %9074 = vmatmul.mubr.f32.gmra.mrb[0].mxu0 %v8658
      %v9075 = vpop.f32.mrb[0].mxu0
      %v9076 = vadd.f32 0.0, %v9075
      %v9077 = vpop.f32.mrb[0].mxu0
      %9078 = vmatprep.mubr.f32.mxu0 0.0
      %9079 = vmatmul.mubr.f32.gmra.mrb[0].mxu0 %v8660
      %v9080 = vpop.f32.mrb[0].mxu0
      %v9081 = vadd.f32 0.0, %v9080
      %v9082 = vpop.f32.mrb[0].mxu0
      %9083 = vmatprep.mubr.f32.mxu0 0.0
      %9084 = vmatmul.mubr.f32.gmra.mrb[0].mxu0 %v8662
      %v9085 = vpop.f32.mrb[0].mxu0
      %v9086 = vadd.f32 0.0, %v9085
      %v9087 = vpop.f32.mrb[0].mxu0
      %9088 = vdwg.mxu0
      %v9089 = vadd.f32 %v8575, %v8731
      %v9090 = vadd.f32 %v8576, %v8736
      %v9091 = vadd.f32 %v8577, %v8741
      %v9092 = vadd.f32 %v8578, %v8746
      %v9093 = vadd.f32 %v8579, %v8751
      %v9094 = vadd.f32 %v8580, %v8756
      %v9095 = vadd.f32 %v8581, %v8761
      %v9096 = vadd.f32 %v8582, %v8766
      %v9097 = vadd.f32 %v8583, %v8771
      %v9098 = vadd.f32 %v8584, %v8776
      %v9099 = vadd.f32 %v8585, %v8781
      %v9100 = vadd.f32 %v8586, %v8786
      %v9101 = vadd.f32 %v8587, %v8791
      %v9102 = vadd.f32 %v8588, %v8796
      %v9103 = vadd.f32 %v8589, %v8801
      %v9104 = vadd.f32 %v8590, %v8806
      %v9105 = vadd.f32 %v8591, %v8811
      %v9106 = vadd.f32 %v8592, %v8816
      %v9107 = vadd.f32 %v8593, %v8821
      %v9108 = vadd.f32 %v8594, %v8826
      %v9109 = vadd.f32 %v8595, %v8831
      %v9110 = vadd.f32 %v8596, %v8836
      %v9111 = vadd.f32 %v8597, %v8841
      %v9112 = vadd.f32 %v8598, %v8846
      %v9113 = vadd.f32 %v8599, %v8851
      %v9114 = vadd.f32 %v8600, %v8856
      %v9115 = vadd.f32 %v8601, %v8861
      %v9116 = vadd.f32 %v8602, %v8866
      %v9117 = vadd.f32 %v8603, %v8871
      %v9118 = vadd.f32 %v8604, %v8876
      %v9119 = vadd.f32 %v8605, %v8881
      %v9120 = vadd.f32 %v8606, %v8886
      %v9121 = vadd.f32 %v8607, %v8891
      %v9122 = vadd.f32 %v8608, %v8896
      %v9123 = vadd.f32 %v8609, %v8901
      %v9124 = vadd.f32 %v8610, %v8906
      %v9125 = vadd.f32 %v8611, %v8911
      %v9126 = vadd.f32 %v8612, %v8916
      %v9127 = vadd.f32 %v8613, %v8921
      %v9128 = vadd.f32 %v8614, %v8926
      %v9129 = vadd.f32 %v8615, %v8931
      %v9130 = vadd.f32 %v8616, %v8936
      %v9131 = vadd.f32 %v8617, %v8941
      %v9132 = vadd.f32 %v8618, %v8946
      %v9133 = vadd.f32 %v8619, %v8951
      %v9134 = vadd.f32 %v8620, %v8956
      %v9135 = vadd.f32 %v8621, %v8961
      %v9136 = vadd.f32 %v8622, %v8966
      %v9137 = vadd.f32 %v8623, %v8971
      %v9138 = vadd.f32 %v8624, %v8976
      %v9139 = vadd.f32 %v8625, %v8981
      %v9140 = vadd.f32 %v8626, %v8986
      %v9141 = vadd.f32 %v8627, %v8991
      %v9142 = vadd.f32 %v8628, %v8996
      %v9143 = vadd.f32 %v8629, %v9001
      %v9144 = vadd.f32 %v8630, %v9006
      %v9145 = vadd.f32 %v8631, %v9011
      %v9146 = vadd.f32 %v8632, %v9016
      %v9147 = vadd.f32 %v8633, %v9021
      %v9148 = vadd.f32 %v8634, %v9026
      %v9149 = vadd.f32 %v8635, %v9031
      %v9150 = vadd.f32 %v8636, %v9036
      %v9151 = vadd.f32 %v8637, %v9041
      %v9152 = vadd.f32 %v8638, %v9046
      %v9153 = vadd.f32 %v8639, %v9051
      %v9154 = vadd.f32 %v8640, %v9056
      %v9155 = vadd.f32 %v8641, %v9061
      %v9156 = vadd.f32 %v8642, %v9066
      %v9157 = vadd.f32 %v8643, %v9071
      %v9158 = vadd.f32 %v8644, %v9076
      %v9159 = vadd.f32 %v8645, %v9081
      %v9160 = vadd.f32 %v8646, %v9086
      %v9161 = vld [vmem:[%s3 + $0xc0] sm:$0xff]
      %v9162 = vld [vmem:[%s3 + $0xc8] sm:$0xff]
      %v9163 = vld [vmem:[%s3 + $0xd0] sm:$0xff]
      %v9164 = vld [vmem:[%s3 + $0xd8] sm:$0xff]
      %v9166 = vsel %vm5670, %v5394, 0
      %v9169 = vsel %vm5670, %v5395, 0
      %v9172 = vsel %vm5670, %v5396, 0
      %9174 = vmatprep.subr.mxu0 0.0
      %9175 = vmatpush1.msra.mxu0 %v9161
      %9176 = vmatprep.subr.mxu0 0.0
      %9177 = vmatpush1.msra.mxu0 %v9162
      %9178 = vmatprep.subr.mxu0 0.0
      %9179 = vmatpush1.msra.mxu0 %v9163
      %9180 = vmatprep.subr.mxu0 0.0
      %9181 = vmatpush1.msra.mxu0 %v9164
      %9182 = vmatprep.subr.mxu0 0.0
      %9183 = vmatpush1.msra.mxu0 0.0
      %9184 = vmatprep.subr.mxu0 0.0
      %9185 = vmatpush1.msra.mxu0 0.0
      %9186 = vmatprep.subr.mxu0 0.0
      %9187 = vmatpush1.msra.mxu0 0.0
      %9188 = vmatprep.subr.mxu0 0.0
      %9189 = vmatpush1.msra.mxu0 0.0
      %9190 = vmatprep.subr.mxu0 0.0
      %9191 = vmatpush1.msra.mxu0 0.0
      %9192 = vmatprep.subr.mxu0 0.0
      %9193 = vmatpush1.msra.mxu0 0.0
      %9194 = vmatprep.subr.mxu0 0.0
      %9195 = vmatpush1.msra.mxu0 0.0
      %9196 = vmatprep.subr.mxu0 0.0
      %9197 = vmatpush1.msra.mxu0 0.0
      %9198 = vmatprep.subr.mxu0 0.0
      %9199 = vmatpush1.msra.mxu0 0.0
      %9200 = vmatprep.subr.mxu0 0.0
      %9201 = vmatpush1.msra.mxu0 0.0
      %9202 = vmatprep.subr.mxu0 0.0
      %9203 = vmatpush1.msra.mxu0 0.0
      %9204 = vmatprep.subr.mxu0 0.0
      %9205 = vmatpush1.msra.mxu0 0.0
      %9206 = vmatprep.subr.mxu0 0.0
      %9207 = vmatpush1.msra.mxu0 0.0
      %9208 = vmatprep.subr.mxu0 0.0
      %9209 = vmatpush1.msra.mxu0 0.0
      %9210 = vmatprep.subr.mxu0 0.0
      %9211 = vmatpush1.msra.mxu0 0.0
      %9212 = vmatprep.subr.mxu0 0.0
      %9213 = vmatpush1.msra.mxu0 0.0
      %9214 = vmatprep.subr.mxu0 0.0
      %9215 = vmatpush1.msra.mxu0 0.0
      %9216 = vmatprep.subr.mxu0 0.0
      %9217 = vmatpush1.msra.mxu0 0.0
      %9218 = vmatprep.subr.mxu0 0.0
      %9219 = vmatpush1.msra.mxu0 0.0
      %9220 = vmatprep.subr.mxu0 0.0
      %9221 = vmatpush1.msra.mxu0 0.0
      %9222 = vmatprep.subr.mxu0 0.0
      %9223 = vmatpush1.msra.mxu0 0.0
      %9224 = vmatprep.subr.mxu0 0.0
      %9225 = vmatpush1.msra.mxu0 0.0
      %9226 = vmatprep.subr.mxu0 0.0
      %9227 = vmatpush1.msra.mxu0 0.0
      %9228 = vmatprep.subr.mxu0 0.0
      %9229 = vmatpush1.msra.mxu0 0.0
      %9230 = vmatprep.subr.mxu0 0.0
      %9231 = vmatpush1.msra.mxu0 0.0
      %9232 = vmatprep.subr.mxu0 0.0
      %9233 = vmatpush1.msra.mxu0 0.0
      %9234 = vmatprep.subr.mxu0 0.0
      %9235 = vmatpush1.msra.mxu0 0.0
      %9236 = vmatprep.subr.mxu0 0.0
      %9237 = vmatpush1.msra.mxu0 0.0
      %9238 = vmatprep.mubr.f32.mxu0 0.0
      %9239 = vmatmul.mubr.f32.gmra.mrb[0].mxu0 %v6252
      %v9240 = vpop.f32.mrb[0].mxu0
      %v9241 = vadd.f32 0.0, %v9240
      %v9242 = vpop.f32.mrb[0].mxu0
      %9243 = vmatprep.mubr.f32.mxu0 0.0
      %9244 = vmatmul.mubr.f32.gmra.mrb[0].mxu0 %v6254
      %v9245 = vpop.f32.mrb[0].mxu0
      %v9246 = vadd.f32 0.0, %v9245
      %v9247 = vpop.f32.mrb[0].mxu0
      %9248 = vmatprep.mubr.f32.mxu0 0.0
      %9249 = vmatmul.mubr.f32.gmra.mrb[0].mxu0 %v6256
      %v9250 = vpop.f32.mrb[0].mxu0
      %v9251 = vadd.f32 0.0, %v9250
      %v9252 = vpop.f32.mrb[0].mxu0
      %9253 = vmatprep.mubr.f32.mxu0 0.0
      %9254 = vmatmul.mubr.f32.gmra.mrb[0].mxu0 %v6258
      %v9255 = vpop.f32.mrb[0].mxu0
      %v9256 = vadd.f32 0.0, %v9255
      %v9257 = vpop.f32.mrb[0].mxu0
      %9258 = vmatprep.mubr.f32.mxu0 0.0
      %9259 = vmatmul.mubr.f32.gmra.mrb[0].mxu0 %v6260
      %v9260 = vpop.f32.mrb[0].mxu0
      %v9261 = vadd.f32 0.0, %v9260
      %v9262 = vpop.f32.mrb[0].mxu0
      %9263 = vmatprep.mubr.f32.mxu0 0.0
      %9264 = vmatmul.mubr.f32.gmra.mrb[0].mxu0 %v6262
      %v9265 = vpop.f32.mrb[0].mxu0
      %v9266 = vadd.f32 0.0, %v9265
      %v9267 = vpop.f32.mrb[0].mxu0
      %9268 = vmatprep.mubr.f32.mxu0 0.0
      %9269 = vmatmul.mubr.f32.gmra.mrb[0].mxu0 %v6264
      %v9270 = vpop.f32.mrb[0].mxu0
      %v9271 = vadd.f32 0.0, %v9270
      %v9272 = vpop.f32.mrb[0].mxu0
      %9273 = vmatprep.mubr.f32.mxu0 0.0
      %9274 = vmatmul.mubr.f32.gmra.mrb[0].mxu0 %v6266
      %v9275 = vpop.f32.mrb[0].mxu0
      %v9276 = vadd.f32 0.0, %v9275
      %v9277 = vpop.f32.mrb[0].mxu0
      %9278 = vmatprep.mubr.f32.mxu0 0.0
      %9279 = vmatmul.mubr.f32.gmra.mrb[0].mxu0 %v6268
      %v9280 = vpop.f32.mrb[0].mxu0
      %v9281 = vadd.f32 0.0, %v9280
      %v9282 = vpop.f32.mrb[0].mxu0
      %9283 = vmatprep.mubr.f32.mxu0 0.0
      %9284 = vmatmul.mubr.f32.gmra.mrb[0].mxu0 %v6270
      %v9285 = vpop.f32.mrb[0].mxu0
      %v9286 = vadd.f32 0.0, %v9285
      %v9287 = vpop.f32.mrb[0].mxu0
      %9288 = vmatprep.mubr.f32.mxu0 0.0
      %9289 = vmatmul.mubr.f32.gmra.mrb[0].mxu0 %v6272
      %v9290 = vpop.f32.mrb[0].mxu0
      %v9291 = vadd.f32 0.0, %v9290
      %v9292 = vpop.f32.mrb[0].mxu0
      %9293 = vmatprep.mubr.f32.mxu0 0.0
      %9294 = vmatmul.mubr.f32.gmra.mrb[0].mxu0 %v6274
      %v9295 = vpop.f32.mrb[0].mxu0
      %v9296 = vadd.f32 0.0, %v9295
      %v9297 = vpop.f32.mrb[0].mxu0
      %9298 = vmatprep.mubr.f32.mxu0 0.0
      %9299 = vmatmul.mubr.f32.gmra.mrb[0].mxu0 %v6276
      %v9300 = vpop.f32.mrb[0].mxu0
      %v9301 = vadd.f32 0.0, %v9300
      %v9302 = vpop.f32.mrb[0].mxu0
      %9303 = vmatprep.mubr.f32.mxu0 0.0
      %9304 = vmatmul.mubr.f32.gmra.mrb[0].mxu0 %v6278
      %v9305 = vpop.f32.mrb[0].mxu0
      %v9306 = vadd.f32 0.0, %v9305
      %v9307 = vpop.f32.mrb[0].mxu0
      %9308 = vmatprep.mubr.f32.mxu0 0.0
      %9309 = vmatmul.mubr.f32.gmra.mrb[0].mxu0 %v6280
      %v9310 = vpop.f32.mrb[0].mxu0
      %v9311 = vadd.f32 0.0, %v9310
      %v9312 = vpop.f32.mrb[0].mxu0
      %9313 = vmatprep.mubr.f32.mxu0 0.0
      %9314 = vmatmul.mubr.f32.gmra.mrb[0].mxu0 %v6282
      %v9315 = vpop.f32.mrb[0].mxu0
      %v9316 = vadd.f32 0.0, %v9315
      %v9317 = vpop.f32.mrb[0].mxu0
      %9318 = vmatprep.mubr.f32.mxu0 0.0
      %9319 = vmatmul.mubr.f32.gmra.mrb[0].mxu0 %v6284
      %v9320 = vpop.f32.mrb[0].mxu0
      %v9321 = vadd.f32 0.0, %v9320
      %v9322 = vpop.f32.mrb[0].mxu0
      %9323 = vmatprep.mubr.f32.mxu0 0.0
      %9324 = vmatmul.mubr.f32.gmra.mrb[0].mxu0 %v6286
      %v9325 = vpop.f32.mrb[0].mxu0
      %v9326 = vadd.f32 0.0, %v9325
      %v9327 = vpop.f32.mrb[0].mxu0
      %9328 = vmatprep.mubr.f32.mxu0 0.0
      %9329 = vmatmul.mubr.f32.gmra.mrb[0].mxu0 %v6288
      %v9330 = vpop.f32.mrb[0].mxu0
      %v9331 = vadd.f32 0.0, %v9330
      %v9332 = vpop.f32.mrb[0].mxu0
      %9333 = vmatprep.mubr.f32.mxu0 0.0
      %9334 = vmatmul.mubr.f32.gmra.mrb[0].mxu0 %v6290
      %v9335 = vpop.f32.mrb[0].mxu0
      %v9336 = vadd.f32 0.0, %v9335
      %v9337 = vpop.f32.mrb[0].mxu0
      %9338 = vmatprep.mubr.f32.mxu0 0.0
      %9339 = vmatmul.mubr.f32.gmra.mrb[0].mxu0 %v6292
      %v9340 = vpop.f32.mrb[0].mxu0
      %v9341 = vadd.f32 0.0, %v9340
      %v9342 = vpop.f32.mrb[0].mxu0
      %9343 = vmatprep.mubr.f32.mxu0 0.0
      %9344 = vmatmul.mubr.f32.gmra.mrb[0].mxu0 %v6294
      %v9345 = vpop.f32.mrb[0].mxu0
      %v9346 = vadd.f32 0.0, %v9345
      %v9347 = vpop.f32.mrb[0].mxu0
      %9348 = vmatprep.mubr.f32.mxu0 0.0
      %9349 = vmatmul.mubr.f32.gmra.mrb[0].mxu0 %v6296
      %v9350 = vpop.f32.mrb[0].mxu0
      %v9351 = vadd.f32 0.0, %v9350
      %v9352 = vpop.f32.mrb[0].mxu0
      %9353 = vmatprep.mubr.f32.mxu0 0.0
      %9354 = vmatmul.mubr.f32.gmra.mrb[0].mxu0 %v6298
      %v9355 = vpop.f32.mrb[0].mxu0
      %v9356 = vadd.f32 0.0, %v9355
      %v9357 = vpop.f32.mrb[0].mxu0
      %9358 = vmatprep.mubr.f32.mxu0 0.0
      %9359 = vmatmul.mubr.f32.gmra.mrb[0].mxu0 %v6300
      %v9360 = vpop.f32.mrb[0].mxu0
      %v9361 = vadd.f32 0.0, %v9360
      %v9362 = vpop.f32.mrb[0].mxu0
      %9363 = vmatprep.mubr.f32.mxu0 0.0
      %9364 = vmatmul.mubr.f32.gmra.mrb[0].mxu0 %v6302
      %v9365 = vpop.f32.mrb[0].mxu0
      %v9366 = vadd.f32 0.0, %v9365
      %v9367 = vpop.f32.mrb[0].mxu0
      %9368 = vmatprep.mubr.f32.mxu0 0.0
      %9369 = vmatmul.mubr.f32.gmra.mrb[0].mxu0 %v6304
      %v9370 = vpop.f32.mrb[0].mxu0
      %v9371 = vadd.f32 0.0, %v9370
      %v9372 = vpop.f32.mrb[0].mxu0
      %9373 = vmatprep.mubr.f32.mxu0 0.0
      %9374 = vmatmul.mubr.f32.gmra.mrb[0].mxu0 %v6306
      %v9375 = vpop.f32.mrb[0].mxu0
      %v9376 = vadd.f32 0.0, %v9375
      %v9377 = vpop.f32.mrb[0].mxu0
      %9378 = vmatprep.mubr.f32.mxu0 0.0
      %9379 = vmatmul.mubr.f32.gmra.mrb[0].mxu0 %v6308
      %v9380 = vpop.f32.mrb[0].mxu0
      %v9381 = vadd.f32 0.0, %v9380
      %v9382 = vpop.f32.mrb[0].mxu0
      %9383 = vmatprep.mubr.f32.mxu0 0.0
      %9384 = vmatmul.mubr.f32.gmra.mrb[0].mxu0 %v6310
      %v9385 = vpop.f32.mrb[0].mxu0
      %v9386 = vadd.f32 0.0, %v9385
      %v9387 = vpop.f32.mrb[0].mxu0
      %9388 = vmatprep.mubr.f32.mxu0 0.0
      %9389 = vmatmul.mubr.f32.gmra.mrb[0].mxu0 %v6312
      %v9390 = vpop.f32.mrb[0].mxu0
      %v9391 = vadd.f32 0.0, %v9390
      %v9392 = vpop.f32.mrb[0].mxu0
      %9393 = vmatprep.mubr.f32.mxu0 0.0
      %9394 = vmatmul.mubr.f32.gmra.mrb[0].mxu0 %v6314
      %v9395 = vpop.f32.mrb[0].mxu0
      %v9396 = vadd.f32 0.0, %v9395
      %v9397 = vpop.f32.mrb[0].mxu0
      %9398 = vmatprep.mubr.f32.mxu0 0.0
      %9399 = vmatmul.mubr.f32.gmra.mrb[0].mxu0 %v6316
      %v9400 = vpop.f32.mrb[0].mxu0
      %v9401 = vadd.f32 0.0, %v9400
      %v9402 = vpop.f32.mrb[0].mxu0
      %9403 = vmatprep.mubr.f32.mxu0 0.0
      %9404 = vmatmul.mubr.f32.gmra.mrb[0].mxu0 %v6318
      %v9405 = vpop.f32.mrb[0].mxu0
      %v9406 = vadd.f32 0.0, %v9405
      %v9407 = vpop.f32.mrb[0].mxu0
      %9408 = vmatprep.mubr.f32.mxu0 0.0
      %9409 = vmatmul.mubr.f32.gmra.mrb[0].mxu0 %v6320
      %v9410 = vpop.f32.mrb[0].mxu0
      %v9411 = vadd.f32 0.0, %v9410
      %v9412 = vpop.f32.mrb[0].mxu0
      %9413 = vmatprep.mubr.f32.mxu0 0.0
      %9414 = vmatmul.mubr.f32.gmra.mrb[0].mxu0 %v6322
      %v9415 = vpop.f32.mrb[0].mxu0
      %v9416 = vadd.f32 0.0, %v9415
      %v9417 = vpop.f32.mrb[0].mxu0
      %9418 = vmatprep.mubr.f32.mxu0 0.0
      %9419 = vmatmul.mubr.f32.gmra.mrb[0].mxu0 %v6324
      %v9420 = vpop.f32.mrb[0].mxu0
      %v9421 = vadd.f32 0.0, %v9420
      %v9422 = vpop.f32.mrb[0].mxu0
      %9423 = vmatprep.mubr.f32.mxu0 0.0
      %9424 = vmatmul.mubr.f32.gmra.mrb[0].mxu0 %v6326
      %v9425 = vpop.f32.mrb[0].mxu0
      %v9426 = vadd.f32 0.0, %v9425
      %v9427 = vpop.f32.mrb[0].mxu0
      %9428 = vmatprep.mubr.f32.mxu0 0.0
      %9429 = vmatmul.mubr.f32.gmra.mrb[0].mxu0 %v6328
      %v9430 = vpop.f32.mrb[0].mxu0
      %v9431 = vadd.f32 0.0, %v9430
      %v9432 = vpop.f32.mrb[0].mxu0
      %9433 = vmatprep.mubr.f32.mxu0 0.0
      %9434 = vmatmul.mubr.f32.gmra.mrb[0].mxu0 %v6330
      %v9435 = vpop.f32.mrb[0].mxu0
      %v9436 = vadd.f32 0.0, %v9435
      %v9437 = vpop.f32.mrb[0].mxu0
      %9438 = vmatprep.mubr.f32.mxu0 0.0
      %9439 = vmatmul.mubr.f32.gmra.mrb[0].mxu0 %v6332
      %v9440 = vpop.f32.mrb[0].mxu0
      %v9441 = vadd.f32 0.0, %v9440
      %v9442 = vpop.f32.mrb[0].mxu0
      %9443 = vmatprep.mubr.f32.mxu0 0.0
      %9444 = vmatmul.mubr.f32.gmra.mrb[0].mxu0 %v6334
      %v9445 = vpop.f32.mrb[0].mxu0
      %v9446 = vadd.f32 0.0, %v9445
      %v9447 = vpop.f32.mrb[0].mxu0
      %9448 = vmatprep.mubr.f32.mxu0 0.0
      %9449 = vmatmul.mubr.f32.gmra.mrb[0].mxu0 %v6336
      %v9450 = vpop.f32.mrb[0].mxu0
      %v9451 = vadd.f32 0.0, %v9450
      %v9452 = vpop.f32.mrb[0].mxu0
      %9453 = vmatprep.mubr.f32.mxu0 0.0
      %9454 = vmatmul.mubr.f32.gmra.mrb[0].mxu0 %v6338
      %v9455 = vpop.f32.mrb[0].mxu0
      %v9456 = vadd.f32 0.0, %v9455
      %v9457 = vpop.f32.mrb[0].mxu0
      %9458 = vmatprep.mubr.f32.mxu0 0.0
      %9459 = vmatmul.mubr.f32.gmra.mrb[0].mxu0 %v6340
      %v9460 = vpop.f32.mrb[0].mxu0
      %v9461 = vadd.f32 0.0, %v9460
      %v9462 = vpop.f32.mrb[0].mxu0
      %9463 = vmatprep.mubr.f32.mxu0 0.0
      %9464 = vmatmul.mubr.f32.gmra.mrb[0].mxu0 %v6342
      %v9465 = vpop.f32.mrb[0].mxu0
      %v9466 = vadd.f32 0.0, %v9465
      %v9467 = vpop.f32.mrb[0].mxu0
      %9468 = vmatprep.mubr.f32.mxu0 0.0
      %9469 = vmatmul.mubr.f32.gmra.mrb[0].mxu0 %v6344
      %v9470 = vpop.f32.mrb[0].mxu0
      %v9471 = vadd.f32 0.0, %v9470
      %v9472 = vpop.f32.mrb[0].mxu0
      %9473 = vmatprep.mubr.f32.mxu0 0.0
      %9474 = vmatmul.mubr.f32.gmra.mrb[0].mxu0 %v6346
      %v9475 = vpop.f32.mrb[0].mxu0
      %v9476 = vadd.f32 0.0, %v9475
      %v9477 = vpop.f32.mrb[0].mxu0
      %9478 = vmatprep.mubr.f32.mxu0 0.0
      %9479 = vmatmul.mubr.f32.gmra.mrb[0].mxu0 %v6348
      %v9480 = vpop.f32.mrb[0].mxu0
      %v9481 = vadd.f32 0.0, %v9480
      %v9482 = vpop.f32.mrb[0].mxu0
      %9483 = vmatprep.mubr.f32.mxu0 0.0
      %9484 = vmatmul.mubr.f32.gmra.mrb[0].mxu0 %v6350
      %v9485 = vpop.f32.mrb[0].mxu0
      %v9486 = vadd.f32 0.0, %v9485
      %v9487 = vpop.f32.mrb[0].mxu0
      %9488 = vmatprep.mubr.f32.mxu0 0.0
      %9489 = vmatmul.mubr.f32.gmra.mrb[0].mxu0 %v6352
      %v9490 = vpop.f32.mrb[0].mxu0
      %v9491 = vadd.f32 0.0, %v9490
      %v9492 = vpop.f32.mrb[0].mxu0
      %9493 = vmatprep.mubr.f32.mxu0 0.0
      %9494 = vmatmul.mubr.f32.gmra.mrb[0].mxu0 %v6354
      %v9495 = vpop.f32.mrb[0].mxu0
      %v9496 = vadd.f32 0.0, %v9495
      %v9497 = vpop.f32.mrb[0].mxu0
      %9498 = vmatprep.mubr.f32.mxu0 0.0
      %9499 = vmatmul.mubr.f32.gmra.mrb[0].mxu0 %v6356
      %v9500 = vpop.f32.mrb[0].mxu0
      %v9501 = vadd.f32 0.0, %v9500
      %v9502 = vpop.f32.mrb[0].mxu0
      %9503 = vmatprep.mubr.f32.mxu0 0.0
      %9504 = vmatmul.mubr.f32.gmra.mrb[0].mxu0 %v6358
      %v9505 = vpop.f32.mrb[0].mxu0
      %v9506 = vadd.f32 0.0, %v9505
      %v9507 = vpop.f32.mrb[0].mxu0
      %9508 = vmatprep.mubr.f32.mxu0 0.0
      %9509 = vmatmul.mubr.f32.gmra.mrb[0].mxu0 %v6360
      %v9510 = vpop.f32.mrb[0].mxu0
      %v9511 = vadd.f32 0.0, %v9510
      %v9512 = vpop.f32.mrb[0].mxu0
      %9513 = vmatprep.mubr.f32.mxu0 0.0
      %9514 = vmatmul.mubr.f32.gmra.mrb[0].mxu0 %v6362
      %v9515 = vpop.f32.mrb[0].mxu0
      %v9516 = vadd.f32 0.0, %v9515
      %v9517 = vpop.f32.mrb[0].mxu0
      %9518 = vmatprep.mubr.f32.mxu0 0.0
      %9519 = vmatmul.mubr.f32.gmra.mrb[0].mxu0 %v6364
      %v9520 = vpop.f32.mrb[0].mxu0
      %v9521 = vadd.f32 0.0, %v9520
      %v9522 = vpop.f32.mrb[0].mxu0
      %9523 = vmatprep.mubr.f32.mxu0 0.0
      %9524 = vmatmul.mubr.f32.gmra.mrb[0].mxu0 %v6366
      %v9525 = vpop.f32.mrb[0].mxu0
      %v9526 = vadd.f32 0.0, %v9525
      %v9527 = vpop.f32.mrb[0].mxu0
      %9528 = vmatprep.mubr.f32.mxu0 0.0
      %9529 = vmatmul.mubr.f32.gmra.mrb[0].mxu0 %v6368
      %v9530 = vpop.f32.mrb[0].mxu0
      %v9531 = vadd.f32 0.0, %v9530
      %v9532 = vpop.f32.mrb[0].mxu0
      %9533 = vmatprep.mubr.f32.mxu0 0.0
      %9534 = vmatmul.mubr.f32.gmra.mrb[0].mxu0 %v6370
      %v9535 = vpop.f32.mrb[0].mxu0
      %v9536 = vadd.f32 0.0, %v9535
      %v9537 = vpop.f32.mrb[0].mxu0
      %9538 = vmatprep.mubr.f32.mxu0 0.0
      %9539 = vmatmul.mubr.f32.gmra.mrb[0].mxu0 %v6372
      %v9540 = vpop.f32.mrb[0].mxu0
      %v9541 = vadd.f32 0.0, %v9540
      %v9542 = vpop.f32.mrb[0].mxu0
      %9543 = vmatprep.mubr.f32.mxu0 0.0
      %9544 = vmatmul.mubr.f32.gmra.mrb[0].mxu0 %v6374
      %v9545 = vpop.f32.mrb[0].mxu0
      %v9546 = vadd.f32 0.0, %v9545
      %v9547 = vpop.f32.mrb[0].mxu0
      %9548 = vmatprep.mubr.f32.mxu0 0.0
      %9549 = vmatmul.mubr.f32.gmra.mrb[0].mxu0 %v6376
      %v9550 = vpop.f32.mrb[0].mxu0
      %v9551 = vadd.f32 0.0, %v9550
      %v9552 = vpop.f32.mrb[0].mxu0
      %9553 = vmatprep.mubr.f32.mxu0 0.0
      %9554 = vmatmul.mubr.f32.gmra.mrb[0].mxu0 %v6378
      %v9555 = vpop.f32.mrb[0].mxu0
      %v9556 = vadd.f32 0.0, %v9555
      %v9557 = vpop.f32.mrb[0].mxu0
      %9558 = vmatprep.mubr.f32.mxu0 0.0
      %9559 = vmatmul.mubr.f32.gmra.mrb[0].mxu0 %v6380
      %v9560 = vpop.f32.mrb[0].mxu0
      %v9561 = vadd.f32 0.0, %v9560
      %v9562 = vpop.f32.mrb[0].mxu0
      %9563 = vmatprep.mubr.f32.mxu0 0.0
      %9564 = vmatmul.mubr.f32.gmra.mrb[0].mxu0 %v6382
      %v9565 = vpop.f32.mrb[0].mxu0
      %v9566 = vadd.f32 0.0, %v9565
      %v9567 = vpop.f32.mrb[0].mxu0
      %9568 = vmatprep.mubr.f32.mxu0 0.0
      %9569 = vmatmul.mubr.f32.gmra.mrb[0].mxu0 %v7627
      %v9570 = vpop.f32.mrb[0].mxu0
      %v9571 = vadd.f32 0.0, %v9570
      %v9572 = vpop.f32.mrb[0].mxu0
      %9573 = vmatprep.mubr.f32.mxu0 0.0
      %9574 = vmatmul.mubr.f32.gmra.mrb[0].mxu0 %v7630
      %v9575 = vpop.f32.mrb[0].mxu0
      %v9576 = vadd.f32 0.0, %v9575
      %v9577 = vpop.f32.mrb[0].mxu0
      %9578 = vmatprep.mubr.f32.mxu0 0.0
      %9579 = vmatmul.mubr.f32.gmra.mrb[0].mxu0 %v7633
      %v9580 = vpop.f32.mrb[0].mxu0
      %v9581 = vadd.f32 0.0, %v9580
      %v9582 = vpop.f32.mrb[0].mxu0
      %9583 = vmatprep.mubr.f32.mxu0 0.0
      %9584 = vmatmul.mubr.f32.gmra.mrb[0].mxu0 %v9166
      %v9585 = vpop.f32.mrb[0].mxu0
      %v9586 = vadd.f32 0.0, %v9585
      %v9587 = vpop.f32.mrb[0].mxu0
      %9588 = vmatprep.mubr.f32.mxu0 0.0
      %9589 = vmatmul.mubr.f32.gmra.mrb[0].mxu0 %v9169
      %v9590 = vpop.f32.mrb[0].mxu0
      %v9591 = vadd.f32 0.0, %v9590
      %v9592 = vpop.f32.mrb[0].mxu0
      %9593 = vmatprep.mubr.f32.mxu0 0.0
      %9594 = vmatmul.mubr.f32.gmra.mrb[0].mxu0 %v9172
      %v9595 = vpop.f32.mrb[0].mxu0
      %v9596 = vadd.f32 0.0, %v9595
      %v9597 = vpop.f32.mrb[0].mxu0
      %9598 = vdwg.mxu0
      %v9599 = vadd.f32 %v9089, %v9241
      %v9600 = vadd.f32 %v9090, %v9246
      %v9601 = vadd.f32 %v9091, %v9251
      %v9602 = vadd.f32 %v9092, %v9256
      %v9603 = vadd.f32 %v9093, %v9261
      %v9604 = vadd.f32 %v9094, %v9266
      %v9605 = vadd.f32 %v9095, %v9271
      %v9606 = vadd.f32 %v9096, %v9276
      %v9607 = vadd.f32 %v9097, %v9281
      %v9608 = vadd.f32 %v9098, %v9286
      %v9609 = vadd.f32 %v9099, %v9291
      %v9610 = vadd.f32 %v9100, %v9296
      %v9611 = vadd.f32 %v9101, %v9301
      %v9612 = vadd.f32 %v9102, %v9306
      %v9613 = vadd.f32 %v9103, %v9311
      %v9614 = vadd.f32 %v9104, %v9316
      %v9615 = vadd.f32 %v9105, %v9321
      %v9616 = vadd.f32 %v9106, %v9326
      %v9617 = vadd.f32 %v9107, %v9331
      %v9618 = vadd.f32 %v9108, %v9336
      %v9619 = vadd.f32 %v9109, %v9341
      %v9620 = vadd.f32 %v9110, %v9346
      %v9621 = vadd.f32 %v9111, %v9351
      %v9622 = vadd.f32 %v9112, %v9356
      %v9623 = vadd.f32 %v9113, %v9361
      %v9624 = vadd.f32 %v9114, %v9366
      %v9625 = vadd.f32 %v9115, %v9371
      %v9626 = vadd.f32 %v9116, %v9376
      %v9627 = vadd.f32 %v9117, %v9381
      %v9628 = vadd.f32 %v9118, %v9386
      %v9629 = vadd.f32 %v9119, %v9391
      %v9630 = vadd.f32 %v9120, %v9396
      %v9631 = vadd.f32 %v9121, %v9401
      %v9632 = vadd.f32 %v9122, %v9406
      %v9633 = vadd.f32 %v9123, %v9411
      %v9634 = vadd.f32 %v9124, %v9416
      %v9635 = vadd.f32 %v9125, %v9421
      %v9636 = vadd.f32 %v9126, %v9426
      %v9637 = vadd.f32 %v9127, %v9431
      %v9638 = vadd.f32 %v9128, %v9436
      %v9639 = vadd.f32 %v9129, %v9441
      %v9640 = vadd.f32 %v9130, %v9446
      %v9641 = vadd.f32 %v9131, %v9451
      %v9642 = vadd.f32 %v9132, %v9456
      %v9643 = vadd.f32 %v9133, %v9461
      %v9644 = vadd.f32 %v9134, %v9466
      %v9645 = vadd.f32 %v9135, %v9471
      %v9646 = vadd.f32 %v9136, %v9476
      %v9647 = vadd.f32 %v9137, %v9481
      %v9648 = vadd.f32 %v9138, %v9486
      %v9649 = vadd.f32 %v9139, %v9491
      %v9650 = vadd.f32 %v9140, %v9496
      %v9651 = vadd.f32 %v9141, %v9501
      %v9652 = vadd.f32 %v9142, %v9506
      %v9653 = vadd.f32 %v9143, %v9511
      %v9654 = vadd.f32 %v9144, %v9516
      %v9655 = vadd.f32 %v9145, %v9521
      %v9656 = vadd.f32 %v9146, %v9526
      %v9657 = vadd.f32 %v9147, %v9531
      %v9658 = vadd.f32 %v9148, %v9536
      %v9659 = vadd.f32 %v9149, %v9541
      %v9660 = vadd.f32 %v9150, %v9546
      %v9661 = vadd.f32 %v9151, %v9551
      %v9662 = vadd.f32 %v9152, %v9556
      %v9663 = vadd.f32 %v9153, %v9561
      %v9664 = vadd.f32 %v9154, %v9566
      %v9665 = vadd.f32 %v9155, %v9571
      %v9666 = vadd.f32 %v9156, %v9576
      %v9667 = vadd.f32 %v9157, %v9581
      %v9668 = vadd.f32 %v9158, %v9586
      %v9669 = vadd.f32 %v9159, %v9591
      %v9670 = vadd.f32 %v9160, %v9596
      %v9672 = vrot.slane %v5394, 1
      %v9673 = vrot.slane %v5395, 1
      %v9674 = vsel %vm1310, %v9672, %v9673
      %v9675 = vrot.slane %v5396, 1
      %v9676 = vsel %vm1310, %v9673, %v9675
      %v9677 = vrot.slane %v5397, 1
      %v9678 = vsel %vm1310, %v9675, %v9677
      %v9679 = vld [vmem:[%s3 + $0xe0] sm:$0xff]
      %v9680 = vld [vmem:[%s3 + $0xe8] sm:$0xff]
      %v9681 = vld [vmem:[%s3 + $0xf0] sm:$0xff]
      %v9682 = vld [vmem:[%s3 + $0xf8] sm:$0xff]
      %v9683 = vsel %vm5670, %v9674, 0
      %v9685 = vsel %vm5670, %v9676, 0
      %v9687 = vsel %vm5670, %v9678, 0
      %9689 = vmatprep.subr.mxu0 0.0
      %9690 = vmatpush1.msra.mxu0 %v9679
      %9691 = vmatprep.subr.mxu0 0.0
      %9692 = vmatpush1.msra.mxu0 %v9680
      %9693 = vmatprep.subr.mxu0 0.0
      %9694 = vmatpush1.msra.mxu0 %v9681
      %9695 = vmatprep.subr.mxu0 0.0
      %9696 = vmatpush1.msra.mxu0 %v9682
      %9697 = vmatprep.subr.mxu0 0.0
      %9698 = vmatpush1.msra.mxu0 0.0
      %9699 = vmatprep.subr.mxu0 0.0
      %9700 = vmatpush1.msra.mxu0 0.0
      %9701 = vmatprep.subr.mxu0 0.0
      %9702 = vmatpush1.msra.mxu0 0.0
      %9703 = vmatprep.subr.mxu0 0.0
      %9704 = vmatpush1.msra.mxu0 0.0
      %9705 = vmatprep.subr.mxu0 0.0
      %9706 = vmatpush1.msra.mxu0 0.0
      %9707 = vmatprep.subr.mxu0 0.0
      %9708 = vmatpush1.msra.mxu0 0.0
      %9709 = vmatprep.subr.mxu0 0.0
      %9710 = vmatpush1.msra.mxu0 0.0
      %9711 = vmatprep.subr.mxu0 0.0
      %9712 = vmatpush1.msra.mxu0 0.0
      %9713 = vmatprep.subr.mxu0 0.0
      %9714 = vmatpush1.msra.mxu0 0.0
      %9715 = vmatprep.subr.mxu0 0.0
      %9716 = vmatpush1.msra.mxu0 0.0
      %9717 = vmatprep.subr.mxu0 0.0
      %9718 = vmatpush1.msra.mxu0 0.0
      %9719 = vmatprep.subr.mxu0 0.0
      %9720 = vmatpush1.msra.mxu0 0.0
      %9721 = vmatprep.subr.mxu0 0.0
      %9722 = vmatpush1.msra.mxu0 0.0
      %9723 = vmatprep.subr.mxu0 0.0
      %9724 = vmatpush1.msra.mxu0 0.0
      %9725 = vmatprep.subr.mxu0 0.0
      %9726 = vmatpush1.msra.mxu0 0.0
      %9727 = vmatprep.subr.mxu0 0.0
      %9728 = vmatpush1.msra.mxu0 0.0
      %9729 = vmatprep.subr.mxu0 0.0
      %9730 = vmatpush1.msra.mxu0 0.0
      %9731 = vmatprep.subr.mxu0 0.0
      %9732 = vmatpush1.msra.mxu0 0.0
      %9733 = vmatprep.subr.mxu0 0.0
      %9734 = vmatpush1.msra.mxu0 0.0
      %9735 = vmatprep.subr.mxu0 0.0
      %9736 = vmatpush1.msra.mxu0 0.0
      %9737 = vmatprep.subr.mxu0 0.0
      %9738 = vmatpush1.msra.mxu0 0.0
      %9739 = vmatprep.subr.mxu0 0.0
      %9740 = vmatpush1.msra.mxu0 0.0
      %9741 = vmatprep.subr.mxu0 0.0
      %9742 = vmatpush1.msra.mxu0 0.0
      %9743 = vmatprep.subr.mxu0 0.0
      %9744 = vmatpush1.msra.mxu0 0.0
      %9745 = vmatprep.subr.mxu0 0.0
      %9746 = vmatpush1.msra.mxu0 0.0
      %9747 = vmatprep.subr.mxu0 0.0
      %9748 = vmatpush1.msra.mxu0 0.0
      %9749 = vmatprep.subr.mxu0 0.0
      %9750 = vmatpush1.msra.mxu0 0.0
      %9751 = vmatprep.subr.mxu0 0.0
      %9752 = vmatpush1.msra.mxu0 0.0
      %9753 = vmatprep.mubr.f32.mxu0 0.0
      %9754 = vmatmul.mubr.f32.gmra.mrb[0].mxu0 %v5683
      %v9755 = vpop.f32.mrb[0].mxu0
      %v9756 = vadd.f32 0.0, %v9755
      %v9757 = vpop.f32.mrb[0].mxu0
      %9758 = vmatprep.mubr.f32.mxu0 0.0
      %9759 = vmatmul.mubr.f32.gmra.mrb[0].mxu0 %v5685
      %v9760 = vpop.f32.mrb[0].mxu0
      %v9761 = vadd.f32 0.0, %v9760
      %v9762 = vpop.f32.mrb[0].mxu0
      %9763 = vmatprep.mubr.f32.mxu0 0.0
      %9764 = vmatmul.mubr.f32.gmra.mrb[0].mxu0 %v5687
      %v9765 = vpop.f32.mrb[0].mxu0
      %v9766 = vadd.f32 0.0, %v9765
      %v9767 = vpop.f32.mrb[0].mxu0
      %9768 = vmatprep.mubr.f32.mxu0 0.0
      %9769 = vmatmul.mubr.f32.gmra.mrb[0].mxu0 %v5689
      %v9770 = vpop.f32.mrb[0].mxu0
      %v9771 = vadd.f32 0.0, %v9770
      %v9772 = vpop.f32.mrb[0].mxu0
      %9773 = vmatprep.mubr.f32.mxu0 0.0
      %9774 = vmatmul.mubr.f32.gmra.mrb[0].mxu0 %v5691
      %v9775 = vpop.f32.mrb[0].mxu0
      %v9776 = vadd.f32 0.0, %v9775
      %v9777 = vpop.f32.mrb[0].mxu0
      %9778 = vmatprep.mubr.f32.mxu0 0.0
      %9779 = vmatmul.mubr.f32.gmra.mrb[0].mxu0 %v5693
      %v9780 = vpop.f32.mrb[0].mxu0
      %v9781 = vadd.f32 0.0, %v9780
      %v9782 = vpop.f32.mrb[0].mxu0
      %9783 = vmatprep.mubr.f32.mxu0 0.0
      %9784 = vmatmul.mubr.f32.gmra.mrb[0].mxu0 %v5695
      %v9785 = vpop.f32.mrb[0].mxu0
      %v9786 = vadd.f32 0.0, %v9785
      %v9787 = vpop.f32.mrb[0].mxu0
      %9788 = vmatprep.mubr.f32.mxu0 0.0
      %9789 = vmatmul.mubr.f32.gmra.mrb[0].mxu0 %v5697
      %v9790 = vpop.f32.mrb[0].mxu0
      %v9791 = vadd.f32 0.0, %v9790
      %v9792 = vpop.f32.mrb[0].mxu0
      %9793 = vmatprep.mubr.f32.mxu0 0.0
      %9794 = vmatmul.mubr.f32.gmra.mrb[0].mxu0 %v5699
      %v9795 = vpop.f32.mrb[0].mxu0
      %v9796 = vadd.f32 0.0, %v9795
      %v9797 = vpop.f32.mrb[0].mxu0
      %9798 = vmatprep.mubr.f32.mxu0 0.0
      %9799 = vmatmul.mubr.f32.gmra.mrb[0].mxu0 %v5701
      %v9800 = vpop.f32.mrb[0].mxu0
      %v9801 = vadd.f32 0.0, %v9800
      %v9802 = vpop.f32.mrb[0].mxu0
      %9803 = vmatprep.mubr.f32.mxu0 0.0
      %9804 = vmatmul.mubr.f32.gmra.mrb[0].mxu0 %v5703
      %v9805 = vpop.f32.mrb[0].mxu0
      %v9806 = vadd.f32 0.0, %v9805
      %v9807 = vpop.f32.mrb[0].mxu0
      %9808 = vmatprep.mubr.f32.mxu0 0.0
      %9809 = vmatmul.mubr.f32.gmra.mrb[0].mxu0 %v5705
      %v9810 = vpop.f32.mrb[0].mxu0
      %v9811 = vadd.f32 0.0, %v9810
      %v9812 = vpop.f32.mrb[0].mxu0
      %9813 = vmatprep.mubr.f32.mxu0 0.0
      %9814 = vmatmul.mubr.f32.gmra.mrb[0].mxu0 %v5707
      %v9815 = vpop.f32.mrb[0].mxu0
      %v9816 = vadd.f32 0.0, %v9815
      %v9817 = vpop.f32.mrb[0].mxu0
      %9818 = vmatprep.mubr.f32.mxu0 0.0
      %9819 = vmatmul.mubr.f32.gmra.mrb[0].mxu0 %v5709
      %v9820 = vpop.f32.mrb[0].mxu0
      %v9821 = vadd.f32 0.0, %v9820
      %v9822 = vpop.f32.mrb[0].mxu0
      %9823 = vmatprep.mubr.f32.mxu0 0.0
      %9824 = vmatmul.mubr.f32.gmra.mrb[0].mxu0 %v5711
      %v9825 = vpop.f32.mrb[0].mxu0
      %v9826 = vadd.f32 0.0, %v9825
      %v9827 = vpop.f32.mrb[0].mxu0
      %9828 = vmatprep.mubr.f32.mxu0 0.0
      %9829 = vmatmul.mubr.f32.gmra.mrb[0].mxu0 %v5713
      %v9830 = vpop.f32.mrb[0].mxu0
      %v9831 = vadd.f32 0.0, %v9830
      %v9832 = vpop.f32.mrb[0].mxu0
      %9833 = vmatprep.mubr.f32.mxu0 0.0
      %9834 = vmatmul.mubr.f32.gmra.mrb[0].mxu0 %v5715
      %v9835 = vpop.f32.mrb[0].mxu0
      %v9836 = vadd.f32 0.0, %v9835
      %v9837 = vpop.f32.mrb[0].mxu0
      %9838 = vmatprep.mubr.f32.mxu0 0.0
      %9839 = vmatmul.mubr.f32.gmra.mrb[0].mxu0 %v5717
      %v9840 = vpop.f32.mrb[0].mxu0
      %v9841 = vadd.f32 0.0, %v9840
      %v9842 = vpop.f32.mrb[0].mxu0
      %9843 = vmatprep.mubr.f32.mxu0 0.0
      %9844 = vmatmul.mubr.f32.gmra.mrb[0].mxu0 %v5719
      %v9845 = vpop.f32.mrb[0].mxu0
      %v9846 = vadd.f32 0.0, %v9845
      %v9847 = vpop.f32.mrb[0].mxu0
      %9848 = vmatprep.mubr.f32.mxu0 0.0
      %9849 = vmatmul.mubr.f32.gmra.mrb[0].mxu0 %v5721
      %v9850 = vpop.f32.mrb[0].mxu0
      %v9851 = vadd.f32 0.0, %v9850
      %v9852 = vpop.f32.mrb[0].mxu0
      %9853 = vmatprep.mubr.f32.mxu0 0.0
      %9854 = vmatmul.mubr.f32.gmra.mrb[0].mxu0 %v5723
      %v9855 = vpop.f32.mrb[0].mxu0
      %v9856 = vadd.f32 0.0, %v9855
      %v9857 = vpop.f32.mrb[0].mxu0
      %9858 = vmatprep.mubr.f32.mxu0 0.0
      %9859 = vmatmul.mubr.f32.gmra.mrb[0].mxu0 %v5725
      %v9860 = vpop.f32.mrb[0].mxu0
      %v9861 = vadd.f32 0.0, %v9860
      %v9862 = vpop.f32.mrb[0].mxu0
      %9863 = vmatprep.mubr.f32.mxu0 0.0
      %9864 = vmatmul.mubr.f32.gmra.mrb[0].mxu0 %v5727
      %v9865 = vpop.f32.mrb[0].mxu0
      %v9866 = vadd.f32 0.0, %v9865
      %v9867 = vpop.f32.mrb[0].mxu0
      %9868 = vmatprep.mubr.f32.mxu0 0.0
      %9869 = vmatmul.mubr.f32.gmra.mrb[0].mxu0 %v5729
      %v9870 = vpop.f32.mrb[0].mxu0
      %v9871 = vadd.f32 0.0, %v9870
      %v9872 = vpop.f32.mrb[0].mxu0
      %9873 = vmatprep.mubr.f32.mxu0 0.0
      %9874 = vmatmul.mubr.f32.gmra.mrb[0].mxu0 %v5731
      %v9875 = vpop.f32.mrb[0].mxu0
      %v9876 = vadd.f32 0.0, %v9875
      %v9877 = vpop.f32.mrb[0].mxu0
      %9878 = vmatprep.mubr.f32.mxu0 0.0
      %9879 = vmatmul.mubr.f32.gmra.mrb[0].mxu0 %v5733
      %v9880 = vpop.f32.mrb[0].mxu0
      %v9881 = vadd.f32 0.0, %v9880
      %v9882 = vpop.f32.mrb[0].mxu0
      %9883 = vmatprep.mubr.f32.mxu0 0.0
      %9884 = vmatmul.mubr.f32.gmra.mrb[0].mxu0 %v5735
      %v9885 = vpop.f32.mrb[0].mxu0
      %v9886 = vadd.f32 0.0, %v9885
      %v9887 = vpop.f32.mrb[0].mxu0
      %9888 = vmatprep.mubr.f32.mxu0 0.0
      %9889 = vmatmul.mubr.f32.gmra.mrb[0].mxu0 %v5737
      %v9890 = vpop.f32.mrb[0].mxu0
      %v9891 = vadd.f32 0.0, %v9890
      %v9892 = vpop.f32.mrb[0].mxu0
      %9893 = vmatprep.mubr.f32.mxu0 0.0
      %9894 = vmatmul.mubr.f32.gmra.mrb[0].mxu0 %v5739
      %v9895 = vpop.f32.mrb[0].mxu0
      %v9896 = vadd.f32 0.0, %v9895
      %v9897 = vpop.f32.mrb[0].mxu0
      %9898 = vmatprep.mubr.f32.mxu0 0.0
      %9899 = vmatmul.mubr.f32.gmra.mrb[0].mxu0 %v5741
      %v9900 = vpop.f32.mrb[0].mxu0
      %v9901 = vadd.f32 0.0, %v9900
      %v9902 = vpop.f32.mrb[0].mxu0
      %9903 = vmatprep.mubr.f32.mxu0 0.0
      %9904 = vmatmul.mubr.f32.gmra.mrb[0].mxu0 %v5743
      %v9905 = vpop.f32.mrb[0].mxu0
      %v9906 = vadd.f32 0.0, %v9905
      %v9907 = vpop.f32.mrb[0].mxu0
      %9908 = vmatprep.mubr.f32.mxu0 0.0
      %9909 = vmatmul.mubr.f32.gmra.mrb[0].mxu0 %v5745
      %v9910 = vpop.f32.mrb[0].mxu0
      %v9911 = vadd.f32 0.0, %v9910
      %v9912 = vpop.f32.mrb[0].mxu0
      %9913 = vmatprep.mubr.f32.mxu0 0.0
      %9914 = vmatmul.mubr.f32.gmra.mrb[0].mxu0 %v5747
      %v9915 = vpop.f32.mrb[0].mxu0
      %v9916 = vadd.f32 0.0, %v9915
      %v9917 = vpop.f32.mrb[0].mxu0
      %9918 = vmatprep.mubr.f32.mxu0 0.0
      %9919 = vmatmul.mubr.f32.gmra.mrb[0].mxu0 %v5749
      %v9920 = vpop.f32.mrb[0].mxu0
      %v9921 = vadd.f32 0.0, %v9920
      %v9922 = vpop.f32.mrb[0].mxu0
      %9923 = vmatprep.mubr.f32.mxu0 0.0
      %9924 = vmatmul.mubr.f32.gmra.mrb[0].mxu0 %v5751
      %v9925 = vpop.f32.mrb[0].mxu0
      %v9926 = vadd.f32 0.0, %v9925
      %v9927 = vpop.f32.mrb[0].mxu0
      %9928 = vmatprep.mubr.f32.mxu0 0.0
      %9929 = vmatmul.mubr.f32.gmra.mrb[0].mxu0 %v5753
      %v9930 = vpop.f32.mrb[0].mxu0
      %v9931 = vadd.f32 0.0, %v9930
      %v9932 = vpop.f32.mrb[0].mxu0
      %9933 = vmatprep.mubr.f32.mxu0 0.0
      %9934 = vmatmul.mubr.f32.gmra.mrb[0].mxu0 %v5755
      %v9935 = vpop.f32.mrb[0].mxu0
      %v9936 = vadd.f32 0.0, %v9935
      %v9937 = vpop.f32.mrb[0].mxu0
      %9938 = vmatprep.mubr.f32.mxu0 0.0
      %9939 = vmatmul.mubr.f32.gmra.mrb[0].mxu0 %v5757
      %v9940 = vpop.f32.mrb[0].mxu0
      %v9941 = vadd.f32 0.0, %v9940
      %v9942 = vpop.f32.mrb[0].mxu0
      %9943 = vmatprep.mubr.f32.mxu0 0.0
      %9944 = vmatmul.mubr.f32.gmra.mrb[0].mxu0 %v5759
      %v9945 = vpop.f32.mrb[0].mxu0
      %v9946 = vadd.f32 0.0, %v9945
      %v9947 = vpop.f32.mrb[0].mxu0
      %9948 = vmatprep.mubr.f32.mxu0 0.0
      %9949 = vmatmul.mubr.f32.gmra.mrb[0].mxu0 %v5761
      %v9950 = vpop.f32.mrb[0].mxu0
      %v9951 = vadd.f32 0.0, %v9950
      %v9952 = vpop.f32.mrb[0].mxu0
      %9953 = vmatprep.mubr.f32.mxu0 0.0
      %9954 = vmatmul.mubr.f32.gmra.mrb[0].mxu0 %v5763
      %v9955 = vpop.f32.mrb[0].mxu0
      %v9956 = vadd.f32 0.0, %v9955
      %v9957 = vpop.f32.mrb[0].mxu0
      %9958 = vmatprep.mubr.f32.mxu0 0.0
      %9959 = vmatmul.mubr.f32.gmra.mrb[0].mxu0 %v5765
      %v9960 = vpop.f32.mrb[0].mxu0
      %v9961 = vadd.f32 0.0, %v9960
      %v9962 = vpop.f32.mrb[0].mxu0
      %9963 = vmatprep.mubr.f32.mxu0 0.0
      %9964 = vmatmul.mubr.f32.gmra.mrb[0].mxu0 %v5767
      %v9965 = vpop.f32.mrb[0].mxu0
      %v9966 = vadd.f32 0.0, %v9965
      %v9967 = vpop.f32.mrb[0].mxu0
      %9968 = vmatprep.mubr.f32.mxu0 0.0
      %9969 = vmatmul.mubr.f32.gmra.mrb[0].mxu0 %v5769
      %v9970 = vpop.f32.mrb[0].mxu0
      %v9971 = vadd.f32 0.0, %v9970
      %v9972 = vpop.f32.mrb[0].mxu0
      %9973 = vmatprep.mubr.f32.mxu0 0.0
      %9974 = vmatmul.mubr.f32.gmra.mrb[0].mxu0 %v5771
      %v9975 = vpop.f32.mrb[0].mxu0
      %v9976 = vadd.f32 0.0, %v9975
      %v9977 = vpop.f32.mrb[0].mxu0
      %9978 = vmatprep.mubr.f32.mxu0 0.0
      %9979 = vmatmul.mubr.f32.gmra.mrb[0].mxu0 %v5773
      %v9980 = vpop.f32.mrb[0].mxu0
      %v9981 = vadd.f32 0.0, %v9980
      %v9982 = vpop.f32.mrb[0].mxu0
      %9983 = vmatprep.mubr.f32.mxu0 0.0
      %9984 = vmatmul.mubr.f32.gmra.mrb[0].mxu0 %v5775
      %v9985 = vpop.f32.mrb[0].mxu0
      %v9986 = vadd.f32 0.0, %v9985
      %v9987 = vpop.f32.mrb[0].mxu0
      %9988 = vmatprep.mubr.f32.mxu0 0.0
      %9989 = vmatmul.mubr.f32.gmra.mrb[0].mxu0 %v5777
      %v9990 = vpop.f32.mrb[0].mxu0
      %v9991 = vadd.f32 0.0, %v9990
      %v9992 = vpop.f32.mrb[0].mxu0
      %9993 = vmatprep.mubr.f32.mxu0 0.0
      %9994 = vmatmul.mubr.f32.gmra.mrb[0].mxu0 %v5779
      %v9995 = vpop.f32.mrb[0].mxu0
      %v9996 = vadd.f32 0.0, %v9995
      %v9997 = vpop.f32.mrb[0].mxu0
      %9998 = vmatprep.mubr.f32.mxu0 0.0
      %9999 = vmatmul.mubr.f32.gmra.mrb[0].mxu0 %v5781
      %v10000 = vpop.f32.mrb[0].mxu0
      %v10001 = vadd.f32 0.0, %v10000
      %v10002 = vpop.f32.mrb[0].mxu0
      %10003 = vmatprep.mubr.f32.mxu0 0.0
      %10004 = vmatmul.mubr.f32.gmra.mrb[0].mxu0 %v5783
      %v10005 = vpop.f32.mrb[0].mxu0
      %v10006 = vadd.f32 0.0, %v10005
      %v10007 = vpop.f32.mrb[0].mxu0
      %10008 = vmatprep.mubr.f32.mxu0 0.0
      %10009 = vmatmul.mubr.f32.gmra.mrb[0].mxu0 %v5785
      %v10010 = vpop.f32.mrb[0].mxu0
      %v10011 = vadd.f32 0.0, %v10010
      %v10012 = vpop.f32.mrb[0].mxu0
      %10013 = vmatprep.mubr.f32.mxu0 0.0
      %10014 = vmatmul.mubr.f32.gmra.mrb[0].mxu0 %v5787
      %v10015 = vpop.f32.mrb[0].mxu0
      %v10016 = vadd.f32 0.0, %v10015
      %v10017 = vpop.f32.mrb[0].mxu0
      %10018 = vmatprep.mubr.f32.mxu0 0.0
      %10019 = vmatmul.mubr.f32.gmra.mrb[0].mxu0 %v5789
      %v10020 = vpop.f32.mrb[0].mxu0
      %v10021 = vadd.f32 0.0, %v10020
      %v10022 = vpop.f32.mrb[0].mxu0
      %10023 = vmatprep.mubr.f32.mxu0 0.0
      %10024 = vmatmul.mubr.f32.gmra.mrb[0].mxu0 %v5791
      %v10025 = vpop.f32.mrb[0].mxu0
      %v10026 = vadd.f32 0.0, %v10025
      %v10027 = vpop.f32.mrb[0].mxu0
      %10028 = vmatprep.mubr.f32.mxu0 0.0
      %10029 = vmatmul.mubr.f32.gmra.mrb[0].mxu0 %v5793
      %v10030 = vpop.f32.mrb[0].mxu0
      %v10031 = vadd.f32 0.0, %v10030
      %v10032 = vpop.f32.mrb[0].mxu0
      %10033 = vmatprep.mubr.f32.mxu0 0.0
      %10034 = vmatmul.mubr.f32.gmra.mrb[0].mxu0 %v5795
      %v10035 = vpop.f32.mrb[0].mxu0
      %v10036 = vadd.f32 0.0, %v10035
      %v10037 = vpop.f32.mrb[0].mxu0
      %10038 = vmatprep.mubr.f32.mxu0 0.0
      %10039 = vmatmul.mubr.f32.gmra.mrb[0].mxu0 %v5797
      %v10040 = vpop.f32.mrb[0].mxu0
      %v10041 = vadd.f32 0.0, %v10040
      %v10042 = vpop.f32.mrb[0].mxu0
      %10043 = vmatprep.mubr.f32.mxu0 0.0
      %10044 = vmatmul.mubr.f32.gmra.mrb[0].mxu0 %v5799
      %v10045 = vpop.f32.mrb[0].mxu0
      %v10046 = vadd.f32 0.0, %v10045
      %v10047 = vpop.f32.mrb[0].mxu0
      %10048 = vmatprep.mubr.f32.mxu0 0.0
      %10049 = vmatmul.mubr.f32.gmra.mrb[0].mxu0 %v5801
      %v10050 = vpop.f32.mrb[0].mxu0
      %v10051 = vadd.f32 0.0, %v10050
      %v10052 = vpop.f32.mrb[0].mxu0
      %10053 = vmatprep.mubr.f32.mxu0 0.0
      %10054 = vmatmul.mubr.f32.gmra.mrb[0].mxu0 %v5803
      %v10055 = vpop.f32.mrb[0].mxu0
      %v10056 = vadd.f32 0.0, %v10055
      %v10057 = vpop.f32.mrb[0].mxu0
      %10058 = vmatprep.mubr.f32.mxu0 0.0
      %10059 = vmatmul.mubr.f32.gmra.mrb[0].mxu0 %v5805
      %v10060 = vpop.f32.mrb[0].mxu0
      %v10061 = vadd.f32 0.0, %v10060
      %v10062 = vpop.f32.mrb[0].mxu0
      %10063 = vmatprep.mubr.f32.mxu0 0.0
      %10064 = vmatmul.mubr.f32.gmra.mrb[0].mxu0 %v5807
      %v10065 = vpop.f32.mrb[0].mxu0
      %v10066 = vadd.f32 0.0, %v10065
      %v10067 = vpop.f32.mrb[0].mxu0
      %10068 = vmatprep.mubr.f32.mxu0 0.0
      %10069 = vmatmul.mubr.f32.gmra.mrb[0].mxu0 %v5809
      %v10070 = vpop.f32.mrb[0].mxu0
      %v10071 = vadd.f32 0.0, %v10070
      %v10072 = vpop.f32.mrb[0].mxu0
      %10073 = vmatprep.mubr.f32.mxu0 0.0
      %10074 = vmatmul.mubr.f32.gmra.mrb[0].mxu0 %v5811
      %v10075 = vpop.f32.mrb[0].mxu0
      %v10076 = vadd.f32 0.0, %v10075
      %v10077 = vpop.f32.mrb[0].mxu0
      %10078 = vmatprep.mubr.f32.mxu0 0.0
      %10079 = vmatmul.mubr.f32.gmra.mrb[0].mxu0 %v5813
      %v10080 = vpop.f32.mrb[0].mxu0
      %v10081 = vadd.f32 0.0, %v10080
      %v10082 = vpop.f32.mrb[0].mxu0
      %10083 = vmatprep.mubr.f32.mxu0 0.0
      %10084 = vmatmul.mubr.f32.gmra.mrb[0].mxu0 %v8144
      %v10085 = vpop.f32.mrb[0].mxu0
      %v10086 = vadd.f32 0.0, %v10085
      %v10087 = vpop.f32.mrb[0].mxu0
      %10088 = vmatprep.mubr.f32.mxu0 0.0
      %10089 = vmatmul.mubr.f32.gmra.mrb[0].mxu0 %v8146
      %v10090 = vpop.f32.mrb[0].mxu0
      %v10091 = vadd.f32 0.0, %v10090
      %v10092 = vpop.f32.mrb[0].mxu0
      %10093 = vmatprep.mubr.f32.mxu0 0.0
      %10094 = vmatmul.mubr.f32.gmra.mrb[0].mxu0 %v8148
      %v10095 = vpop.f32.mrb[0].mxu0
      %v10096 = vadd.f32 0.0, %v10095
      %v10097 = vpop.f32.mrb[0].mxu0
      %10098 = vmatprep.mubr.f32.mxu0 0.0
      %10099 = vmatmul.mubr.f32.gmra.mrb[0].mxu0 %v9683
      %v10100 = vpop.f32.mrb[0].mxu0
      %v10101 = vadd.f32 0.0, %v10100
      %v10102 = vpop.f32.mrb[0].mxu0
      %10103 = vmatprep.mubr.f32.mxu0 0.0
      %10104 = vmatmul.mubr.f32.gmra.mrb[0].mxu0 %v9685
      %v10105 = vpop.f32.mrb[0].mxu0
      %v10106 = vadd.f32 0.0, %v10105
      %v10107 = vpop.f32.mrb[0].mxu0
      %10108 = vmatprep.mubr.f32.mxu0 0.0
      %10109 = vmatmul.mubr.f32.gmra.mrb[0].mxu0 %v9687
      %v10110 = vpop.f32.mrb[0].mxu0
      %v10111 = vadd.f32 0.0, %v10110
      %v10112 = vpop.f32.mrb[0].mxu0
      %10113 = vdwg.mxu0
      %v10114 = vadd.f32 %v9599, %v9756
      %v10115 = vadd.f32 %v9600, %v9761
      %v10116 = vadd.f32 %v9601, %v9766
      %v10117 = vadd.f32 %v9602, %v9771
      %v10118 = vadd.f32 %v9603, %v9776
      %v10119 = vadd.f32 %v9604, %v9781
      %v10120 = vadd.f32 %v9605, %v9786
      %v10121 = vadd.f32 %v9606, %v9791
      %v10122 = vadd.f32 %v9607, %v9796
      %v10123 = vadd.f32 %v9608, %v9801
      %v10124 = vadd.f32 %v9609, %v9806
      %v10125 = vadd.f32 %v9610, %v9811
      %v10126 = vadd.f32 %v9611, %v9816
      %v10127 = vadd.f32 %v9612, %v9821
      %v10128 = vadd.f32 %v9613, %v9826
      %v10129 = vadd.f32 %v9614, %v9831
      %v10130 = vadd.f32 %v9615, %v9836
      %v10131 = vadd.f32 %v9616, %v9841
      %v10132 = vadd.f32 %v9617, %v9846
      %v10133 = vadd.f32 %v9618, %v9851
      %v10134 = vadd.f32 %v9619, %v9856
      %v10135 = vadd.f32 %v9620, %v9861
      %v10136 = vadd.f32 %v9621, %v9866
      %v10137 = vadd.f32 %v9622, %v9871
      %v10138 = vadd.f32 %v9623, %v9876
      %v10139 = vadd.f32 %v9624, %v9881
      %v10140 = vadd.f32 %v9625, %v9886
      %v10141 = vadd.f32 %v9626, %v9891
      %v10142 = vadd.f32 %v9627, %v9896
      %v10143 = vadd.f32 %v9628, %v9901
      %v10144 = vadd.f32 %v9629, %v9906
      %v10145 = vadd.f32 %v9630, %v9911
      %v10146 = vadd.f32 %v9631, %v9916
      %v10147 = vadd.f32 %v9632, %v9921
      %v10148 = vadd.f32 %v9633, %v9926
      %v10149 = vadd.f32 %v9634, %v9931
      %v10150 = vadd.f32 %v9635, %v9936
      %v10151 = vadd.f32 %v9636, %v9941
      %v10152 = vadd.f32 %v9637, %v9946
      %v10153 = vadd.f32 %v9638, %v9951
      %v10154 = vadd.f32 %v9639, %v9956
      %v10155 = vadd.f32 %v9640, %v9961
      %v10156 = vadd.f32 %v9641, %v9966
      %v10157 = vadd.f32 %v9642, %v9971
      %v10158 = vadd.f32 %v9643, %v9976
      %v10159 = vadd.f32 %v9644, %v9981
      %v10160 = vadd.f32 %v9645, %v9986
      %v10161 = vadd.f32 %v9646, %v9991
      %v10162 = vadd.f32 %v9647, %v9996
      %v10163 = vadd.f32 %v9648, %v10001
      %v10164 = vadd.f32 %v9649, %v10006
      %v10165 = vadd.f32 %v9650, %v10011
      %v10166 = vadd.f32 %v9651, %v10016
      %v10167 = vadd.f32 %v9652, %v10021
      %v10168 = vadd.f32 %v9653, %v10026
      %v10169 = vadd.f32 %v9654, %v10031
      %v10170 = vadd.f32 %v9655, %v10036
      %v10171 = vadd.f32 %v9656, %v10041
      %v10172 = vadd.f32 %v9657, %v10046
      %v10173 = vadd.f32 %v9658, %v10051
      %v10174 = vadd.f32 %v9659, %v10056
      %v10175 = vadd.f32 %v9660, %v10061
      %v10176 = vadd.f32 %v9661, %v10066
      %v10177 = vadd.f32 %v9662, %v10071
      %v10178 = vadd.f32 %v9663, %v10076
      %v10179 = vadd.f32 %v9664, %v10081
      %v10180 = vadd.f32 %v9665, %v10086
      %v10181 = vadd.f32 %v9666, %v10091
      %v10182 = vadd.f32 %v9667, %v10096
      %v10183 = vadd.f32 %v9668, %v10101
      %v10184 = vadd.f32 %v9669, %v10106
      %v10185 = vadd.f32 %v9670, %v10111
      %v10186 = vrot.slane %v5394, 2
      %v10187 = vrot.slane %v5395, 2
      %v10188 = vsel %vm1914, %v10186, %v10187
      %v10189 = vrot.slane %v5396, 2
      %v10190 = vsel %vm1914, %v10187, %v10189
      %v10191 = vrot.slane %v5397, 2
      %v10192 = vsel %vm1914, %v10189, %v10191
      %v10193 = vld [vmem:[%s3 + $0x100] sm:$0xff]
      %v10194 = vld [vmem:[%s3 + $0x108] sm:$0xff]
      %v10195 = vld [vmem:[%s3 + $0x110] sm:$0xff]
      %v10196 = vld [vmem:[%s3 + $0x118] sm:$0xff]
      %v10197 = vsel %vm5670, %v10188, 0
      %v10199 = vsel %vm5670, %v10190, 0
      %v10201 = vsel %vm5670, %v10192, 0
      %10203 = vmatprep.subr.mxu0 0.0
      %10204 = vmatpush1.msra.mxu0 %v10193
      %10205 = vmatprep.subr.mxu0 0.0
      %10206 = vmatpush1.msra.mxu0 %v10194
      %10207 = vmatprep.subr.mxu0 0.0
      %10208 = vmatpush1.msra.mxu0 %v10195
      %10209 = vmatprep.subr.mxu0 0.0
      %10210 = vmatpush1.msra.mxu0 %v10196
      %10211 = vmatprep.subr.mxu0 0.0
      %10212 = vmatpush1.msra.mxu0 0.0
      %10213 = vmatprep.subr.mxu0 0.0
      %10214 = vmatpush1.msra.mxu0 0.0
      %10215 = vmatprep.subr.mxu0 0.0
      %10216 = vmatpush1.msra.mxu0 0.0
      %10217 = vmatprep.subr.mxu0 0.0
      %10218 = vmatpush1.msra.mxu0 0.0
      %10219 = vmatprep.subr.mxu0 0.0
      %10220 = vmatpush1.msra.mxu0 0.0
      %10221 = vmatprep.subr.mxu0 0.0
      %10222 = vmatpush1.msra.mxu0 0.0
      %10223 = vmatprep.subr.mxu0 0.0
      %10224 = vmatpush1.msra.mxu0 0.0
      %10225 = vmatprep.subr.mxu0 0.0
      %10226 = vmatpush1.msra.mxu0 0.0
      %10227 = vmatprep.subr.mxu0 0.0
      %10228 = vmatpush1.msra.mxu0 0.0
      %10229 = vmatprep.subr.mxu0 0.0
      %10230 = vmatpush1.msra.mxu0 0.0
      %10231 = vmatprep.subr.mxu0 0.0
      %10232 = vmatpush1.msra.mxu0 0.0
      %10233 = vmatprep.subr.mxu0 0.0
      %10234 = vmatpush1.msra.mxu0 0.0
      %10235 = vmatprep.subr.mxu0 0.0
      %10236 = vmatpush1.msra.mxu0 0.0
      %10237 = vmatprep.subr.mxu0 0.0
      %10238 = vmatpush1.msra.mxu0 0.0
      %10239 = vmatprep.subr.mxu0 0.0
      %10240 = vmatpush1.msra.mxu0 0.0
      %10241 = vmatprep.subr.mxu0 0.0
      %10242 = vmatpush1.msra.mxu0 0.0
      %10243 = vmatprep.subr.mxu0 0.0
      %10244 = vmatpush1.msra.mxu0 0.0
      %10245 = vmatprep.subr.mxu0 0.0
      %10246 = vmatpush1.msra.mxu0 0.0
      %10247 = vmatprep.subr.mxu0 0.0
      %10248 = vmatpush1.msra.mxu0 0.0
      %10249 = vmatprep.subr.mxu0 0.0
      %10250 = vmatpush1.msra.mxu0 0.0
      %10251 = vmatprep.subr.mxu0 0.0
      %10252 = vmatpush1.msra.mxu0 0.0
      %10253 = vmatprep.subr.mxu0 0.0
      %10254 = vmatpush1.msra.mxu0 0.0
      %10255 = vmatprep.subr.mxu0 0.0
      %10256 = vmatpush1.msra.mxu0 0.0
      %10257 = vmatprep.subr.mxu0 0.0
      %10258 = vmatpush1.msra.mxu0 0.0
      %10259 = vmatprep.subr.mxu0 0.0
      %10260 = vmatpush1.msra.mxu0 0.0
      %10261 = vmatprep.subr.mxu0 0.0
      %10262 = vmatpush1.msra.mxu0 0.0
      %10263 = vmatprep.subr.mxu0 0.0
      %10264 = vmatpush1.msra.mxu0 0.0
      %10265 = vmatprep.subr.mxu0 0.0
      %10266 = vmatpush1.msra.mxu0 0.0
      %10267 = vmatprep.mubr.f32.mxu0 0.0
      %10268 = vmatmul.mubr.f32.gmra.mrb[0].mxu0 %v6993
      %v10269 = vpop.f32.mrb[0].mxu0
      %v10270 = vadd.f32 0.0, %v10269
      %v10271 = vpop.f32.mrb[0].mxu0
      %10272 = vmatprep.mubr.f32.mxu0 0.0
      %10273 = vmatmul.mubr.f32.gmra.mrb[0].mxu0 %v6995
      %v10274 = vpop.f32.mrb[0].mxu0
      %v10275 = vadd.f32 0.0, %v10274
      %v10276 = vpop.f32.mrb[0].mxu0
      %10277 = vmatprep.mubr.f32.mxu0 0.0
      %10278 = vmatmul.mubr.f32.gmra.mrb[0].mxu0 %v6997
      %v10279 = vpop.f32.mrb[0].mxu0
      %v10280 = vadd.f32 0.0, %v10279
      %v10281 = vpop.f32.mrb[0].mxu0
      %10282 = vmatprep.mubr.f32.mxu0 0.0
      %10283 = vmatmul.mubr.f32.gmra.mrb[0].mxu0 %v6999
      %v10284 = vpop.f32.mrb[0].mxu0
      %v10285 = vadd.f32 0.0, %v10284
      %v10286 = vpop.f32.mrb[0].mxu0
      %10287 = vmatprep.mubr.f32.mxu0 0.0
      %10288 = vmatmul.mubr.f32.gmra.mrb[0].mxu0 %v7001
      %v10289 = vpop.f32.mrb[0].mxu0
      %v10290 = vadd.f32 0.0, %v10289
      %v10291 = vpop.f32.mrb[0].mxu0
      %10292 = vmatprep.mubr.f32.mxu0 0.0
      %10293 = vmatmul.mubr.f32.gmra.mrb[0].mxu0 %v7003
      %v10294 = vpop.f32.mrb[0].mxu0
      %v10295 = vadd.f32 0.0, %v10294
      %v10296 = vpop.f32.mrb[0].mxu0
      %10297 = vmatprep.mubr.f32.mxu0 0.0
      %10298 = vmatmul.mubr.f32.gmra.mrb[0].mxu0 %v7005
      %v10299 = vpop.f32.mrb[0].mxu0
      %v10300 = vadd.f32 0.0, %v10299
      %v10301 = vpop.f32.mrb[0].mxu0
      %10302 = vmatprep.mubr.f32.mxu0 0.0
      %10303 = vmatmul.mubr.f32.gmra.mrb[0].mxu0 %v7007
      %v10304 = vpop.f32.mrb[0].mxu0
      %v10305 = vadd.f32 0.0, %v10304
      %v10306 = vpop.f32.mrb[0].mxu0
      %10307 = vmatprep.mubr.f32.mxu0 0.0
      %10308 = vmatmul.mubr.f32.gmra.mrb[0].mxu0 %v7009
      %v10309 = vpop.f32.mrb[0].mxu0
      %v10310 = vadd.f32 0.0, %v10309
      %v10311 = vpop.f32.mrb[0].mxu0
      %10312 = vmatprep.mubr.f32.mxu0 0.0
      %10313 = vmatmul.mubr.f32.gmra.mrb[0].mxu0 %v7011
      %v10314 = vpop.f32.mrb[0].mxu0
      %v10315 = vadd.f32 0.0, %v10314
      %v10316 = vpop.f32.mrb[0].mxu0
      %10317 = vmatprep.mubr.f32.mxu0 0.0
      %10318 = vmatmul.mubr.f32.gmra.mrb[0].mxu0 %v7013
      %v10319 = vpop.f32.mrb[0].mxu0
      %v10320 = vadd.f32 0.0, %v10319
      %v10321 = vpop.f32.mrb[0].mxu0
      %10322 = vmatprep.mubr.f32.mxu0 0.0
      %10323 = vmatmul.mubr.f32.gmra.mrb[0].mxu0 %v7015
      %v10324 = vpop.f32.mrb[0].mxu0
      %v10325 = vadd.f32 0.0, %v10324
      %v10326 = vpop.f32.mrb[0].mxu0
      %10327 = vmatprep.mubr.f32.mxu0 0.0
      %10328 = vmatmul.mubr.f32.gmra.mrb[0].mxu0 %v7017
      %v10329 = vpop.f32.mrb[0].mxu0
      %v10330 = vadd.f32 0.0, %v10329
      %v10331 = vpop.f32.mrb[0].mxu0
      %10332 = vmatprep.mubr.f32.mxu0 0.0
      %10333 = vmatmul.mubr.f32.gmra.mrb[0].mxu0 %v7019
      %v10334 = vpop.f32.mrb[0].mxu0
      %v10335 = vadd.f32 0.0, %v10334
      %v10336 = vpop.f32.mrb[0].mxu0
      %10337 = vmatprep.mubr.f32.mxu0 0.0
      %10338 = vmatmul.mubr.f32.gmra.mrb[0].mxu0 %v7021
      %v10339 = vpop.f32.mrb[0].mxu0
      %v10340 = vadd.f32 0.0, %v10339
      %v10341 = vpop.f32.mrb[0].mxu0
      %10342 = vmatprep.mubr.f32.mxu0 0.0
      %10343 = vmatmul.mubr.f32.gmra.mrb[0].mxu0 %v7023
      %v10344 = vpop.f32.mrb[0].mxu0
      %v10345 = vadd.f32 0.0, %v10344
      %v10346 = vpop.f32.mrb[0].mxu0
      %10347 = vmatprep.mubr.f32.mxu0 0.0
      %10348 = vmatmul.mubr.f32.gmra.mrb[0].mxu0 %v7025
      %v10349 = vpop.f32.mrb[0].mxu0
      %v10350 = vadd.f32 0.0, %v10349
      %v10351 = vpop.f32.mrb[0].mxu0
      %10352 = vmatprep.mubr.f32.mxu0 0.0
      %10353 = vmatmul.mubr.f32.gmra.mrb[0].mxu0 %v7027
      %v10354 = vpop.f32.mrb[0].mxu0
      %v10355 = vadd.f32 0.0, %v10354
      %v10356 = vpop.f32.mrb[0].mxu0
      %10357 = vmatprep.mubr.f32.mxu0 0.0
      %10358 = vmatmul.mubr.f32.gmra.mrb[0].mxu0 %v7029
      %v10359 = vpop.f32.mrb[0].mxu0
      %v10360 = vadd.f32 0.0, %v10359
      %v10361 = vpop.f32.mrb[0].mxu0
      %10362 = vmatprep.mubr.f32.mxu0 0.0
      %10363 = vmatmul.mubr.f32.gmra.mrb[0].mxu0 %v7031
      %v10364 = vpop.f32.mrb[0].mxu0
      %v10365 = vadd.f32 0.0, %v10364
      %v10366 = vpop.f32.mrb[0].mxu0
      %10367 = vmatprep.mubr.f32.mxu0 0.0
      %10368 = vmatmul.mubr.f32.gmra.mrb[0].mxu0 %v7033
      %v10369 = vpop.f32.mrb[0].mxu0
      %v10370 = vadd.f32 0.0, %v10369
      %v10371 = vpop.f32.mrb[0].mxu0
      %10372 = vmatprep.mubr.f32.mxu0 0.0
      %10373 = vmatmul.mubr.f32.gmra.mrb[0].mxu0 %v7035
      %v10374 = vpop.f32.mrb[0].mxu0
      %v10375 = vadd.f32 0.0, %v10374
      %v10376 = vpop.f32.mrb[0].mxu0
      %10377 = vmatprep.mubr.f32.mxu0 0.0
      %10378 = vmatmul.mubr.f32.gmra.mrb[0].mxu0 %v7037
      %v10379 = vpop.f32.mrb[0].mxu0
      %v10380 = vadd.f32 0.0, %v10379
      %v10381 = vpop.f32.mrb[0].mxu0
      %10382 = vmatprep.mubr.f32.mxu0 0.0
      %10383 = vmatmul.mubr.f32.gmra.mrb[0].mxu0 %v7039
      %v10384 = vpop.f32.mrb[0].mxu0
      %v10385 = vadd.f32 0.0, %v10384
      %v10386 = vpop.f32.mrb[0].mxu0
      %10387 = vmatprep.mubr.f32.mxu0 0.0
      %10388 = vmatmul.mubr.f32.gmra.mrb[0].mxu0 %v7041
      %v10389 = vpop.f32.mrb[0].mxu0
      %v10390 = vadd.f32 0.0, %v10389
      %v10391 = vpop.f32.mrb[0].mxu0
      %10392 = vmatprep.mubr.f32.mxu0 0.0
      %10393 = vmatmul.mubr.f32.gmra.mrb[0].mxu0 %v7043
      %v10394 = vpop.f32.mrb[0].mxu0
      %v10395 = vadd.f32 0.0, %v10394
      %v10396 = vpop.f32.mrb[0].mxu0
      %10397 = vmatprep.mubr.f32.mxu0 0.0
      %10398 = vmatmul.mubr.f32.gmra.mrb[0].mxu0 %v7045
      %v10399 = vpop.f32.mrb[0].mxu0
      %v10400 = vadd.f32 0.0, %v10399
      %v10401 = vpop.f32.mrb[0].mxu0
      %10402 = vmatprep.mubr.f32.mxu0 0.0
      %10403 = vmatmul.mubr.f32.gmra.mrb[0].mxu0 %v7047
      %v10404 = vpop.f32.mrb[0].mxu0
      %v10405 = vadd.f32 0.0, %v10404
      %v10406 = vpop.f32.mrb[0].mxu0
      %10407 = vmatprep.mubr.f32.mxu0 0.0
      %10408 = vmatmul.mubr.f32.gmra.mrb[0].mxu0 %v7049
      %v10409 = vpop.f32.mrb[0].mxu0
      %v10410 = vadd.f32 0.0, %v10409
      %v10411 = vpop.f32.mrb[0].mxu0
      %10412 = vmatprep.mubr.f32.mxu0 0.0
      %10413 = vmatmul.mubr.f32.gmra.mrb[0].mxu0 %v7051
      %v10414 = vpop.f32.mrb[0].mxu0
      %v10415 = vadd.f32 0.0, %v10414
      %v10416 = vpop.f32.mrb[0].mxu0
      %10417 = vmatprep.mubr.f32.mxu0 0.0
      %10418 = vmatmul.mubr.f32.gmra.mrb[0].mxu0 %v7053
      %v10419 = vpop.f32.mrb[0].mxu0
      %v10420 = vadd.f32 0.0, %v10419
      %v10421 = vpop.f32.mrb[0].mxu0
      %10422 = vmatprep.mubr.f32.mxu0 0.0
      %10423 = vmatmul.mubr.f32.gmra.mrb[0].mxu0 %v7055
      %v10424 = vpop.f32.mrb[0].mxu0
      %v10425 = vadd.f32 0.0, %v10424
      %v10426 = vpop.f32.mrb[0].mxu0
      %10427 = vmatprep.mubr.f32.mxu0 0.0
      %10428 = vmatmul.mubr.f32.gmra.mrb[0].mxu0 %v7057
      %v10429 = vpop.f32.mrb[0].mxu0
      %v10430 = vadd.f32 0.0, %v10429
      %v10431 = vpop.f32.mrb[0].mxu0
      %10432 = vmatprep.mubr.f32.mxu0 0.0
      %10433 = vmatmul.mubr.f32.gmra.mrb[0].mxu0 %v7059
      %v10434 = vpop.f32.mrb[0].mxu0
      %v10435 = vadd.f32 0.0, %v10434
      %v10436 = vpop.f32.mrb[0].mxu0
      %10437 = vmatprep.mubr.f32.mxu0 0.0
      %10438 = vmatmul.mubr.f32.gmra.mrb[0].mxu0 %v7061
      %v10439 = vpop.f32.mrb[0].mxu0
      %v10440 = vadd.f32 0.0, %v10439
      %v10441 = vpop.f32.mrb[0].mxu0
      %10442 = vmatprep.mubr.f32.mxu0 0.0
      %10443 = vmatmul.mubr.f32.gmra.mrb[0].mxu0 %v7063
      %v10444 = vpop.f32.mrb[0].mxu0
      %v10445 = vadd.f32 0.0, %v10444
      %v10446 = vpop.f32.mrb[0].mxu0
      %10447 = vmatprep.mubr.f32.mxu0 0.0
      %10448 = vmatmul.mubr.f32.gmra.mrb[0].mxu0 %v7065
      %v10449 = vpop.f32.mrb[0].mxu0
      %v10450 = vadd.f32 0.0, %v10449
      %v10451 = vpop.f32.mrb[0].mxu0
      %10452 = vmatprep.mubr.f32.mxu0 0.0
      %10453 = vmatmul.mubr.f32.gmra.mrb[0].mxu0 %v7067
      %v10454 = vpop.f32.mrb[0].mxu0
      %v10455 = vadd.f32 0.0, %v10454
      %v10456 = vpop.f32.mrb[0].mxu0
      %10457 = vmatprep.mubr.f32.mxu0 0.0
      %10458 = vmatmul.mubr.f32.gmra.mrb[0].mxu0 %v7069
      %v10459 = vpop.f32.mrb[0].mxu0
      %v10460 = vadd.f32 0.0, %v10459
      %v10461 = vpop.f32.mrb[0].mxu0
      %10462 = vmatprep.mubr.f32.mxu0 0.0
      %10463 = vmatmul.mubr.f32.gmra.mrb[0].mxu0 %v7071
      %v10464 = vpop.f32.mrb[0].mxu0
      %v10465 = vadd.f32 0.0, %v10464
      %v10466 = vpop.f32.mrb[0].mxu0
      %10467 = vmatprep.mubr.f32.mxu0 0.0
      %10468 = vmatmul.mubr.f32.gmra.mrb[0].mxu0 %v7073
      %v10469 = vpop.f32.mrb[0].mxu0
      %v10470 = vadd.f32 0.0, %v10469
      %v10471 = vpop.f32.mrb[0].mxu0
      %10472 = vmatprep.mubr.f32.mxu0 0.0
      %10473 = vmatmul.mubr.f32.gmra.mrb[0].mxu0 %v7075
      %v10474 = vpop.f32.mrb[0].mxu0
      %v10475 = vadd.f32 0.0, %v10474
      %v10476 = vpop.f32.mrb[0].mxu0
      %10477 = vmatprep.mubr.f32.mxu0 0.0
      %10478 = vmatmul.mubr.f32.gmra.mrb[0].mxu0 %v7077
      %v10479 = vpop.f32.mrb[0].mxu0
      %v10480 = vadd.f32 0.0, %v10479
      %v10481 = vpop.f32.mrb[0].mxu0
      %10482 = vmatprep.mubr.f32.mxu0 0.0
      %10483 = vmatmul.mubr.f32.gmra.mrb[0].mxu0 %v7079
      %v10484 = vpop.f32.mrb[0].mxu0
      %v10485 = vadd.f32 0.0, %v10484
      %v10486 = vpop.f32.mrb[0].mxu0
      %10487 = vmatprep.mubr.f32.mxu0 0.0
      %10488 = vmatmul.mubr.f32.gmra.mrb[0].mxu0 %v7081
      %v10489 = vpop.f32.mrb[0].mxu0
      %v10490 = vadd.f32 0.0, %v10489
      %v10491 = vpop.f32.mrb[0].mxu0
      %10492 = vmatprep.mubr.f32.mxu0 0.0
      %10493 = vmatmul.mubr.f32.gmra.mrb[0].mxu0 %v7083
      %v10494 = vpop.f32.mrb[0].mxu0
      %v10495 = vadd.f32 0.0, %v10494
      %v10496 = vpop.f32.mrb[0].mxu0
      %10497 = vmatprep.mubr.f32.mxu0 0.0
      %10498 = vmatmul.mubr.f32.gmra.mrb[0].mxu0 %v7085
      %v10499 = vpop.f32.mrb[0].mxu0
      %v10500 = vadd.f32 0.0, %v10499
      %v10501 = vpop.f32.mrb[0].mxu0
      %10502 = vmatprep.mubr.f32.mxu0 0.0
      %10503 = vmatmul.mubr.f32.gmra.mrb[0].mxu0 %v7087
      %v10504 = vpop.f32.mrb[0].mxu0
      %v10505 = vadd.f32 0.0, %v10504
      %v10506 = vpop.f32.mrb[0].mxu0
      %10507 = vmatprep.mubr.f32.mxu0 0.0
      %10508 = vmatmul.mubr.f32.gmra.mrb[0].mxu0 %v7089
      %v10509 = vpop.f32.mrb[0].mxu0
      %v10510 = vadd.f32 0.0, %v10509
      %v10511 = vpop.f32.mrb[0].mxu0
      %10512 = vmatprep.mubr.f32.mxu0 0.0
      %10513 = vmatmul.mubr.f32.gmra.mrb[0].mxu0 %v7091
      %v10514 = vpop.f32.mrb[0].mxu0
      %v10515 = vadd.f32 0.0, %v10514
      %v10516 = vpop.f32.mrb[0].mxu0
      %10517 = vmatprep.mubr.f32.mxu0 0.0
      %10518 = vmatmul.mubr.f32.gmra.mrb[0].mxu0 %v7093
      %v10519 = vpop.f32.mrb[0].mxu0
      %v10520 = vadd.f32 0.0, %v10519
      %v10521 = vpop.f32.mrb[0].mxu0
      %10522 = vmatprep.mubr.f32.mxu0 0.0
      %10523 = vmatmul.mubr.f32.gmra.mrb[0].mxu0 %v7095
      %v10524 = vpop.f32.mrb[0].mxu0
      %v10525 = vadd.f32 0.0, %v10524
      %v10526 = vpop.f32.mrb[0].mxu0
      %10527 = vmatprep.mubr.f32.mxu0 0.0
      %10528 = vmatmul.mubr.f32.gmra.mrb[0].mxu0 %v7097
      %v10529 = vpop.f32.mrb[0].mxu0
      %v10530 = vadd.f32 0.0, %v10529
      %v10531 = vpop.f32.mrb[0].mxu0
      %10532 = vmatprep.mubr.f32.mxu0 0.0
      %10533 = vmatmul.mubr.f32.gmra.mrb[0].mxu0 %v7099
      %v10534 = vpop.f32.mrb[0].mxu0
      %v10535 = vadd.f32 0.0, %v10534
      %v10536 = vpop.f32.mrb[0].mxu0
      %10537 = vmatprep.mubr.f32.mxu0 0.0
      %10538 = vmatmul.mubr.f32.gmra.mrb[0].mxu0 %v7101
      %v10539 = vpop.f32.mrb[0].mxu0
      %v10540 = vadd.f32 0.0, %v10539
      %v10541 = vpop.f32.mrb[0].mxu0
      %10542 = vmatprep.mubr.f32.mxu0 0.0
      %10543 = vmatmul.mubr.f32.gmra.mrb[0].mxu0 %v7103
      %v10544 = vpop.f32.mrb[0].mxu0
      %v10545 = vadd.f32 0.0, %v10544
      %v10546 = vpop.f32.mrb[0].mxu0
      %10547 = vmatprep.mubr.f32.mxu0 0.0
      %10548 = vmatmul.mubr.f32.gmra.mrb[0].mxu0 %v7105
      %v10549 = vpop.f32.mrb[0].mxu0
      %v10550 = vadd.f32 0.0, %v10549
      %v10551 = vpop.f32.mrb[0].mxu0
      %10552 = vmatprep.mubr.f32.mxu0 0.0
      %10553 = vmatmul.mubr.f32.gmra.mrb[0].mxu0 %v7107
      %v10554 = vpop.f32.mrb[0].mxu0
      %v10555 = vadd.f32 0.0, %v10554
      %v10556 = vpop.f32.mrb[0].mxu0
      %10557 = vmatprep.mubr.f32.mxu0 0.0
      %10558 = vmatmul.mubr.f32.gmra.mrb[0].mxu0 %v7109
      %v10559 = vpop.f32.mrb[0].mxu0
      %v10560 = vadd.f32 0.0, %v10559
      %v10561 = vpop.f32.mrb[0].mxu0
      %10562 = vmatprep.mubr.f32.mxu0 0.0
      %10563 = vmatmul.mubr.f32.gmra.mrb[0].mxu0 %v7111
      %v10564 = vpop.f32.mrb[0].mxu0
      %v10565 = vadd.f32 0.0, %v10564
      %v10566 = vpop.f32.mrb[0].mxu0
      %10567 = vmatprep.mubr.f32.mxu0 0.0
      %10568 = vmatmul.mubr.f32.gmra.mrb[0].mxu0 %v7113
      %v10569 = vpop.f32.mrb[0].mxu0
      %v10570 = vadd.f32 0.0, %v10569
      %v10571 = vpop.f32.mrb[0].mxu0
      %10572 = vmatprep.mubr.f32.mxu0 0.0
      %10573 = vmatmul.mubr.f32.gmra.mrb[0].mxu0 %v7115
      %v10574 = vpop.f32.mrb[0].mxu0
      %v10575 = vadd.f32 0.0, %v10574
      %v10576 = vpop.f32.mrb[0].mxu0
      %10577 = vmatprep.mubr.f32.mxu0 0.0
      %10578 = vmatmul.mubr.f32.gmra.mrb[0].mxu0 %v7117
      %v10579 = vpop.f32.mrb[0].mxu0
      %v10580 = vadd.f32 0.0, %v10579
      %v10581 = vpop.f32.mrb[0].mxu0
      %10582 = vmatprep.mubr.f32.mxu0 0.0
      %10583 = vmatmul.mubr.f32.gmra.mrb[0].mxu0 %v7119
      %v10584 = vpop.f32.mrb[0].mxu0
      %v10585 = vadd.f32 0.0, %v10584
      %v10586 = vpop.f32.mrb[0].mxu0
      %10587 = vmatprep.mubr.f32.mxu0 0.0
      %10588 = vmatmul.mubr.f32.gmra.mrb[0].mxu0 %v7121
      %v10589 = vpop.f32.mrb[0].mxu0
      %v10590 = vadd.f32 0.0, %v10589
      %v10591 = vpop.f32.mrb[0].mxu0
      %10592 = vmatprep.mubr.f32.mxu0 0.0
      %10593 = vmatmul.mubr.f32.gmra.mrb[0].mxu0 %v7123
      %v10594 = vpop.f32.mrb[0].mxu0
      %v10595 = vadd.f32 0.0, %v10594
      %v10596 = vpop.f32.mrb[0].mxu0
      %10597 = vmatprep.mubr.f32.mxu0 0.0
      %10598 = vmatmul.mubr.f32.gmra.mrb[0].mxu0 %v8658
      %v10599 = vpop.f32.mrb[0].mxu0
      %v10600 = vadd.f32 0.0, %v10599
      %v10601 = vpop.f32.mrb[0].mxu0
      %10602 = vmatprep.mubr.f32.mxu0 0.0
      %10603 = vmatmul.mubr.f32.gmra.mrb[0].mxu0 %v8660
      %v10604 = vpop.f32.mrb[0].mxu0
      %v10605 = vadd.f32 0.0, %v10604
      %v10606 = vpop.f32.mrb[0].mxu0
      %10607 = vmatprep.mubr.f32.mxu0 0.0
      %10608 = vmatmul.mubr.f32.gmra.mrb[0].mxu0 %v8662
      %v10609 = vpop.f32.mrb[0].mxu0
      %v10610 = vadd.f32 0.0, %v10609
      %v10611 = vpop.f32.mrb[0].mxu0
      %10612 = vmatprep.mubr.f32.mxu0 0.0
      %10613 = vmatmul.mubr.f32.gmra.mrb[0].mxu0 %v10197
      %v10614 = vpop.f32.mrb[0].mxu0
      %v10615 = vadd.f32 0.0, %v10614
      %v10616 = vpop.f32.mrb[0].mxu0
      %10617 = vmatprep.mubr.f32.mxu0 0.0
      %10618 = vmatmul.mubr.f32.gmra.mrb[0].mxu0 %v10199
      %v10619 = vpop.f32.mrb[0].mxu0
      %v10620 = vadd.f32 0.0, %v10619
      %v10621 = vpop.f32.mrb[0].mxu0
      %10622 = vmatprep.mubr.f32.mxu0 0.0
      %10623 = vmatmul.mubr.f32.gmra.mrb[0].mxu0 %v10201
      %v10624 = vpop.f32.mrb[0].mxu0
      %v10625 = vadd.f32 0.0, %v10624
      %v10626 = vpop.f32.mrb[0].mxu0
      %10627 = vdwg.mxu0
      %v10628 = vadd.f32 %v10114, %v10270
      %v10629 = vadd.f32 %v10115, %v10275
      %v10630 = vadd.f32 %v10116, %v10280
      %v10631 = vadd.f32 %v10117, %v10285
      %v10632 = vadd.f32 %v10118, %v10290
      %v10633 = vadd.f32 %v10119, %v10295
      %v10634 = vadd.f32 %v10120, %v10300
      %v10635 = vadd.f32 %v10121, %v10305
      %v10636 = vadd.f32 %v10122, %v10310
      %v10637 = vadd.f32 %v10123, %v10315
      %v10638 = vadd.f32 %v10124, %v10320
      %v10639 = vadd.f32 %v10125, %v10325
      %v10640 = vadd.f32 %v10126, %v10330
      %v10641 = vadd.f32 %v10127, %v10335
      %v10642 = vadd.f32 %v10128, %v10340
      %v10643 = vadd.f32 %v10129, %v10345
      %v10644 = vadd.f32 %v10130, %v10350
      %v10645 = vadd.f32 %v10131, %v10355
      %v10646 = vadd.f32 %v10132, %v10360
      %v10647 = vadd.f32 %v10133, %v10365
      %v10648 = vadd.f32 %v10134, %v10370
      %v10649 = vadd.f32 %v10135, %v10375
      %v10650 = vadd.f32 %v10136, %v10380
      %v10651 = vadd.f32 %v10137, %v10385
      %v10652 = vadd.f32 %v10138, %v10390
      %v10653 = vadd.f32 %v10139, %v10395
      %v10654 = vadd.f32 %v10140, %v10400
      %v10655 = vadd.f32 %v10141, %v10405
      %v10656 = vadd.f32 %v10142, %v10410
      %v10657 = vadd.f32 %v10143, %v10415
      %v10658 = vadd.f32 %v10144, %v10420
      %v10659 = vadd.f32 %v10145, %v10425
      %v10660 = vadd.f32 %v10146, %v10430
      %v10661 = vadd.f32 %v10147, %v10435
      %v10662 = vadd.f32 %v10148, %v10440
      %v10663 = vadd.f32 %v10149, %v10445
      %v10664 = vadd.f32 %v10150, %v10450
      %v10665 = vadd.f32 %v10151, %v10455
      %v10666 = vadd.f32 %v10152, %v10460
      %v10667 = vadd.f32 %v10153, %v10465
      %v10668 = vadd.f32 %v10154, %v10470
      %v10669 = vadd.f32 %v10155, %v10475
      %v10670 = vadd.f32 %v10156, %v10480
      %v10671 = vadd.f32 %v10157, %v10485
      %v10672 = vadd.f32 %v10158, %v10490
      %v10673 = vadd.f32 %v10159, %v10495
      %v10674 = vadd.f32 %v10160, %v10500
      %v10675 = vadd.f32 %v10161, %v10505
      %v10676 = vadd.f32 %v10162, %v10510
      %v10677 = vadd.f32 %v10163, %v10515
      %v10678 = vadd.f32 %v10164, %v10520
      %v10679 = vadd.f32 %v10165, %v10525
      %v10680 = vadd.f32 %v10166, %v10530
      %v10681 = vadd.f32 %v10167, %v10535
      %v10682 = vadd.f32 %v10168, %v10540
      %v10683 = vadd.f32 %v10169, %v10545
      %v10684 = vadd.f32 %v10170, %v10550
      %v10685 = vadd.f32 %v10171, %v10555
      %v10686 = vadd.f32 %v10172, %v10560
      %v10687 = vadd.f32 %v10173, %v10565
      %v10688 = vadd.f32 %v10174, %v10570
      %v10689 = vadd.f32 %v10175, %v10575
      %v10690 = vadd.f32 %v10176, %v10580
      %v10691 = vadd.f32 %v10177, %v10585
      %v10692 = vadd.f32 %v10178, %v10590
      %v10693 = vadd.f32 %v10179, %v10595
      %v10694 = vadd.f32 %v10180, %v10600
      %v10695 = vadd.f32 %v10181, %v10605
      %v10696 = vadd.f32 %v10182, %v10610
      %v10697 = vadd.f32 %v10183, %v10615
      %v10698 = vadd.f32 %v10184, %v10620
      %v10699 = vadd.f32 %v10185, %v10625
      %v10700 = vld [vmem:[%s4] sm:$0x1]
      %v10702 = vlaneseq
      %v10703 = vshrl.u32 %v10702, 7
      %v10704 = vsub.s32 0, %v10703
      %v10705 = vrot.slane %v10700, %v10704
      %v10707 = vadd.f32 %v10628, %v10705
      %v10708 = vadd.f32 %v10629, %v10705
      %v10709 = vadd.f32 %v10630, %v10705
      %v10710 = vadd.f32 %v10631, %v10705
      %v10711 = vadd.f32 %v10632, %v10705
      %v10712 = vadd.f32 %v10633, %v10705
      %v10713 = vadd.f32 %v10634, %v10705
      %v10714 = vadd.f32 %v10635, %v10705
      %v10715 = vadd.f32 %v10636, %v10705
      %v10716 = vadd.f32 %v10637, %v10705
      %v10717 = vadd.f32 %v10638, %v10705
      %v10718 = vadd.f32 %v10639, %v10705
      %v10719 = vadd.f32 %v10640, %v10705
      %v10720 = vadd.f32 %v10641, %v10705
      %v10721 = vadd.f32 %v10642, %v10705
      %v10722 = vadd.f32 %v10643, %v10705
      %v10723 = vadd.f32 %v10644, %v10705
      %v10724 = vadd.f32 %v10645, %v10705
      %v10725 = vadd.f32 %v10646, %v10705
      %v10726 = vadd.f32 %v10647, %v10705
      %v10727 = vadd.f32 %v10648, %v10705
      %v10728 = vadd.f32 %v10649, %v10705
      %v10729 = vadd.f32 %v10650, %v10705
      %v10730 = vadd.f32 %v10651, %v10705
      %v10731 = vadd.f32 %v10652, %v10705
      %v10732 = vadd.f32 %v10653, %v10705
      %v10733 = vadd.f32 %v10654, %v10705
      %v10734 = vadd.f32 %v10655, %v10705
      %v10735 = vadd.f32 %v10656, %v10705
      %v10736 = vadd.f32 %v10657, %v10705
      %v10737 = vadd.f32 %v10658, %v10705
      %v10738 = vadd.f32 %v10659, %v10705
      %v10739 = vadd.f32 %v10660, %v10705
      %v10740 = vadd.f32 %v10661, %v10705
      %v10741 = vadd.f32 %v10662, %v10705
      %v10742 = vadd.f32 %v10663, %v10705
      %v10743 = vadd.f32 %v10664, %v10705
      %v10744 = vadd.f32 %v10665, %v10705
      %v10745 = vadd.f32 %v10666, %v10705
      %v10746 = vadd.f32 %v10667, %v10705
      %v10747 = vadd.f32 %v10668, %v10705
      %v10748 = vadd.f32 %v10669, %v10705
      %v10749 = vadd.f32 %v10670, %v10705
      %v10750 = vadd.f32 %v10671, %v10705
      %v10751 = vadd.f32 %v10672, %v10705
      %v10752 = vadd.f32 %v10673, %v10705
      %v10753 = vadd.f32 %v10674, %v10705
      %v10754 = vadd.f32 %v10675, %v10705
      %v10755 = vadd.f32 %v10676, %v10705
      %v10756 = vadd.f32 %v10677, %v10705
      %v10757 = vadd.f32 %v10678, %v10705
      %v10758 = vadd.f32 %v10679, %v10705
      %v10759 = vadd.f32 %v10680, %v10705
      %v10760 = vadd.f32 %v10681, %v10705
      %v10761 = vadd.f32 %v10682, %v10705
      %v10762 = vadd.f32 %v10683, %v10705
      %v10763 = vadd.f32 %v10684, %v10705
      %v10764 = vadd.f32 %v10685, %v10705
      %v10765 = vadd.f32 %v10686, %v10705
      %v10766 = vadd.f32 %v10687, %v10705
      %v10767 = vadd.f32 %v10688, %v10705
      %v10768 = vadd.f32 %v10689, %v10705
      %v10769 = vadd.f32 %v10690, %v10705
      %v10770 = vadd.f32 %v10691, %v10705
      %v10771 = vadd.f32 %v10692, %v10705
      %v10772 = vadd.f32 %v10693, %v10705
      %v10773 = vadd.f32 %v10694, %v10705
      %v10774 = vadd.f32 %v10695, %v10705
      %v10775 = vadd.f32 %v10696, %v10705
      %v10776 = vadd.f32 %v10697, %v10705
      %v10777 = vadd.f32 %v10698, %v10705
      %v10778 = vadd.f32 %v10699, %v10705
      %v10779 = vmax.f32 %v10707, 0.0
      %v10780 = vmax.f32 %v10708, 0.0
      %v10781 = vmax.f32 %v10709, 0.0
      %v10782 = vmax.f32 %v10710, 0.0
      %v10783 = vmax.f32 %v10711, 0.0
      %v10784 = vmax.f32 %v10712, 0.0
      %v10785 = vmax.f32 %v10713, 0.0
      %v10786 = vmax.f32 %v10714, 0.0
      %v10787 = vmax.f32 %v10715, 0.0
      %v10788 = vmax.f32 %v10716, 0.0
      %v10789 = vmax.f32 %v10717, 0.0
      %v10790 = vmax.f32 %v10718, 0.0
      %v10791 = vmax.f32 %v10719, 0.0
      %v10792 = vmax.f32 %v10720, 0.0
      %v10793 = vmax.f32 %v10721, 0.0
      %v10794 = vmax.f32 %v10722, 0.0
      %v10795 = vmax.f32 %v10723, 0.0
      %v10796 = vmax.f32 %v10724, 0.0
      %v10797 = vmax.f32 %v10725, 0.0
      %v10798 = vmax.f32 %v10726, 0.0
      %v10799 = vmax.f32 %v10727, 0.0
      %v10800 = vmax.f32 %v10728, 0.0
      %v10801 = vmax.f32 %v10729, 0.0
      %v10802 = vmax.f32 %v10730, 0.0
      %v10803 = vmax.f32 %v10731, 0.0
      %v10804 = vmax.f32 %v10732, 0.0
      %v10805 = vmax.f32 %v10733, 0.0
      %v10806 = vmax.f32 %v10734, 0.0
      %v10807 = vmax.f32 %v10735, 0.0
      %v10808 = vmax.f32 %v10736, 0.0
      %v10809 = vmax.f32 %v10737, 0.0
      %v10810 = vmax.f32 %v10738, 0.0
      %v10811 = vmax.f32 %v10739, 0.0
      %v10812 = vmax.f32 %v10740, 0.0
      %v10813 = vmax.f32 %v10741, 0.0
      %v10814 = vmax.f32 %v10742, 0.0
      %v10815 = vmax.f32 %v10743, 0.0
      %v10816 = vmax.f32 %v10744, 0.0
      %v10817 = vmax.f32 %v10745, 0.0
      %v10818 = vmax.f32 %v10746, 0.0
      %v10819 = vmax.f32 %v10747, 0.0
      %v10820 = vmax.f32 %v10748, 0.0
      %v10821 = vmax.f32 %v10749, 0.0
      %v10822 = vmax.f32 %v10750, 0.0
      %v10823 = vmax.f32 %v10751, 0.0
      %v10824 = vmax.f32 %v10752, 0.0
      %v10825 = vmax.f32 %v10753, 0.0
      %v10826 = vmax.f32 %v10754, 0.0
      %v10827 = vmax.f32 %v10755, 0.0
      %v10828 = vmax.f32 %v10756, 0.0
      %v10829 = vmax.f32 %v10757, 0.0
      %v10830 = vmax.f32 %v10758, 0.0
      %v10831 = vmax.f32 %v10759, 0.0
      %v10832 = vmax.f32 %v10760, 0.0
      %v10833 = vmax.f32 %v10761, 0.0
      %v10834 = vmax.f32 %v10762, 0.0
      %v10835 = vmax.f32 %v10763, 0.0
      %v10836 = vmax.f32 %v10764, 0.0
      %v10837 = vmax.f32 %v10765, 0.0
      %v10838 = vmax.f32 %v10766, 0.0
      %v10839 = vmax.f32 %v10767, 0.0
      %v10840 = vmax.f32 %v10768, 0.0
      %v10841 = vmax.f32 %v10769, 0.0
      %v10842 = vmax.f32 %v10770, 0.0
      %v10843 = vmax.f32 %v10771, 0.0
      %v10844 = vmax.f32 %v10772, 0.0
      %v10845 = vmax.f32 %v10773, 0.0
      %v10846 = vmax.f32 %v10774, 0.0
      %v10847 = vmax.f32 %v10775, 0.0
      %v10848 = vmax.f32 %v10776, 0.0
      %v10849 = vmax.f32 %v10777, 0.0
      %v10850 = vmax.f32 %v10778, 0.0
      %v10920 = vrot.slane %v10779, 1
      %v10921 = vrot.slane %v10780, 1
      %v10922 = vsel %vm1310, %v10920, %v10921
      %v10923 = vrot.slane %v10781, 1
      %v10924 = vsel %vm1310, %v10921, %v10923
      %v10925 = vrot.slane %v10782, 1
      %v10926 = vsel %vm1310, %v10923, %v10925
      %v10927 = vrot.slane %v10783, 1
      %v10928 = vsel %vm1310, %v10925, %v10927
      %v10929 = vrot.slane %v10784, 1
      %v10930 = vsel %vm1310, %v10927, %v10929
      %v10931 = vrot.slane %v10785, 1
      %v10932 = vsel %vm1310, %v10929, %v10931
      %v10933 = vrot.slane %v10786, 1
      %v10934 = vsel %vm1310, %v10931, %v10933
      %v10935 = vrot.slane %v10787, 1
      %v10936 = vsel %vm1310, %v10933, %v10935
      %v10937 = vrot.slane %v10788, 1
      %v10938 = vsel %vm1310, %v10935, %v10937
      %v10939 = vrot.slane %v10789, 1
      %v10940 = vsel %vm1310, %v10937, %v10939
      %v10941 = vrot.slane %v10790, 1
      %v10942 = vsel %vm1310, %v10939, %v10941
      %v10943 = vrot.slane %v10791, 1
      %v10944 = vsel %vm1310, %v10941, %v10943
      %v10945 = vrot.slane %v10792, 1
      %v10946 = vsel %vm1310, %v10943, %v10945
      %v10947 = vrot.slane %v10793, 1
      %v10948 = vsel %vm1310, %v10945, %v10947
      %v10949 = vrot.slane %v10794, 1
      %v10950 = vsel %vm1310, %v10947, %v10949
      %v10951 = vrot.slane %v10795, 1
      %v10952 = vsel %vm1310, %v10949, %v10951
      %v10953 = vrot.slane %v10796, 1
      %v10954 = vsel %vm1310, %v10951, %v10953
      %v10955 = vrot.slane %v10797, 1
      %v10956 = vsel %vm1310, %v10953, %v10955
      %v10957 = vrot.slane %v10798, 1
      %v10958 = vsel %vm1310, %v10955, %v10957
      %v10959 = vrot.slane %v10799, 1
      %v10960 = vsel %vm1310, %v10957, %v10959
      %v10961 = vrot.slane %v10800, 1
      %v10962 = vsel %vm1310, %v10959, %v10961
      %v10963 = vrot.slane %v10801, 1
      %v10964 = vsel %vm1310, %v10961, %v10963
      %v10965 = vrot.slane %v10802, 1
      %v10966 = vsel %vm1310, %v10963, %v10965
      %v10967 = vrot.slane %v10803, 1
      %v10968 = vsel %vm1310, %v10965, %v10967
      %v10969 = vrot.slane %v10804, 1
      %v10970 = vsel %vm1310, %v10967, %v10969
      %v10971 = vrot.slane %v10805, 1
      %v10972 = vsel %vm1310, %v10969, %v10971
      %v10973 = vrot.slane %v10806, 1
      %v10974 = vsel %vm1310, %v10971, %v10973
      %v10975 = vrot.slane %v10807, 1
      %v10976 = vsel %vm1310, %v10973, %v10975
      %v10977 = vrot.slane %v10808, 1
      %v10978 = vsel %vm1310, %v10975, %v10977
      %v10979 = vrot.slane %v10809, 1
      %v10980 = vsel %vm1310, %v10977, %v10979
      %v10981 = vrot.slane %v10810, 1
      %v10982 = vsel %vm1310, %v10979, %v10981
      %v10983 = vrot.slane %v10811, 1
      %v10984 = vsel %vm1310, %v10981, %v10983
      %v10985 = vrot.slane %v10812, 1
      %v10986 = vsel %vm1310, %v10983, %v10985
      %v10987 = vrot.slane %v10813, 1
      %v10988 = vsel %vm1310, %v10985, %v10987
      %v10989 = vrot.slane %v10814, 1
      %v10990 = vsel %vm1310, %v10987, %v10989
      %v10991 = vrot.slane %v10815, 1
      %v10992 = vsel %vm1310, %v10989, %v10991
      %v10993 = vrot.slane %v10816, 1
      %v10994 = vsel %vm1310, %v10991, %v10993
      %v10995 = vrot.slane %v10817, 1
      %v10996 = vsel %vm1310, %v10993, %v10995
      %v10997 = vrot.slane %v10818, 1
      %v10998 = vsel %vm1310, %v10995, %v10997
      %v10999 = vrot.slane %v10819, 1
      %v11000 = vsel %vm1310, %v10997, %v10999
      %v11001 = vrot.slane %v10820, 1
      %v11002 = vsel %vm1310, %v10999, %v11001
      %v11003 = vrot.slane %v10821, 1
      %v11004 = vsel %vm1310, %v11001, %v11003
      %v11005 = vrot.slane %v10822, 1
      %v11006 = vsel %vm1310, %v11003, %v11005
      %v11007 = vrot.slane %v10823, 1
      %v11008 = vsel %vm1310, %v11005, %v11007
      %v11009 = vrot.slane %v10824, 1
      %v11010 = vsel %vm1310, %v11007, %v11009
      %v11011 = vrot.slane %v10825, 1
      %v11012 = vsel %vm1310, %v11009, %v11011
      %v11013 = vrot.slane %v10826, 1
      %v11014 = vsel %vm1310, %v11011, %v11013
      %v11015 = vrot.slane %v10827, 1
      %v11016 = vsel %vm1310, %v11013, %v11015
      %v11017 = vrot.slane %v10828, 1
      %v11018 = vsel %vm1310, %v11015, %v11017
      %v11019 = vrot.slane %v10829, 1
      %v11020 = vsel %vm1310, %v11017, %v11019
      %v11021 = vrot.slane %v10830, 1
      %v11022 = vsel %vm1310, %v11019, %v11021
      %v11023 = vrot.slane %v10831, 1
      %v11024 = vsel %vm1310, %v11021, %v11023
      %v11025 = vrot.slane %v10832, 1
      %v11026 = vsel %vm1310, %v11023, %v11025
      %v11027 = vrot.slane %v10833, 1
      %v11028 = vsel %vm1310, %v11025, %v11027
      %v11029 = vrot.slane %v10834, 1
      %v11030 = vsel %vm1310, %v11027, %v11029
      %v11031 = vrot.slane %v10835, 1
      %v11032 = vsel %vm1310, %v11029, %v11031
      %v11033 = vrot.slane %v10836, 1
      %v11034 = vsel %vm1310, %v11031, %v11033
      %v11035 = vrot.slane %v10837, 1
      %v11036 = vsel %vm1310, %v11033, %v11035
      %v11037 = vrot.slane %v10838, 1
      %v11038 = vsel %vm1310, %v11035, %v11037
      %v11039 = vrot.slane %v10839, 1
      %v11040 = vsel %vm1310, %v11037, %v11039
      %v11041 = vrot.slane %v10840, 1
      %v11042 = vsel %vm1310, %v11039, %v11041
      %v11043 = vrot.slane %v10841, 1
      %v11044 = vsel %vm1310, %v11041, %v11043
      %v11045 = vrot.slane %v10842, 1
      %v11046 = vsel %vm1310, %v11043, %v11045
      %v11047 = vrot.slane %v10843, 1
      %v11048 = vsel %vm1310, %v11045, %v11047
      %v11049 = vrot.slane %v10844, 1
      %v11050 = vsel %vm1310, %v11047, %v11049
      %v11051 = vrot.slane %v10845, 1
      %v11052 = vsel %vm1310, %v11049, %v11051
      %v11053 = vrot.slane %v10846, 1
      %v11054 = vsel %vm1310, %v11051, %v11053
      %v11055 = vrot.slane %v10847, 1
      %v11056 = vsel %vm1310, %v11053, %v11055
      %v11126 = vmax.f32 %v10779, %v10922
      %v11127 = vmax.f32 %v10780, %v10924
      %v11128 = vmax.f32 %v10781, %v10926
      %v11129 = vmax.f32 %v10782, %v10928
      %v11130 = vmax.f32 %v10783, %v10930
      %v11131 = vmax.f32 %v10784, %v10932
      %v11132 = vmax.f32 %v10785, %v10934
      %v11133 = vmax.f32 %v10786, %v10936
      %v11134 = vmax.f32 %v10787, %v10938
      %v11135 = vmax.f32 %v10788, %v10940
      %v11136 = vmax.f32 %v10789, %v10942
      %v11137 = vmax.f32 %v10790, %v10944
      %v11138 = vmax.f32 %v10791, %v10946
      %v11139 = vmax.f32 %v10792, %v10948
      %v11140 = vmax.f32 %v10793, %v10950
      %v11141 = vmax.f32 %v10794, %v10952
      %v11142 = vmax.f32 %v10795, %v10954
      %v11143 = vmax.f32 %v10796, %v10956
      %v11144 = vmax.f32 %v10797, %v10958
      %v11145 = vmax.f32 %v10798, %v10960
      %v11146 = vmax.f32 %v10799, %v10962
      %v11147 = vmax.f32 %v10800, %v10964
      %v11148 = vmax.f32 %v10801, %v10966
      %v11149 = vmax.f32 %v10802, %v10968
      %v11150 = vmax.f32 %v10803, %v10970
      %v11151 = vmax.f32 %v10804, %v10972
      %v11152 = vmax.f32 %v10805, %v10974
      %v11153 = vmax.f32 %v10806, %v10976
      %v11154 = vmax.f32 %v10807, %v10978
      %v11155 = vmax.f32 %v10808, %v10980
      %v11156 = vmax.f32 %v10809, %v10982
      %v11157 = vmax.f32 %v10810, %v10984
      %v11158 = vmax.f32 %v10811, %v10986
      %v11159 = vmax.f32 %v10812, %v10988
      %v11160 = vmax.f32 %v10813, %v10990
      %v11161 = vmax.f32 %v10814, %v10992
      %v11162 = vmax.f32 %v10815, %v10994
      %v11163 = vmax.f32 %v10816, %v10996
      %v11164 = vmax.f32 %v10817, %v10998
      %v11165 = vmax.f32 %v10818, %v11000
      %v11166 = vmax.f32 %v10819, %v11002
      %v11167 = vmax.f32 %v10820, %v11004
      %v11168 = vmax.f32 %v10821, %v11006
      %v11169 = vmax.f32 %v10822, %v11008
      %v11170 = vmax.f32 %v10823, %v11010
      %v11171 = vmax.f32 %v10824, %v11012
      %v11172 = vmax.f32 %v10825, %v11014
      %v11173 = vmax.f32 %v10826, %v11016
      %v11174 = vmax.f32 %v10827, %v11018
      %v11175 = vmax.f32 %v10828, %v11020
      %v11176 = vmax.f32 %v10829, %v11022
      %v11177 = vmax.f32 %v10830, %v11024
      %v11178 = vmax.f32 %v10831, %v11026
      %v11179 = vmax.f32 %v10832, %v11028
      %v11180 = vmax.f32 %v10833, %v11030
      %v11181 = vmax.f32 %v10834, %v11032
      %v11182 = vmax.f32 %v10835, %v11034
      %v11183 = vmax.f32 %v10836, %v11036
      %v11184 = vmax.f32 %v10837, %v11038
      %v11185 = vmax.f32 %v10838, %v11040
      %v11186 = vmax.f32 %v10839, %v11042
      %v11187 = vmax.f32 %v10840, %v11044
      %v11188 = vmax.f32 %v10841, %v11046
      %v11189 = vmax.f32 %v10842, %v11048
      %v11190 = vmax.f32 %v10843, %v11050
      %v11191 = vmax.f32 %v10844, %v11052
      %v11192 = vmax.f32 %v10845, %v11054
      %v11193 = vmax.f32 %v10846, %v11056
      %v11194 = vmax.f32 %v10847, %v11055
      %v11198 = vrot.slane %v10848, 1
      %v11199 = vsel %vm1310, %v11055, %v11198
      %v11200 = vrot.slane %v10849, 1
      %v11201 = vsel %vm1310, %v11198, %v11200
      %v11202 = vrot.slane %v10850, 1
      %v11203 = vsel %vm1310, %v11200, %v11202
      %v11208 = vmax.f32 %v10847, %v11199
      %v11209 = vmax.f32 %v10848, %v11201
      %v11210 = vmax.f32 %v10849, %v11203
      %v11211 = vmax.f32 %v10850, %v11202
      %v11212 = vmax.f32 %v11126, %v11129
      %v11213 = vmax.f32 %v11127, %v11130
      %v11214 = vmax.f32 %v11128, %v11131
      %v11215 = vmax.f32 %v11129, %v11132
      %v11216 = vmax.f32 %v11130, %v11133
      %v11217 = vmax.f32 %v11131, %v11134
      %v11218 = vmax.f32 %v11132, %v11135
      %v11219 = vmax.f32 %v11133, %v11136
      %v11220 = vmax.f32 %v11134, %v11137
      %v11221 = vmax.f32 %v11135, %v11138
      %v11222 = vmax.f32 %v11136, %v11139
      %v11223 = vmax.f32 %v11137, %v11140
      %v11224 = vmax.f32 %v11138, %v11141
      %v11225 = vmax.f32 %v11139, %v11142
      %v11226 = vmax.f32 %v11140, %v11143
      %v11227 = vmax.f32 %v11141, %v11144
      %v11228 = vmax.f32 %v11142, %v11145
      %v11229 = vmax.f32 %v11143, %v11146
      %v11230 = vmax.f32 %v11144, %v11147
      %v11231 = vmax.f32 %v11145, %v11148
      %v11232 = vmax.f32 %v11146, %v11149
      %v11233 = vmax.f32 %v11147, %v11150
      %v11234 = vmax.f32 %v11148, %v11151
      %v11235 = vmax.f32 %v11149, %v11152
      %v11236 = vmax.f32 %v11150, %v11153
      %v11237 = vmax.f32 %v11151, %v11154
      %v11238 = vmax.f32 %v11152, %v11155
      %v11239 = vmax.f32 %v11153, %v11156
      %v11240 = vmax.f32 %v11154, %v11157
      %v11241 = vmax.f32 %v11155, %v11158
      %v11242 = vmax.f32 %v11156, %v11159
      %v11243 = vmax.f32 %v11157, %v11160
      %v11244 = vmax.f32 %v11158, %v11161
      %v11245 = vmax.f32 %v11159, %v11162
      %v11246 = vmax.f32 %v11160, %v11163
      %v11247 = vmax.f32 %v11161, %v11164
      %v11248 = vmax.f32 %v11162, %v11165
      %v11249 = vmax.f32 %v11163, %v11166
      %v11250 = vmax.f32 %v11164, %v11167
      %v11251 = vmax.f32 %v11165, %v11168
      %v11252 = vmax.f32 %v11166, %v11169
      %v11253 = vmax.f32 %v11167, %v11170
      %v11254 = vmax.f32 %v11168, %v11171
      %v11255 = vmax.f32 %v11169, %v11172
      %v11256 = vmax.f32 %v11170, %v11173
      %v11257 = vmax.f32 %v11171, %v11174
      %v11258 = vmax.f32 %v11172, %v11175
      %v11259 = vmax.f32 %v11173, %v11176
      %v11260 = vmax.f32 %v11174, %v11177
      %v11261 = vmax.f32 %v11175, %v11178
      %v11262 = vmax.f32 %v11176, %v11179
      %v11263 = vmax.f32 %v11177, %v11180
      %v11264 = vmax.f32 %v11178, %v11181
      %v11265 = vmax.f32 %v11179, %v11182
      %v11266 = vmax.f32 %v11180, %v11183
      %v11267 = vmax.f32 %v11181, %v11184
      %v11268 = vmax.f32 %v11182, %v11185
      %v11269 = vmax.f32 %v11183, %v11186
      %v11270 = vmax.f32 %v11184, %v11187
      %v11271 = vmax.f32 %v11185, %v11188
      %v11272 = vmax.f32 %v11186, %v11189
      %v11273 = vmax.f32 %v11187, %v11190
      %v11274 = vmax.f32 %v11188, %v11191
      %v11275 = vmax.f32 %v11189, %v11192
      %v11276 = vmax.f32 %v11190, %v11193
      %v11277 = vmax.f32 %v11191, %v11208
      %v11278 = vmax.f32 %v11192, %v11209
      %v11279 = vmax.f32 %v11193, %v11210
      %v11280 = vmax.f32 %v11194, %v11211
      %v11281 = vld [vmem:[%s5] sm:$0xff]
      %v11282 = vld [vmem:[%s5 + $0x8] sm:$0xff]
      %v11283 = vld [vmem:[%s5 + $0x10] sm:$0xff]
      %v11284 = vld [vmem:[%s5 + $0x18] sm:$0xff]
      %v11285 = vld [vmem:[%s5 + $0x20] sm:$0xff]
      %v11286 = vld [vmem:[%s5 + $0x28] sm:$0xff]
      %v11287 = vld [vmem:[%s5 + $0x30] sm:$0xff]
      %v11288 = vld [vmem:[%s5 + $0x38] sm:$0xff]
      %v11289 = vld [vmem:[%s5 + $0x40] sm:$0xff]
      %v11290 = vld [vmem:[%s5 + $0x48] sm:$0xff]
      %v11291 = vld [vmem:[%s5 + $0x50] sm:$0xff]
      %v11292 = vld [vmem:[%s5 + $0x58] sm:$0xff]
      %v11293 = vld [vmem:[%s5 + $0x60] sm:$0xff]
      %v11294 = vld [vmem:[%s5 + $0x68] sm:$0xff]
      %v11295 = vld [vmem:[%s5 + $0x70] sm:$0xff]
      %v11296 = vld [vmem:[%s5 + $0x78] sm:$0xff]
      %v11297 = vld [vmem:[%s5 + $0x80] sm:$0xff]
      %v11298 = vld [vmem:[%s5 + $0x88] sm:$0xff]
      %v11299 = vld [vmem:[%s5 + $0x90] sm:$0xff]
      %v11300 = vld [vmem:[%s5 + $0x98] sm:$0xff]
      %v11301 = vld [vmem:[%s5 + $0xa0] sm:$0xff]
      %v11302 = vld [vmem:[%s5 + $0xa8] sm:$0xff]
      %v11303 = vld [vmem:[%s5 + $0xb0] sm:$0xff]
      %v11304 = vld [vmem:[%s5 + $0xb8] sm:$0xff]
      %v11305 = vld [vmem:[%s5 + $0xc0] sm:$0xff]
      %v11306 = vld [vmem:[%s5 + $0xc8] sm:$0xff]
      %v11307 = vld [vmem:[%s5 + $0xd0] sm:$0xff]
      %v11308 = vld [vmem:[%s5 + $0xd8] sm:$0xff]
      %v11309 = vld [vmem:[%s5 + $0xe0] sm:$0xff]
      %v11310 = vld [vmem:[%s5 + $0xe8] sm:$0xff]
      %v11311 = vld [vmem:[%s5 + $0xf0] sm:$0xff]
      %v11312 = vld [vmem:[%s5 + $0xf8] sm:$0xff]
      %v11313 = vld [vmem:[%s5 + $0x100] sm:$0xff]
      %v11314 = vld [vmem:[%s5 + $0x108] sm:$0xff]
      %v11315 = vld [vmem:[%s5 + $0x110] sm:$0xff]
      %v11316 = vld [vmem:[%s5 + $0x118] sm:$0xff]
      %v11317 = vld [vmem:[%s5 + $0x120] sm:$0xff]
      %v11318 = vld [vmem:[%s5 + $0x128] sm:$0xff]
      %v11319 = vld [vmem:[%s5 + $0x130] sm:$0xff]
      %v11320 = vld [vmem:[%s5 + $0x138] sm:$0xff]
      %v11321 = vld [vmem:[%s5 + $0x140] sm:$0xff]
      %v11322 = vld [vmem:[%s5 + $0x148] sm:$0xff]
      %v11323 = vld [vmem:[%s5 + $0x150] sm:$0xff]
      %v11324 = vld [vmem:[%s5 + $0x158] sm:$0xff]
      %v11325 = vld [vmem:[%s5 + $0x160] sm:$0xff]
      %v11326 = vld [vmem:[%s5 + $0x168] sm:$0xff]
      %v11327 = vld [vmem:[%s5 + $0x170] sm:$0xff]
      %v11328 = vld [vmem:[%s5 + $0x178] sm:$0xff]
      %v11329 = vld [vmem:[%s5 + $0x180] sm:$0xff]
      %v11330 = vld [vmem:[%s5 + $0x188] sm:$0xff]
      %v11331 = vld [vmem:[%s5 + $0x190] sm:$0xff]
      %v11332 = vld [vmem:[%s5 + $0x198] sm:$0xff]
      %v11333 = vld [vmem:[%s5 + $0x1a0] sm:$0xff]
      %v11334 = vld [vmem:[%s5 + $0x1a8] sm:$0xff]
      %v11335 = vld [vmem:[%s5 + $0x1b0] sm:$0xff]
      %v11336 = vld [vmem:[%s5 + $0x1b8] sm:$0xff]
      %v11337 = vld [vmem:[%s5 + $0x1c0] sm:$0xff]
      %v11338 = vld [vmem:[%s5 + $0x1c8] sm:$0xff]
      %v11339 = vld [vmem:[%s5 + $0x1d0] sm:$0xff]
      %v11340 = vld [vmem:[%s5 + $0x1d8] sm:$0xff]
      %v11341 = vld [vmem:[%s5 + $0x1e0] sm:$0xff]
      %v11342 = vld [vmem:[%s5 + $0x1e8] sm:$0xff]
      %v11343 = vld [vmem:[%s5 + $0x1f0] sm:$0xff]
      %v11344 = vld [vmem:[%s5 + $0x1f8] sm:$0xff]
      %v11345 = vld [vmem:[%s5 + $0x200] sm:$0xff]
      %v11346 = vld [vmem:[%s5 + $0x208] sm:$0xff]
      %v11347 = vld [vmem:[%s5 + $0x210] sm:$0xff]
      %v11348 = vld [vmem:[%s5 + $0x218] sm:$0xff]
      %v11349 = vld [vmem:[%s5 + $0x220] sm:$0xff]
      %v11350 = vld [vmem:[%s5 + $0x228] sm:$0xff]
      %v11351 = vld [vmem:[%s5 + $0x230] sm:$0xff]
      %v11352 = vld [vmem:[%s5 + $0x238] sm:$0xff]
      %v11353 = vld [vmem:[%s5 + $0x240] sm:$0xff]
      %v11354 = vld [vmem:[%s5 + $0x248] sm:$0xff]
      %v11355 = vld [vmem:[%s5 + $0x250] sm:$0xff]
      %v11356 = vld [vmem:[%s5 + $0x258] sm:$0xff]
      %v11357 = vld [vmem:[%s5 + $0x260] sm:$0xff]
      %v11358 = vld [vmem:[%s5 + $0x268] sm:$0xff]
      %v11359 = vld [vmem:[%s5 + $0x270] sm:$0xff]
      %v11360 = vld [vmem:[%s5 + $0x278] sm:$0xff]
      %v11361 = vld [vmem:[%s5 + $0x280] sm:$0xff]
      %v11362 = vld [vmem:[%s5 + $0x288] sm:$0xff]
      %v11363 = vld [vmem:[%s5 + $0x290] sm:$0xff]
      %v11364 = vld [vmem:[%s5 + $0x298] sm:$0xff]
      %v11365 = vld [vmem:[%s5 + $0x2a0] sm:$0xff]
      %v11366 = vld [vmem:[%s5 + $0x2a8] sm:$0xff]
      %v11367 = vld [vmem:[%s5 + $0x2b0] sm:$0xff]
      %v11368 = vld [vmem:[%s5 + $0x2b8] sm:$0xff]
      %v11369 = vld [vmem:[%s5 + $0x2c0] sm:$0xff]
      %v11370 = vld [vmem:[%s5 + $0x2c8] sm:$0xff]
      %vm11371 = vcmask 318464
      %v11373 = vsel %vm11371, %v11285, 0
      %v11376 = vsel %vm11371, %v11290, 0
      %v11379 = vsel %vm11371, %v11295, 0
      %v11382 = vsel %vm11371, %v11300, 0
      %v11385 = vsel %vm11371, %v11305, 0
      %v11388 = vsel %vm11371, %v11310, 0
      %v11391 = vsel %vm11371, %v11315, 0
      %v11394 = vsel %vm11371, %v11320, 0
      %v11397 = vsel %vm11371, %v11325, 0
      %v11400 = vsel %vm11371, %v11330, 0
      %v11403 = vsel %vm11371, %v11335, 0
      %v11406 = vsel %vm11371, %v11340, 0
      %v11409 = vsel %vm11371, %v11345, 0
      %v11412 = vsel %vm11371, %v11350, 0
      %v11415 = vsel %vm11371, %v11355, 0
      %v11418 = vsel %vm11371, %v11360, 0
      %v11421 = vsel %vm11371, %v11365, 0
      %v11424 = vsel %vm11371, %v11370, 0
      %v11427 = vsel %vm1310, %v11280, 0
      %11429 = vmatprep.subr.mxu0 0.0
      %11430 = vmatpush1.msra.mxu0 %v11212
      %11431 = vmatprep.subr.mxu0 0.0
      %11432 = vmatpush1.msra.mxu0 %v11213
      %11433 = vmatprep.subr.mxu0 0.0
      %11434 = vmatpush1.msra.mxu0 %v11214
      %11435 = vmatprep.subr.mxu0 0.0
      %11436 = vmatpush1.msra.mxu0 %v11215
      %11437 = vmatprep.subr.mxu0 0.0
      %11438 = vmatpush1.msra.mxu0 %v11216
      %11439 = vmatprep.subr.mxu0 0.0
      %11440 = vmatpush1.msra.mxu0 %v11217
      %11441 = vmatprep.subr.mxu0 0.0
      %11442 = vmatpush1.msra.mxu0 %v11218
      %11443 = vmatprep.subr.mxu0 0.0
      %11444 = vmatpush1.msra.mxu0 %v11219
      %11445 = vmatprep.subr.mxu0 0.0
      %11446 = vmatpush1.msra.mxu0 %v11220
      %11447 = vmatprep.subr.mxu0 0.0
      %11448 = vmatpush1.msra.mxu0 %v11221
      %11449 = vmatprep.subr.mxu0 0.0
      %11450 = vmatpush1.msra.mxu0 %v11222
      %11451 = vmatprep.subr.mxu0 0.0
      %11452 = vmatpush1.msra.mxu0 %v11223
      %11453 = vmatprep.subr.mxu0 0.0
      %11454 = vmatpush1.msra.mxu0 %v11224
      %11455 = vmatprep.subr.mxu0 0.0
      %11456 = vmatpush1.msra.mxu0 %v11225
      %11457 = vmatprep.subr.mxu0 0.0
      %11458 = vmatpush1.msra.mxu0 %v11226
      %11459 = vmatprep.subr.mxu0 0.0
      %11460 = vmatpush1.msra.mxu0 %v11227
      %11461 = vmatprep.subr.mxu0 0.0
      %11462 = vmatpush1.msra.mxu0 %v11228
      %11463 = vmatprep.subr.mxu0 0.0
      %11464 = vmatpush1.msra.mxu0 %v11229
      %11465 = vmatprep.subr.mxu0 0.0
      %11466 = vmatpush1.msra.mxu0 %v11230
      %11467 = vmatprep.subr.mxu0 0.0
      %11468 = vmatpush1.msra.mxu0 %v11231
      %11469 = vmatprep.subr.mxu0 0.0
      %11470 = vmatpush1.msra.mxu0 %v11232
      %11471 = vmatprep.subr.mxu0 0.0
      %11472 = vmatpush1.msra.mxu0 %v11233
      %11473 = vmatprep.subr.mxu0 0.0
      %11474 = vmatpush1.msra.mxu0 %v11234
      %11475 = vmatprep.subr.mxu0 0.0
      %11476 = vmatpush1.msra.mxu0 %v11235
      %11477 = vmatprep.subr.mxu0 0.0
      %11478 = vmatpush1.msra.mxu0 %v11236
      %11479 = vmatprep.subr.mxu0 0.0
      %11480 = vmatpush1.msra.mxu0 %v11237
      %11481 = vmatprep.subr.mxu0 0.0
      %11482 = vmatpush1.msra.mxu0 %v11238
      %11483 = vmatprep.subr.mxu0 0.0
      %11484 = vmatpush1.msra.mxu0 %v11239
      %11485 = vmatprep.subr.mxu0 0.0
      %11486 = vmatpush1.msra.mxu0 %v11240
      %11487 = vmatprep.subr.mxu0 0.0
      %11488 = vmatpush1.msra.mxu0 %v11241
      %11489 = vmatprep.subr.mxu0 0.0
      %11490 = vmatpush1.msra.mxu0 %v11242
      %11491 = vmatprep.subr.mxu0 0.0
      %11492 = vmatpush1.msra.mxu0 %v11243
      %11493 = vmatprep.mubr.f32.mxu0 %v11282
      %11494 = vmatmul.mubr.f32.gmra.mrb[0].mxu0 %v11281
      %v11495 = vpop.f32.mrb[0].mxu0
      %v11496 = vadd.f32 0.0, %v11495
      %v11497 = vpop.f32.mrb[0].mxu0
      %11498 = vmatprep.mubr.f32.mxu0 %v11287
      %11499 = vmatmul.mubr.f32.gmra.mrb[0].mxu0 %v11286
      %v11500 = vpop.f32.mrb[0].mxu0
      %v11501 = vadd.f32 0.0, %v11500
      %v11502 = vpop.f32.mrb[0].mxu0
      %11503 = vmatprep.mubr.f32.mxu0 %v11292
      %11504 = vmatmul.mubr.f32.gmra.mrb[0].mxu0 %v11291
      %v11505 = vpop.f32.mrb[0].mxu0
      %v11506 = vadd.f32 0.0, %v11505
      %v11507 = vpop.f32.mrb[0].mxu0
      %11508 = vmatprep.mubr.f32.mxu0 %v11297
      %11509 = vmatmul.mubr.f32.gmra.mrb[0].mxu0 %v11296
      %v11510 = vpop.f32.mrb[0].mxu0
      %v11511 = vadd.f32 0.0, %v11510
      %v11512 = vpop.f32.mrb[0].mxu0
      %11513 = vmatprep.mubr.f32.mxu0 %v11302
      %11514 = vmatmul.mubr.f32.gmra.mrb[0].mxu0 %v11301
      %v11515 = vpop.f32.mrb[0].mxu0
      %v11516 = vadd.f32 0.0, %v11515
      %v11517 = vpop.f32.mrb[0].mxu0
      %11518 = vmatprep.mubr.f32.mxu0 %v11307
      %11519 = vmatmul.mubr.f32.gmra.mrb[0].mxu0 %v11306
      %v11520 = vpop.f32.mrb[0].mxu0
      %v11521 = vadd.f32 0.0, %v11520
      %v11522 = vpop.f32.mrb[0].mxu0
      %11523 = vmatprep.mubr.f32.mxu0 %v11312
      %11524 = vmatmul.mubr.f32.gmra.mrb[0].mxu0 %v11311
      %v11525 = vpop.f32.mrb[0].mxu0
      %v11526 = vadd.f32 0.0, %v11525
      %v11527 = vpop.f32.mrb[0].mxu0
      %11528 = vmatprep.mubr.f32.mxu0 %v11317
      %11529 = vmatmul.mubr.f32.gmra.mrb[0].mxu0 %v11316
      %v11530 = vpop.f32.mrb[0].mxu0
      %v11531 = vadd.f32 0.0, %v11530
      %v11532 = vpop.f32.mrb[0].mxu0
      %11533 = vmatprep.mubr.f32.mxu0 %v11322
      %11534 = vmatmul.mubr.f32.gmra.mrb[0].mxu0 %v11321
      %v11535 = vpop.f32.mrb[0].mxu0
      %v11536 = vadd.f32 0.0, %v11535
      %v11537 = vpop.f32.mrb[0].mxu0
      %11538 = vmatprep.mubr.f32.mxu0 %v11327
      %11539 = vmatmul.mubr.f32.gmra.mrb[0].mxu0 %v11326
      %v11540 = vpop.f32.mrb[0].mxu0
      %v11541 = vadd.f32 0.0, %v11540
      %v11542 = vpop.f32.mrb[0].mxu0
      %11543 = vmatprep.mubr.f32.mxu0 %v11332
      %11544 = vmatmul.mubr.f32.gmra.mrb[0].mxu0 %v11331
      %v11545 = vpop.f32.mrb[0].mxu0
      %v11546 = vadd.f32 0.0, %v11545
      %v11547 = vpop.f32.mrb[0].mxu0
      %11548 = vmatprep.mubr.f32.mxu0 %v11337
      %11549 = vmatmul.mubr.f32.gmra.mrb[0].mxu0 %v11336
      %v11550 = vpop.f32.mrb[0].mxu0
      %v11551 = vadd.f32 0.0, %v11550
      %v11552 = vpop.f32.mrb[0].mxu0
      %11553 = vmatprep.mubr.f32.mxu0 %v11342
      %11554 = vmatmul.mubr.f32.gmra.mrb[0].mxu0 %v11341
      %v11555 = vpop.f32.mrb[0].mxu0
      %v11556 = vadd.f32 0.0, %v11555
      %v11557 = vpop.f32.mrb[0].mxu0
      %11558 = vmatprep.mubr.f32.mxu0 %v11347
      %11559 = vmatmul.mubr.f32.gmra.mrb[0].mxu0 %v11346
      %v11560 = vpop.f32.mrb[0].mxu0
      %v11561 = vadd.f32 0.0, %v11560
      %v11562 = vpop.f32.mrb[0].mxu0
      %11563 = vmatprep.mubr.f32.mxu0 %v11352
      %11564 = vmatmul.mubr.f32.gmra.mrb[0].mxu0 %v11351
      %v11565 = vpop.f32.mrb[0].mxu0
      %v11566 = vadd.f32 0.0, %v11565
      %v11567 = vpop.f32.mrb[0].mxu0
      %11568 = vmatprep.mubr.f32.mxu0 %v11357
      %11569 = vmatmul.mubr.f32.gmra.mrb[0].mxu0 %v11356
      %v11570 = vpop.f32.mrb[0].mxu0
      %v11571 = vadd.f32 0.0, %v11570
      %v11572 = vpop.f32.mrb[0].mxu0
      %11573 = vmatprep.mubr.f32.mxu0 %v11362
      %11574 = vmatmul.mubr.f32.gmra.mrb[0].mxu0 %v11361
      %v11575 = vpop.f32.mrb[0].mxu0
      %v11576 = vadd.f32 0.0, %v11575
      %v11577 = vpop.f32.mrb[0].mxu0
      %11578 = vmatprep.mubr.f32.mxu0 %v11367
      %11579 = vmatmul.mubr.f32.gmra.mrb[0].mxu0 %v11366
      %v11580 = vpop.f32.mrb[0].mxu0
      %v11581 = vadd.f32 0.0, %v11580
      %v11582 = vpop.f32.mrb[0].mxu0
      %11583 = vdwg.mxu0
      %11584 = vmatprep.subr.mxu0 0.0
      %11585 = vmatpush1.msra.mxu0 %v11244
      %11586 = vmatprep.subr.mxu0 0.0
      %11587 = vmatpush1.msra.mxu0 %v11245
      %11588 = vmatprep.subr.mxu0 0.0
      %11589 = vmatpush1.msra.mxu0 %v11246
      %11590 = vmatprep.subr.mxu0 0.0
      %11591 = vmatpush1.msra.mxu0 %v11247
      %11592 = vmatprep.subr.mxu0 0.0
      %11593 = vmatpush1.msra.mxu0 %v11248
      %11594 = vmatprep.subr.mxu0 0.0
      %11595 = vmatpush1.msra.mxu0 %v11249
      %11596 = vmatprep.subr.mxu0 0.0
      %11597 = vmatpush1.msra.mxu0 %v11250
      %11598 = vmatprep.subr.mxu0 0.0
      %11599 = vmatpush1.msra.mxu0 %v11251
      %11600 = vmatprep.subr.mxu0 0.0
      %11601 = vmatpush1.msra.mxu0 %v11252
      %11602 = vmatprep.subr.mxu0 0.0
      %11603 = vmatpush1.msra.mxu0 %v11253
      %11604 = vmatprep.subr.mxu0 0.0
      %11605 = vmatpush1.msra.mxu0 %v11254
      %11606 = vmatprep.subr.mxu0 0.0
      %11607 = vmatpush1.msra.mxu0 %v11255
      %11608 = vmatprep.subr.mxu0 0.0
      %11609 = vmatpush1.msra.mxu0 %v11256
      %11610 = vmatprep.subr.mxu0 0.0
      %11611 = vmatpush1.msra.mxu0 %v11257
      %11612 = vmatprep.subr.mxu0 0.0
      %11613 = vmatpush1.msra.mxu0 %v11258
      %11614 = vmatprep.subr.mxu0 0.0
      %11615 = vmatpush1.msra.mxu0 %v11259
      %11616 = vmatprep.subr.mxu0 0.0
      %11617 = vmatpush1.msra.mxu0 %v11260
      %11618 = vmatprep.subr.mxu0 0.0
      %11619 = vmatpush1.msra.mxu0 %v11261
      %11620 = vmatprep.subr.mxu0 0.0
      %11621 = vmatpush1.msra.mxu0 %v11262
      %11622 = vmatprep.subr.mxu0 0.0
      %11623 = vmatpush1.msra.mxu0 %v11263
      %11624 = vmatprep.subr.mxu0 0.0
      %11625 = vmatpush1.msra.mxu0 %v11264
      %11626 = vmatprep.subr.mxu0 0.0
      %11627 = vmatpush1.msra.mxu0 %v11265
      %11628 = vmatprep.subr.mxu0 0.0
      %11629 = vmatpush1.msra.mxu0 %v11266
      %11630 = vmatprep.subr.mxu0 0.0
      %11631 = vmatpush1.msra.mxu0 %v11267
      %11632 = vmatprep.subr.mxu0 0.0
      %11633 = vmatpush1.msra.mxu0 %v11268
      %11634 = vmatprep.subr.mxu0 0.0
      %11635 = vmatpush1.msra.mxu0 %v11269
      %11636 = vmatprep.subr.mxu0 0.0
      %11637 = vmatpush1.msra.mxu0 %v11270
      %11638 = vmatprep.subr.mxu0 0.0
      %11639 = vmatpush1.msra.mxu0 %v11271
      %11640 = vmatprep.subr.mxu0 0.0
      %11641 = vmatpush1.msra.mxu0 %v11272
      %11642 = vmatprep.subr.mxu0 0.0
      %11643 = vmatpush1.msra.mxu0 %v11273
      %11644 = vmatprep.subr.mxu0 0.0
      %11645 = vmatpush1.msra.mxu0 %v11274
      %11646 = vmatprep.subr.mxu0 0.0
      %11647 = vmatpush1.msra.mxu0 %v11275
      %11648 = vmatprep.mubr.f32.mxu0 %v11284
      %11649 = vmatmul.mubr.f32.gmra.mrb[0].mxu0 %v11283
      %v11650 = vpop.f32.mrb[0].mxu0
      %v11651 = vadd.f32 %v11496, %v11650
      %v11652 = vpop.f32.mrb[0].mxu0
      %11653 = vmatprep.mubr.f32.mxu0 %v11289
      %11654 = vmatmul.mubr.f32.gmra.mrb[0].mxu0 %v11288
      %v11655 = vpop.f32.mrb[0].mxu0
      %v11656 = vadd.f32 %v11501, %v11655
      %v11657 = vpop.f32.mrb[0].mxu0
      %11658 = vmatprep.mubr.f32.mxu0 %v11294
      %11659 = vmatmul.mubr.f32.gmra.mrb[0].mxu0 %v11293
      %v11660 = vpop.f32.mrb[0].mxu0
      %v11661 = vadd.f32 %v11506, %v11660
      %v11662 = vpop.f32.mrb[0].mxu0
      %11663 = vmatprep.mubr.f32.mxu0 %v11299
      %11664 = vmatmul.mubr.f32.gmra.mrb[0].mxu0 %v11298
      %v11665 = vpop.f32.mrb[0].mxu0
      %v11666 = vadd.f32 %v11511, %v11665
      %v11667 = vpop.f32.mrb[0].mxu0
      %11668 = vmatprep.mubr.f32.mxu0 %v11304
      %11669 = vmatmul.mubr.f32.gmra.mrb[0].mxu0 %v11303
      %v11670 = vpop.f32.mrb[0].mxu0
      %v11671 = vadd.f32 %v11516, %v11670
      %v11672 = vpop.f32.mrb[0].mxu0
      %11673 = vmatprep.mubr.f32.mxu0 %v11309
      %11674 = vmatmul.mubr.f32.gmra.mrb[0].mxu0 %v11308
      %v11675 = vpop.f32.mrb[0].mxu0
      %v11676 = vadd.f32 %v11521, %v11675
      %v11677 = vpop.f32.mrb[0].mxu0
      %11678 = vmatprep.mubr.f32.mxu0 %v11314
      %11679 = vmatmul.mubr.f32.gmra.mrb[0].mxu0 %v11313
      %v11680 = vpop.f32.mrb[0].mxu0
      %v11681 = vadd.f32 %v11526, %v11680
      %v11682 = vpop.f32.mrb[0].mxu0
      %11683 = vmatprep.mubr.f32.mxu0 %v11319
      %11684 = vmatmul.mubr.f32.gmra.mrb[0].mxu0 %v11318
      %v11685 = vpop.f32.mrb[0].mxu0
      %v11686 = vadd.f32 %v11531, %v11685
      %v11687 = vpop.f32.mrb[0].mxu0
      %11688 = vmatprep.mubr.f32.mxu0 %v11324
      %11689 = vmatmul.mubr.f32.gmra.mrb[0].mxu0 %v11323
      %v11690 = vpop.f32.mrb[0].mxu0
      %v11691 = vadd.f32 %v11536, %v11690
      %v11692 = vpop.f32.mrb[0].mxu0
      %11693 = vmatprep.mubr.f32.mxu0 %v11329
      %11694 = vmatmul.mubr.f32.gmra.mrb[0].mxu0 %v11328
      %v11695 = vpop.f32.mrb[0].mxu0
      %v11696 = vadd.f32 %v11541, %v11695
      %v11697 = vpop.f32.mrb[0].mxu0
      %11698 = vmatprep.mubr.f32.mxu0 %v11334
      %11699 = vmatmul.mubr.f32.gmra.mrb[0].mxu0 %v11333
      %v11700 = vpop.f32.mrb[0].mxu0
      %v11701 = vadd.f32 %v11546, %v11700
      %v11702 = vpop.f32.mrb[0].mxu0
      %11703 = vmatprep.mubr.f32.mxu0 %v11339
      %11704 = vmatmul.mubr.f32.gmra.mrb[0].mxu0 %v11338
      %v11705 = vpop.f32.mrb[0].mxu0
      %v11706 = vadd.f32 %v11551, %v11705
      %v11707 = vpop.f32.mrb[0].mxu0
      %11708 = vmatprep.mubr.f32.mxu0 %v11344
      %11709 = vmatmul.mubr.f32.gmra.mrb[0].mxu0 %v11343
      %v11710 = vpop.f32.mrb[0].mxu0
      %v11711 = vadd.f32 %v11556, %v11710
      %v11712 = vpop.f32.mrb[0].mxu0
      %11713 = vmatprep.mubr.f32.mxu0 %v11349
      %11714 = vmatmul.mubr.f32.gmra.mrb[0].mxu0 %v11348
      %v11715 = vpop.f32.mrb[0].mxu0
      %v11716 = vadd.f32 %v11561, %v11715
      %v11717 = vpop.f32.mrb[0].mxu0
      %11718 = vmatprep.mubr.f32.mxu0 %v11354
      %11719 = vmatmul.mubr.f32.gmra.mrb[0].mxu0 %v11353
      %v11720 = vpop.f32.mrb[0].mxu0
      %v11721 = vadd.f32 %v11566, %v11720
      %v11722 = vpop.f32.mrb[0].mxu0
      %11723 = vmatprep.mubr.f32.mxu0 %v11359
      %11724 = vmatmul.mubr.f32.gmra.mrb[0].mxu0 %v11358
      %v11725 = vpop.f32.mrb[0].mxu0
      %v11726 = vadd.f32 %v11571, %v11725
      %v11727 = vpop.f32.mrb[0].mxu0
      %11728 = vmatprep.mubr.f32.mxu0 %v11364
      %11729 = vmatmul.mubr.f32.gmra.mrb[0].mxu0 %v11363
      %v11730 = vpop.f32.mrb[0].mxu0
      %v11731 = vadd.f32 %v11576, %v11730
      %v11732 = vpop.f32.mrb[0].mxu0
      %11733 = vmatprep.mubr.f32.mxu0 %v11369
      %11734 = vmatmul.mubr.f32.gmra.mrb[0].mxu0 %v11368
      %v11735 = vpop.f32.mrb[0].mxu0
      %v11736 = vadd.f32 %v11581, %v11735
      %v11737 = vpop.f32.mrb[0].mxu0
      %11738 = vdwg.mxu0
      %11739 = vmatprep.subr.mxu0 0.0
      %11740 = vmatpush1.msra.mxu0 %v11276
      %11741 = vmatprep.subr.mxu0 0.0
      %11742 = vmatpush1.msra.mxu0 %v11277
      %11743 = vmatprep.subr.mxu0 0.0
      %11744 = vmatpush1.msra.mxu0 %v11278
      %11745 = vmatprep.subr.mxu0 0.0
      %11746 = vmatpush1.msra.mxu0 %v11279
      %11747 = vmatprep.subr.mxu0 0.0
      %11748 = vmatpush1.msra.mxu0 %v11427
      %11749 = vmatprep.subr.mxu0 0.0
      %11750 = vmatpush1.msra.mxu0 0.0
      %11751 = vmatprep.subr.mxu0 0.0
      %11752 = vmatpush1.msra.mxu0 0.0
      %11753 = vmatprep.subr.mxu0 0.0
      %11754 = vmatpush1.msra.mxu0 0.0
      %11755 = vmatprep.subr.mxu0 0.0
      %11756 = vmatpush1.msra.mxu0 0.0
      %11757 = vmatprep.subr.mxu0 0.0
      %11758 = vmatpush1.msra.mxu0 0.0
      %11759 = vmatprep.subr.mxu0 0.0
      %11760 = vmatpush1.msra.mxu0 0.0
      %11761 = vmatprep.subr.mxu0 0.0
      %11762 = vmatpush1.msra.mxu0 0.0
      %11763 = vmatprep.subr.mxu0 0.0
      %11764 = vmatpush1.msra.mxu0 0.0
      %11765 = vmatprep.subr.mxu0 0.0
      %11766 = vmatpush1.msra.mxu0 0.0
      %11767 = vmatprep.subr.mxu0 0.0
      %11768 = vmatpush1.msra.mxu0 0.0
      %11769 = vmatprep.subr.mxu0 0.0
      %11770 = vmatpush1.msra.mxu0 0.0
      %11771 = vmatprep.subr.mxu0 0.0
      %11772 = vmatpush1.msra.mxu0 0.0
      %11773 = vmatprep.subr.mxu0 0.0
      %11774 = vmatpush1.msra.mxu0 0.0
      %11775 = vmatprep.subr.mxu0 0.0
      %11776 = vmatpush1.msra.mxu0 0.0
      %11777 = vmatprep.subr.mxu0 0.0
      %11778 = vmatpush1.msra.mxu0 0.0
      %11779 = vmatprep.subr.mxu0 0.0
      %11780 = vmatpush1.msra.mxu0 0.0
      %11781 = vmatprep.subr.mxu0 0.0
      %11782 = vmatpush1.msra.mxu0 0.0
      %11783 = vmatprep.subr.mxu0 0.0
      %11784 = vmatpush1.msra.mxu0 0.0
      %11785 = vmatprep.subr.mxu0 0.0
      %11786 = vmatpush1.msra.mxu0 0.0
      %11787 = vmatprep.subr.mxu0 0.0
      %11788 = vmatpush1.msra.mxu0 0.0
      %11789 = vmatprep.subr.mxu0 0.0
      %11790 = vmatpush1.msra.mxu0 0.0
      %11791 = vmatprep.subr.mxu0 0.0
      %11792 = vmatpush1.msra.mxu0 0.0
      %11793 = vmatprep.subr.mxu0 0.0
      %11794 = vmatpush1.msra.mxu0 0.0
      %11795 = vmatprep.subr.mxu0 0.0
      %11796 = vmatpush1.msra.mxu0 0.0
      %11797 = vmatprep.subr.mxu0 0.0
      %11798 = vmatpush1.msra.mxu0 0.0
      %11799 = vmatprep.subr.mxu0 0.0
      %11800 = vmatpush1.msra.mxu0 0.0
      %11801 = vmatprep.subr.mxu0 0.0
      %11802 = vmatpush1.msra.mxu0 0.0
      %11803 = vmatprep.mubr.f32.mxu0 0.0
      %11804 = vmatmul.mubr.f32.gmra.mrb[0].mxu0 %v11373
      %v11805 = vpop.f32.mrb[0].mxu0
      %v11806 = vadd.f32 %v11651, %v11805
      %v11807 = vpop.f32.mrb[0].mxu0
      %11808 = vmatprep.mubr.f32.mxu0 0.0
      %11809 = vmatmul.mubr.f32.gmra.mrb[0].mxu0 %v11376
      %v11810 = vpop.f32.mrb[0].mxu0
      %v11811 = vadd.f32 %v11656, %v11810
      %v11812 = vpop.f32.mrb[0].mxu0
      %11813 = vmatprep.mubr.f32.mxu0 0.0
      %11814 = vmatmul.mubr.f32.gmra.mrb[0].mxu0 %v11379
      %v11815 = vpop.f32.mrb[0].mxu0
      %v11816 = vadd.f32 %v11661, %v11815
      %v11817 = vpop.f32.mrb[0].mxu0
      %11818 = vmatprep.mubr.f32.mxu0 0.0
      %11819 = vmatmul.mubr.f32.gmra.mrb[0].mxu0 %v11382
      %v11820 = vpop.f32.mrb[0].mxu0
      %v11821 = vadd.f32 %v11666, %v11820
      %v11822 = vpop.f32.mrb[0].mxu0
      %11823 = vmatprep.mubr.f32.mxu0 0.0
      %11824 = vmatmul.mubr.f32.gmra.mrb[0].mxu0 %v11385
      %v11825 = vpop.f32.mrb[0].mxu0
      %v11826 = vadd.f32 %v11671, %v11825
      %v11827 = vpop.f32.mrb[0].mxu0
      %11828 = vmatprep.mubr.f32.mxu0 0.0
      %11829 = vmatmul.mubr.f32.gmra.mrb[0].mxu0 %v11388
      %v11830 = vpop.f32.mrb[0].mxu0
      %v11831 = vadd.f32 %v11676, %v11830
      %v11832 = vpop.f32.mrb[0].mxu0
      %11833 = vmatprep.mubr.f32.mxu0 0.0
      %11834 = vmatmul.mubr.f32.gmra.mrb[0].mxu0 %v11391
      %v11835 = vpop.f32.mrb[0].mxu0
      %v11836 = vadd.f32 %v11681, %v11835
      %v11837 = vpop.f32.mrb[0].mxu0
      %11838 = vmatprep.mubr.f32.mxu0 0.0
      %11839 = vmatmul.mubr.f32.gmra.mrb[0].mxu0 %v11394
      %v11840 = vpop.f32.mrb[0].mxu0
      %v11841 = vadd.f32 %v11686, %v11840
      %v11842 = vpop.f32.mrb[0].mxu0
      %11843 = vmatprep.mubr.f32.mxu0 0.0
      %11844 = vmatmul.mubr.f32.gmra.mrb[0].mxu0 %v11397
      %v11845 = vpop.f32.mrb[0].mxu0
      %v11846 = vadd.f32 %v11691, %v11845
      %v11847 = vpop.f32.mrb[0].mxu0
      %11848 = vmatprep.mubr.f32.mxu0 0.0
      %11849 = vmatmul.mubr.f32.gmra.mrb[0].mxu0 %v11400
      %v11850 = vpop.f32.mrb[0].mxu0
      %v11851 = vadd.f32 %v11696, %v11850
      %v11852 = vpop.f32.mrb[0].mxu0
      %11853 = vmatprep.mubr.f32.mxu0 0.0
      %11854 = vmatmul.mubr.f32.gmra.mrb[0].mxu0 %v11403
      %v11855 = vpop.f32.mrb[0].mxu0
      %v11856 = vadd.f32 %v11701, %v11855
      %v11857 = vpop.f32.mrb[0].mxu0
      %11858 = vmatprep.mubr.f32.mxu0 0.0
      %11859 = vmatmul.mubr.f32.gmra.mrb[0].mxu0 %v11406
      %v11860 = vpop.f32.mrb[0].mxu0
      %v11861 = vadd.f32 %v11706, %v11860
      %v11862 = vpop.f32.mrb[0].mxu0
      %11863 = vmatprep.mubr.f32.mxu0 0.0
      %11864 = vmatmul.mubr.f32.gmra.mrb[0].mxu0 %v11409
      %v11865 = vpop.f32.mrb[0].mxu0
      %v11866 = vadd.f32 %v11711, %v11865
      %v11867 = vpop.f32.mrb[0].mxu0
      %11868 = vmatprep.mubr.f32.mxu0 0.0
      %11869 = vmatmul.mubr.f32.gmra.mrb[0].mxu0 %v11412
      %v11870 = vpop.f32.mrb[0].mxu0
      %v11871 = vadd.f32 %v11716, %v11870
      %v11872 = vpop.f32.mrb[0].mxu0
      %11873 = vmatprep.mubr.f32.mxu0 0.0
      %11874 = vmatmul.mubr.f32.gmra.mrb[0].mxu0 %v11415
      %v11875 = vpop.f32.mrb[0].mxu0
      %v11876 = vadd.f32 %v11721, %v11875
      %v11877 = vpop.f32.mrb[0].mxu0
      %11878 = vmatprep.mubr.f32.mxu0 0.0
      %11879 = vmatmul.mubr.f32.gmra.mrb[0].mxu0 %v11418
      %v11880 = vpop.f32.mrb[0].mxu0
      %v11881 = vadd.f32 %v11726, %v11880
      %v11882 = vpop.f32.mrb[0].mxu0
      %11883 = vmatprep.mubr.f32.mxu0 0.0
      %11884 = vmatmul.mubr.f32.gmra.mrb[0].mxu0 %v11421
      %v11885 = vpop.f32.mrb[0].mxu0
      %v11886 = vadd.f32 %v11731, %v11885
      %v11887 = vpop.f32.mrb[0].mxu0
      %11888 = vmatprep.mubr.f32.mxu0 0.0
      %11889 = vmatmul.mubr.f32.gmra.mrb[0].mxu0 %v11424
      %v11890 = vpop.f32.mrb[0].mxu0
      %v11891 = vadd.f32 %v11736, %v11890
      %v11892 = vpop.f32.mrb[0].mxu0
      %11893 = vdwg.mxu0
      %vm11894 = vcmask 523264
      %11895 = vst.msk [vmem:[%s251] sm:$0xff] %vm11894, %v11806
      %11896 = vst.msk [vmem:[%s251 + $0x8] sm:$0xff] %vm11894, %v11811
      %11897 = vst.msk [vmem:[%s251 + $0x10] sm:$0xff] %vm11894, %v11816
      %11898 = vst.msk [vmem:[%s251 + $0x18] sm:$0xff] %vm11894, %v11821
      %11899 = vst.msk [vmem:[%s251 + $0x20] sm:$0xff] %vm11894, %v11826
      %11900 = vst.msk [vmem:[%s251 + $0x28] sm:$0xff] %vm11894, %v11831
      %11901 = vst.msk [vmem:[%s251 + $0x30] sm:$0xff] %vm11894, %v11836
      %11902 = vst.msk [vmem:[%s251 + $0x38] sm:$0xff] %vm11894, %v11841
      %11903 = vst.msk [vmem:[%s251 + $0x40] sm:$0xff] %vm11894, %v11846
      %11904 = vst.msk [vmem:[%s251 + $0x48] sm:$0xff] %vm11894, %v11851
      %11905 = vst.msk [vmem:[%s251 + $0x50] sm:$0xff] %vm11894, %v11856
      %11906 = vst.msk [vmem:[%s251 + $0x58] sm:$0xff] %vm11894, %v11861
      %11907 = vst.msk [vmem:[%s251 + $0x60] sm:$0xff] %vm11894, %v11866
      %11908 = vst.msk [vmem:[%s251 + $0x68] sm:$0xff] %vm11894, %v11871
      %11909 = vst.msk [vmem:[%s251 + $0x70] sm:$0xff] %vm11894, %v11876
      %11910 = vst.msk [vmem:[%s251 + $0x78] sm:$0xff] %vm11894, %v11881
      %11911 = vst.msk [vmem:[%s251 + $0x80] sm:$0xff] %vm11894, %v11886
      %11912 = vst.msk [vmem:[%s251 + $0x88] sm:$0xff] %vm11894, %v11891
      %p11913 = scmp.lt.s32.totalorder %s17, 7
      %s11914 = scalar_select %p11913, %s17, 7
      %s11915 = smul.addr %s11914, 18
      %s11916 = smul.addr %s11915, 8
      %s11917 = scalar_lea.vmem %s6, %s11916
      // Predicated region
      $region45: #{tpu_custom_call.1} parent=43 // pred_check
        %p11918 = pneg %p166
      $region46: #{tpu_custom_call.1} parent=43 // pred_check_branch
        %11920 = sbr.rel (%p11918) target = $region48
      $region47: #{tpu_custom_call.1} parent=43 // pred_region
        _
      $region48: #{tpu_custom_call.1} parent=43 // pred_fallthru
        _
    $region44: #{tpu_custom_call.1} parent=5 // pred_fallthru
      _
    %p11921 = scmp.le.s32.totalorder 2, %s12
    // Predicated region
    $region49: #{tpu_custom_call.1} parent=5 // pred_check
      %p11922 = pneg %p11921
    $region50: #{tpu_custom_call.1} parent=5 // pred_check_branch
      %11924 = sbr.rel (%p11922) target = $region52
    $region51: #{tpu_custom_call.1} parent=5 // pred_region
      %s11925 = ssub.s32 %s12, 2
      // Predicated region
      $region53: #{tpu_custom_call.1} parent=51 // pred_check
        %p11926 = pneg %p172
      $region54: #{tpu_custom_call.1} parent=51 // pred_check_branch
        %11928 = sbr.rel (%p11926) target = $region56
      $region55: #{tpu_custom_call.1} parent=51 // pred_region
        %p11929 = scmp.lt.s32.totalorder %s18, 7
        %s11930 = scalar_select %p11929, %s18, 7
        %s11931 = smul.addr %s11930, 18
        %s11932 = smul.addr %s11931, 8
        %s11933 = scalar_lea.vmem %s6, %s11932
      $region56: #{tpu_custom_call.1} parent=51 // pred_fallthru
        _
    $region52: #{tpu_custom_call.1} parent=5 // pred_fallthru
      _
  $region6: #{tpu_custom_call.1} parent=0 // loop_footer
    %s16 = sadd.s32 1, %s12
  $region7: #{tpu_custom_call.1} parent=0 // loop_footer_branch
    %11 = sbr.rel target = $region3
  $region8: #{tpu_custom_call.1} parent=0 // loop_exit
    _

</llo_original>
